<compile_context>
chip_gen: v7x
topology: tpu7x:2x2x1
jax: 0.10.0
libtpu: 0.0.40
codegen_flags: <defaults>
</compile_context>

<pallas_src>
import functools

import jax
import jax.numpy as jnp
from jax.experimental import pallas as pl
from jax.experimental.pallas import tpu as pltpu


LN_EPS = 1e-5          # PyTorch LayerNorm default
MXU_DTYPE = jnp.bfloat16


def _layernorm_f32(h, gamma, beta):
    """PyTorch-style LayerNorm (biased variance) in f32 over the last dim."""
    mean = jnp.mean(h, axis=-1, keepdims=True)
    var = jnp.mean(jnp.square(h - mean), axis=-1, keepdims=True)
    return (h - mean) * jax.lax.rsqrt(var + LN_EPS) * gamma + beta


# ----------------------------------------------------------------------------
# Single fused forward kernel (one batch element per grid step)
# ----------------------------------------------------------------------------

def _fused_forward_kernel(ids_ref, tok_emb_ref, pos_ref, ln_g_ref, ln_b_ref,
                          w_in_ref, b_in_ref, w_out_ref, b_out_ref,
                          ln1_g_ref, ln1_b_ref, w1_ref, b1_ref, w2_ref, b2_ref,
                          ln2_g_ref, ln2_b_ref, w_head_ref, b_head_ref,
                          o_ref, *, num_layers, num_heads, scale):
    S = ids_ref.shape[0]
    VP_ID, H = tok_emb_ref.shape
    Dh = H // num_heads

    # ---- token embedding as a one-hot MXU matmul (vocab padded -> lane-dense) ----
    ids = ids_ref[...]                                          # [S, 1] int32
    cols = jax.lax.broadcasted_iota(jnp.int32, (S, VP_ID), 1)   # [S, VP_ID]
    onehot = (ids == cols).astype(MXU_DTYPE)                    # [S, VP_ID] bf16
    tok = jnp.dot(onehot, tok_emb_ref[...],
                  preferred_element_type=jnp.float32)           # [S, H] f32

    # ---- + positional embedding, embedding LayerNorm ----
    h = tok + pos_ref[...].astype(jnp.float32)
    h = _layernorm_f32(h, ln_g_ref[...], ln_b_ref[...])
    x = h.astype(MXU_DTYPE)                                     # [S, H] bf16

    # ---- transformer encoder layers (static loop, weights resident in VMEM) ----
    for l in range(num_layers):
        # QKV projection: bf16 operands, f32 accumulation; single full-vreg cast.
        qkv = jnp.dot(x, w_in_ref[l], preferred_element_type=jnp.float32)
        qkv = qkv + b_in_ref[l]                                 # [S, 3H] f32
        qkv_bf = qkv.astype(MXU_DTYPE)                          # one cast, then slice

        # Per-head attention with the out-projection accumulated per head
        # (no lane-dim concatenation of 32-wide pieces).
        w_out_l = w_out_ref[l]                                  # [H, H] bf16
        attn = jnp.zeros((S, H), jnp.float32)
        for hd in range(num_heads):
            q = qkv_bf[:, hd * Dh:(hd + 1) * Dh]                        # [S, Dh]
            k = qkv_bf[:, H + hd * Dh:H + (hd + 1) * Dh]                # [S, Dh]
            v = qkv_bf[:, 2 * H + hd * Dh:2 * H + (hd + 1) * Dh]        # [S, Dh]
            s = jax.lax.dot_general(q, k, (((1,), (1,)), ((), ())),
                                    preferred_element_type=jnp.float32) * scale
            m = jnp.max(s, axis=-1, keepdims=True)
            p = jnp.exp(s - m)
            denom = jnp.sum(p, axis=-1, keepdims=True)
            p = (p * pl.reciprocal(denom, approx=True)).astype(MXU_DTYPE)
            ho = jnp.dot(p, v, preferred_element_type=jnp.float32)      # [S, Dh]
            attn = attn + jnp.dot(ho.astype(MXU_DTYPE),
                                  w_out_l[hd * Dh:(hd + 1) * Dh, :],
                                  preferred_element_type=jnp.float32)   # [S, H]
        attn = attn + b_out_ref[l]

        # residual + LayerNorm 1
        h1 = _layernorm_f32(x.astype(jnp.float32) + attn,
                            ln1_g_ref[l], ln1_b_ref[l])                 # [S, H] f32

        # feed-forward (relu)
        ff = (jnp.dot(h1.astype(MXU_DTYPE), w1_ref[l],
                      preferred_element_type=jnp.float32) + b1_ref[l])
        ff = jnp.maximum(ff, 0.0)
        ff = (jnp.dot(ff.astype(MXU_DTYPE), w2_ref[l],
                      preferred_element_type=jnp.float32) + b2_ref[l])

        # residual + LayerNorm 2
        h2 = _layernorm_f32(h1 + ff, ln2_g_ref[l], ln2_b_ref[l])
        x = h2.astype(MXU_DTYPE)

    # ---- output head (vocab padded to 128 -> lane-dense f32 stores) ----
    logits = (jnp.dot(x, w_head_ref[...], preferred_element_type=jnp.float32)
              + b_head_ref[...])
    o_ref[...] = logits


def protein_model_forward(params, input_ids):
    """input_ids: int32 [B, S] -> logits float32 [B, S, vocab_size]."""
    B, S = input_ids.shape
    H = params["hidden_size"]
    L = params["num_layers"]
    nh = params["num_heads"]
    F = params["w1"].shape[2]
    VP_ID = params["token_embedding"].shape[0]
    VPAD = params["w_head"].shape[1]
    Dh = H // nh
    scale = 1.0 / (Dh ** 0.5)

    ids3 = input_ids.astype(jnp.int32).reshape(B, S, 1)

    def res2(shape):   # weight block resident in VMEM across grid steps
        return pl.BlockSpec(shape, lambda b: (0, 0))

    def res3(shape):
        return pl.BlockSpec(shape, lambda b: (0, 0, 0))

    logits_pad = pl.pallas_call(
        functools.partial(_fused_forward_kernel,
                          num_layers=L, num_heads=nh, scale=scale),
        out_shape=jax.ShapeDtypeStruct((B, S, VPAD), jnp.float32),
        grid=(B,),
        in_specs=[
            pl.BlockSpec((None, S, 1), lambda b: (b, 0, 0)),   # input_ids (one batch)
            res2((VP_ID, H)),                                  # padded token emb table
            res2((S, H)),                                      # pos rows 0..S-1
            res2((1, H)), res2((1, H)),                        # embed LN gamma/beta
            res3((L, H, 3 * H)), res3((L, 1, 3 * H)),          # w_in, b_in
            res3((L, H, H)),     res3((L, 1, H)),              # w_out, b_out
            res3((L, 1, H)),     res3((L, 1, H)),              # ln1 gamma/beta
            res3((L, H, F)),     res3((L, 1, F)),              # w1, b1
            res3((L, F, H)),     res3((L, 1, H)),              # w2, b2
            res3((L, 1, H)),     res3((L, 1, H)),              # ln2 gamma/beta
            res2((H, VPAD)),     res2((1, VPAD)),              # output head
        ],
        out_specs=pl.BlockSpec((None, S, VPAD), lambda b: (b, 0, 0)),
        compiler_params=pltpu.CompilerParams(dimension_semantics=("parallel",)),
    )(ids3,
      params["token_embedding"], params["position_embedding"],
      params["ln_g"], params["ln_b"],
      params["w_in"], params["b_in"], params["w_out"], params["b_out"],
      params["ln1_g"], params["ln1_b"], params["w1"], params["b1"],
      params["w2"], params["b2"], params["ln2_g"], params["ln2_b"],
      params["w_head"], params["b_head"])

    return logits_pad[:, :, :params["vocab_size"]]              # [B, S, V] f32


# ----------------------------------------------------------------------------
# Parameter init (deterministic, synthetic), laid out for the fused kernel
# ----------------------------------------------------------------------------

def init_params(key, *, vocab_size, hidden_size, num_layers, num_heads, max_length):
    F = hidden_size * 4
    VP_ID = 128                                  # one-hot vocab pad (lane-dense)
    VPAD = ((vocab_size + 127) // 128) * 128     # head output pad
    keys = jax.random.split(key, 3 + num_layers)

    def normal(k, shape, scale=0.02, dtype=MXU_DTYPE):
        return (scale * jax.random.normal(k, shape, dtype=jnp.float32)).astype(dtype)

    tok = jnp.zeros((VP_ID, hidden_size), MXU_DTYPE).at[:vocab_size].set(
        normal(keys[0], (vocab_size, hidden_size)))
    pos = normal(keys[1], (max_length, hidden_size))
    head_w = jnp.zeros((hidden_size, VPAD), MXU_DTYPE).at[:, :vocab_size].set(
        normal(keys[2], (hidden_size, vocab_size)))

    w_in, w_out, w1, w2 = [], [], [], []
    for l in range(num_layers):
        k1, k2, k3, k4 = jax.random.split(keys[3 + l] if 3 + l < len(keys)
                                          else keys[-1], 4)
        # in_proj: torch [3H, H] -> stored transposed [H, 3H], q|k|v along cols
        w_in.append(normal(k1, (hidden_size, 3 * hidden_size)))
        w_out.append(normal(k2, (hidden_size, hidden_size)))
        w1.append(normal(k3, (hidden_size, F)))
        w2.append(normal(k4, (F, hidden_size)))

    f32 = jnp.float32
    params = {
        "vocab_size": vocab_size,
        "hidden_size": hidden_size,
        "num_layers": num_layers,
        "num_heads": num_heads,
        "token_embedding": tok,                      # [128, H] bf16 (rows >= V zero)
        "position_embedding": pos,                   # [max_len, H] bf16
        "ln_g": jnp.ones((1, hidden_size), f32),
        "ln_b": jnp.zeros((1, hidden_size), f32),
        "w_in": jnp.stack(w_in),                     # [L, H, 3H] bf16
        "b_in": jnp.zeros((num_layers, 1, 3 * hidden_size), f32),
        "w_out": jnp.stack(w_out),                   # [L, H, H] bf16
        "b_out": jnp.zeros((num_layers, 1, hidden_size), f32),
        "ln1_g": jnp.ones((num_layers, 1, hidden_size), f32),
        "ln1_b": jnp.zeros((num_layers, 1, hidden_size), f32),
        "w1": jnp.stack(w1),                         # [L, H, F] bf16
        "b1": jnp.zeros((num_layers, 1, F), f32),
        "w2": jnp.stack(w2),                         # [L, F, H] bf16
        "b2": jnp.zeros((num_layers, 1, hidden_size), f32),
        "ln2_g": jnp.ones((num_layers, 1, hidden_size), f32),
        "ln2_b": jnp.zeros((num_layers, 1, hidden_size), f32),
        "w_head": head_w,                            # [H, 128] bf16
        "b_head": jnp.zeros((1, VPAD), f32),
    }
    return params


# ----------------------------------------------------------------------------
# Main
# ----------------------------------------------------------------------------

if __name__ == "__main__":
    # Small shapes consistent with the module's structure (hidden divisible by
    # heads; hidden a multiple of 128 so every kernel store is lane-dense).
    VOCAB, HIDDEN, LAYERS, HEADS, MAXLEN = 25, 128, 2, 4, 64
    B, S = 2, 64

    key = jax.random.PRNGKey(0)
    pkey, ikey = jax.random.split(key)
    params = init_params(pkey, vocab_size=VOCAB, hidden_size=HIDDEN,
                         num_layers=LAYERS, num_heads=HEADS, max_length=MAXLEN)
    input_ids = jax.random.randint(ikey, (B, S), 0, VOCAB, dtype=jnp.int32)

    fwd = jax.jit(lambda ids: protein_model_forward(params, ids))
    logits = jax.block_until_ready(fwd(input_ids))

    assert logits.shape == (B, S, VOCAB)
    assert bool(jnp.all(jnp.isfinite(logits)))
    print("KERNEL_OK")
</pallas_src>

<mosaic_0001>
module attributes {stable_mosaic.version = 11 : i64} {
  func.func @_fused_forward_kernel(%arg0: i32, %arg1: memref<1x64x1xi32, #tpu.memory_space<vmem>>, %arg2: memref<128x128xbf16, #tpu.memory_space<vmem>>, %arg3: memref<64x128xbf16, #tpu.memory_space<vmem>>, %arg4: memref<1x128xf32, #tpu.memory_space<vmem>>, %arg5: memref<1x128xf32, #tpu.memory_space<vmem>>, %arg6: memref<2x128x384xbf16, #tpu.memory_space<vmem>>, %arg7: memref<2x1x384xf32, #tpu.memory_space<vmem>>, %arg8: memref<2x128x128xbf16, #tpu.memory_space<vmem>>, %arg9: memref<2x1x128xf32, #tpu.memory_space<vmem>>, %arg10: memref<2x1x128xf32, #tpu.memory_space<vmem>>, %arg11: memref<2x1x128xf32, #tpu.memory_space<vmem>>, %arg12: memref<2x128x512xbf16, #tpu.memory_space<vmem>>, %arg13: memref<2x1x512xf32, #tpu.memory_space<vmem>>, %arg14: memref<2x512x128xbf16, #tpu.memory_space<vmem>>, %arg15: memref<2x1x128xf32, #tpu.memory_space<vmem>>, %arg16: memref<2x1x128xf32, #tpu.memory_space<vmem>>, %arg17: memref<2x1x128xf32, #tpu.memory_space<vmem>>, %arg18: memref<128x128xbf16, #tpu.memory_space<vmem>>, %arg19: memref<1x128xf32, #tpu.memory_space<vmem>>, %arg20: memref<1x64x128xf32, #tpu.memory_space<vmem>>) attributes {dimension_semantics = [#tpu.dimension_semantics<parallel>], iteration_bounds = array<i64: 2>, scalar_prefetch = 0 : i64, scratch_operands = 0 : i64, tpu.core_type = #tpu.core_type<tc>, window_params = [{transform_indices = @transform_0, window_bounds = array<i64: 1, 64, 1>}, {pipeline_mode = #tpu.pipeline_mode<synchronous>, transform_indices = @transform_1, window_bounds = array<i64: 128, 128>}, {pipeline_mode = #tpu.pipeline_mode<synchronous>, transform_indices = @transform_2, window_bounds = array<i64: 64, 128>}, {pipeline_mode = #tpu.pipeline_mode<synchronous>, transform_indices = @transform_3, window_bounds = array<i64: 1, 128>}, {pipeline_mode = #tpu.pipeline_mode<synchronous>, transform_indices = @transform_4, window_bounds = array<i64: 1, 128>}, {pipeline_mode = #tpu.pipeline_mode<synchronous>, transform_indices = @transform_5, window_bounds = array<i64: 2, 128, 384>}, {pipeline_mode = #tpu.pipeline_mode<synchronous>, transform_indices = @transform_6, window_bounds = array<i64: 2, 1, 384>}, {pipeline_mode = #tpu.pipeline_mode<synchronous>, transform_indices = @transform_7, window_bounds = array<i64: 2, 128, 128>}, {pipeline_mode = #tpu.pipeline_mode<synchronous>, transform_indices = @transform_8, window_bounds = array<i64: 2, 1, 128>}, {pipeline_mode = #tpu.pipeline_mode<synchronous>, transform_indices = @transform_9, window_bounds = array<i64: 2, 1, 128>}, {pipeline_mode = #tpu.pipeline_mode<synchronous>, transform_indices = @transform_10, window_bounds = array<i64: 2, 1, 128>}, {pipeline_mode = #tpu.pipeline_mode<synchronous>, transform_indices = @transform_11, window_bounds = array<i64: 2, 128, 512>}, {pipeline_mode = #tpu.pipeline_mode<synchronous>, transform_indices = @transform_12, window_bounds = array<i64: 2, 1, 512>}, {pipeline_mode = #tpu.pipeline_mode<synchronous>, transform_indices = @transform_13, window_bounds = array<i64: 2, 512, 128>}, {pipeline_mode = #tpu.pipeline_mode<synchronous>, transform_indices = @transform_14, window_bounds = array<i64: 2, 1, 128>}, {pipeline_mode = #tpu.pipeline_mode<synchronous>, transform_indices = @transform_15, window_bounds = array<i64: 2, 1, 128>}, {pipeline_mode = #tpu.pipeline_mode<synchronous>, transform_indices = @transform_16, window_bounds = array<i64: 2, 1, 128>}, {pipeline_mode = #tpu.pipeline_mode<synchronous>, transform_indices = @transform_17, window_bounds = array<i64: 128, 128>}, {pipeline_mode = #tpu.pipeline_mode<synchronous>, transform_indices = @transform_18, window_bounds = array<i64: 1, 128>}, {transform_indices = @transform_19, window_bounds = array<i64: 1, 64, 128>}]} {
    %c0 = arith.constant 0 : index
    %c0_0 = arith.constant 0 : index
    %c0_1 = arith.constant 0 : index
    %0 = vector.load %arg1[%c0, %c0_0, %c0_1] : memref<1x64x1xi32, #tpu.memory_space<vmem>>, vector<1x64x1xi32>
    %1 = vector.shape_cast %0 : vector<1x64x1xi32> to vector<64x1xi32>
    %2 = tpu.iota {dimensions = array<i32: 1>} : vector<64x128xi32>
    %3 = vector.broadcast %1 : vector<64x1xi32> to vector<64x128xi32>
    %4 = arith.cmpi eq, %3, %2 : vector<64x128xi32>
    %5 = arith.extui %4 : vector<64x128xi1> to vector<64x128xi32>
    %6 = arith.sitofp %5 : vector<64x128xi32> to vector<64x128xf32>
    %7 = arith.truncf %6 : vector<64x128xf32> to vector<64x128xbf16>
    %c0_2 = arith.constant 0 : index
    %c0_3 = arith.constant 0 : index
    %8 = vector.load %arg2[%c0_2, %c0_3] : memref<128x128xbf16, #tpu.memory_space<vmem>>, vector<128x128xbf16>
    %cst = arith.constant dense<0.000000e+00> : vector<64x128xf32>
    %9 = tpu.matmul %7, %8, %cst {dimension_numbers = #tpu.dot_dimension_numbers<[1], [0], [0], [1], [0, 0, 1, 1], [], []>} : vector<64x128xbf16>, vector<128x128xbf16>, vector<64x128xf32> -> vector<64x128xf32>
    %c0_4 = arith.constant 0 : index
    %c0_5 = arith.constant 0 : index
    %10 = vector.load %arg3[%c0_4, %c0_5] : memref<64x128xbf16, #tpu.memory_space<vmem>>, vector<64x128xbf16>
    %11 = arith.extf %10 : vector<64x128xbf16> to vector<64x128xf32>
    %12 = arith.addf %9, %11 : vector<64x128xf32>
    %c0_6 = arith.constant 0 : index
    %c0_7 = arith.constant 0 : index
    %13 = vector.load %arg4[%c0_6, %c0_7] : memref<1x128xf32, #tpu.memory_space<vmem>>, vector<1x128xf32>
    %c0_8 = arith.constant 0 : index
    %c0_9 = arith.constant 0 : index
    %14 = vector.load %arg5[%c0_8, %c0_9] : memref<1x128xf32, #tpu.memory_space<vmem>>, vector<1x128xf32>
    %cst_10 = arith.constant dense<0.000000e+00> : vector<64xf32>
    %15 = vector.multi_reduction <add>, %12, %cst_10 [1] : vector<64x128xf32> to vector<64xf32>
    %16 = vector.shape_cast %15 : vector<64xf32> to vector<64x1xf32>
    %cst_11 = arith.constant 1.280000e+02 : f32
    %17 = vector.broadcast %cst_11 : f32 to vector<64x1xf32>
    %18 = arith.divf %16, %17 : vector<64x1xf32>
    %19 = vector.broadcast %18 : vector<64x1xf32> to vector<64x128xf32>
    %20 = arith.subf %12, %19 : vector<64x128xf32>
    %21 = arith.mulf %20, %20 : vector<64x128xf32>
    %cst_12 = arith.constant dense<0.000000e+00> : vector<64xf32>
    %22 = vector.multi_reduction <add>, %21, %cst_12 [1] : vector<64x128xf32> to vector<64xf32>
    %23 = vector.shape_cast %22 : vector<64xf32> to vector<64x1xf32>
    %cst_13 = arith.constant 1.280000e+02 : f32
    %24 = vector.broadcast %cst_13 : f32 to vector<64x1xf32>
    %25 = arith.divf %23, %24 : vector<64x1xf32>
    %26 = vector.broadcast %18 : vector<64x1xf32> to vector<64x128xf32>
    %27 = arith.subf %12, %26 : vector<64x128xf32>
    %cst_14 = arith.constant 9.99999974E-6 : f32
    %28 = vector.broadcast %cst_14 : f32 to vector<64x1xf32>
    %29 = arith.addf %25, %28 : vector<64x1xf32>
    %30 = math.rsqrt %29 : vector<64x1xf32>
    %31 = vector.broadcast %30 : vector<64x1xf32> to vector<64x128xf32>
    %32 = arith.mulf %27, %31 : vector<64x128xf32>
    %33 = vector.broadcast %13 : vector<1x128xf32> to vector<64x128xf32>
    %34 = arith.mulf %32, %33 : vector<64x128xf32>
    %35 = vector.broadcast %14 : vector<1x128xf32> to vector<64x128xf32>
    %36 = arith.addf %34, %35 : vector<64x128xf32>
    %37 = arith.truncf %36 : vector<64x128xf32> to vector<64x128xbf16>
    %c0_15 = arith.constant 0 : index
    %c0_16 = arith.constant 0 : index
    %c0_17 = arith.constant 0 : index
    %38 = vector.load %arg6[%c0_15, %c0_16, %c0_17] : memref<2x128x384xbf16, #tpu.memory_space<vmem>>, vector<1x128x384xbf16>
    %39 = vector.shape_cast %38 : vector<1x128x384xbf16> to vector<128x384xbf16>
    %cst_18 = arith.constant dense<0.000000e+00> : vector<64x384xf32>
    %40 = tpu.matmul %37, %39, %cst_18 {dimension_numbers = #tpu.dot_dimension_numbers<[1], [0], [0], [1], [0, 0, 1, 1], [], []>} : vector<64x128xbf16>, vector<128x384xbf16>, vector<64x384xf32> -> vector<64x384xf32>
    %c0_19 = arith.constant 0 : index
    %c0_20 = arith.constant 0 : index
    %c0_21 = arith.constant 0 : index
    %41 = vector.load %arg7[%c0_19, %c0_20, %c0_21] : memref<2x1x384xf32, #tpu.memory_space<vmem>>, vector<1x1x384xf32>
    %42 = vector.shape_cast %41 : vector<1x1x384xf32> to vector<1x384xf32>
    %43 = vector.broadcast %42 : vector<1x384xf32> to vector<64x384xf32>
    %44 = arith.addf %40, %43 : vector<64x384xf32>
    %45 = arith.truncf %44 : vector<64x384xf32> to vector<64x384xbf16>
    %c0_22 = arith.constant 0 : index
    %c0_23 = arith.constant 0 : index
    %c0_24 = arith.constant 0 : index
    %46 = vector.load %arg8[%c0_22, %c0_23, %c0_24] : memref<2x128x128xbf16, #tpu.memory_space<vmem>>, vector<1x128x128xbf16>
    %47 = vector.shape_cast %46 : vector<1x128x128xbf16> to vector<128x128xbf16>
    %cst_25 = arith.constant 0.000000e+00 : f32
    %48 = vector.broadcast %cst_25 : f32 to vector<64x128xf32>
    %49 = vector.extract_strided_slice %45 {offsets = [0, 0], sizes = [64, 32], strides = [1, 1]} : vector<64x384xbf16> to vector<64x32xbf16>
    %50 = vector.extract_strided_slice %45 {offsets = [0, 128], sizes = [64, 32], strides = [1, 1]} : vector<64x384xbf16> to vector<64x32xbf16>
    %51 = vector.extract_strided_slice %45 {offsets = [0, 256], sizes = [64, 32], strides = [1, 1]} : vector<64x384xbf16> to vector<64x32xbf16>
    %cst_26 = arith.constant dense<0.000000e+00> : vector<64x64xf32>
    %52 = tpu.matmul %49, %50, %cst_26 {dimension_numbers = #tpu.dot_dimension_numbers<[1], [1], [0], [0], [0, 0, 1, 0], [], []>} : vector<64x32xbf16>, vector<64x32xbf16>, vector<64x64xf32> -> vector<64x64xf32>
    %cst_27 = arith.constant 0.176776692 : f32
    %53 = vector.broadcast %cst_27 : f32 to vector<64x64xf32>
    %54 = arith.mulf %52, %53 : vector<64x64xf32>
    %cst_28 = arith.constant dense<0xFF800000> : vector<64xf32>
    %55 = vector.multi_reduction <maximumf>, %54, %cst_28 [1] : vector<64x64xf32> to vector<64xf32>
    %56 = vector.shape_cast %55 : vector<64xf32> to vector<64x1xf32>
    %57 = vector.broadcast %56 : vector<64x1xf32> to vector<64x64xf32>
    %58 = arith.subf %54, %57 : vector<64x64xf32>
    %59 = math.exp %58 : vector<64x64xf32>
    %cst_29 = arith.constant dense<0.000000e+00> : vector<64xf32>
    %60 = vector.multi_reduction <add>, %59, %cst_29 [1] : vector<64x64xf32> to vector<64xf32>
    %61 = vector.shape_cast %60 : vector<64xf32> to vector<64x1xf32>
    %62 = tpu.reciprocal %61 {approx = true} : vector<64x1xf32> -> vector<64x1xf32>
    %63 = vector.broadcast %62 : vector<64x1xf32> to vector<64x64xf32>
    %64 = arith.mulf %59, %63 : vector<64x64xf32>
    %65 = arith.truncf %64 : vector<64x64xf32> to vector<64x64xbf16>
    %cst_30 = arith.constant dense<0.000000e+00> : vector<64x32xf32>
    %66 = tpu.matmul %65, %51, %cst_30 {dimension_numbers = #tpu.dot_dimension_numbers<[1], [0], [0], [1], [0, 0, 1, 1], [], []>} : vector<64x64xbf16>, vector<64x32xbf16>, vector<64x32xf32> -> vector<64x32xf32>
    %67 = arith.truncf %66 : vector<64x32xf32> to vector<64x32xbf16>
    %68 = vector.extract_strided_slice %47 {offsets = [0, 0], sizes = [32, 128], strides = [1, 1]} : vector<128x128xbf16> to vector<32x128xbf16>
    %cst_31 = arith.constant dense<0.000000e+00> : vector<64x128xf32>
    %69 = tpu.matmul %67, %68, %cst_31 {dimension_numbers = #tpu.dot_dimension_numbers<[1], [0], [0], [1], [0, 0, 1, 1], [], []>} : vector<64x32xbf16>, vector<32x128xbf16>, vector<64x128xf32> -> vector<64x128xf32>
    %70 = arith.addf %48, %69 : vector<64x128xf32>
    %71 = vector.extract_strided_slice %45 {offsets = [0, 32], sizes = [64, 32], strides = [1, 1]} : vector<64x384xbf16> to vector<64x32xbf16>
    %72 = vector.extract_strided_slice %45 {offsets = [0, 160], sizes = [64, 32], strides = [1, 1]} : vector<64x384xbf16> to vector<64x32xbf16>
    %73 = vector.extract_strided_slice %45 {offsets = [0, 288], sizes = [64, 32], strides = [1, 1]} : vector<64x384xbf16> to vector<64x32xbf16>
    %cst_32 = arith.constant dense<0.000000e+00> : vector<64x64xf32>
    %74 = tpu.matmul %71, %72, %cst_32 {dimension_numbers = #tpu.dot_dimension_numbers<[1], [1], [0], [0], [0, 0, 1, 0], [], []>} : vector<64x32xbf16>, vector<64x32xbf16>, vector<64x64xf32> -> vector<64x64xf32>
    %cst_33 = arith.constant 0.176776692 : f32
    %75 = vector.broadcast %cst_33 : f32 to vector<64x64xf32>
    %76 = arith.mulf %74, %75 : vector<64x64xf32>
    %cst_34 = arith.constant dense<0xFF800000> : vector<64xf32>
    %77 = vector.multi_reduction <maximumf>, %76, %cst_34 [1] : vector<64x64xf32> to vector<64xf32>
    %78 = vector.shape_cast %77 : vector<64xf32> to vector<64x1xf32>
    %79 = vector.broadcast %78 : vector<64x1xf32> to vector<64x64xf32>
    %80 = arith.subf %76, %79 : vector<64x64xf32>
    %81 = math.exp %80 : vector<64x64xf32>
    %cst_35 = arith.constant dense<0.000000e+00> : vector<64xf32>
    %82 = vector.multi_reduction <add>, %81, %cst_35 [1] : vector<64x64xf32> to vector<64xf32>
    %83 = vector.shape_cast %82 : vector<64xf32> to vector<64x1xf32>
    %84 = tpu.reciprocal %83 {approx = true} : vector<64x1xf32> -> vector<64x1xf32>
    %85 = vector.broadcast %84 : vector<64x1xf32> to vector<64x64xf32>
    %86 = arith.mulf %81, %85 : vector<64x64xf32>
    %87 = arith.truncf %86 : vector<64x64xf32> to vector<64x64xbf16>
    %cst_36 = arith.constant dense<0.000000e+00> : vector<64x32xf32>
    %88 = tpu.matmul %87, %73, %cst_36 {dimension_numbers = #tpu.dot_dimension_numbers<[1], [0], [0], [1], [0, 0, 1, 1], [], []>} : vector<64x64xbf16>, vector<64x32xbf16>, vector<64x32xf32> -> vector<64x32xf32>
    %89 = arith.truncf %88 : vector<64x32xf32> to vector<64x32xbf16>
    %90 = vector.extract_strided_slice %47 {offsets = [32, 0], sizes = [32, 128], strides = [1, 1]} : vector<128x128xbf16> to vector<32x128xbf16>
    %cst_37 = arith.constant dense<0.000000e+00> : vector<64x128xf32>
    %91 = tpu.matmul %89, %90, %cst_37 {dimension_numbers = #tpu.dot_dimension_numbers<[1], [0], [0], [1], [0, 0, 1, 1], [], []>} : vector<64x32xbf16>, vector<32x128xbf16>, vector<64x128xf32> -> vector<64x128xf32>
    %92 = arith.addf %70, %91 : vector<64x128xf32>
    %93 = vector.extract_strided_slice %45 {offsets = [0, 64], sizes = [64, 32], strides = [1, 1]} : vector<64x384xbf16> to vector<64x32xbf16>
    %94 = vector.extract_strided_slice %45 {offsets = [0, 192], sizes = [64, 32], strides = [1, 1]} : vector<64x384xbf16> to vector<64x32xbf16>
    %95 = vector.extract_strided_slice %45 {offsets = [0, 320], sizes = [64, 32], strides = [1, 1]} : vector<64x384xbf16> to vector<64x32xbf16>
    %cst_38 = arith.constant dense<0.000000e+00> : vector<64x64xf32>
    %96 = tpu.matmul %93, %94, %cst_38 {dimension_numbers = #tpu.dot_dimension_numbers<[1], [1], [0], [0], [0, 0, 1, 0], [], []>} : vector<64x32xbf16>, vector<64x32xbf16>, vector<64x64xf32> -> vector<64x64xf32>
    %cst_39 = arith.constant 0.176776692 : f32
    %97 = vector.broadcast %cst_39 : f32 to vector<64x64xf32>
    %98 = arith.mulf %96, %97 : vector<64x64xf32>
    %cst_40 = arith.constant dense<0xFF800000> : vector<64xf32>
    %99 = vector.multi_reduction <maximumf>, %98, %cst_40 [1] : vector<64x64xf32> to vector<64xf32>
    %100 = vector.shape_cast %99 : vector<64xf32> to vector<64x1xf32>
    %101 = vector.broadcast %100 : vector<64x1xf32> to vector<64x64xf32>
    %102 = arith.subf %98, %101 : vector<64x64xf32>
    %103 = math.exp %102 : vector<64x64xf32>
    %cst_41 = arith.constant dense<0.000000e+00> : vector<64xf32>
    %104 = vector.multi_reduction <add>, %103, %cst_41 [1] : vector<64x64xf32> to vector<64xf32>
    %105 = vector.shape_cast %104 : vector<64xf32> to vector<64x1xf32>
    %106 = tpu.reciprocal %105 {approx = true} : vector<64x1xf32> -> vector<64x1xf32>
    %107 = vector.broadcast %106 : vector<64x1xf32> to vector<64x64xf32>
    %108 = arith.mulf %103, %107 : vector<64x64xf32>
    %109 = arith.truncf %108 : vector<64x64xf32> to vector<64x64xbf16>
    %cst_42 = arith.constant dense<0.000000e+00> : vector<64x32xf32>
    %110 = tpu.matmul %109, %95, %cst_42 {dimension_numbers = #tpu.dot_dimension_numbers<[1], [0], [0], [1], [0, 0, 1, 1], [], []>} : vector<64x64xbf16>, vector<64x32xbf16>, vector<64x32xf32> -> vector<64x32xf32>
    %111 = arith.truncf %110 : vector<64x32xf32> to vector<64x32xbf16>
    %112 = vector.extract_strided_slice %47 {offsets = [64, 0], sizes = [32, 128], strides = [1, 1]} : vector<128x128xbf16> to vector<32x128xbf16>
    %cst_43 = arith.constant dense<0.000000e+00> : vector<64x128xf32>
    %113 = tpu.matmul %111, %112, %cst_43 {dimension_numbers = #tpu.dot_dimension_numbers<[1], [0], [0], [1], [0, 0, 1, 1], [], []>} : vector<64x32xbf16>, vector<32x128xbf16>, vector<64x128xf32> -> vector<64x128xf32>
    %114 = arith.addf %92, %113 : vector<64x128xf32>
    %115 = vector.extract_strided_slice %45 {offsets = [0, 96], sizes = [64, 32], strides = [1, 1]} : vector<64x384xbf16> to vector<64x32xbf16>
    %116 = vector.extract_strided_slice %45 {offsets = [0, 224], sizes = [64, 32], strides = [1, 1]} : vector<64x384xbf16> to vector<64x32xbf16>
    %117 = vector.extract_strided_slice %45 {offsets = [0, 352], sizes = [64, 32], strides = [1, 1]} : vector<64x384xbf16> to vector<64x32xbf16>
    %cst_44 = arith.constant dense<0.000000e+00> : vector<64x64xf32>
    %118 = tpu.matmul %115, %116, %cst_44 {dimension_numbers = #tpu.dot_dimension_numbers<[1], [1], [0], [0], [0, 0, 1, 0], [], []>} : vector<64x32xbf16>, vector<64x32xbf16>, vector<64x64xf32> -> vector<64x64xf32>
    %cst_45 = arith.constant 0.176776692 : f32
    %119 = vector.broadcast %cst_45 : f32 to vector<64x64xf32>
    %120 = arith.mulf %118, %119 : vector<64x64xf32>
    %cst_46 = arith.constant dense<0xFF800000> : vector<64xf32>
    %121 = vector.multi_reduction <maximumf>, %120, %cst_46 [1] : vector<64x64xf32> to vector<64xf32>
    %122 = vector.shape_cast %121 : vector<64xf32> to vector<64x1xf32>
    %123 = vector.broadcast %122 : vector<64x1xf32> to vector<64x64xf32>
    %124 = arith.subf %120, %123 : vector<64x64xf32>
    %125 = math.exp %124 : vector<64x64xf32>
    %cst_47 = arith.constant dense<0.000000e+00> : vector<64xf32>
    %126 = vector.multi_reduction <add>, %125, %cst_47 [1] : vector<64x64xf32> to vector<64xf32>
    %127 = vector.shape_cast %126 : vector<64xf32> to vector<64x1xf32>
    %128 = tpu.reciprocal %127 {approx = true} : vector<64x1xf32> -> vector<64x1xf32>
    %129 = vector.broadcast %128 : vector<64x1xf32> to vector<64x64xf32>
    %130 = arith.mulf %125, %129 : vector<64x64xf32>
    %131 = arith.truncf %130 : vector<64x64xf32> to vector<64x64xbf16>
    %cst_48 = arith.constant dense<0.000000e+00> : vector<64x32xf32>
    %132 = tpu.matmul %131, %117, %cst_48 {dimension_numbers = #tpu.dot_dimension_numbers<[1], [0], [0], [1], [0, 0, 1, 1], [], []>} : vector<64x64xbf16>, vector<64x32xbf16>, vector<64x32xf32> -> vector<64x32xf32>
    %133 = arith.truncf %132 : vector<64x32xf32> to vector<64x32xbf16>
    %134 = vector.extract_strided_slice %47 {offsets = [96, 0], sizes = [32, 128], strides = [1, 1]} : vector<128x128xbf16> to vector<32x128xbf16>
    %cst_49 = arith.constant dense<0.000000e+00> : vector<64x128xf32>
    %135 = tpu.matmul %133, %134, %cst_49 {dimension_numbers = #tpu.dot_dimension_numbers<[1], [0], [0], [1], [0, 0, 1, 1], [], []>} : vector<64x32xbf16>, vector<32x128xbf16>, vector<64x128xf32> -> vector<64x128xf32>
    %136 = arith.addf %114, %135 : vector<64x128xf32>
    %c0_50 = arith.constant 0 : index
    %c0_51 = arith.constant 0 : index
    %c0_52 = arith.constant 0 : index
    %137 = vector.load %arg9[%c0_50, %c0_51, %c0_52] : memref<2x1x128xf32, #tpu.memory_space<vmem>>, vector<1x1x128xf32>
    %138 = vector.shape_cast %137 : vector<1x1x128xf32> to vector<1x128xf32>
    %139 = vector.broadcast %138 : vector<1x128xf32> to vector<64x128xf32>
    %140 = arith.addf %136, %139 : vector<64x128xf32>
    %141 = arith.extf %37 : vector<64x128xbf16> to vector<64x128xf32>
    %142 = arith.addf %141, %140 : vector<64x128xf32>
    %c0_53 = arith.constant 0 : index
    %c0_54 = arith.constant 0 : index
    %c0_55 = arith.constant 0 : index
    %143 = vector.load %arg10[%c0_53, %c0_54, %c0_55] : memref<2x1x128xf32, #tpu.memory_space<vmem>>, vector<1x1x128xf32>
    %144 = vector.shape_cast %143 : vector<1x1x128xf32> to vector<1x128xf32>
    %c0_56 = arith.constant 0 : index
    %c0_57 = arith.constant 0 : index
    %c0_58 = arith.constant 0 : index
    %145 = vector.load %arg11[%c0_56, %c0_57, %c0_58] : memref<2x1x128xf32, #tpu.memory_space<vmem>>, vector<1x1x128xf32>
    %146 = vector.shape_cast %145 : vector<1x1x128xf32> to vector<1x128xf32>
    %cst_59 = arith.constant dense<0.000000e+00> : vector<64xf32>
    %147 = vector.multi_reduction <add>, %142, %cst_59 [1] : vector<64x128xf32> to vector<64xf32>
    %148 = vector.shape_cast %147 : vector<64xf32> to vector<64x1xf32>
    %cst_60 = arith.constant 1.280000e+02 : f32
    %149 = vector.broadcast %cst_60 : f32 to vector<64x1xf32>
    %150 = arith.divf %148, %149 : vector<64x1xf32>
    %151 = vector.broadcast %150 : vector<64x1xf32> to vector<64x128xf32>
    %152 = arith.subf %142, %151 : vector<64x128xf32>
    %153 = arith.mulf %152, %152 : vector<64x128xf32>
    %cst_61 = arith.constant dense<0.000000e+00> : vector<64xf32>
    %154 = vector.multi_reduction <add>, %153, %cst_61 [1] : vector<64x128xf32> to vector<64xf32>
    %155 = vector.shape_cast %154 : vector<64xf32> to vector<64x1xf32>
    %cst_62 = arith.constant 1.280000e+02 : f32
    %156 = vector.broadcast %cst_62 : f32 to vector<64x1xf32>
    %157 = arith.divf %155, %156 : vector<64x1xf32>
    %158 = vector.broadcast %150 : vector<64x1xf32> to vector<64x128xf32>
    %159 = arith.subf %142, %158 : vector<64x128xf32>
    %cst_63 = arith.constant 9.99999974E-6 : f32
    %160 = vector.broadcast %cst_63 : f32 to vector<64x1xf32>
    %161 = arith.addf %157, %160 : vector<64x1xf32>
    %162 = math.rsqrt %161 : vector<64x1xf32>
    %163 = vector.broadcast %162 : vector<64x1xf32> to vector<64x128xf32>
    %164 = arith.mulf %159, %163 : vector<64x128xf32>
    %165 = vector.broadcast %144 : vector<1x128xf32> to vector<64x128xf32>
    %166 = arith.mulf %164, %165 : vector<64x128xf32>
    %167 = vector.broadcast %146 : vector<1x128xf32> to vector<64x128xf32>
    %168 = arith.addf %166, %167 : vector<64x128xf32>
    %169 = arith.truncf %168 : vector<64x128xf32> to vector<64x128xbf16>
    %c0_64 = arith.constant 0 : index
    %c0_65 = arith.constant 0 : index
    %c0_66 = arith.constant 0 : index
    %170 = vector.load %arg12[%c0_64, %c0_65, %c0_66] : memref<2x128x512xbf16, #tpu.memory_space<vmem>>, vector<1x128x512xbf16>
    %171 = vector.shape_cast %170 : vector<1x128x512xbf16> to vector<128x512xbf16>
    %cst_67 = arith.constant dense<0.000000e+00> : vector<64x512xf32>
    %172 = tpu.matmul %169, %171, %cst_67 {dimension_numbers = #tpu.dot_dimension_numbers<[1], [0], [0], [1], [0, 0, 1, 1], [], []>} : vector<64x128xbf16>, vector<128x512xbf16>, vector<64x512xf32> -> vector<64x512xf32>
    %c0_68 = arith.constant 0 : index
    %c0_69 = arith.constant 0 : index
    %c0_70 = arith.constant 0 : index
    %173 = vector.load %arg13[%c0_68, %c0_69, %c0_70] : memref<2x1x512xf32, #tpu.memory_space<vmem>>, vector<1x1x512xf32>
    %174 = vector.shape_cast %173 : vector<1x1x512xf32> to vector<1x512xf32>
    %175 = vector.broadcast %174 : vector<1x512xf32> to vector<64x512xf32>
    %176 = arith.addf %172, %175 : vector<64x512xf32>
    %cst_71 = arith.constant 0.000000e+00 : f32
    %177 = vector.broadcast %cst_71 : f32 to vector<64x512xf32>
    %178 = arith.maximumf %176, %177 : vector<64x512xf32>
    %179 = arith.truncf %178 : vector<64x512xf32> to vector<64x512xbf16>
    %c0_72 = arith.constant 0 : index
    %c0_73 = arith.constant 0 : index
    %c0_74 = arith.constant 0 : index
    %180 = vector.load %arg14[%c0_72, %c0_73, %c0_74] : memref<2x512x128xbf16, #tpu.memory_space<vmem>>, vector<1x512x128xbf16>
    %181 = vector.shape_cast %180 : vector<1x512x128xbf16> to vector<512x128xbf16>
    %cst_75 = arith.constant dense<0.000000e+00> : vector<64x128xf32>
    %182 = tpu.matmul %179, %181, %cst_75 {dimension_numbers = #tpu.dot_dimension_numbers<[1], [0], [0], [1], [0, 0, 1, 1], [], []>} : vector<64x512xbf16>, vector<512x128xbf16>, vector<64x128xf32> -> vector<64x128xf32>
    %c0_76 = arith.constant 0 : index
    %c0_77 = arith.constant 0 : index
    %c0_78 = arith.constant 0 : index
    %183 = vector.load %arg15[%c0_76, %c0_77, %c0_78] : memref<2x1x128xf32, #tpu.memory_space<vmem>>, vector<1x1x128xf32>
    %184 = vector.shape_cast %183 : vector<1x1x128xf32> to vector<1x128xf32>
    %185 = vector.broadcast %184 : vector<1x128xf32> to vector<64x128xf32>
    %186 = arith.addf %182, %185 : vector<64x128xf32>
    %187 = arith.addf %168, %186 : vector<64x128xf32>
    %c0_79 = arith.constant 0 : index
    %c0_80 = arith.constant 0 : index
    %c0_81 = arith.constant 0 : index
    %188 = vector.load %arg16[%c0_79, %c0_80, %c0_81] : memref<2x1x128xf32, #tpu.memory_space<vmem>>, vector<1x1x128xf32>
    %189 = vector.shape_cast %188 : vector<1x1x128xf32> to vector<1x128xf32>
    %c0_82 = arith.constant 0 : index
    %c0_83 = arith.constant 0 : index
    %c0_84 = arith.constant 0 : index
    %190 = vector.load %arg17[%c0_82, %c0_83, %c0_84] : memref<2x1x128xf32, #tpu.memory_space<vmem>>, vector<1x1x128xf32>
    %191 = vector.shape_cast %190 : vector<1x1x128xf32> to vector<1x128xf32>
    %cst_85 = arith.constant dense<0.000000e+00> : vector<64xf32>
    %192 = vector.multi_reduction <add>, %187, %cst_85 [1] : vector<64x128xf32> to vector<64xf32>
    %193 = vector.shape_cast %192 : vector<64xf32> to vector<64x1xf32>
    %cst_86 = arith.constant 1.280000e+02 : f32
    %194 = vector.broadcast %cst_86 : f32 to vector<64x1xf32>
    %195 = arith.divf %193, %194 : vector<64x1xf32>
    %196 = vector.broadcast %195 : vector<64x1xf32> to vector<64x128xf32>
    %197 = arith.subf %187, %196 : vector<64x128xf32>
    %198 = arith.mulf %197, %197 : vector<64x128xf32>
    %cst_87 = arith.constant dense<0.000000e+00> : vector<64xf32>
    %199 = vector.multi_reduction <add>, %198, %cst_87 [1] : vector<64x128xf32> to vector<64xf32>
    %200 = vector.shape_cast %199 : vector<64xf32> to vector<64x1xf32>
    %cst_88 = arith.constant 1.280000e+02 : f32
    %201 = vector.broadcast %cst_88 : f32 to vector<64x1xf32>
    %202 = arith.divf %200, %201 : vector<64x1xf32>
    %203 = vector.broadcast %195 : vector<64x1xf32> to vector<64x128xf32>
    %204 = arith.subf %187, %203 : vector<64x128xf32>
    %cst_89 = arith.constant 9.99999974E-6 : f32
    %205 = vector.broadcast %cst_89 : f32 to vector<64x1xf32>
    %206 = arith.addf %202, %205 : vector<64x1xf32>
    %207 = math.rsqrt %206 : vector<64x1xf32>
    %208 = vector.broadcast %207 : vector<64x1xf32> to vector<64x128xf32>
    %209 = arith.mulf %204, %208 : vector<64x128xf32>
    %210 = vector.broadcast %189 : vector<1x128xf32> to vector<64x128xf32>
    %211 = arith.mulf %209, %210 : vector<64x128xf32>
    %212 = vector.broadcast %191 : vector<1x128xf32> to vector<64x128xf32>
    %213 = arith.addf %211, %212 : vector<64x128xf32>
    %214 = arith.truncf %213 : vector<64x128xf32> to vector<64x128xbf16>
    %c1 = arith.constant 1 : index
    %c0_90 = arith.constant 0 : index
    %c0_91 = arith.constant 0 : index
    %215 = vector.load %arg6[%c1, %c0_90, %c0_91] : memref<2x128x384xbf16, #tpu.memory_space<vmem>>, vector<1x128x384xbf16>
    %216 = vector.shape_cast %215 : vector<1x128x384xbf16> to vector<128x384xbf16>
    %cst_92 = arith.constant dense<0.000000e+00> : vector<64x384xf32>
    %217 = tpu.matmul %214, %216, %cst_92 {dimension_numbers = #tpu.dot_dimension_numbers<[1], [0], [0], [1], [0, 0, 1, 1], [], []>} : vector<64x128xbf16>, vector<128x384xbf16>, vector<64x384xf32> -> vector<64x384xf32>
    %c1_93 = arith.constant 1 : index
    %c0_94 = arith.constant 0 : index
    %c0_95 = arith.constant 0 : index
    %218 = vector.load %arg7[%c1_93, %c0_94, %c0_95] : memref<2x1x384xf32, #tpu.memory_space<vmem>>, vector<1x1x384xf32>
    %219 = vector.shape_cast %218 : vector<1x1x384xf32> to vector<1x384xf32>
    %220 = vector.broadcast %219 : vector<1x384xf32> to vector<64x384xf32>
    %221 = arith.addf %217, %220 : vector<64x384xf32>
    %222 = arith.truncf %221 : vector<64x384xf32> to vector<64x384xbf16>
    %c1_96 = arith.constant 1 : index
    %c0_97 = arith.constant 0 : index
    %c0_98 = arith.constant 0 : index
    %223 = vector.load %arg8[%c1_96, %c0_97, %c0_98] : memref<2x128x128xbf16, #tpu.memory_space<vmem>>, vector<1x128x128xbf16>
    %224 = vector.shape_cast %223 : vector<1x128x128xbf16> to vector<128x128xbf16>
    %cst_99 = arith.constant 0.000000e+00 : f32
    %225 = vector.broadcast %cst_99 : f32 to vector<64x128xf32>
    %226 = vector.extract_strided_slice %222 {offsets = [0, 0], sizes = [64, 32], strides = [1, 1]} : vector<64x384xbf16> to vector<64x32xbf16>
    %227 = vector.extract_strided_slice %222 {offsets = [0, 128], sizes = [64, 32], strides = [1, 1]} : vector<64x384xbf16> to vector<64x32xbf16>
    %228 = vector.extract_strided_slice %222 {offsets = [0, 256], sizes = [64, 32], strides = [1, 1]} : vector<64x384xbf16> to vector<64x32xbf16>
    %cst_100 = arith.constant dense<0.000000e+00> : vector<64x64xf32>
    %229 = tpu.matmul %226, %227, %cst_100 {dimension_numbers = #tpu.dot_dimension_numbers<[1], [1], [0], [0], [0, 0, 1, 0], [], []>} : vector<64x32xbf16>, vector<64x32xbf16>, vector<64x64xf32> -> vector<64x64xf32>
    %cst_101 = arith.constant 0.176776692 : f32
    %230 = vector.broadcast %cst_101 : f32 to vector<64x64xf32>
    %231 = arith.mulf %229, %230 : vector<64x64xf32>
    %cst_102 = arith.constant dense<0xFF800000> : vector<64xf32>
    %232 = vector.multi_reduction <maximumf>, %231, %cst_102 [1] : vector<64x64xf32> to vector<64xf32>
    %233 = vector.shape_cast %232 : vector<64xf32> to vector<64x1xf32>
    %234 = vector.broadcast %233 : vector<64x1xf32> to vector<64x64xf32>
    %235 = arith.subf %231, %234 : vector<64x64xf32>
    %236 = math.exp %235 : vector<64x64xf32>
    %cst_103 = arith.constant dense<0.000000e+00> : vector<64xf32>
    %237 = vector.multi_reduction <add>, %236, %cst_103 [1] : vector<64x64xf32> to vector<64xf32>
    %238 = vector.shape_cast %237 : vector<64xf32> to vector<64x1xf32>
    %239 = tpu.reciprocal %238 {approx = true} : vector<64x1xf32> -> vector<64x1xf32>
    %240 = vector.broadcast %239 : vector<64x1xf32> to vector<64x64xf32>
    %241 = arith.mulf %236, %240 : vector<64x64xf32>
    %242 = arith.truncf %241 : vector<64x64xf32> to vector<64x64xbf16>
    %cst_104 = arith.constant dense<0.000000e+00> : vector<64x32xf32>
    %243 = tpu.matmul %242, %228, %cst_104 {dimension_numbers = #tpu.dot_dimension_numbers<[1], [0], [0], [1], [0, 0, 1, 1], [], []>} : vector<64x64xbf16>, vector<64x32xbf16>, vector<64x32xf32> -> vector<64x32xf32>
    %244 = arith.truncf %243 : vector<64x32xf32> to vector<64x32xbf16>
    %245 = vector.extract_strided_slice %224 {offsets = [0, 0], sizes = [32, 128], strides = [1, 1]} : vector<128x128xbf16> to vector<32x128xbf16>
    %cst_105 = arith.constant dense<0.000000e+00> : vector<64x128xf32>
    %246 = tpu.matmul %244, %245, %cst_105 {dimension_numbers = #tpu.dot_dimension_numbers<[1], [0], [0], [1], [0, 0, 1, 1], [], []>} : vector<64x32xbf16>, vector<32x128xbf16>, vector<64x128xf32> -> vector<64x128xf32>
    %247 = arith.addf %225, %246 : vector<64x128xf32>
    %248 = vector.extract_strided_slice %222 {offsets = [0, 32], sizes = [64, 32], strides = [1, 1]} : vector<64x384xbf16> to vector<64x32xbf16>
    %249 = vector.extract_strided_slice %222 {offsets = [0, 160], sizes = [64, 32], strides = [1, 1]} : vector<64x384xbf16> to vector<64x32xbf16>
    %250 = vector.extract_strided_slice %222 {offsets = [0, 288], sizes = [64, 32], strides = [1, 1]} : vector<64x384xbf16> to vector<64x32xbf16>
    %cst_106 = arith.constant dense<0.000000e+00> : vector<64x64xf32>
    %251 = tpu.matmul %248, %249, %cst_106 {dimension_numbers = #tpu.dot_dimension_numbers<[1], [1], [0], [0], [0, 0, 1, 0], [], []>} : vector<64x32xbf16>, vector<64x32xbf16>, vector<64x64xf32> -> vector<64x64xf32>
    %cst_107 = arith.constant 0.176776692 : f32
    %252 = vector.broadcast %cst_107 : f32 to vector<64x64xf32>
    %253 = arith.mulf %251, %252 : vector<64x64xf32>
    %cst_108 = arith.constant dense<0xFF800000> : vector<64xf32>
    %254 = vector.multi_reduction <maximumf>, %253, %cst_108 [1] : vector<64x64xf32> to vector<64xf32>
    %255 = vector.shape_cast %254 : vector<64xf32> to vector<64x1xf32>
    %256 = vector.broadcast %255 : vector<64x1xf32> to vector<64x64xf32>
    %257 = arith.subf %253, %256 : vector<64x64xf32>
    %258 = math.exp %257 : vector<64x64xf32>
    %cst_109 = arith.constant dense<0.000000e+00> : vector<64xf32>
    %259 = vector.multi_reduction <add>, %258, %cst_109 [1] : vector<64x64xf32> to vector<64xf32>
    %260 = vector.shape_cast %259 : vector<64xf32> to vector<64x1xf32>
    %261 = tpu.reciprocal %260 {approx = true} : vector<64x1xf32> -> vector<64x1xf32>
    %262 = vector.broadcast %261 : vector<64x1xf32> to vector<64x64xf32>
    %263 = arith.mulf %258, %262 : vector<64x64xf32>
    %264 = arith.truncf %263 : vector<64x64xf32> to vector<64x64xbf16>
    %cst_110 = arith.constant dense<0.000000e+00> : vector<64x32xf32>
    %265 = tpu.matmul %264, %250, %cst_110 {dimension_numbers = #tpu.dot_dimension_numbers<[1], [0], [0], [1], [0, 0, 1, 1], [], []>} : vector<64x64xbf16>, vector<64x32xbf16>, vector<64x32xf32> -> vector<64x32xf32>
    %266 = arith.truncf %265 : vector<64x32xf32> to vector<64x32xbf16>
    %267 = vector.extract_strided_slice %224 {offsets = [32, 0], sizes = [32, 128], strides = [1, 1]} : vector<128x128xbf16> to vector<32x128xbf16>
    %cst_111 = arith.constant dense<0.000000e+00> : vector<64x128xf32>
    %268 = tpu.matmul %266, %267, %cst_111 {dimension_numbers = #tpu.dot_dimension_numbers<[1], [0], [0], [1], [0, 0, 1, 1], [], []>} : vector<64x32xbf16>, vector<32x128xbf16>, vector<64x128xf32> -> vector<64x128xf32>
    %269 = arith.addf %247, %268 : vector<64x128xf32>
    %270 = vector.extract_strided_slice %222 {offsets = [0, 64], sizes = [64, 32], strides = [1, 1]} : vector<64x384xbf16> to vector<64x32xbf16>
    %271 = vector.extract_strided_slice %222 {offsets = [0, 192], sizes = [64, 32], strides = [1, 1]} : vector<64x384xbf16> to vector<64x32xbf16>
    %272 = vector.extract_strided_slice %222 {offsets = [0, 320], sizes = [64, 32], strides = [1, 1]} : vector<64x384xbf16> to vector<64x32xbf16>
    %cst_112 = arith.constant dense<0.000000e+00> : vector<64x64xf32>
    %273 = tpu.matmul %270, %271, %cst_112 {dimension_numbers = #tpu.dot_dimension_numbers<[1], [1], [0], [0], [0, 0, 1, 0], [], []>} : vector<64x32xbf16>, vector<64x32xbf16>, vector<64x64xf32> -> vector<64x64xf32>
    %cst_113 = arith.constant 0.176776692 : f32
    %274 = vector.broadcast %cst_113 : f32 to vector<64x64xf32>
    %275 = arith.mulf %273, %274 : vector<64x64xf32>
    %cst_114 = arith.constant dense<0xFF800000> : vector<64xf32>
    %276 = vector.multi_reduction <maximumf>, %275, %cst_114 [1] : vector<64x64xf32> to vector<64xf32>
    %277 = vector.shape_cast %276 : vector<64xf32> to vector<64x1xf32>
    %278 = vector.broadcast %277 : vector<64x1xf32> to vector<64x64xf32>
    %279 = arith.subf %275, %278 : vector<64x64xf32>
    %280 = math.exp %279 : vector<64x64xf32>
    %cst_115 = arith.constant dense<0.000000e+00> : vector<64xf32>
    %281 = vector.multi_reduction <add>, %280, %cst_115 [1] : vector<64x64xf32> to vector<64xf32>
    %282 = vector.shape_cast %281 : vector<64xf32> to vector<64x1xf32>
    %283 = tpu.reciprocal %282 {approx = true} : vector<64x1xf32> -> vector<64x1xf32>
    %284 = vector.broadcast %283 : vector<64x1xf32> to vector<64x64xf32>
    %285 = arith.mulf %280, %284 : vector<64x64xf32>
    %286 = arith.truncf %285 : vector<64x64xf32> to vector<64x64xbf16>
    %cst_116 = arith.constant dense<0.000000e+00> : vector<64x32xf32>
    %287 = tpu.matmul %286, %272, %cst_116 {dimension_numbers = #tpu.dot_dimension_numbers<[1], [0], [0], [1], [0, 0, 1, 1], [], []>} : vector<64x64xbf16>, vector<64x32xbf16>, vector<64x32xf32> -> vector<64x32xf32>
    %288 = arith.truncf %287 : vector<64x32xf32> to vector<64x32xbf16>
    %289 = vector.extract_strided_slice %224 {offsets = [64, 0], sizes = [32, 128], strides = [1, 1]} : vector<128x128xbf16> to vector<32x128xbf16>
    %cst_117 = arith.constant dense<0.000000e+00> : vector<64x128xf32>
    %290 = tpu.matmul %288, %289, %cst_117 {dimension_numbers = #tpu.dot_dimension_numbers<[1], [0], [0], [1], [0, 0, 1, 1], [], []>} : vector<64x32xbf16>, vector<32x128xbf16>, vector<64x128xf32> -> vector<64x128xf32>
    %291 = arith.addf %269, %290 : vector<64x128xf32>
    %292 = vector.extract_strided_slice %222 {offsets = [0, 96], sizes = [64, 32], strides = [1, 1]} : vector<64x384xbf16> to vector<64x32xbf16>
    %293 = vector.extract_strided_slice %222 {offsets = [0, 224], sizes = [64, 32], strides = [1, 1]} : vector<64x384xbf16> to vector<64x32xbf16>
    %294 = vector.extract_strided_slice %222 {offsets = [0, 352], sizes = [64, 32], strides = [1, 1]} : vector<64x384xbf16> to vector<64x32xbf16>
    %cst_118 = arith.constant dense<0.000000e+00> : vector<64x64xf32>
    %295 = tpu.matmul %292, %293, %cst_118 {dimension_numbers = #tpu.dot_dimension_numbers<[1], [1], [0], [0], [0, 0, 1, 0], [], []>} : vector<64x32xbf16>, vector<64x32xbf16>, vector<64x64xf32> -> vector<64x64xf32>
    %cst_119 = arith.constant 0.176776692 : f32
    %296 = vector.broadcast %cst_119 : f32 to vector<64x64xf32>
    %297 = arith.mulf %295, %296 : vector<64x64xf32>
    %cst_120 = arith.constant dense<0xFF800000> : vector<64xf32>
    %298 = vector.multi_reduction <maximumf>, %297, %cst_120 [1] : vector<64x64xf32> to vector<64xf32>
    %299 = vector.shape_cast %298 : vector<64xf32> to vector<64x1xf32>
    %300 = vector.broadcast %299 : vector<64x1xf32> to vector<64x64xf32>
    %301 = arith.subf %297, %300 : vector<64x64xf32>
    %302 = math.exp %301 : vector<64x64xf32>
    %cst_121 = arith.constant dense<0.000000e+00> : vector<64xf32>
    %303 = vector.multi_reduction <add>, %302, %cst_121 [1] : vector<64x64xf32> to vector<64xf32>
    %304 = vector.shape_cast %303 : vector<64xf32> to vector<64x1xf32>
    %305 = tpu.reciprocal %304 {approx = true} : vector<64x1xf32> -> vector<64x1xf32>
    %306 = vector.broadcast %305 : vector<64x1xf32> to vector<64x64xf32>
    %307 = arith.mulf %302, %306 : vector<64x64xf32>
    %308 = arith.truncf %307 : vector<64x64xf32> to vector<64x64xbf16>
    %cst_122 = arith.constant dense<0.000000e+00> : vector<64x32xf32>
    %309 = tpu.matmul %308, %294, %cst_122 {dimension_numbers = #tpu.dot_dimension_numbers<[1], [0], [0], [1], [0, 0, 1, 1], [], []>} : vector<64x64xbf16>, vector<64x32xbf16>, vector<64x32xf32> -> vector<64x32xf32>
    %310 = arith.truncf %309 : vector<64x32xf32> to vector<64x32xbf16>
    %311 = vector.extract_strided_slice %224 {offsets = [96, 0], sizes = [32, 128], strides = [1, 1]} : vector<128x128xbf16> to vector<32x128xbf16>
    %cst_123 = arith.constant dense<0.000000e+00> : vector<64x128xf32>
    %312 = tpu.matmul %310, %311, %cst_123 {dimension_numbers = #tpu.dot_dimension_numbers<[1], [0], [0], [1], [0, 0, 1, 1], [], []>} : vector<64x32xbf16>, vector<32x128xbf16>, vector<64x128xf32> -> vector<64x128xf32>
    %313 = arith.addf %291, %312 : vector<64x128xf32>
    %c1_124 = arith.constant 1 : index
    %c0_125 = arith.constant 0 : index
    %c0_126 = arith.constant 0 : index
    %314 = vector.load %arg9[%c1_124, %c0_125, %c0_126] : memref<2x1x128xf32, #tpu.memory_space<vmem>>, vector<1x1x128xf32>
    %315 = vector.shape_cast %314 : vector<1x1x128xf32> to vector<1x128xf32>
    %316 = vector.broadcast %315 : vector<1x128xf32> to vector<64x128xf32>
    %317 = arith.addf %313, %316 : vector<64x128xf32>
    %318 = arith.extf %214 : vector<64x128xbf16> to vector<64x128xf32>
    %319 = arith.addf %318, %317 : vector<64x128xf32>
    %c1_127 = arith.constant 1 : index
    %c0_128 = arith.constant 0 : index
    %c0_129 = arith.constant 0 : index
    %320 = vector.load %arg10[%c1_127, %c0_128, %c0_129] : memref<2x1x128xf32, #tpu.memory_space<vmem>>, vector<1x1x128xf32>
    %321 = vector.shape_cast %320 : vector<1x1x128xf32> to vector<1x128xf32>
    %c1_130 = arith.constant 1 : index
    %c0_131 = arith.constant 0 : index
    %c0_132 = arith.constant 0 : index
    %322 = vector.load %arg11[%c1_130, %c0_131, %c0_132] : memref<2x1x128xf32, #tpu.memory_space<vmem>>, vector<1x1x128xf32>
    %323 = vector.shape_cast %322 : vector<1x1x128xf32> to vector<1x128xf32>
    %cst_133 = arith.constant dense<0.000000e+00> : vector<64xf32>
    %324 = vector.multi_reduction <add>, %319, %cst_133 [1] : vector<64x128xf32> to vector<64xf32>
    %325 = vector.shape_cast %324 : vector<64xf32> to vector<64x1xf32>
    %cst_134 = arith.constant 1.280000e+02 : f32
    %326 = vector.broadcast %cst_134 : f32 to vector<64x1xf32>
    %327 = arith.divf %325, %326 : vector<64x1xf32>
    %328 = vector.broadcast %327 : vector<64x1xf32> to vector<64x128xf32>
    %329 = arith.subf %319, %328 : vector<64x128xf32>
    %330 = arith.mulf %329, %329 : vector<64x128xf32>
    %cst_135 = arith.constant dense<0.000000e+00> : vector<64xf32>
    %331 = vector.multi_reduction <add>, %330, %cst_135 [1] : vector<64x128xf32> to vector<64xf32>
    %332 = vector.shape_cast %331 : vector<64xf32> to vector<64x1xf32>
    %cst_136 = arith.constant 1.280000e+02 : f32
    %333 = vector.broadcast %cst_136 : f32 to vector<64x1xf32>
    %334 = arith.divf %332, %333 : vector<64x1xf32>
    %335 = vector.broadcast %327 : vector<64x1xf32> to vector<64x128xf32>
    %336 = arith.subf %319, %335 : vector<64x128xf32>
    %cst_137 = arith.constant 9.99999974E-6 : f32
    %337 = vector.broadcast %cst_137 : f32 to vector<64x1xf32>
    %338 = arith.addf %334, %337 : vector<64x1xf32>
    %339 = math.rsqrt %338 : vector<64x1xf32>
    %340 = vector.broadcast %339 : vector<64x1xf32> to vector<64x128xf32>
    %341 = arith.mulf %336, %340 : vector<64x128xf32>
    %342 = vector.broadcast %321 : vector<1x128xf32> to vector<64x128xf32>
    %343 = arith.mulf %341, %342 : vector<64x128xf32>
    %344 = vector.broadcast %323 : vector<1x128xf32> to vector<64x128xf32>
    %345 = arith.addf %343, %344 : vector<64x128xf32>
    %346 = arith.truncf %345 : vector<64x128xf32> to vector<64x128xbf16>
    %c1_138 = arith.constant 1 : index
    %c0_139 = arith.constant 0 : index
    %c0_140 = arith.constant 0 : index
    %347 = vector.load %arg12[%c1_138, %c0_139, %c0_140] : memref<2x128x512xbf16, #tpu.memory_space<vmem>>, vector<1x128x512xbf16>
    %348 = vector.shape_cast %347 : vector<1x128x512xbf16> to vector<128x512xbf16>
    %cst_141 = arith.constant dense<0.000000e+00> : vector<64x512xf32>
    %349 = tpu.matmul %346, %348, %cst_141 {dimension_numbers = #tpu.dot_dimension_numbers<[1], [0], [0], [1], [0, 0, 1, 1], [], []>} : vector<64x128xbf16>, vector<128x512xbf16>, vector<64x512xf32> -> vector<64x512xf32>
    %c1_142 = arith.constant 1 : index
    %c0_143 = arith.constant 0 : index
    %c0_144 = arith.constant 0 : index
    %350 = vector.load %arg13[%c1_142, %c0_143, %c0_144] : memref<2x1x512xf32, #tpu.memory_space<vmem>>, vector<1x1x512xf32>
    %351 = vector.shape_cast %350 : vector<1x1x512xf32> to vector<1x512xf32>
    %352 = vector.broadcast %351 : vector<1x512xf32> to vector<64x512xf32>
    %353 = arith.addf %349, %352 : vector<64x512xf32>
    %cst_145 = arith.constant 0.000000e+00 : f32
    %354 = vector.broadcast %cst_145 : f32 to vector<64x512xf32>
    %355 = arith.maximumf %353, %354 : vector<64x512xf32>
    %356 = arith.truncf %355 : vector<64x512xf32> to vector<64x512xbf16>
    %c1_146 = arith.constant 1 : index
    %c0_147 = arith.constant 0 : index
    %c0_148 = arith.constant 0 : index
    %357 = vector.load %arg14[%c1_146, %c0_147, %c0_148] : memref<2x512x128xbf16, #tpu.memory_space<vmem>>, vector<1x512x128xbf16>
    %358 = vector.shape_cast %357 : vector<1x512x128xbf16> to vector<512x128xbf16>
    %cst_149 = arith.constant dense<0.000000e+00> : vector<64x128xf32>
    %359 = tpu.matmul %356, %358, %cst_149 {dimension_numbers = #tpu.dot_dimension_numbers<[1], [0], [0], [1], [0, 0, 1, 1], [], []>} : vector<64x512xbf16>, vector<512x128xbf16>, vector<64x128xf32> -> vector<64x128xf32>
    %c1_150 = arith.constant 1 : index
    %c0_151 = arith.constant 0 : index
    %c0_152 = arith.constant 0 : index
    %360 = vector.load %arg15[%c1_150, %c0_151, %c0_152] : memref<2x1x128xf32, #tpu.memory_space<vmem>>, vector<1x1x128xf32>
    %361 = vector.shape_cast %360 : vector<1x1x128xf32> to vector<1x128xf32>
    %362 = vector.broadcast %361 : vector<1x128xf32> to vector<64x128xf32>
    %363 = arith.addf %359, %362 : vector<64x128xf32>
    %364 = arith.addf %345, %363 : vector<64x128xf32>
    %c1_153 = arith.constant 1 : index
    %c0_154 = arith.constant 0 : index
    %c0_155 = arith.constant 0 : index
    %365 = vector.load %arg16[%c1_153, %c0_154, %c0_155] : memref<2x1x128xf32, #tpu.memory_space<vmem>>, vector<1x1x128xf32>
    %366 = vector.shape_cast %365 : vector<1x1x128xf32> to vector<1x128xf32>
    %c1_156 = arith.constant 1 : index
    %c0_157 = arith.constant 0 : index
    %c0_158 = arith.constant 0 : index
    %367 = vector.load %arg17[%c1_156, %c0_157, %c0_158] : memref<2x1x128xf32, #tpu.memory_space<vmem>>, vector<1x1x128xf32>
    %368 = vector.shape_cast %367 : vector<1x1x128xf32> to vector<1x128xf32>
    %cst_159 = arith.constant dense<0.000000e+00> : vector<64xf32>
    %369 = vector.multi_reduction <add>, %364, %cst_159 [1] : vector<64x128xf32> to vector<64xf32>
    %370 = vector.shape_cast %369 : vector<64xf32> to vector<64x1xf32>
    %cst_160 = arith.constant 1.280000e+02 : f32
    %371 = vector.broadcast %cst_160 : f32 to vector<64x1xf32>
    %372 = arith.divf %370, %371 : vector<64x1xf32>
    %373 = vector.broadcast %372 : vector<64x1xf32> to vector<64x128xf32>
    %374 = arith.subf %364, %373 : vector<64x128xf32>
    %375 = arith.mulf %374, %374 : vector<64x128xf32>
    %cst_161 = arith.constant dense<0.000000e+00> : vector<64xf32>
    %376 = vector.multi_reduction <add>, %375, %cst_161 [1] : vector<64x128xf32> to vector<64xf32>
    %377 = vector.shape_cast %376 : vector<64xf32> to vector<64x1xf32>
    %cst_162 = arith.constant 1.280000e+02 : f32
    %378 = vector.broadcast %cst_162 : f32 to vector<64x1xf32>
    %379 = arith.divf %377, %378 : vector<64x1xf32>
    %380 = vector.broadcast %372 : vector<64x1xf32> to vector<64x128xf32>
    %381 = arith.subf %364, %380 : vector<64x128xf32>
    %cst_163 = arith.constant 9.99999974E-6 : f32
    %382 = vector.broadcast %cst_163 : f32 to vector<64x1xf32>
    %383 = arith.addf %379, %382 : vector<64x1xf32>
    %384 = math.rsqrt %383 : vector<64x1xf32>
    %385 = vector.broadcast %384 : vector<64x1xf32> to vector<64x128xf32>
    %386 = arith.mulf %381, %385 : vector<64x128xf32>
    %387 = vector.broadcast %366 : vector<1x128xf32> to vector<64x128xf32>
    %388 = arith.mulf %386, %387 : vector<64x128xf32>
    %389 = vector.broadcast %368 : vector<1x128xf32> to vector<64x128xf32>
    %390 = arith.addf %388, %389 : vector<64x128xf32>
    %391 = arith.truncf %390 : vector<64x128xf32> to vector<64x128xbf16>
    %c0_164 = arith.constant 0 : index
    %c0_165 = arith.constant 0 : index
    %392 = vector.load %arg18[%c0_164, %c0_165] : memref<128x128xbf16, #tpu.memory_space<vmem>>, vector<128x128xbf16>
    %cst_166 = arith.constant dense<0.000000e+00> : vector<64x128xf32>
    %393 = tpu.matmul %391, %392, %cst_166 {dimension_numbers = #tpu.dot_dimension_numbers<[1], [0], [0], [1], [0, 0, 1, 1], [], []>} : vector<64x128xbf16>, vector<128x128xbf16>, vector<64x128xf32> -> vector<64x128xf32>
    %c0_167 = arith.constant 0 : index
    %c0_168 = arith.constant 0 : index
    %394 = vector.load %arg19[%c0_167, %c0_168] : memref<1x128xf32, #tpu.memory_space<vmem>>, vector<1x128xf32>
    %395 = vector.broadcast %394 : vector<1x128xf32> to vector<64x128xf32>
    %396 = arith.addf %393, %395 : vector<64x128xf32>
    %c0_169 = arith.constant 0 : index
    %c0_170 = arith.constant 0 : index
    %c0_171 = arith.constant 0 : index
    %397 = vector.load %arg20[%c0_169, %c0_170, %c0_171] : memref<1x64x128xf32, #tpu.memory_space<vmem>>, vector<1x64x128xf32>
    %398 = vector.shape_cast %397 : vector<1x64x128xf32> to vector<64x128xf32>
    %399 = vector.shape_cast %396 : vector<64x128xf32> to vector<1x64x128xf32>
    tpu.vector_store %arg20[%c0_169, %c0_170, %c0_171], %399 {strides = array<i32>} : memref<1x64x128xf32, #tpu.memory_space<vmem>>, vector<1x64x128xf32>,
    return
  }
  func.func @transform_0(%arg0: i32) -> (i32, i32, i32) {
    %c0_i32 = arith.constant 0 : i32
    %c0_i32_0 = arith.constant 0 : i32
    %c0_i32_1 = arith.constant 0 : i32
    return %arg0, %c0_i32, %c0_i32_0 : i32, i32, i32
  }
  func.func @transform_1(%arg0: i32) -> (i32, i32) {
    %c0_i32 = arith.constant 0 : i32
    %c0_i32_0 = arith.constant 0 : i32
    %c0_i32_1 = arith.constant 0 : i32
    return %c0_i32, %c0_i32_0 : i32, i32
  }
  func.func @transform_2(%arg0: i32) -> (i32, i32) {
    %c0_i32 = arith.constant 0 : i32
    %c0_i32_0 = arith.constant 0 : i32
    %c0_i32_1 = arith.constant 0 : i32
    return %c0_i32, %c0_i32_0 : i32, i32
  }
  func.func @transform_3(%arg0: i32) -> (i32, i32) {
    %c0_i32 = arith.constant 0 : i32
    %c0_i32_0 = arith.constant 0 : i32
    %c0_i32_1 = arith.constant 0 : i32
    return %c0_i32, %c0_i32_0 : i32, i32
  }
  func.func @transform_4(%arg0: i32) -> (i32, i32) {
    %c0_i32 = arith.constant 0 : i32
    %c0_i32_0 = arith.constant 0 : i32
    %c0_i32_1 = arith.constant 0 : i32
    return %c0_i32, %c0_i32_0 : i32, i32
  }
  func.func @transform_5(%arg0: i32) -> (i32, i32, i32) {
    %c0_i32 = arith.constant 0 : i32
    %c0_i32_0 = arith.constant 0 : i32
    %c0_i32_1 = arith.constant 0 : i32
    %c0_i32_2 = arith.constant 0 : i32
    return %c0_i32, %c0_i32_0, %c0_i32_1 : i32, i32, i32
  }
  func.func @transform_6(%arg0: i32) -> (i32, i32, i32) {
    %c0_i32 = arith.constant 0 : i32
    %c0_i32_0 = arith.constant 0 : i32
    %c0_i32_1 = arith.constant 0 : i32
    %c0_i32_2 = arith.constant 0 : i32
    return %c0_i32, %c0_i32_0, %c0_i32_1 : i32, i32, i32
  }
  func.func @transform_7(%arg0: i32) -> (i32, i32, i32) {
    %c0_i32 = arith.constant 0 : i32
    %c0_i32_0 = arith.constant 0 : i32
    %c0_i32_1 = arith.constant 0 : i32
    %c0_i32_2 = arith.constant 0 : i32
    return %c0_i32, %c0_i32_0, %c0_i32_1 : i32, i32, i32
  }
  func.func @transform_8(%arg0: i32) -> (i32, i32, i32) {
    %c0_i32 = arith.constant 0 : i32
    %c0_i32_0 = arith.constant 0 : i32
    %c0_i32_1 = arith.constant 0 : i32
    %c0_i32_2 = arith.constant 0 : i32
    return %c0_i32, %c0_i32_0, %c0_i32_1 : i32, i32, i32
  }
  func.func @transform_9(%arg0: i32) -> (i32, i32, i32) {
    %c0_i32 = arith.constant 0 : i32
    %c0_i32_0 = arith.constant 0 : i32
    %c0_i32_1 = arith.constant 0 : i32
    %c0_i32_2 = arith.constant 0 : i32
    return %c0_i32, %c0_i32_0, %c0_i32_1 : i32, i32, i32
  }
  func.func @transform_10(%arg0: i32) -> (i32, i32, i32) {
    %c0_i32 = arith.constant 0 : i32
    %c0_i32_0 = arith.constant 0 : i32
    %c0_i32_1 = arith.constant 0 : i32
    %c0_i32_2 = arith.constant 0 : i32
    return %c0_i32, %c0_i32_0, %c0_i32_1 : i32, i32, i32
  }
  func.func @transform_11(%arg0: i32) -> (i32, i32, i32) {
    %c0_i32 = arith.constant 0 : i32
    %c0_i32_0 = arith.constant 0 : i32
    %c0_i32_1 = arith.constant 0 : i32
    %c0_i32_2 = arith.constant 0 : i32
    return %c0_i32, %c0_i32_0, %c0_i32_1 : i32, i32, i32
  }
  func.func @transform_12(%arg0: i32) -> (i32, i32, i32) {
    %c0_i32 = arith.constant 0 : i32
    %c0_i32_0 = arith.constant 0 : i32
    %c0_i32_1 = arith.constant 0 : i32
    %c0_i32_2 = arith.constant 0 : i32
    return %c0_i32, %c0_i32_0, %c0_i32_1 : i32, i32, i32
  }
  func.func @transform_13(%arg0: i32) -> (i32, i32, i32) {
    %c0_i32 = arith.constant 0 : i32
    %c0_i32_0 = arith.constant 0 : i32
    %c0_i32_1 = arith.constant 0 : i32
    %c0_i32_2 = arith.constant 0 : i32
    return %c0_i32, %c0_i32_0, %c0_i32_1 : i32, i32, i32
  }
  func.func @transform_14(%arg0: i32) -> (i32, i32, i32) {
    %c0_i32 = arith.constant 0 : i32
    %c0_i32_0 = arith.constant 0 : i32
    %c0_i32_1 = arith.constant 0 : i32
    %c0_i32_2 = arith.constant 0 : i32
    return %c0_i32, %c0_i32_0, %c0_i32_1 : i32, i32, i32
  }
  func.func @transform_15(%arg0: i32) -> (i32, i32, i32) {
    %c0_i32 = arith.constant 0 : i32
    %c0_i32_0 = arith.constant 0 : i32
    %c0_i32_1 = arith.constant 0 : i32
    %c0_i32_2 = arith.constant 0 : i32
    return %c0_i32, %c0_i32_0, %c0_i32_1 : i32, i32, i32
  }
  func.func @transform_16(%arg0: i32) -> (i32, i32, i32) {
    %c0_i32 = arith.constant 0 : i32
    %c0_i32_0 = arith.constant 0 : i32
    %c0_i32_1 = arith.constant 0 : i32
    %c0_i32_2 = arith.constant 0 : i32
    return %c0_i32, %c0_i32_0, %c0_i32_1 : i32, i32, i32
  }
  func.func @transform_17(%arg0: i32) -> (i32, i32) {
    %c0_i32 = arith.constant 0 : i32
    %c0_i32_0 = arith.constant 0 : i32
    %c0_i32_1 = arith.constant 0 : i32
    return %c0_i32, %c0_i32_0 : i32, i32
  }
  func.func @transform_18(%arg0: i32) -> (i32, i32) {
    %c0_i32 = arith.constant 0 : i32
    %c0_i32_0 = arith.constant 0 : i32
    %c0_i32_1 = arith.constant 0 : i32
    return %c0_i32, %c0_i32_0 : i32, i32
  }
  func.func @transform_19(%arg0: i32) -> (i32, i32, i32) {
    %c0_i32 = arith.constant 0 : i32
    %c0_i32_0 = arith.constant 0 : i32
    %c0_i32_1 = arith.constant 0 : i32
    return %arg0, %c0_i32, %c0_i32_0 : i32, i32, i32
  }
}

</mosaic_0001>

<llo_original>
// kernel: _lambda_.1
$region0: #{_lambda_.1}
  #allocation0 [shape = 'u32[]', space=smem, size = 0x4, offset = 0x4, fixed_abs, tag = 'smem constant byte address 0x4 - core index']
  #allocation1 [shape = 'u32[144,128]{1,0:T(1,128)}', space=vmem, size = 0x12000, scoped, tag = 'internal scratch']
  %s0 = inlined_call_operand.vmem [shape: s32[2,64,1], index: 0, kind: input, shape index: {}]
  %s1 = inlined_call_operand.vmem [shape: bf16[128,128], index: 1, kind: input, shape index: {}]
  %s2 = inlined_call_operand.vmem [shape: bf16[64,128], index: 2, kind: input, shape index: {}]
  %s3 = inlined_call_operand.vmem [shape: f32[1,128], index: 3, kind: input, shape index: {}]
  %s4 = inlined_call_operand.vmem [shape: f32[1,128], index: 4, kind: input, shape index: {}, may-alias: {4,18}]
  %s5 = inlined_call_operand.vmem [shape: bf16[2,128,384], index: 5, kind: input, shape index: {}]
  %s6 = inlined_call_operand.vmem [shape: f32[2,1,384], index: 6, kind: input, shape index: {}]
  %s7 = inlined_call_operand.vmem [shape: bf16[2,128,128], index: 7, kind: input, shape index: {}]
  %s8 = inlined_call_operand.vmem [shape: f32[2,1,128], index: 8, kind: input, shape index: {}, may-alias: {8,10,14,16}]
  %s9 = inlined_call_operand.vmem [shape: f32[2,1,128], index: 9, kind: input, shape index: {}, may-alias: {9,15}]
  %s10 = inlined_call_operand.vmem [shape: f32[2,1,128], index: 10, kind: input, shape index: {}, may-alias: {8,10,14,16}]
  %s11 = inlined_call_operand.vmem [shape: bf16[2,128,512], index: 11, kind: input, shape index: {}]
  %s12 = inlined_call_operand.vmem [shape: f32[2,1,512], index: 12, kind: input, shape index: {}]
  %s13 = inlined_call_operand.vmem [shape: bf16[2,512,128], index: 13, kind: input, shape index: {}]
  %s14 = inlined_call_operand.vmem [shape: f32[2,1,128], index: 14, kind: input, shape index: {}, may-alias: {8,10,14,16}]
  %s15 = inlined_call_operand.vmem [shape: f32[2,1,128], index: 15, kind: input, shape index: {}, may-alias: {9,15}]
  %s16 = inlined_call_operand.vmem [shape: f32[2,1,128], index: 16, kind: input, shape index: {}, may-alias: {8,10,14,16}]
  %s17 = inlined_call_operand.vmem [shape: bf16[128,128], index: 17, kind: input, shape index: {}]
  %s18 = inlined_call_operand.vmem [shape: f32[1,128], index: 18, kind: input, shape index: {}, may-alias: {4,18}]
  %s19 = inlined_call_operand.vmem [shape: f32[2,64,128], index: 19, kind: output, shape index: {}]
  %s20 = sld [smem:[#allocation0]]
  $region109: #{_lambda_.1} parent=0
    _
  %s22 = ssub.s32 1, %s20
  %s23 = scalar_select 0, %s22, %s20
  loop: start=0, step=1, limit=4
  $region2: #{_lambda_.1} parent=0 // loop_pre_header
    _
  $region3: #{_lambda_.1} parent=0 // loop_header
    %s25 = sphi 0, %s29
    %p26 = scmp.ge.s32.totalorder %s25, 4
    %s35 = sphi 0, %s37
    %s38 = sphi 0, %s35
    %s39 = sphi 0, %s38
    %s55 = sphi 0, %s39
    %s59 = sphi 0, %s59
    %s61 = sphi 0, %s59
    %s62 = sphi 0, %s61
    %s76 = sphi 0, %s62
    %s80 = sphi 0, %s80
    %s82 = sphi 0, %s80
    %s83 = sphi 0, %s82
    %s97 = sphi 0, %s83
    %s101 = sphi 0, %s101
    %s103 = sphi 0, %s101
    %s104 = sphi 0, %s103
    %s118 = sphi 0, %s104
    %s122 = sphi 0, %s122
    %s124 = sphi 0, %s122
    %s125 = sphi 0, %s124
    %s139 = sphi 0, %s125
    %s143 = sphi 0, %s143
    %s145 = sphi 0, %s143
    %s146 = sphi 0, %s145
    %s160 = sphi 0, %s146
    %s164 = sphi 0, %s164
    %s166 = sphi 0, %s164
    %s167 = sphi 0, %s166
    %s181 = sphi 0, %s167
    %s185 = sphi 0, %s185
    %s187 = sphi 0, %s185
    %s188 = sphi 0, %s187
    %s202 = sphi 0, %s188
    %s206 = sphi 0, %s206
    %s208 = sphi 0, %s206
    %s209 = sphi 0, %s208
    %s223 = sphi 0, %s209
    %s227 = sphi 0, %s227
    %s229 = sphi 0, %s227
    %s230 = sphi 0, %s229
    %s244 = sphi 0, %s230
    %s248 = sphi 0, %s248
    %s250 = sphi 0, %s248
    %s251 = sphi 0, %s250
    %s265 = sphi 0, %s251
    %s269 = sphi 0, %s269
    %s271 = sphi 0, %s269
    %s272 = sphi 0, %s271
    %s286 = sphi 0, %s272
    %s290 = sphi 0, %s290
    %s292 = sphi 0, %s290
    %s293 = sphi 0, %s292
    %s307 = sphi 0, %s293
    %s311 = sphi 0, %s311
    %s313 = sphi 0, %s311
    %s314 = sphi 0, %s313
    %s328 = sphi 0, %s314
    %s332 = sphi 0, %s332
    %s334 = sphi 0, %s332
    %s335 = sphi 0, %s334
    %s349 = sphi 0, %s335
    %s353 = sphi 0, %s353
    %s355 = sphi 0, %s353
    %s356 = sphi 0, %s355
    %s370 = sphi 0, %s356
    %s374 = sphi 0, %s374
    %s376 = sphi 0, %s374
    %s377 = sphi 0, %s376
    %s391 = sphi 0, %s377
    %s395 = sphi 0, %s395
    %s397 = sphi 0, %s395
    %s398 = sphi 0, %s397
    %s412 = sphi 0, %s398
    %s416 = sphi 0, %s416
    %s418 = sphi 0, %s416
    %s419 = sphi 0, %s418
    %s433 = sphi 0, %s419
    %s439 = sphi 0, %s441
    %s442 = sphi 0, %s439
    %s443 = sphi 0, %s442
    %s459 = sphi 0, %s443
  $region4: #{_lambda_.1} parent=0 // loop_header_branch
    %28 = sbr.rel (%p26) target = $region8
  $region5: #{_lambda_.1} parent=0 // loop_body
    %s30 = ssub.s32 %s25, 1
    %s31 = ssub.s32 %s25, 2
    %s32 = sadd.s32 %s25, 1
    %s33 = ssub.s32 %s25, %s32
    %p34 = scmp.eq.s32.totalorder %s33, 0
    %s36 = sadd.s32 %s35, 1
    %s37 = scalar_select %p34, %s35, %s36
    %p40 = pneg %p34
    %p41 = scmp.eq.s32.totalorder %s25, 1
    %p42 = por %p40, %p41
    %p43 = scmp.ne.s32.totalorder %s35, %s38
    %p44 = scmp.eq.s32.totalorder %s25, 0
    %p45 = por %p43, %p44
    %p46 = scmp.ne.s32.totalorder %s35, %s38
    %p47 = scmp.eq.s32.totalorder %s30, 1
    %p48 = por %p46, %p47
    %p49 = scmp.ne.s32.totalorder %s38, %s39
    %p50 = scmp.eq.s32.totalorder %s30, 0
    %p51 = por %p49, %p50
    %p52 = scmp.ne.s32.totalorder %s38, %s39
    %p53 = scmp.eq.s32.totalorder %s31, 1
    %p54 = por %p52, %p53
    %p56 = scmp.ne.s32.totalorder %s39, %s55
    %p57 = scmp.eq.s32.totalorder %s31, 0
    %p58 = por %p56, %p57
    %s60 = sadd.s32 %s59, 1
    %p63 = scmp.eq.s32.totalorder %s25, 1
    %p64 = scmp.ne.s32.totalorder %s59, %s61
    %p65 = scmp.eq.s32.totalorder %s25, 0
    %p66 = por %p64, %p65
    %p67 = scmp.ne.s32.totalorder %s59, %s61
    %p68 = scmp.eq.s32.totalorder %s30, 1
    %p69 = por %p67, %p68
    %p70 = scmp.ne.s32.totalorder %s61, %s62
    %p71 = scmp.eq.s32.totalorder %s30, 0
    %p72 = por %p70, %p71
    %p73 = scmp.ne.s32.totalorder %s61, %s62
    %p74 = scmp.eq.s32.totalorder %s31, 1
    %p75 = por %p73, %p74
    %p77 = scmp.ne.s32.totalorder %s62, %s76
    %p78 = scmp.eq.s32.totalorder %s31, 0
    %p79 = por %p77, %p78
    %s81 = sadd.s32 %s80, 1
    %p84 = scmp.eq.s32.totalorder %s25, 1
    %p85 = scmp.ne.s32.totalorder %s80, %s82
    %p86 = scmp.eq.s32.totalorder %s25, 0
    %p87 = por %p85, %p86
    %p88 = scmp.ne.s32.totalorder %s80, %s82
    %p89 = scmp.eq.s32.totalorder %s30, 1
    %p90 = por %p88, %p89
    %p91 = scmp.ne.s32.totalorder %s82, %s83
    %p92 = scmp.eq.s32.totalorder %s30, 0
    %p93 = por %p91, %p92
    %p94 = scmp.ne.s32.totalorder %s82, %s83
    %p95 = scmp.eq.s32.totalorder %s31, 1
    %p96 = por %p94, %p95
    %p98 = scmp.ne.s32.totalorder %s83, %s97
    %p99 = scmp.eq.s32.totalorder %s31, 0
    %p100 = por %p98, %p99
    %s102 = sadd.s32 %s101, 1
    %p105 = scmp.eq.s32.totalorder %s25, 1
    %p106 = scmp.ne.s32.totalorder %s101, %s103
    %p107 = scmp.eq.s32.totalorder %s25, 0
    %p108 = por %p106, %p107
    %p109 = scmp.ne.s32.totalorder %s101, %s103
    %p110 = scmp.eq.s32.totalorder %s30, 1
    %p111 = por %p109, %p110
    %p112 = scmp.ne.s32.totalorder %s103, %s104
    %p113 = scmp.eq.s32.totalorder %s30, 0
    %p114 = por %p112, %p113
    %p115 = scmp.ne.s32.totalorder %s103, %s104
    %p116 = scmp.eq.s32.totalorder %s31, 1
    %p117 = por %p115, %p116
    %p119 = scmp.ne.s32.totalorder %s104, %s118
    %p120 = scmp.eq.s32.totalorder %s31, 0
    %p121 = por %p119, %p120
    %s123 = sadd.s32 %s122, 1
    %p126 = scmp.eq.s32.totalorder %s25, 1
    %p127 = scmp.ne.s32.totalorder %s122, %s124
    %p128 = scmp.eq.s32.totalorder %s25, 0
    %p129 = por %p127, %p128
    %p130 = scmp.ne.s32.totalorder %s122, %s124
    %p131 = scmp.eq.s32.totalorder %s30, 1
    %p132 = por %p130, %p131
    %p133 = scmp.ne.s32.totalorder %s124, %s125
    %p134 = scmp.eq.s32.totalorder %s30, 0
    %p135 = por %p133, %p134
    %p136 = scmp.ne.s32.totalorder %s124, %s125
    %p137 = scmp.eq.s32.totalorder %s31, 1
    %p138 = por %p136, %p137
    %p140 = scmp.ne.s32.totalorder %s125, %s139
    %p141 = scmp.eq.s32.totalorder %s31, 0
    %p142 = por %p140, %p141
    %s144 = sadd.s32 %s143, 1
    %p147 = scmp.eq.s32.totalorder %s25, 1
    %p148 = scmp.ne.s32.totalorder %s143, %s145
    %p149 = scmp.eq.s32.totalorder %s25, 0
    %p150 = por %p148, %p149
    %p151 = scmp.ne.s32.totalorder %s143, %s145
    %p152 = scmp.eq.s32.totalorder %s30, 1
    %p153 = por %p151, %p152
    %p154 = scmp.ne.s32.totalorder %s145, %s146
    %p155 = scmp.eq.s32.totalorder %s30, 0
    %p156 = por %p154, %p155
    %p157 = scmp.ne.s32.totalorder %s145, %s146
    %p158 = scmp.eq.s32.totalorder %s31, 1
    %p159 = por %p157, %p158
    %p161 = scmp.ne.s32.totalorder %s146, %s160
    %p162 = scmp.eq.s32.totalorder %s31, 0
    %p163 = por %p161, %p162
    %s165 = sadd.s32 %s164, 1
    %p168 = scmp.eq.s32.totalorder %s25, 1
    %p169 = scmp.ne.s32.totalorder %s164, %s166
    %p170 = scmp.eq.s32.totalorder %s25, 0
    %p171 = por %p169, %p170
    %p172 = scmp.ne.s32.totalorder %s164, %s166
    %p173 = scmp.eq.s32.totalorder %s30, 1
    %p174 = por %p172, %p173
    %p175 = scmp.ne.s32.totalorder %s166, %s167
    %p176 = scmp.eq.s32.totalorder %s30, 0
    %p177 = por %p175, %p176
    %p178 = scmp.ne.s32.totalorder %s166, %s167
    %p179 = scmp.eq.s32.totalorder %s31, 1
    %p180 = por %p178, %p179
    %p182 = scmp.ne.s32.totalorder %s167, %s181
    %p183 = scmp.eq.s32.totalorder %s31, 0
    %p184 = por %p182, %p183
    %s186 = sadd.s32 %s185, 1
    %p189 = scmp.eq.s32.totalorder %s25, 1
    %p190 = scmp.ne.s32.totalorder %s185, %s187
    %p191 = scmp.eq.s32.totalorder %s25, 0
    %p192 = por %p190, %p191
    %p193 = scmp.ne.s32.totalorder %s185, %s187
    %p194 = scmp.eq.s32.totalorder %s30, 1
    %p195 = por %p193, %p194
    %p196 = scmp.ne.s32.totalorder %s187, %s188
    %p197 = scmp.eq.s32.totalorder %s30, 0
    %p198 = por %p196, %p197
    %p199 = scmp.ne.s32.totalorder %s187, %s188
    %p200 = scmp.eq.s32.totalorder %s31, 1
    %p201 = por %p199, %p200
    %p203 = scmp.ne.s32.totalorder %s188, %s202
    %p204 = scmp.eq.s32.totalorder %s31, 0
    %p205 = por %p203, %p204
    %s207 = sadd.s32 %s206, 1
    %p210 = scmp.eq.s32.totalorder %s25, 1
    %p211 = scmp.ne.s32.totalorder %s206, %s208
    %p212 = scmp.eq.s32.totalorder %s25, 0
    %p213 = por %p211, %p212
    %p214 = scmp.ne.s32.totalorder %s206, %s208
    %p215 = scmp.eq.s32.totalorder %s30, 1
    %p216 = por %p214, %p215
    %p217 = scmp.ne.s32.totalorder %s208, %s209
    %p218 = scmp.eq.s32.totalorder %s30, 0
    %p219 = por %p217, %p218
    %p220 = scmp.ne.s32.totalorder %s208, %s209
    %p221 = scmp.eq.s32.totalorder %s31, 1
    %p222 = por %p220, %p221
    %p224 = scmp.ne.s32.totalorder %s209, %s223
    %p225 = scmp.eq.s32.totalorder %s31, 0
    %p226 = por %p224, %p225
    %s228 = sadd.s32 %s227, 1
    %p231 = scmp.eq.s32.totalorder %s25, 1
    %p232 = scmp.ne.s32.totalorder %s227, %s229
    %p233 = scmp.eq.s32.totalorder %s25, 0
    %p234 = por %p232, %p233
    %p235 = scmp.ne.s32.totalorder %s227, %s229
    %p236 = scmp.eq.s32.totalorder %s30, 1
    %p237 = por %p235, %p236
    %p238 = scmp.ne.s32.totalorder %s229, %s230
    %p239 = scmp.eq.s32.totalorder %s30, 0
    %p240 = por %p238, %p239
    %p241 = scmp.ne.s32.totalorder %s229, %s230
    %p242 = scmp.eq.s32.totalorder %s31, 1
    %p243 = por %p241, %p242
    %p245 = scmp.ne.s32.totalorder %s230, %s244
    %p246 = scmp.eq.s32.totalorder %s31, 0
    %p247 = por %p245, %p246
    %s249 = sadd.s32 %s248, 1
    %p252 = scmp.eq.s32.totalorder %s25, 1
    %p253 = scmp.ne.s32.totalorder %s248, %s250
    %p254 = scmp.eq.s32.totalorder %s25, 0
    %p255 = por %p253, %p254
    %p256 = scmp.ne.s32.totalorder %s248, %s250
    %p257 = scmp.eq.s32.totalorder %s30, 1
    %p258 = por %p256, %p257
    %p259 = scmp.ne.s32.totalorder %s250, %s251
    %p260 = scmp.eq.s32.totalorder %s30, 0
    %p261 = por %p259, %p260
    %p262 = scmp.ne.s32.totalorder %s250, %s251
    %p263 = scmp.eq.s32.totalorder %s31, 1
    %p264 = por %p262, %p263
    %p266 = scmp.ne.s32.totalorder %s251, %s265
    %p267 = scmp.eq.s32.totalorder %s31, 0
    %p268 = por %p266, %p267
    %s270 = sadd.s32 %s269, 1
    %p273 = scmp.eq.s32.totalorder %s25, 1
    %p274 = scmp.ne.s32.totalorder %s269, %s271
    %p275 = scmp.eq.s32.totalorder %s25, 0
    %p276 = por %p274, %p275
    %p277 = scmp.ne.s32.totalorder %s269, %s271
    %p278 = scmp.eq.s32.totalorder %s30, 1
    %p279 = por %p277, %p278
    %p280 = scmp.ne.s32.totalorder %s271, %s272
    %p281 = scmp.eq.s32.totalorder %s30, 0
    %p282 = por %p280, %p281
    %p283 = scmp.ne.s32.totalorder %s271, %s272
    %p284 = scmp.eq.s32.totalorder %s31, 1
    %p285 = por %p283, %p284
    %p287 = scmp.ne.s32.totalorder %s272, %s286
    %p288 = scmp.eq.s32.totalorder %s31, 0
    %p289 = por %p287, %p288
    %s291 = sadd.s32 %s290, 1
    %p294 = scmp.eq.s32.totalorder %s25, 1
    %p295 = scmp.ne.s32.totalorder %s290, %s292
    %p296 = scmp.eq.s32.totalorder %s25, 0
    %p297 = por %p295, %p296
    %p298 = scmp.ne.s32.totalorder %s290, %s292
    %p299 = scmp.eq.s32.totalorder %s30, 1
    %p300 = por %p298, %p299
    %p301 = scmp.ne.s32.totalorder %s292, %s293
    %p302 = scmp.eq.s32.totalorder %s30, 0
    %p303 = por %p301, %p302
    %p304 = scmp.ne.s32.totalorder %s292, %s293
    %p305 = scmp.eq.s32.totalorder %s31, 1
    %p306 = por %p304, %p305
    %p308 = scmp.ne.s32.totalorder %s293, %s307
    %p309 = scmp.eq.s32.totalorder %s31, 0
    %p310 = por %p308, %p309
    %s312 = sadd.s32 %s311, 1
    %p315 = scmp.eq.s32.totalorder %s25, 1
    %p316 = scmp.ne.s32.totalorder %s311, %s313
    %p317 = scmp.eq.s32.totalorder %s25, 0
    %p318 = por %p316, %p317
    %p319 = scmp.ne.s32.totalorder %s311, %s313
    %p320 = scmp.eq.s32.totalorder %s30, 1
    %p321 = por %p319, %p320
    %p322 = scmp.ne.s32.totalorder %s313, %s314
    %p323 = scmp.eq.s32.totalorder %s30, 0
    %p324 = por %p322, %p323
    %p325 = scmp.ne.s32.totalorder %s313, %s314
    %p326 = scmp.eq.s32.totalorder %s31, 1
    %p327 = por %p325, %p326
    %p329 = scmp.ne.s32.totalorder %s314, %s328
    %p330 = scmp.eq.s32.totalorder %s31, 0
    %p331 = por %p329, %p330
    %s333 = sadd.s32 %s332, 1
    %p336 = scmp.eq.s32.totalorder %s25, 1
    %p337 = scmp.ne.s32.totalorder %s332, %s334
    %p338 = scmp.eq.s32.totalorder %s25, 0
    %p339 = por %p337, %p338
    %p340 = scmp.ne.s32.totalorder %s332, %s334
    %p341 = scmp.eq.s32.totalorder %s30, 1
    %p342 = por %p340, %p341
    %p343 = scmp.ne.s32.totalorder %s334, %s335
    %p344 = scmp.eq.s32.totalorder %s30, 0
    %p345 = por %p343, %p344
    %p346 = scmp.ne.s32.totalorder %s334, %s335
    %p347 = scmp.eq.s32.totalorder %s31, 1
    %p348 = por %p346, %p347
    %p350 = scmp.ne.s32.totalorder %s335, %s349
    %p351 = scmp.eq.s32.totalorder %s31, 0
    %p352 = por %p350, %p351
    %s354 = sadd.s32 %s353, 1
    %p357 = scmp.eq.s32.totalorder %s25, 1
    %p358 = scmp.ne.s32.totalorder %s353, %s355
    %p359 = scmp.eq.s32.totalorder %s25, 0
    %p360 = por %p358, %p359
    %p361 = scmp.ne.s32.totalorder %s353, %s355
    %p362 = scmp.eq.s32.totalorder %s30, 1
    %p363 = por %p361, %p362
    %p364 = scmp.ne.s32.totalorder %s355, %s356
    %p365 = scmp.eq.s32.totalorder %s30, 0
    %p366 = por %p364, %p365
    %p367 = scmp.ne.s32.totalorder %s355, %s356
    %p368 = scmp.eq.s32.totalorder %s31, 1
    %p369 = por %p367, %p368
    %p371 = scmp.ne.s32.totalorder %s356, %s370
    %p372 = scmp.eq.s32.totalorder %s31, 0
    %p373 = por %p371, %p372
    %s375 = sadd.s32 %s374, 1
    %p378 = scmp.eq.s32.totalorder %s25, 1
    %p379 = scmp.ne.s32.totalorder %s374, %s376
    %p380 = scmp.eq.s32.totalorder %s25, 0
    %p381 = por %p379, %p380
    %p382 = scmp.ne.s32.totalorder %s374, %s376
    %p383 = scmp.eq.s32.totalorder %s30, 1
    %p384 = por %p382, %p383
    %p385 = scmp.ne.s32.totalorder %s376, %s377
    %p386 = scmp.eq.s32.totalorder %s30, 0
    %p387 = por %p385, %p386
    %p388 = scmp.ne.s32.totalorder %s376, %s377
    %p389 = scmp.eq.s32.totalorder %s31, 1
    %p390 = por %p388, %p389
    %p392 = scmp.ne.s32.totalorder %s377, %s391
    %p393 = scmp.eq.s32.totalorder %s31, 0
    %p394 = por %p392, %p393
    %s396 = sadd.s32 %s395, 1
    %p399 = scmp.eq.s32.totalorder %s25, 1
    %p400 = scmp.ne.s32.totalorder %s395, %s397
    %p401 = scmp.eq.s32.totalorder %s25, 0
    %p402 = por %p400, %p401
    %p403 = scmp.ne.s32.totalorder %s395, %s397
    %p404 = scmp.eq.s32.totalorder %s30, 1
    %p405 = por %p403, %p404
    %p406 = scmp.ne.s32.totalorder %s397, %s398
    %p407 = scmp.eq.s32.totalorder %s30, 0
    %p408 = por %p406, %p407
    %p409 = scmp.ne.s32.totalorder %s397, %s398
    %p410 = scmp.eq.s32.totalorder %s31, 1
    %p411 = por %p409, %p410
    %p413 = scmp.ne.s32.totalorder %s398, %s412
    %p414 = scmp.eq.s32.totalorder %s31, 0
    %p415 = por %p413, %p414
    %s417 = sadd.s32 %s416, 1
    %p420 = scmp.eq.s32.totalorder %s25, 1
    %p421 = scmp.ne.s32.totalorder %s416, %s418
    %p422 = scmp.eq.s32.totalorder %s25, 0
    %p423 = por %p421, %p422
    %p424 = scmp.ne.s32.totalorder %s416, %s418
    %p425 = scmp.eq.s32.totalorder %s30, 1
    %p426 = por %p424, %p425
    %p427 = scmp.ne.s32.totalorder %s418, %s419
    %p428 = scmp.eq.s32.totalorder %s30, 0
    %p429 = por %p427, %p428
    %p430 = scmp.ne.s32.totalorder %s418, %s419
    %p431 = scmp.eq.s32.totalorder %s31, 1
    %p432 = por %p430, %p431
    %p434 = scmp.ne.s32.totalorder %s419, %s433
    %p435 = scmp.eq.s32.totalorder %s31, 0
    %p436 = por %p434, %p435
    %s437 = ssub.s32 %s25, %s32
    %p438 = scmp.eq.s32.totalorder %s437, 0
    %s440 = sadd.s32 %s439, 1
    %s441 = scalar_select %p438, %s439, %s440
    %p444 = pneg %p438
    %p445 = scmp.eq.s32.totalorder %s25, 1
    %p446 = por %p444, %p445
    %p447 = scmp.ne.s32.totalorder %s439, %s442
    %p448 = scmp.eq.s32.totalorder %s25, 0
    %p449 = por %p447, %p448
    %p450 = scmp.ne.s32.totalorder %s439, %s442
    %p451 = scmp.eq.s32.totalorder %s30, 1
    %p452 = por %p450, %p451
    %p453 = scmp.ne.s32.totalorder %s442, %s443
    %p454 = scmp.eq.s32.totalorder %s30, 0
    %p455 = por %p453, %p454
    %p456 = scmp.ne.s32.totalorder %s442, %s443
    %p457 = scmp.eq.s32.totalorder %s31, 1
    %p458 = por %p456, %p457
    %p460 = scmp.ne.s32.totalorder %s443, %s459
    %p461 = scmp.eq.s32.totalorder %s31, 0
    %p462 = por %p460, %p461
    %p463 = scmp.le.s32.totalorder 1, %s25
    %p464 = scmp.lt.s32.totalorder %s25, 3
    %p465 = pnand %p463, %p464
    %p466 = pneg %p465
    // Predicated region
    $region9: #{_lambda_.1} parent=5 // pred_check
      _
    $region10: #{_lambda_.1} parent=5 // pred_check_branch
      %468 = sbr.rel (%p465) target = $region12
    $region11: #{_lambda_.1} parent=5 // pred_region
      %s469 = ssub.s32 %s25, 1
      // Predicated region
      $region13: #{_lambda_.1} parent=11 // pred_check
        %p470 = pneg %p72
      $region14: #{_lambda_.1} parent=11 // pred_check_branch
        %472 = sbr.rel (%p470) target = $region16
      $region15: #{_lambda_.1} parent=11 // pred_region
        _
      $region16: #{_lambda_.1} parent=11 // pred_fallthru
        _
      // Predicated region
      $region17: #{_lambda_.1} parent=11 // pred_check
        %p473 = pneg %p93
      $region18: #{_lambda_.1} parent=11 // pred_check_branch
        %475 = sbr.rel (%p473) target = $region20
      $region19: #{_lambda_.1} parent=11 // pred_region
        _
      $region20: #{_lambda_.1} parent=11 // pred_fallthru
        _
      // Predicated region
      $region21: #{_lambda_.1} parent=11 // pred_check
        %p476 = pneg %p114
      $region22: #{_lambda_.1} parent=11 // pred_check_branch
        %478 = sbr.rel (%p476) target = $region24
      $region23: #{_lambda_.1} parent=11 // pred_region
        _
      $region24: #{_lambda_.1} parent=11 // pred_fallthru
        _
      // Predicated region
      $region25: #{_lambda_.1} parent=11 // pred_check
        %p479 = pneg %p135
      $region26: #{_lambda_.1} parent=11 // pred_check_branch
        %481 = sbr.rel (%p479) target = $region28
      $region27: #{_lambda_.1} parent=11 // pred_region
        _
      $region28: #{_lambda_.1} parent=11 // pred_fallthru
        _
      // Predicated region
      $region29: #{_lambda_.1} parent=11 // pred_check
        %p482 = pneg %p156
      $region30: #{_lambda_.1} parent=11 // pred_check_branch
        %484 = sbr.rel (%p482) target = $region32
      $region31: #{_lambda_.1} parent=11 // pred_region
        _
      $region32: #{_lambda_.1} parent=11 // pred_fallthru
        _
      // Predicated region
      $region33: #{_lambda_.1} parent=11 // pred_check
        %p485 = pneg %p177
      $region34: #{_lambda_.1} parent=11 // pred_check_branch
        %487 = sbr.rel (%p485) target = $region36
      $region35: #{_lambda_.1} parent=11 // pred_region
        _
      $region36: #{_lambda_.1} parent=11 // pred_fallthru
        _
      // Predicated region
      $region37: #{_lambda_.1} parent=11 // pred_check
        %p488 = pneg %p198
      $region38: #{_lambda_.1} parent=11 // pred_check_branch
        %490 = sbr.rel (%p488) target = $region40
      $region39: #{_lambda_.1} parent=11 // pred_region
        _
      $region40: #{_lambda_.1} parent=11 // pred_fallthru
        _
      // Predicated region
      $region41: #{_lambda_.1} parent=11 // pred_check
        %p491 = pneg %p219
      $region42: #{_lambda_.1} parent=11 // pred_check_branch
        %493 = sbr.rel (%p491) target = $region44
      $region43: #{_lambda_.1} parent=11 // pred_region
        _
      $region44: #{_lambda_.1} parent=11 // pred_fallthru
        _
      // Predicated region
      $region45: #{_lambda_.1} parent=11 // pred_check
        %p494 = pneg %p240
      $region46: #{_lambda_.1} parent=11 // pred_check_branch
        %496 = sbr.rel (%p494) target = $region48
      $region47: #{_lambda_.1} parent=11 // pred_region
        _
      $region48: #{_lambda_.1} parent=11 // pred_fallthru
        _
      // Predicated region
      $region49: #{_lambda_.1} parent=11 // pred_check
        %p497 = pneg %p261
      $region50: #{_lambda_.1} parent=11 // pred_check_branch
        %499 = sbr.rel (%p497) target = $region52
      $region51: #{_lambda_.1} parent=11 // pred_region
        _
      $region52: #{_lambda_.1} parent=11 // pred_fallthru
        _
      // Predicated region
      $region53: #{_lambda_.1} parent=11 // pred_check
        %p500 = pneg %p282
      $region54: #{_lambda_.1} parent=11 // pred_check_branch
        %502 = sbr.rel (%p500) target = $region56
      $region55: #{_lambda_.1} parent=11 // pred_region
        _
      $region56: #{_lambda_.1} parent=11 // pred_fallthru
        _
      // Predicated region
      $region57: #{_lambda_.1} parent=11 // pred_check
        %p503 = pneg %p303
      $region58: #{_lambda_.1} parent=11 // pred_check_branch
        %505 = sbr.rel (%p503) target = $region60
      $region59: #{_lambda_.1} parent=11 // pred_region
        _
      $region60: #{_lambda_.1} parent=11 // pred_fallthru
        _
      // Predicated region
      $region61: #{_lambda_.1} parent=11 // pred_check
        %p506 = pneg %p324
      $region62: #{_lambda_.1} parent=11 // pred_check_branch
        %508 = sbr.rel (%p506) target = $region64
      $region63: #{_lambda_.1} parent=11 // pred_region
        _
      $region64: #{_lambda_.1} parent=11 // pred_fallthru
        _
      // Predicated region
      $region65: #{_lambda_.1} parent=11 // pred_check
        %p509 = pneg %p345
      $region66: #{_lambda_.1} parent=11 // pred_check_branch
        %511 = sbr.rel (%p509) target = $region68
      $region67: #{_lambda_.1} parent=11 // pred_region
        _
      $region68: #{_lambda_.1} parent=11 // pred_fallthru
        _
      // Predicated region
      $region69: #{_lambda_.1} parent=11 // pred_check
        %p512 = pneg %p366
      $region70: #{_lambda_.1} parent=11 // pred_check_branch
        %514 = sbr.rel (%p512) target = $region72
      $region71: #{_lambda_.1} parent=11 // pred_region
        _
      $region72: #{_lambda_.1} parent=11 // pred_fallthru
        _
      // Predicated region
      $region73: #{_lambda_.1} parent=11 // pred_check
        %p515 = pneg %p387
      $region74: #{_lambda_.1} parent=11 // pred_check_branch
        %517 = sbr.rel (%p515) target = $region76
      $region75: #{_lambda_.1} parent=11 // pred_region
        _
      $region76: #{_lambda_.1} parent=11 // pred_fallthru
        _
      // Predicated region
      $region77: #{_lambda_.1} parent=11 // pred_check
        %p518 = pneg %p408
      $region78: #{_lambda_.1} parent=11 // pred_check_branch
        %520 = sbr.rel (%p518) target = $region80
      $region79: #{_lambda_.1} parent=11 // pred_region
        _
      $region80: #{_lambda_.1} parent=11 // pred_fallthru
        _
      // Predicated region
      $region81: #{_lambda_.1} parent=11 // pred_check
        %p521 = pneg %p429
      $region82: #{_lambda_.1} parent=11 // pred_check_branch
        %523 = sbr.rel (%p521) target = $region84
      $region83: #{_lambda_.1} parent=11 // pred_region
        _
      $region84: #{_lambda_.1} parent=11 // pred_fallthru
        _
    $region12: #{_lambda_.1} parent=5 // pred_fallthru
      _
    %p524 = scmp.lt.s32.totalorder %s25, 2
    // Predicated region
    $region85: #{_lambda_.1} parent=5 // pred_check
      %p525 = pneg %p524
    $region86: #{_lambda_.1} parent=5 // pred_check_branch
      %527 = sbr.rel (%p525) target = $region88
    $region87: #{_lambda_.1} parent=5 // pred_region
      // Predicated region
      $region89: #{_lambda_.1} parent=87 // pred_check
        %p528 = pneg %p45
      $region90: #{_lambda_.1} parent=87 // pred_check_branch
        %530 = sbr.rel (%p528) target = $region92
      $region91: #{_lambda_.1} parent=87 // pred_region
        %p531 = scmp.lt.s32.totalorder %s25, 1
        %s532 = scalar_select %p531, %s25, 1
        %s533 = smul.addr %s532, 8
        %s534 = smul.addr %s533, 8
        %s535 = scalar_lea.vmem %s0, %s534
      $region92: #{_lambda_.1} parent=87 // pred_fallthru
        _
    $region88: #{_lambda_.1} parent=5 // pred_fallthru
      _
    %p536 = scmp.le.s32.totalorder 1, %s25
    %p537 = scmp.lt.s32.totalorder %s25, 3
    %p538 = pnand %p536, %p537
    %p539 = pneg %p538
    // Predicated region
    $region93: #{_lambda_.1} parent=5 // pred_check
      _
    $region94: #{_lambda_.1} parent=5 // pred_check_branch
      %541 = sbr.rel (%p538) target = $region96
    $region95: #{_lambda_.1} parent=5 // pred_region
      %s542 = ssub.s32 %s25, 1
      %p543 = scmp.lt.s32.totalorder %s30, 1
      %s544 = scalar_select %p543, %s30, 1
      %s545 = smul.addr %s544, 8
      %s546 = smul.addr %s545, 8
      %s547 = scalar_lea.vmem %s0, %s546
      %p548 = pneg %p51
      %p549 = pneg %p48
      %p550 = pneg %p72
      %p551 = pneg %p69
      %p552 = pneg %p93
      %p553 = pneg %p90
      %p554 = pneg %p114
      %p555 = pneg %p111
      %p556 = pneg %p135
      %p557 = pneg %p132
      %p558 = pneg %p156
      %p559 = pneg %p153
      %p560 = pneg %p177
      %p561 = pneg %p174
      %p562 = pneg %p198
      %p563 = pneg %p195
      %p564 = pneg %p219
      %p565 = pneg %p216
      %p566 = pneg %p240
      %p567 = pneg %p237
      %p568 = pneg %p261
      %p569 = pneg %p258
      %p570 = pneg %p282
      %p571 = pneg %p279
      %p572 = pneg %p303
      %p573 = pneg %p300
      %p574 = pneg %p324
      %p575 = pneg %p321
      %p576 = pneg %p345
      %p577 = pneg %p342
      %p578 = pneg %p366
      %p579 = pneg %p363
      %p580 = pneg %p387
      %p581 = pneg %p384
      %p582 = pneg %p408
      %p583 = pneg %p405
      %p584 = pneg %p429
      %p585 = pneg %p426
      %p586 = pneg %p455
      %p587 = pneg %p452
      %p588 = scmp.lt.s32.totalorder %s30, 1
      %s589 = scalar_select %p588, %s30, 1
      %s590 = smul.addr %s589, 8
      %s591 = smul.addr %s590, 8
      %s592 = scalar_lea.vmem %s19, %s591
      %p593 = scmp.lt.s32.totalorder %s30, 1
      %s594 = scalar_select %p593, %s30, 1
      %s595 = smul.addr %s594, 8
      %s596 = smul.addr %s595, 8
      %s597 = scalar_lea.vmem %s0, %s596
      %p598 = scmp.lt.s32.totalorder %s30, 1
      %s599 = scalar_select %p598, %s30, 1
      %s600 = smul.addr %s599, 8
      %s601 = smul.addr %s600, 8
      %s602 = scalar_lea.vmem %s19, %s601
      %v604 = vld [vmem:[%s597] sm:$0xff]
      %v605 = vld [vmem:[%s597 + $0x8] sm:$0xff]
      %v606 = vld [vmem:[%s597 + $0x10] sm:$0xff]
      %v607 = vld [vmem:[%s597 + $0x18] sm:$0xff]
      %v608 = vld [vmem:[%s597 + $0x20] sm:$0xff]
      %v609 = vld [vmem:[%s597 + $0x28] sm:$0xff]
      %v610 = vld [vmem:[%s597 + $0x30] sm:$0xff]
      %v611 = vld [vmem:[%s597 + $0x38] sm:$0xff]
      %v612 = vlaneseq
      %v613 = vand.u32 %v612, 127
      %614 = vset.pattern.permute.xlu0 0
      %615 = vperm.xlu0 %614, %v604
      %v616 = vpop.permute.xlu0 %615
      %617 = vset.pattern.permute.xlu0 0
      %618 = vperm.xlu0 %617, %v605
      %v619 = vpop.permute.xlu0 %618
      %620 = vset.pattern.permute.xlu0 0
      %621 = vperm.xlu0 %620, %v606
      %v622 = vpop.permute.xlu0 %621
      %623 = vset.pattern.permute.xlu0 0
      %624 = vperm.xlu0 %623, %v607
      %v625 = vpop.permute.xlu0 %624
      %626 = vset.pattern.permute.xlu0 0
      %627 = vperm.xlu0 %626, %v608
      %v628 = vpop.permute.xlu0 %627
      %629 = vset.pattern.permute.xlu0 0
      %630 = vperm.xlu0 %629, %v609
      %v631 = vpop.permute.xlu0 %630
      %632 = vset.pattern.permute.xlu0 0
      %633 = vperm.xlu0 %632, %v610
      %v634 = vpop.permute.xlu0 %633
      %635 = vset.pattern.permute.xlu0 0
      %636 = vperm.xlu0 %635, %v611
      %v637 = vpop.permute.xlu0 %636
      %vm638 = vcmp.eq.s32.totalorder %v616, %v613
      %vm639 = vcmp.eq.s32.totalorder %v619, %v613
      %vm640 = vcmp.eq.s32.totalorder %v622, %v613
      %vm641 = vcmp.eq.s32.totalorder %v625, %v613
      %vm642 = vcmp.eq.s32.totalorder %v628, %v613
      %vm643 = vcmp.eq.s32.totalorder %v631, %v613
      %vm644 = vcmp.eq.s32.totalorder %v634, %v613
      %vm645 = vcmp.eq.s32.totalorder %v637, %v613
      %v646 = vsel %vm638, 1, 0
      %v647 = vsel %vm639, 1, 0
      %v648 = vsel %vm640, 1, 0
      %v649 = vsel %vm641, 1, 0
      %v650 = vsel %vm642, 1, 0
      %v651 = vsel %vm643, 1, 0
      %v652 = vsel %vm644, 1, 0
      %v653 = vsel %vm645, 1, 0
      %v654 = vcvt.s32.f32 %v646
      %v655 = vcvt.s32.f32 %v647
      %v656 = vcvt.s32.f32 %v648
      %v657 = vcvt.s32.f32 %v649
      %v658 = vcvt.s32.f32 %v650
      %v659 = vcvt.s32.f32 %v651
      %v660 = vcvt.s32.f32 %v652
      %v661 = vcvt.s32.f32 %v653
      %v662 = vpack.c.bf16 %v655, %v654
      %v663 = vpack.c.bf16 %v657, %v656
      %v664 = vpack.c.bf16 %v659, %v658
      %v665 = vpack.c.bf16 %v661, %v660
      %v666 = vld [vmem:[%s1] sm:$0xf]
      %v667 = vld [vmem:[%s1 + $0x4] sm:$0xf]
      %v668 = vld [vmem:[%s1 + $0x8] sm:$0xf]
      %v669 = vld [vmem:[%s1 + $0xc] sm:$0xf]
      %v670 = vld [vmem:[%s1 + $0x10] sm:$0xf]
      %v671 = vld [vmem:[%s1 + $0x14] sm:$0xf]
      %v672 = vld [vmem:[%s1 + $0x18] sm:$0xf]
      %v673 = vld [vmem:[%s1 + $0x1c] sm:$0xf]
      %v674 = vld [vmem:[%s1 + $0x20] sm:$0xf]
      %v675 = vld [vmem:[%s1 + $0x24] sm:$0xf]
      %v676 = vld [vmem:[%s1 + $0x28] sm:$0xf]
      %v677 = vld [vmem:[%s1 + $0x2c] sm:$0xf]
      %v678 = vld [vmem:[%s1 + $0x30] sm:$0xf]
      %v679 = vld [vmem:[%s1 + $0x34] sm:$0xf]
      %v680 = vld [vmem:[%s1 + $0x38] sm:$0xf]
      %v681 = vld [vmem:[%s1 + $0x3c] sm:$0xf]
      %v682 = vld [vmem:[%s2] sm:$0xf]
      %v683 = vld [vmem:[%s2 + $0x4] sm:$0xf]
      %v684 = vld [vmem:[%s2 + $0x8] sm:$0xf]
      %v685 = vld [vmem:[%s2 + $0xc] sm:$0xf]
      %v686 = vld [vmem:[%s2 + $0x10] sm:$0xf]
      %v687 = vld [vmem:[%s2 + $0x14] sm:$0xf]
      %v688 = vld [vmem:[%s2 + $0x18] sm:$0xf]
      %v689 = vld [vmem:[%s2 + $0x1c] sm:$0xf]
      %v690 = vunpack.c.l.bf16 %v682
      %v691 = vunpack.c.l.bf16 %v683
      %v692 = vunpack.c.l.bf16 %v684
      %v693 = vunpack.c.l.bf16 %v685
      %v694 = vunpack.c.l.bf16 %v686
      %v695 = vunpack.c.l.bf16 %v687
      %v696 = vunpack.c.l.bf16 %v688
      %v697 = vunpack.c.l.bf16 %v689
      %v714 = vunpack.c.l.b16 %v666
      %v715 = vunpack.c.l.b16 %v667
      %v716 = vunpack.c.l.b16 %v668
      %v717 = vunpack.c.l.b16 %v669
      %v718 = vunpack.c.l.b16 %v670
      %v719 = vunpack.c.l.b16 %v671
      %v720 = vunpack.c.l.b16 %v672
      %v721 = vunpack.c.l.b16 %v673
      %v722 = vunpack.c.l.b16 %v674
      %v723 = vunpack.c.l.b16 %v675
      %v724 = vunpack.c.l.b16 %v676
      %v725 = vunpack.c.l.b16 %v677
      %v726 = vunpack.c.l.b16 %v678
      %v727 = vunpack.c.l.b16 %v679
      %v728 = vunpack.c.l.b16 %v680
      %v729 = vunpack.c.l.b16 %v681
      %v730 = vpack.c.b16 %v715, %v714
      %v731 = vpack.c.b16 %v717, %v716
      %v732 = vpack.c.b16 %v719, %v718
      %v733 = vpack.c.b16 %v721, %v720
      %v734 = vpack.c.b16 %v723, %v722
      %v735 = vpack.c.b16 %v725, %v724
      %v736 = vpack.c.b16 %v727, %v726
      %v737 = vpack.c.b16 %v729, %v728
      %746 = vmatprep.subr.bf16.mxu0 0
      %747 = vmatpush1.bf16.msra.mxu0 %v730
      %748 = vmatprep.subr.bf16.mxu0 0
      %749 = vmatpush1.bf16.msra.mxu0 %v731
      %750 = vmatprep.subr.bf16.mxu0 0
      %751 = vmatpush1.bf16.msra.mxu0 %v732
      %752 = vmatprep.subr.bf16.mxu0 0
      %753 = vmatpush1.bf16.msra.mxu0 %v733
      %754 = vmatprep.subr.bf16.mxu0 0
      %755 = vmatpush1.bf16.msra.mxu0 %v734
      %756 = vmatprep.subr.bf16.mxu0 0
      %757 = vmatpush1.bf16.msra.mxu0 %v735
      %758 = vmatprep.subr.bf16.mxu0 0
      %759 = vmatpush1.bf16.msra.mxu0 %v736
      %760 = vmatprep.subr.bf16.mxu0 0
      %761 = vmatpush1.bf16.msra.mxu0 %v737
      %762 = vmatprep.subr.bf16.mxu0 0
      %763 = vmatpush1.bf16.msra.mxu0 0
      %764 = vmatprep.subr.bf16.mxu0 0
      %765 = vmatpush1.bf16.msra.mxu0 0
      %766 = vmatprep.subr.bf16.mxu0 0
      %767 = vmatpush1.bf16.msra.mxu0 0
      %768 = vmatprep.subr.bf16.mxu0 0
      %769 = vmatpush1.bf16.msra.mxu0 0
      %770 = vmatprep.subr.bf16.mxu0 0
      %771 = vmatpush1.bf16.msra.mxu0 0
      %772 = vmatprep.subr.bf16.mxu0 0
      %773 = vmatpush1.bf16.msra.mxu0 0
      %774 = vmatprep.subr.bf16.mxu0 0
      %775 = vmatpush1.bf16.msra.mxu0 0
      %776 = vmatprep.subr.bf16.mxu0 0
      %777 = vmatpush1.bf16.msra.mxu0 0
      %778 = vmatprep.mubr.bf16.mxu0 0
      %779 = vmatmul.mubr.bf16.gmra.mrb[0].mxu0 %v662
      %v780 = vpop.f32.mrb[0].mxu0
      %v781 = vadd.f32 %v690, %v780
      %v782 = vpop.f32.mrb[0].mxu0
      %v783 = vpop.f32.mrb[0].mxu0
      %v784 = vadd.f32 %v691, %v783
      %v785 = vpop.f32.mrb[0].mxu0
      %786 = vmatprep.mubr.bf16.mxu0 0
      %787 = vmatmul.mubr.bf16.gmra.mrb[0].mxu0 %v663
      %v788 = vpop.f32.mrb[0].mxu0
      %v789 = vadd.f32 %v692, %v788
      %v790 = vpop.f32.mrb[0].mxu0
      %v791 = vpop.f32.mrb[0].mxu0
      %v792 = vadd.f32 %v693, %v791
      %v793 = vpop.f32.mrb[0].mxu0
      %794 = vmatprep.mubr.bf16.mxu0 0
      %795 = vmatmul.mubr.bf16.gmra.mrb[0].mxu0 %v664
      %v796 = vpop.f32.mrb[0].mxu0
      %v797 = vadd.f32 %v694, %v796
      %v798 = vpop.f32.mrb[0].mxu0
      %v799 = vpop.f32.mrb[0].mxu0
      %v800 = vadd.f32 %v695, %v799
      %v801 = vpop.f32.mrb[0].mxu0
      %802 = vmatprep.mubr.bf16.mxu0 0
      %803 = vmatmul.mubr.bf16.gmra.mrb[0].mxu0 %v665
      %v804 = vpop.f32.mrb[0].mxu0
      %v805 = vadd.f32 %v696, %v804
      %v806 = vpop.f32.mrb[0].mxu0
      %v807 = vpop.f32.mrb[0].mxu0
      %v808 = vadd.f32 %v697, %v807
      %v809 = vpop.f32.mrb[0].mxu0
      %810 = vdwg.mxu0
      %v811 = vld [vmem:[%s3] sm:$0x1]
      %v812 = vld [vmem:[%s4] sm:$0x1]
      %813 = vadd.xlane.f32.xlu0 %v781
      %v814 = vpop.xlane.xlu0 %813
      %815 = vadd.xlane.f32.xlu0 %v784
      %v816 = vpop.xlane.xlu0 %815
      %817 = vadd.xlane.f32.xlu0 %v789
      %v818 = vpop.xlane.xlu0 %817
      %819 = vadd.xlane.f32.xlu0 %v792
      %v820 = vpop.xlane.xlu0 %819
      %821 = vadd.xlane.f32.xlu0 %v797
      %v822 = vpop.xlane.xlu0 %821
      %823 = vadd.xlane.f32.xlu0 %v800
      %v824 = vpop.xlane.xlu0 %823
      %825 = vadd.xlane.f32.xlu0 %v805
      %v826 = vpop.xlane.xlu0 %825
      %827 = vadd.xlane.f32.xlu0 %v808
      %v828 = vpop.xlane.xlu0 %827
      %v829 = vrcp.pop 128.0
      %v830 = vmul.f32 %v814, %v829
      %v831 = vmul.f32 %v816, %v829
      %v832 = vmul.f32 %v818, %v829
      %v833 = vmul.f32 %v820, %v829
      %v834 = vmul.f32 %v822, %v829
      %v835 = vmul.f32 %v824, %v829
      %v836 = vmul.f32 %v826, %v829
      %v837 = vmul.f32 %v828, %v829
      %v838 = vsub.f32 %v781, %v830
      %v839 = vsub.f32 %v784, %v831
      %v840 = vsub.f32 %v789, %v832
      %v841 = vsub.f32 %v792, %v833
      %v842 = vsub.f32 %v797, %v834
      %v843 = vsub.f32 %v800, %v835
      %v844 = vsub.f32 %v805, %v836
      %v845 = vsub.f32 %v808, %v837
      %v846 = vmul.f32 %v838, %v838
      %v847 = vmul.f32 %v839, %v839
      %v848 = vmul.f32 %v840, %v840
      %v849 = vmul.f32 %v841, %v841
      %v850 = vmul.f32 %v842, %v842
      %v851 = vmul.f32 %v843, %v843
      %v852 = vmul.f32 %v844, %v844
      %v853 = vmul.f32 %v845, %v845
      %854 = vadd.xlane.f32.xlu0 %v846
      %v855 = vpop.xlane.xlu0 %854
      %856 = vadd.xlane.f32.xlu0 %v847
      %v857 = vpop.xlane.xlu0 %856
      %858 = vadd.xlane.f32.xlu0 %v848
      %v859 = vpop.xlane.xlu0 %858
      %860 = vadd.xlane.f32.xlu0 %v849
      %v861 = vpop.xlane.xlu0 %860
      %862 = vadd.xlane.f32.xlu0 %v850
      %v863 = vpop.xlane.xlu0 %862
      %864 = vadd.xlane.f32.xlu0 %v851
      %v865 = vpop.xlane.xlu0 %864
      %866 = vadd.xlane.f32.xlu0 %v852
      %v867 = vpop.xlane.xlu0 %866
      %868 = vadd.xlane.f32.xlu0 %v853
      %v869 = vpop.xlane.xlu0 %868
      %v870 = vmul.f32 %v855, %v829
      %v871 = vmul.f32 %v857, %v829
      %v872 = vmul.f32 %v859, %v829
      %v873 = vmul.f32 %v861, %v829
      %v874 = vmul.f32 %v863, %v829
      %v875 = vmul.f32 %v865, %v829
      %v876 = vmul.f32 %v867, %v829
      %v877 = vmul.f32 %v869, %v829
      %v878 = vadd.f32 %v870, 1e-05
      %v879 = vadd.f32 %v871, 1e-05
      %v880 = vadd.f32 %v872, 1e-05
      %v881 = vadd.f32 %v873, 1e-05
      %v882 = vadd.f32 %v874, 1e-05
      %v883 = vadd.f32 %v875, 1e-05
      %v884 = vadd.f32 %v876, 1e-05
      %v885 = vadd.f32 %v877, 1e-05
      %v886 = vrsqrt.pop %v878
      %v887 = vrsqrt.pop %v879
      %v888 = vrsqrt.pop %v880
      %v889 = vrsqrt.pop %v881
      %v890 = vrsqrt.pop %v882
      %v891 = vrsqrt.pop %v883
      %v892 = vrsqrt.pop %v884
      %v893 = vrsqrt.pop %v885
      %v894 = vmul.f32 %v838, %v886
      %v895 = vmul.f32 %v839, %v887
      %v896 = vmul.f32 %v840, %v888
      %v897 = vmul.f32 %v841, %v889
      %v898 = vmul.f32 %v842, %v890
      %v899 = vmul.f32 %v843, %v891
      %v900 = vmul.f32 %v844, %v892
      %v901 = vmul.f32 %v845, %v893
      %v903 = vlaneseq
      %v904 = vshrl.u32 %v903, 7
      %v905 = vsub.s32 0, %v904
      %v906 = vrot.slane %v811, %v905
      %v908 = vmul.f32 %v894, %v906
      %v909 = vmul.f32 %v895, %v906
      %v910 = vmul.f32 %v896, %v906
      %v911 = vmul.f32 %v897, %v906
      %v912 = vmul.f32 %v898, %v906
      %v913 = vmul.f32 %v899, %v906
      %v914 = vmul.f32 %v900, %v906
      %v915 = vmul.f32 %v901, %v906
      %v917 = vlaneseq
      %v918 = vshrl.u32 %v917, 7
      %v919 = vsub.s32 0, %v918
      %v920 = vrot.slane %v812, %v919
      %v922 = vadd.f32 %v908, %v920
      %v923 = vadd.f32 %v909, %v920
      %v924 = vadd.f32 %v910, %v920
      %v925 = vadd.f32 %v911, %v920
      %v926 = vadd.f32 %v912, %v920
      %v927 = vadd.f32 %v913, %v920
      %v928 = vadd.f32 %v914, %v920
      %v929 = vadd.f32 %v915, %v920
      %v930 = vpack.c.bf16 %v923, %v922
      %v931 = vpack.c.bf16 %v925, %v924
      %v932 = vpack.c.bf16 %v927, %v926
      %v933 = vpack.c.bf16 %v929, %v928
      %v934 = vld [vmem:[%s5] sm:$0xff]
      %v935 = vld [vmem:[%s5 + $0x8] sm:$0xf]
      %v936 = vld [vmem:[%s5 + $0xc] sm:$0xff]
      %v937 = vld [vmem:[%s5 + $0x14] sm:$0xf]
      %v938 = vld [vmem:[%s5 + $0x18] sm:$0xff]
      %v939 = vld [vmem:[%s5 + $0x20] sm:$0xf]
      %v940 = vld [vmem:[%s5 + $0x24] sm:$0xff]
      %v941 = vld [vmem:[%s5 + $0x2c] sm:$0xf]
      %v942 = vld [vmem:[%s5 + $0x30] sm:$0xff]
      %v943 = vld [vmem:[%s5 + $0x38] sm:$0xf]
      %v944 = vld [vmem:[%s5 + $0x3c] sm:$0xff]
      %v945 = vld [vmem:[%s5 + $0x44] sm:$0xf]
      %v946 = vld [vmem:[%s5 + $0x48] sm:$0xff]
      %v947 = vld [vmem:[%s5 + $0x50] sm:$0xf]
      %v948 = vld [vmem:[%s5 + $0x54] sm:$0xff]
      %v949 = vld [vmem:[%s5 + $0x5c] sm:$0xf]
      %v950 = vld [vmem:[%s5 + $0x60] sm:$0xff]
      %v951 = vld [vmem:[%s5 + $0x68] sm:$0xf]
      %v952 = vld [vmem:[%s5 + $0x6c] sm:$0xff]
      %v953 = vld [vmem:[%s5 + $0x74] sm:$0xf]
      %v954 = vld [vmem:[%s5 + $0x78] sm:$0xff]
      %v955 = vld [vmem:[%s5 + $0x80] sm:$0xf]
      %v956 = vld [vmem:[%s5 + $0x84] sm:$0xff]
      %v957 = vld [vmem:[%s5 + $0x8c] sm:$0xf]
      %v958 = vld [vmem:[%s5 + $0x90] sm:$0xff]
      %v959 = vld [vmem:[%s5 + $0x98] sm:$0xf]
      %v960 = vld [vmem:[%s5 + $0x9c] sm:$0xff]
      %v961 = vld [vmem:[%s5 + $0xa4] sm:$0xf]
      %v962 = vld [vmem:[%s5 + $0xa8] sm:$0xff]
      %v963 = vld [vmem:[%s5 + $0xb0] sm:$0xf]
      %v964 = vld [vmem:[%s5 + $0xb4] sm:$0xff]
      %v965 = vld [vmem:[%s5 + $0xbc] sm:$0xf]
      %v966 = vld [vmem:[%s6] sm:$0x7]
      %v968 = vlaneseq
      %v969 = vshrl.u32 %v968, 7
      %v970 = vsub.s32 0, %v969
      %v971 = vrot.slane %v966, %v970
      %v972 = vlaneseq
      %v973 = vshrl.u32 %v972, 7
      %v974 = vsub.s32 1, %v973
      %v975 = vrot.slane %v966, %v974
      %v976 = vlaneseq
      %v977 = vshrl.u32 %v976, 7
      %v978 = vsub.s32 2, %v977
      %v979 = vrot.slane %v966, %v978
      %v1015 = vunpack.c.l.b16 %v934
      %v1016 = vunpack.c.h.b16 %v934
      %v1017 = vunpack.c.l.b16 %v935
      %v1018 = vunpack.c.l.b16 %v936
      %v1019 = vunpack.c.h.b16 %v936
      %v1020 = vunpack.c.l.b16 %v937
      %v1021 = vunpack.c.l.b16 %v938
      %v1022 = vunpack.c.h.b16 %v938
      %v1023 = vunpack.c.l.b16 %v939
      %v1024 = vunpack.c.l.b16 %v940
      %v1025 = vunpack.c.h.b16 %v940
      %v1026 = vunpack.c.l.b16 %v941
      %v1027 = vunpack.c.l.b16 %v942
      %v1028 = vunpack.c.h.b16 %v942
      %v1029 = vunpack.c.l.b16 %v943
      %v1030 = vunpack.c.l.b16 %v944
      %v1031 = vunpack.c.h.b16 %v944
      %v1032 = vunpack.c.l.b16 %v945
      %v1033 = vunpack.c.l.b16 %v946
      %v1034 = vunpack.c.h.b16 %v946
      %v1035 = vunpack.c.l.b16 %v947
      %v1036 = vunpack.c.l.b16 %v948
      %v1037 = vunpack.c.h.b16 %v948
      %v1038 = vunpack.c.l.b16 %v949
      %v1039 = vunpack.c.l.b16 %v950
      %v1040 = vunpack.c.h.b16 %v950
      %v1041 = vunpack.c.l.b16 %v951
      %v1042 = vunpack.c.l.b16 %v952
      %v1043 = vunpack.c.h.b16 %v952
      %v1044 = vunpack.c.l.b16 %v953
      %v1045 = vunpack.c.l.b16 %v954
      %v1046 = vunpack.c.h.b16 %v954
      %v1047 = vunpack.c.l.b16 %v955
      %v1048 = vunpack.c.l.b16 %v956
      %v1049 = vunpack.c.h.b16 %v956
      %v1050 = vunpack.c.l.b16 %v957
      %v1051 = vunpack.c.l.b16 %v958
      %v1052 = vunpack.c.h.b16 %v958
      %v1053 = vunpack.c.l.b16 %v959
      %v1054 = vunpack.c.l.b16 %v960
      %v1055 = vunpack.c.h.b16 %v960
      %v1056 = vunpack.c.l.b16 %v961
      %v1057 = vunpack.c.l.b16 %v962
      %v1058 = vunpack.c.h.b16 %v962
      %v1059 = vunpack.c.l.b16 %v963
      %v1060 = vunpack.c.l.b16 %v964
      %v1061 = vunpack.c.h.b16 %v964
      %v1062 = vunpack.c.l.b16 %v965
      %v1063 = vpack.c.b16 %v1018, %v1015
      %v1064 = vpack.c.b16 %v1019, %v1016
      %v1065 = vpack.c.b16 %v1020, %v1017
      %v1066 = vpack.c.b16 %v1024, %v1021
      %v1067 = vpack.c.b16 %v1025, %v1022
      %v1068 = vpack.c.b16 %v1026, %v1023
      %v1069 = vpack.c.b16 %v1030, %v1027
      %v1070 = vpack.c.b16 %v1031, %v1028
      %v1071 = vpack.c.b16 %v1032, %v1029
      %v1072 = vpack.c.b16 %v1036, %v1033
      %v1073 = vpack.c.b16 %v1037, %v1034
      %v1074 = vpack.c.b16 %v1038, %v1035
      %v1075 = vpack.c.b16 %v1042, %v1039
      %v1076 = vpack.c.b16 %v1043, %v1040
      %v1077 = vpack.c.b16 %v1044, %v1041
      %v1078 = vpack.c.b16 %v1048, %v1045
      %v1079 = vpack.c.b16 %v1049, %v1046
      %v1080 = vpack.c.b16 %v1050, %v1047
      %v1081 = vpack.c.b16 %v1054, %v1051
      %v1082 = vpack.c.b16 %v1055, %v1052
      %v1083 = vpack.c.b16 %v1056, %v1053
      %v1084 = vpack.c.b16 %v1060, %v1057
      %v1085 = vpack.c.b16 %v1061, %v1058
      %v1086 = vpack.c.b16 %v1062, %v1059
      %1111 = vmatprep.subr.bf16.mxu0 %v1064
      %1112 = vmatpush1.bf16.msra.mxu0 %v1063
      %1113 = vmatprep.subr.bf16.mxu0 %v1067
      %1114 = vmatpush1.bf16.msra.mxu0 %v1066
      %1115 = vmatprep.subr.bf16.mxu0 %v1070
      %1116 = vmatpush1.bf16.msra.mxu0 %v1069
      %1117 = vmatprep.subr.bf16.mxu0 %v1073
      %1118 = vmatpush1.bf16.msra.mxu0 %v1072
      %1119 = vmatprep.subr.bf16.mxu0 %v1076
      %1120 = vmatpush1.bf16.msra.mxu0 %v1075
      %1121 = vmatprep.subr.bf16.mxu0 %v1079
      %1122 = vmatpush1.bf16.msra.mxu0 %v1078
      %1123 = vmatprep.subr.bf16.mxu0 %v1082
      %1124 = vmatpush1.bf16.msra.mxu0 %v1081
      %1125 = vmatprep.subr.bf16.mxu0 %v1085
      %1126 = vmatpush1.bf16.msra.mxu0 %v1084
      %1127 = vmatprep.subr.bf16.mxu0 0
      %1128 = vmatpush1.bf16.msra.mxu0 0
      %1129 = vmatprep.subr.bf16.mxu0 0
      %1130 = vmatpush1.bf16.msra.mxu0 0
      %1131 = vmatprep.subr.bf16.mxu0 0
      %1132 = vmatpush1.bf16.msra.mxu0 0
      %1133 = vmatprep.subr.bf16.mxu0 0
      %1134 = vmatpush1.bf16.msra.mxu0 0
      %1135 = vmatprep.subr.bf16.mxu0 0
      %1136 = vmatpush1.bf16.msra.mxu0 0
      %1137 = vmatprep.subr.bf16.mxu0 0
      %1138 = vmatpush1.bf16.msra.mxu0 0
      %1139 = vmatprep.subr.bf16.mxu0 0
      %1140 = vmatpush1.bf16.msra.mxu0 0
      %1141 = vmatprep.subr.bf16.mxu0 0
      %1142 = vmatpush1.bf16.msra.mxu0 0
      %1143 = vmatprep.mubr.bf16.mxu0 0
      %1144 = vmatmul.mubr.bf16.gmra.mrb[0].mxu0 %v930
      %v1145 = vpop.f32.mrb[0].mxu0
      %v1146 = vadd.f32 %v971, %v1145
      %v1147 = vpop.f32.mrb[0].mxu0
      %v1148 = vadd.f32 %v975, %v1147
      %v1149 = vpop.f32.mrb[0].mxu0
      %v1150 = vadd.f32 %v971, %v1149
      %v1151 = vpop.f32.mrb[0].mxu0
      %v1152 = vadd.f32 %v975, %v1151
      %1153 = vmatprep.mubr.bf16.mxu0 0
      %1154 = vmatmul.mubr.bf16.gmra.mrb[0].mxu0 %v931
      %v1155 = vpop.f32.mrb[0].mxu0
      %v1156 = vadd.f32 %v971, %v1155
      %v1157 = vpop.f32.mrb[0].mxu0
      %v1158 = vadd.f32 %v975, %v1157
      %v1159 = vpop.f32.mrb[0].mxu0
      %v1160 = vadd.f32 %v971, %v1159
      %v1161 = vpop.f32.mrb[0].mxu0
      %v1162 = vadd.f32 %v975, %v1161
      %1163 = vmatprep.mubr.bf16.mxu0 0
      %1164 = vmatmul.mubr.bf16.gmra.mrb[0].mxu0 %v932
      %v1165 = vpop.f32.mrb[0].mxu0
      %v1166 = vadd.f32 %v971, %v1165
      %v1167 = vpop.f32.mrb[0].mxu0
      %v1168 = vadd.f32 %v975, %v1167
      %v1169 = vpop.f32.mrb[0].mxu0
      %v1170 = vadd.f32 %v971, %v1169
      %v1171 = vpop.f32.mrb[0].mxu0
      %v1172 = vadd.f32 %v975, %v1171
      %1173 = vmatprep.mubr.bf16.mxu0 0
      %1174 = vmatmul.mubr.bf16.gmra.mrb[0].mxu0 %v933
      %v1175 = vpop.f32.mrb[0].mxu0
      %v1176 = vadd.f32 %v971, %v1175
      %v1177 = vpop.f32.mrb[0].mxu0
      %v1178 = vadd.f32 %v975, %v1177
      %v1179 = vpop.f32.mrb[0].mxu0
      %v1180 = vadd.f32 %v971, %v1179
      %v1181 = vpop.f32.mrb[0].mxu0
      %v1182 = vadd.f32 %v975, %v1181
      %1183 = vdwg.mxu0
      %1184 = vmatprep.subr.bf16.mxu0 0
      %1185 = vmatpush1.bf16.msra.mxu0 %v1065
      %1186 = vmatprep.subr.bf16.mxu0 0
      %1187 = vmatpush1.bf16.msra.mxu0 %v1068
      %1188 = vmatprep.subr.bf16.mxu0 0
      %1189 = vmatpush1.bf16.msra.mxu0 %v1071
      %1190 = vmatprep.subr.bf16.mxu0 0
      %1191 = vmatpush1.bf16.msra.mxu0 %v1074
      %1192 = vmatprep.subr.bf16.mxu0 0
      %1193 = vmatpush1.bf16.msra.mxu0 %v1077
      %1194 = vmatprep.subr.bf16.mxu0 0
      %1195 = vmatpush1.bf16.msra.mxu0 %v1080
      %1196 = vmatprep.subr.bf16.mxu0 0
      %1197 = vmatpush1.bf16.msra.mxu0 %v1083
      %1198 = vmatprep.subr.bf16.mxu0 0
      %1199 = vmatpush1.bf16.msra.mxu0 %v1086
      %1200 = vmatprep.subr.bf16.mxu0 0
      %1201 = vmatpush1.bf16.msra.mxu0 0
      %1202 = vmatprep.subr.bf16.mxu0 0
      %1203 = vmatpush1.bf16.msra.mxu0 0
      %1204 = vmatprep.subr.bf16.mxu0 0
      %1205 = vmatpush1.bf16.msra.mxu0 0
      %1206 = vmatprep.subr.bf16.mxu0 0
      %1207 = vmatpush1.bf16.msra.mxu0 0
      %1208 = vmatprep.subr.bf16.mxu0 0
      %1209 = vmatpush1.bf16.msra.mxu0 0
      %1210 = vmatprep.subr.bf16.mxu0 0
      %1211 = vmatpush1.bf16.msra.mxu0 0
      %1212 = vmatprep.subr.bf16.mxu0 0
      %1213 = vmatpush1.bf16.msra.mxu0 0
      %1214 = vmatprep.subr.bf16.mxu0 0
      %1215 = vmatpush1.bf16.msra.mxu0 0
      %1216 = vmatprep.mubr.bf16.mxu0 0
      %1217 = vmatmul.mubr.bf16.gmra.mrb[0].mxu0 %v930
      %v1218 = vpop.f32.mrb[0].mxu0
      %v1219 = vadd.f32 %v979, %v1218
      %v1220 = vpop.f32.mrb[0].mxu0
      %v1221 = vpop.f32.mrb[0].mxu0
      %v1222 = vadd.f32 %v979, %v1221
      %v1223 = vpop.f32.mrb[0].mxu0
      %1224 = vmatprep.mubr.bf16.mxu0 0
      %1225 = vmatmul.mubr.bf16.gmra.mrb[0].mxu0 %v931
      %v1226 = vpop.f32.mrb[0].mxu0
      %v1227 = vadd.f32 %v979, %v1226
      %v1228 = vpop.f32.mrb[0].mxu0
      %v1229 = vpop.f32.mrb[0].mxu0
      %v1230 = vadd.f32 %v979, %v1229
      %v1231 = vpop.f32.mrb[0].mxu0
      %1232 = vmatprep.mubr.bf16.mxu0 0
      %1233 = vmatmul.mubr.bf16.gmra.mrb[0].mxu0 %v932
      %v1234 = vpop.f32.mrb[0].mxu0
      %v1235 = vadd.f32 %v979, %v1234
      %v1236 = vpop.f32.mrb[0].mxu0
      %v1237 = vpop.f32.mrb[0].mxu0
      %v1238 = vadd.f32 %v979, %v1237
      %v1239 = vpop.f32.mrb[0].mxu0
      %1240 = vmatprep.mubr.bf16.mxu0 0
      %1241 = vmatmul.mubr.bf16.gmra.mrb[0].mxu0 %v933
      %v1242 = vpop.f32.mrb[0].mxu0
      %v1243 = vadd.f32 %v979, %v1242
      %v1244 = vpop.f32.mrb[0].mxu0
      %v1245 = vpop.f32.mrb[0].mxu0
      %v1246 = vadd.f32 %v979, %v1245
      %v1247 = vpop.f32.mrb[0].mxu0
      %1248 = vdwg.mxu0
      %v1249 = vpack.c.bf16 %v1150, %v1146
      %v1250 = vpack.c.bf16 %v1152, %v1148
      %v1251 = vpack.c.bf16 %v1222, %v1219
      %v1252 = vpack.c.bf16 %v1160, %v1156
      %v1253 = vpack.c.bf16 %v1162, %v1158
      %v1254 = vpack.c.bf16 %v1230, %v1227
      %v1255 = vpack.c.bf16 %v1170, %v1166
      %v1256 = vpack.c.bf16 %v1172, %v1168
      %v1257 = vpack.c.bf16 %v1238, %v1235
      %v1258 = vpack.c.bf16 %v1180, %v1176
      %v1259 = vpack.c.bf16 %v1182, %v1178
      %v1260 = vpack.c.bf16 %v1246, %v1243
      %v1261 = vld [vmem:[%s7] sm:$0xf]
      %v1262 = vld [vmem:[%s7 + $0x4] sm:$0xf]
      %v1263 = vld [vmem:[%s7 + $0x8] sm:$0xf]
      %v1264 = vld [vmem:[%s7 + $0xc] sm:$0xf]
      %v1265 = vld [vmem:[%s7 + $0x10] sm:$0xf]
      %v1266 = vld [vmem:[%s7 + $0x14] sm:$0xf]
      %v1267 = vld [vmem:[%s7 + $0x18] sm:$0xf]
      %v1268 = vld [vmem:[%s7 + $0x1c] sm:$0xf]
      %v1269 = vld [vmem:[%s7 + $0x20] sm:$0xf]
      %v1270 = vld [vmem:[%s7 + $0x24] sm:$0xf]
      %v1271 = vld [vmem:[%s7 + $0x28] sm:$0xf]
      %v1272 = vld [vmem:[%s7 + $0x2c] sm:$0xf]
      %v1273 = vld [vmem:[%s7 + $0x30] sm:$0xf]
      %v1274 = vld [vmem:[%s7 + $0x34] sm:$0xf]
      %v1275 = vld [vmem:[%s7 + $0x38] sm:$0xf]
      %v1276 = vld [vmem:[%s7 + $0x3c] sm:$0xf]
      %vm1277 = vcmask 261120
      %v1279 = vsel %vm1277, %v1249, 0
      %v1282 = vsel %vm1277, %v1252, 0
      %v1285 = vsel %vm1277, %v1255, 0
      %v1288 = vsel %vm1277, %v1258, 0
      %v1291 = vsel %vm1277, %v1250, 0
      %v1294 = vsel %vm1277, %v1253, 0
      %v1297 = vsel %vm1277, %v1256, 0
      %v1300 = vsel %vm1277, %v1259, 0
      %1302 = vmatprep.subr.bf16.mxu0 0
      %1303 = vmatpush1.bf16.xpose.msra.mxu0 %v1291
      %1304 = vmatprep.subr.bf16.mxu0 0
      %1305 = vmatpush1.bf16.xpose.msra.mxu0 %v1294
      %1306 = vmatprep.subr.bf16.mxu0 0
      %1307 = vmatpush1.bf16.xpose.msra.mxu0 %v1297
      %1308 = vmatprep.subr.bf16.mxu0 0
      %1309 = vmatpush1.bf16.xpose.msra.mxu0 %v1300
      %1310 = vmatprep.subr.bf16.mxu0 0
      %1311 = vmatpush1.bf16.xpose.msra.mxu0 0
      %1312 = vmatprep.subr.bf16.mxu0 0
      %1313 = vmatpush1.bf16.xpose.msra.mxu0 0
      %1314 = vmatprep.subr.bf16.mxu0 0
      %1315 = vmatpush1.bf16.xpose.msra.mxu0 0
      %1316 = vmatprep.subr.bf16.mxu0 0
      %1317 = vmatpush1.bf16.xpose.msra.mxu0 0
      %1318 = vmatprep.subr.bf16.mxu0 0
      %1319 = vmatpush1.bf16.xpose.msra.mxu0 0
      %1320 = vmatprep.subr.bf16.mxu0 0
      %1321 = vmatpush1.bf16.xpose.msra.mxu0 0
      %1322 = vmatprep.subr.bf16.mxu0 0
      %1323 = vmatpush1.bf16.xpose.msra.mxu0 0
      %1324 = vmatprep.subr.bf16.mxu0 0
      %1325 = vmatpush1.bf16.xpose.msra.mxu0 0
      %1326 = vmatprep.subr.bf16.mxu0 0
      %1327 = vmatpush1.bf16.xpose.msra.mxu0 0
      %1328 = vmatprep.subr.bf16.mxu0 0
      %1329 = vmatpush1.bf16.xpose.msra.mxu0 0
      %1330 = vmatprep.subr.bf16.mxu0 0
      %1331 = vmatpush1.bf16.xpose.msra.mxu0 0
      %1332 = vmatprep.subr.bf16.mxu0 0
      %1333 = vmatpush1.bf16.xpose.msra.mxu0 0
      %1334 = vmatprep.mubr.bf16.mxu0 0
      %1335 = vmatmul.mubr.bf16.gmra.mrb[0].mxu0 %v1279
      %v1336 = vpop.f32.mrb[0].mxu0
      %v1337 = vadd.f32 0.0, %v1336
      %v1338 = vpop.f32.mrb[0].mxu0
      %v1339 = vpop.f32.mrb[0].mxu0
      %v1340 = vadd.f32 0.0, %v1339
      %v1341 = vpop.f32.mrb[0].mxu0
      %1342 = vmatprep.mubr.bf16.mxu0 0
      %1343 = vmatmul.mubr.bf16.gmra.mrb[0].mxu0 %v1282
      %v1344 = vpop.f32.mrb[0].mxu0
      %v1345 = vadd.f32 0.0, %v1344
      %v1346 = vpop.f32.mrb[0].mxu0
      %v1347 = vpop.f32.mrb[0].mxu0
      %v1348 = vadd.f32 0.0, %v1347
      %v1349 = vpop.f32.mrb[0].mxu0
      %1350 = vmatprep.mubr.bf16.mxu0 0
      %1351 = vmatmul.mubr.bf16.gmra.mrb[0].mxu0 %v1285
      %v1352 = vpop.f32.mrb[0].mxu0
      %v1353 = vadd.f32 0.0, %v1352
      %v1354 = vpop.f32.mrb[0].mxu0
      %v1355 = vpop.f32.mrb[0].mxu0
      %v1356 = vadd.f32 0.0, %v1355
      %v1357 = vpop.f32.mrb[0].mxu0
      %1358 = vmatprep.mubr.bf16.mxu0 0
      %1359 = vmatmul.mubr.bf16.gmra.mrb[0].mxu0 %v1288
      %v1360 = vpop.f32.mrb[0].mxu0
      %v1361 = vadd.f32 0.0, %v1360
      %v1362 = vpop.f32.mrb[0].mxu0
      %v1363 = vpop.f32.mrb[0].mxu0
      %v1364 = vadd.f32 0.0, %v1363
      %v1365 = vpop.f32.mrb[0].mxu0
      %1366 = vdwg.mxu0
      %v1367 = vmul.f32 %v1337, 0.17677669
      %v1368 = vmul.f32 %v1340, 0.17677669
      %v1369 = vmul.f32 %v1345, 0.17677669
      %v1370 = vmul.f32 %v1348, 0.17677669
      %v1371 = vmul.f32 %v1353, 0.17677669
      %v1372 = vmul.f32 %v1356, 0.17677669
      %v1373 = vmul.f32 %v1361, 0.17677669
      %v1374 = vmul.f32 %v1364, 0.17677669
      %vm1375 = vcmask 523264
      %v1376 = vsel %vm1375, %v1367, -inf
      %1377 = vmax.xlane.f32.xlu0 %v1376
      %v1378 = vpop.xlane.xlu0 %1377
      %v1379 = vsel %vm1375, %v1368, -inf
      %1380 = vmax.xlane.f32.xlu0 %v1379
      %v1381 = vpop.xlane.xlu0 %1380
      %v1382 = vsel %vm1375, %v1369, -inf
      %1383 = vmax.xlane.f32.xlu0 %v1382
      %v1384 = vpop.xlane.xlu0 %1383
      %v1385 = vsel %vm1375, %v1370, -inf
      %1386 = vmax.xlane.f32.xlu0 %v1385
      %v1387 = vpop.xlane.xlu0 %1386
      %v1388 = vsel %vm1375, %v1371, -inf
      %1389 = vmax.xlane.f32.xlu0 %v1388
      %v1390 = vpop.xlane.xlu0 %1389
      %v1391 = vsel %vm1375, %v1372, -inf
      %1392 = vmax.xlane.f32.xlu0 %v1391
      %v1393 = vpop.xlane.xlu0 %1392
      %v1394 = vsel %vm1375, %v1373, -inf
      %1395 = vmax.xlane.f32.xlu0 %v1394
      %v1396 = vpop.xlane.xlu0 %1395
      %v1397 = vsel %vm1375, %v1374, -inf
      %1398 = vmax.xlane.f32.xlu0 %v1397
      %v1399 = vpop.xlane.xlu0 %1398
      %v1400 = vsub.f32 %v1367, %v1378
      %v1401 = vsub.f32 %v1368, %v1381
      %v1402 = vsub.f32 %v1369, %v1384
      %v1403 = vsub.f32 %v1370, %v1387
      %v1404 = vsub.f32 %v1371, %v1390
      %v1405 = vsub.f32 %v1372, %v1393
      %v1406 = vsub.f32 %v1373, %v1396
      %v1407 = vsub.f32 %v1374, %v1399
      %v1408 = vmul.f32 %v1400, 1.442695
      %v1409 = vpow.pop %v1408
      %v1410 = vmul.f32 %v1401, 1.442695
      %v1411 = vpow.pop %v1410
      %v1412 = vmul.f32 %v1402, 1.442695
      %v1413 = vpow.pop %v1412
      %v1414 = vmul.f32 %v1403, 1.442695
      %v1415 = vpow.pop %v1414
      %v1416 = vmul.f32 %v1404, 1.442695
      %v1417 = vpow.pop %v1416
      %v1418 = vmul.f32 %v1405, 1.442695
      %v1419 = vpow.pop %v1418
      %v1420 = vmul.f32 %v1406, 1.442695
      %v1421 = vpow.pop %v1420
      %v1422 = vmul.f32 %v1407, 1.442695
      %v1423 = vpow.pop %v1422
      %v1424 = vsel %vm1375, %v1409, 0.0
      %1425 = vadd.xlane.f32.xlu0 %v1424
      %v1426 = vpop.xlane.xlu0 %1425
      %v1427 = vsel %vm1375, %v1411, 0.0
      %1428 = vadd.xlane.f32.xlu0 %v1427
      %v1429 = vpop.xlane.xlu0 %1428
      %v1430 = vsel %vm1375, %v1413, 0.0
      %1431 = vadd.xlane.f32.xlu0 %v1430
      %v1432 = vpop.xlane.xlu0 %1431
      %v1433 = vsel %vm1375, %v1415, 0.0
      %1434 = vadd.xlane.f32.xlu0 %v1433
      %v1435 = vpop.xlane.xlu0 %1434
      %v1436 = vsel %vm1375, %v1417, 0.0
      %1437 = vadd.xlane.f32.xlu0 %v1436
      %v1438 = vpop.xlane.xlu0 %1437
      %v1439 = vsel %vm1375, %v1419, 0.0
      %1440 = vadd.xlane.f32.xlu0 %v1439
      %v1441 = vpop.xlane.xlu0 %1440
      %v1442 = vsel %vm1375, %v1421, 0.0
      %1443 = vadd.xlane.f32.xlu0 %v1442
      %v1444 = vpop.xlane.xlu0 %1443
      %v1445 = vsel %vm1375, %v1423, 0.0
      %1446 = vadd.xlane.f32.xlu0 %v1445
      %v1447 = vpop.xlane.xlu0 %1446
      %v1448 = vrcp.pop %v1426
      %v1449 = vrcp.pop %v1429
      %v1450 = vrcp.pop %v1432
      %v1451 = vrcp.pop %v1435
      %v1452 = vrcp.pop %v1438
      %v1453 = vrcp.pop %v1441
      %v1454 = vrcp.pop %v1444
      %v1455 = vrcp.pop %v1447
      %v1456 = vmul.f32 %v1409, %v1448
      %v1457 = vmul.f32 %v1411, %v1449
      %v1458 = vmul.f32 %v1413, %v1450
      %v1459 = vmul.f32 %v1415, %v1451
      %v1460 = vmul.f32 %v1417, %v1452
      %v1461 = vmul.f32 %v1419, %v1453
      %v1462 = vmul.f32 %v1421, %v1454
      %v1463 = vmul.f32 %v1423, %v1455
      %v1464 = vpack.c.bf16 %v1457, %v1456
      %v1465 = vpack.c.bf16 %v1459, %v1458
      %v1466 = vpack.c.bf16 %v1461, %v1460
      %v1467 = vpack.c.bf16 %v1463, %v1462
      %v1469 = vsel %vm1375, %v1464, 0
      %v1472 = vsel %vm1375, %v1465, 0
      %v1475 = vsel %vm1375, %v1466, 0
      %v1478 = vsel %vm1375, %v1467, 0
      %1480 = vmatprep.subr.bf16.mxu0 0
      %1481 = vmatpush1.bf16.msra.mxu0 %v1251
      %1482 = vmatprep.subr.bf16.mxu0 0
      %1483 = vmatpush1.bf16.msra.mxu0 %v1254
      %1484 = vmatprep.subr.bf16.mxu0 0
      %1485 = vmatpush1.bf16.msra.mxu0 %v1257
      %1486 = vmatprep.subr.bf16.mxu0 0
      %1487 = vmatpush1.bf16.msra.mxu0 %v1260
      %1488 = vmatprep.subr.bf16.mxu0 0
      %1489 = vmatpush1.bf16.msra.mxu0 0
      %1490 = vmatprep.subr.bf16.mxu0 0
      %1491 = vmatpush1.bf16.msra.mxu0 0
      %1492 = vmatprep.subr.bf16.mxu0 0
      %1493 = vmatpush1.bf16.msra.mxu0 0
      %1494 = vmatprep.subr.bf16.mxu0 0
      %1495 = vmatpush1.bf16.msra.mxu0 0
      %1496 = vmatprep.subr.bf16.mxu0 0
      %1497 = vmatpush1.bf16.msra.mxu0 0
      %1498 = vmatprep.subr.bf16.mxu0 0
      %1499 = vmatpush1.bf16.msra.mxu0 0
      %1500 = vmatprep.subr.bf16.mxu0 0
      %1501 = vmatpush1.bf16.msra.mxu0 0
      %1502 = vmatprep.subr.bf16.mxu0 0
      %1503 = vmatpush1.bf16.msra.mxu0 0
      %1504 = vmatprep.subr.bf16.mxu0 0
      %1505 = vmatpush1.bf16.msra.mxu0 0
      %1506 = vmatprep.subr.bf16.mxu0 0
      %1507 = vmatpush1.bf16.msra.mxu0 0
      %1508 = vmatprep.subr.bf16.mxu0 0
      %1509 = vmatpush1.bf16.msra.mxu0 0
      %1510 = vmatprep.subr.bf16.mxu0 0
      %1511 = vmatpush1.bf16.msra.mxu0 0
      %1512 = vmatprep.mubr.bf16.mxu0 0
      %1513 = vmatmul.mubr.bf16.gmra.mrb[0].mxu0 %v1469
      %v1514 = vpop.f32.mrb[0].mxu0
      %v1515 = vadd.f32 0.0, %v1514
      %v1516 = vpop.f32.mrb[0].mxu0
      %v1517 = vpop.f32.mrb[0].mxu0
      %v1518 = vadd.f32 0.0, %v1517
      %v1519 = vpop.f32.mrb[0].mxu0
      %1520 = vmatprep.mubr.bf16.mxu0 0
      %1521 = vmatmul.mubr.bf16.gmra.mrb[0].mxu0 %v1472
      %v1522 = vpop.f32.mrb[0].mxu0
      %v1523 = vadd.f32 0.0, %v1522
      %v1524 = vpop.f32.mrb[0].mxu0
      %v1525 = vpop.f32.mrb[0].mxu0
      %v1526 = vadd.f32 0.0, %v1525
      %v1527 = vpop.f32.mrb[0].mxu0
      %1528 = vmatprep.mubr.bf16.mxu0 0
      %1529 = vmatmul.mubr.bf16.gmra.mrb[0].mxu0 %v1475
      %v1530 = vpop.f32.mrb[0].mxu0
      %v1531 = vadd.f32 0.0, %v1530
      %v1532 = vpop.f32.mrb[0].mxu0
      %v1533 = vpop.f32.mrb[0].mxu0
      %v1534 = vadd.f32 0.0, %v1533
      %v1535 = vpop.f32.mrb[0].mxu0
      %1536 = vmatprep.mubr.bf16.mxu0 0
      %1537 = vmatmul.mubr.bf16.gmra.mrb[0].mxu0 %v1478
      %v1538 = vpop.f32.mrb[0].mxu0
      %v1539 = vadd.f32 0.0, %v1538
      %v1540 = vpop.f32.mrb[0].mxu0
      %v1541 = vpop.f32.mrb[0].mxu0
      %v1542 = vadd.f32 0.0, %v1541
      %v1543 = vpop.f32.mrb[0].mxu0
      %1544 = vdwg.mxu0
      %v1545 = vpack.c.bf16 %v1518, %v1515
      %v1546 = vpack.c.bf16 %v1526, %v1523
      %v1547 = vpack.c.bf16 %v1534, %v1531
      %v1548 = vpack.c.bf16 %v1542, %v1539
      %1553 = vrot.lane.b32.xlu0 %v1249, 96
      %v1554 = vpop.permute.xlu0 %1553
      %1555 = vrot.lane.b32.xlu0 %v1252, 96
      %v1556 = vpop.permute.xlu0 %1555
      %1557 = vrot.lane.b32.xlu0 %v1255, 96
      %v1558 = vpop.permute.xlu0 %1557
      %1559 = vrot.lane.b32.xlu0 %v1258, 96
      %v1560 = vpop.permute.xlu0 %1559
      %1565 = vrot.lane.b32.xlu0 %v1250, 96
      %v1566 = vpop.permute.xlu0 %1565
      %1567 = vrot.lane.b32.xlu0 %v1253, 96
      %v1568 = vpop.permute.xlu0 %1567
      %1569 = vrot.lane.b32.xlu0 %v1256, 96
      %v1570 = vpop.permute.xlu0 %1569
      %1571 = vrot.lane.b32.xlu0 %v1259, 96
      %v1572 = vpop.permute.xlu0 %1571
      %v1574 = vsel %vm1277, %v1554, 0
      %v1577 = vsel %vm1277, %v1556, 0
      %v1580 = vsel %vm1277, %v1558, 0
      %v1583 = vsel %vm1277, %v1560, 0
      %v1586 = vsel %vm1277, %v1566, 0
      %v1589 = vsel %vm1277, %v1568, 0
      %v1592 = vsel %vm1277, %v1570, 0
      %v1595 = vsel %vm1277, %v1572, 0
      %1597 = vmatprep.subr.bf16.mxu0 0
      %1598 = vmatpush1.bf16.xpose.msra.mxu0 %v1586
      %1599 = vmatprep.subr.bf16.mxu0 0
      %1600 = vmatpush1.bf16.xpose.msra.mxu0 %v1589
      %1601 = vmatprep.subr.bf16.mxu0 0
      %1602 = vmatpush1.bf16.xpose.msra.mxu0 %v1592
      %1603 = vmatprep.subr.bf16.mxu0 0
      %1604 = vmatpush1.bf16.xpose.msra.mxu0 %v1595
      %1605 = vmatprep.subr.bf16.mxu0 0
      %1606 = vmatpush1.bf16.xpose.msra.mxu0 0
      %1607 = vmatprep.subr.bf16.mxu0 0
      %1608 = vmatpush1.bf16.xpose.msra.mxu0 0
      %1609 = vmatprep.subr.bf16.mxu0 0
      %1610 = vmatpush1.bf16.xpose.msra.mxu0 0
      %1611 = vmatprep.subr.bf16.mxu0 0
      %1612 = vmatpush1.bf16.xpose.msra.mxu0 0
      %1613 = vmatprep.subr.bf16.mxu0 0
      %1614 = vmatpush1.bf16.xpose.msra.mxu0 0
      %1615 = vmatprep.subr.bf16.mxu0 0
      %1616 = vmatpush1.bf16.xpose.msra.mxu0 0
      %1617 = vmatprep.subr.bf16.mxu0 0
      %1618 = vmatpush1.bf16.xpose.msra.mxu0 0
      %1619 = vmatprep.subr.bf16.mxu0 0
      %1620 = vmatpush1.bf16.xpose.msra.mxu0 0
      %1621 = vmatprep.subr.bf16.mxu0 0
      %1622 = vmatpush1.bf16.xpose.msra.mxu0 0
      %1623 = vmatprep.subr.bf16.mxu0 0
      %1624 = vmatpush1.bf16.xpose.msra.mxu0 0
      %1625 = vmatprep.subr.bf16.mxu0 0
      %1626 = vmatpush1.bf16.xpose.msra.mxu0 0
      %1627 = vmatprep.subr.bf16.mxu0 0
      %1628 = vmatpush1.bf16.xpose.msra.mxu0 0
      %1629 = vmatprep.mubr.bf16.mxu0 0
      %1630 = vmatmul.mubr.bf16.gmra.mrb[0].mxu0 %v1574
      %v1631 = vpop.f32.mrb[0].mxu0
      %v1632 = vadd.f32 0.0, %v1631
      %v1633 = vpop.f32.mrb[0].mxu0
      %v1634 = vpop.f32.mrb[0].mxu0
      %v1635 = vadd.f32 0.0, %v1634
      %v1636 = vpop.f32.mrb[0].mxu0
      %1637 = vmatprep.mubr.bf16.mxu0 0
      %1638 = vmatmul.mubr.bf16.gmra.mrb[0].mxu0 %v1577
      %v1639 = vpop.f32.mrb[0].mxu0
      %v1640 = vadd.f32 0.0, %v1639
      %v1641 = vpop.f32.mrb[0].mxu0
      %v1642 = vpop.f32.mrb[0].mxu0
      %v1643 = vadd.f32 0.0, %v1642
      %v1644 = vpop.f32.mrb[0].mxu0
      %1645 = vmatprep.mubr.bf16.mxu0 0
      %1646 = vmatmul.mubr.bf16.gmra.mrb[0].mxu0 %v1580
      %v1647 = vpop.f32.mrb[0].mxu0
      %v1648 = vadd.f32 0.0, %v1647
      %v1649 = vpop.f32.mrb[0].mxu0
      %v1650 = vpop.f32.mrb[0].mxu0
      %v1651 = vadd.f32 0.0, %v1650
      %v1652 = vpop.f32.mrb[0].mxu0
      %1653 = vmatprep.mubr.bf16.mxu0 0
      %1654 = vmatmul.mubr.bf16.gmra.mrb[0].mxu0 %v1583
      %v1655 = vpop.f32.mrb[0].mxu0
      %v1656 = vadd.f32 0.0, %v1655
      %v1657 = vpop.f32.mrb[0].mxu0
      %v1658 = vpop.f32.mrb[0].mxu0
      %v1659 = vadd.f32 0.0, %v1658
      %v1660 = vpop.f32.mrb[0].mxu0
      %1661 = vdwg.mxu0
      %v1662 = vmul.f32 %v1632, 0.17677669
      %v1663 = vmul.f32 %v1635, 0.17677669
      %v1664 = vmul.f32 %v1640, 0.17677669
      %v1665 = vmul.f32 %v1643, 0.17677669
      %v1666 = vmul.f32 %v1648, 0.17677669
      %v1667 = vmul.f32 %v1651, 0.17677669
      %v1668 = vmul.f32 %v1656, 0.17677669
      %v1669 = vmul.f32 %v1659, 0.17677669
      %v1670 = vsel %vm1375, %v1662, -inf
      %1671 = vmax.xlane.f32.xlu0 %v1670
      %v1672 = vpop.xlane.xlu0 %1671
      %v1673 = vsel %vm1375, %v1663, -inf
      %1674 = vmax.xlane.f32.xlu0 %v1673
      %v1675 = vpop.xlane.xlu0 %1674
      %v1676 = vsel %vm1375, %v1664, -inf
      %1677 = vmax.xlane.f32.xlu0 %v1676
      %v1678 = vpop.xlane.xlu0 %1677
      %v1679 = vsel %vm1375, %v1665, -inf
      %1680 = vmax.xlane.f32.xlu0 %v1679
      %v1681 = vpop.xlane.xlu0 %1680
      %v1682 = vsel %vm1375, %v1666, -inf
      %1683 = vmax.xlane.f32.xlu0 %v1682
      %v1684 = vpop.xlane.xlu0 %1683
      %v1685 = vsel %vm1375, %v1667, -inf
      %1686 = vmax.xlane.f32.xlu0 %v1685
      %v1687 = vpop.xlane.xlu0 %1686
      %v1688 = vsel %vm1375, %v1668, -inf
      %1689 = vmax.xlane.f32.xlu0 %v1688
      %v1690 = vpop.xlane.xlu0 %1689
      %v1691 = vsel %vm1375, %v1669, -inf
      %1692 = vmax.xlane.f32.xlu0 %v1691
      %v1693 = vpop.xlane.xlu0 %1692
      %v1694 = vsub.f32 %v1662, %v1672
      %v1695 = vsub.f32 %v1663, %v1675
      %v1696 = vsub.f32 %v1664, %v1678
      %v1697 = vsub.f32 %v1665, %v1681
      %v1698 = vsub.f32 %v1666, %v1684
      %v1699 = vsub.f32 %v1667, %v1687
      %v1700 = vsub.f32 %v1668, %v1690
      %v1701 = vsub.f32 %v1669, %v1693
      %v1702 = vmul.f32 %v1694, 1.442695
      %v1703 = vpow.pop %v1702
      %v1704 = vmul.f32 %v1695, 1.442695
      %v1705 = vpow.pop %v1704
      %v1706 = vmul.f32 %v1696, 1.442695
      %v1707 = vpow.pop %v1706
      %v1708 = vmul.f32 %v1697, 1.442695
      %v1709 = vpow.pop %v1708
      %v1710 = vmul.f32 %v1698, 1.442695
      %v1711 = vpow.pop %v1710
      %v1712 = vmul.f32 %v1699, 1.442695
      %v1713 = vpow.pop %v1712
      %v1714 = vmul.f32 %v1700, 1.442695
      %v1715 = vpow.pop %v1714
      %v1716 = vmul.f32 %v1701, 1.442695
      %v1717 = vpow.pop %v1716
      %v1718 = vsel %vm1375, %v1703, 0.0
      %1719 = vadd.xlane.f32.xlu0 %v1718
      %v1720 = vpop.xlane.xlu0 %1719
      %v1721 = vsel %vm1375, %v1705, 0.0
      %1722 = vadd.xlane.f32.xlu0 %v1721
      %v1723 = vpop.xlane.xlu0 %1722
      %v1724 = vsel %vm1375, %v1707, 0.0
      %1725 = vadd.xlane.f32.xlu0 %v1724
      %v1726 = vpop.xlane.xlu0 %1725
      %v1727 = vsel %vm1375, %v1709, 0.0
      %1728 = vadd.xlane.f32.xlu0 %v1727
      %v1729 = vpop.xlane.xlu0 %1728
      %v1730 = vsel %vm1375, %v1711, 0.0
      %1731 = vadd.xlane.f32.xlu0 %v1730
      %v1732 = vpop.xlane.xlu0 %1731
      %v1733 = vsel %vm1375, %v1713, 0.0
      %1734 = vadd.xlane.f32.xlu0 %v1733
      %v1735 = vpop.xlane.xlu0 %1734
      %v1736 = vsel %vm1375, %v1715, 0.0
      %1737 = vadd.xlane.f32.xlu0 %v1736
      %v1738 = vpop.xlane.xlu0 %1737
      %v1739 = vsel %vm1375, %v1717, 0.0
      %1740 = vadd.xlane.f32.xlu0 %v1739
      %v1741 = vpop.xlane.xlu0 %1740
      %v1742 = vrcp.pop %v1720
      %v1743 = vrcp.pop %v1723
      %v1744 = vrcp.pop %v1726
      %v1745 = vrcp.pop %v1729
      %v1746 = vrcp.pop %v1732
      %v1747 = vrcp.pop %v1735
      %v1748 = vrcp.pop %v1738
      %v1749 = vrcp.pop %v1741
      %v1750 = vmul.f32 %v1703, %v1742
      %v1751 = vmul.f32 %v1705, %v1743
      %v1752 = vmul.f32 %v1707, %v1744
      %v1753 = vmul.f32 %v1709, %v1745
      %v1754 = vmul.f32 %v1711, %v1746
      %v1755 = vmul.f32 %v1713, %v1747
      %v1756 = vmul.f32 %v1715, %v1748
      %v1757 = vmul.f32 %v1717, %v1749
      %v1758 = vpack.c.bf16 %v1751, %v1750
      %v1759 = vpack.c.bf16 %v1753, %v1752
      %v1760 = vpack.c.bf16 %v1755, %v1754
      %v1761 = vpack.c.bf16 %v1757, %v1756
      %1766 = vrot.lane.b32.xlu0 %v1251, 96
      %v1767 = vpop.permute.xlu0 %1766
      %1768 = vrot.lane.b32.xlu0 %v1254, 96
      %v1769 = vpop.permute.xlu0 %1768
      %1770 = vrot.lane.b32.xlu0 %v1257, 96
      %v1771 = vpop.permute.xlu0 %1770
      %1772 = vrot.lane.b32.xlu0 %v1260, 96
      %v1773 = vpop.permute.xlu0 %1772
      %v1779 = vsel %vm1375, %v1758, 0
      %v1782 = vsel %vm1375, %v1759, 0
      %v1785 = vsel %vm1375, %v1760, 0
      %v1788 = vsel %vm1375, %v1761, 0
      %1790 = vmatprep.subr.bf16.mxu0 0
      %1791 = vmatpush1.bf16.msra.mxu0 %v1767
      %1792 = vmatprep.subr.bf16.mxu0 0
      %1793 = vmatpush1.bf16.msra.mxu0 %v1769
      %1794 = vmatprep.subr.bf16.mxu0 0
      %1795 = vmatpush1.bf16.msra.mxu0 %v1771
      %1796 = vmatprep.subr.bf16.mxu0 0
      %1797 = vmatpush1.bf16.msra.mxu0 %v1773
      %1798 = vmatprep.subr.bf16.mxu0 0
      %1799 = vmatpush1.bf16.msra.mxu0 0
      %1800 = vmatprep.subr.bf16.mxu0 0
      %1801 = vmatpush1.bf16.msra.mxu0 0
      %1802 = vmatprep.subr.bf16.mxu0 0
      %1803 = vmatpush1.bf16.msra.mxu0 0
      %1804 = vmatprep.subr.bf16.mxu0 0
      %1805 = vmatpush1.bf16.msra.mxu0 0
      %1806 = vmatprep.subr.bf16.mxu0 0
      %1807 = vmatpush1.bf16.msra.mxu0 0
      %1808 = vmatprep.subr.bf16.mxu0 0
      %1809 = vmatpush1.bf16.msra.mxu0 0
      %1810 = vmatprep.subr.bf16.mxu0 0
      %1811 = vmatpush1.bf16.msra.mxu0 0
      %1812 = vmatprep.subr.bf16.mxu0 0
      %1813 = vmatpush1.bf16.msra.mxu0 0
      %1814 = vmatprep.subr.bf16.mxu0 0
      %1815 = vmatpush1.bf16.msra.mxu0 0
      %1816 = vmatprep.subr.bf16.mxu0 0
      %1817 = vmatpush1.bf16.msra.mxu0 0
      %1818 = vmatprep.subr.bf16.mxu0 0
      %1819 = vmatpush1.bf16.msra.mxu0 0
      %1820 = vmatprep.subr.bf16.mxu0 0
      %1821 = vmatpush1.bf16.msra.mxu0 0
      %1822 = vmatprep.mubr.bf16.mxu0 0
      %1823 = vmatmul.mubr.bf16.gmra.mrb[0].mxu0 %v1779
      %v1824 = vpop.f32.mrb[0].mxu0
      %v1825 = vadd.f32 0.0, %v1824
      %v1826 = vpop.f32.mrb[0].mxu0
      %v1827 = vpop.f32.mrb[0].mxu0
      %v1828 = vadd.f32 0.0, %v1827
      %v1829 = vpop.f32.mrb[0].mxu0
      %1830 = vmatprep.mubr.bf16.mxu0 0
      %1831 = vmatmul.mubr.bf16.gmra.mrb[0].mxu0 %v1782
      %v1832 = vpop.f32.mrb[0].mxu0
      %v1833 = vadd.f32 0.0, %v1832
      %v1834 = vpop.f32.mrb[0].mxu0
      %v1835 = vpop.f32.mrb[0].mxu0
      %v1836 = vadd.f32 0.0, %v1835
      %v1837 = vpop.f32.mrb[0].mxu0
      %1838 = vmatprep.mubr.bf16.mxu0 0
      %1839 = vmatmul.mubr.bf16.gmra.mrb[0].mxu0 %v1785
      %v1840 = vpop.f32.mrb[0].mxu0
      %v1841 = vadd.f32 0.0, %v1840
      %v1842 = vpop.f32.mrb[0].mxu0
      %v1843 = vpop.f32.mrb[0].mxu0
      %v1844 = vadd.f32 0.0, %v1843
      %v1845 = vpop.f32.mrb[0].mxu0
      %1846 = vmatprep.mubr.bf16.mxu0 0
      %1847 = vmatmul.mubr.bf16.gmra.mrb[0].mxu0 %v1788
      %v1848 = vpop.f32.mrb[0].mxu0
      %v1849 = vadd.f32 0.0, %v1848
      %v1850 = vpop.f32.mrb[0].mxu0
      %v1851 = vpop.f32.mrb[0].mxu0
      %v1852 = vadd.f32 0.0, %v1851
      %v1853 = vpop.f32.mrb[0].mxu0
      %1854 = vdwg.mxu0
      %v1855 = vpack.c.bf16 %v1828, %v1825
      %v1856 = vpack.c.bf16 %v1836, %v1833
      %v1857 = vpack.c.bf16 %v1844, %v1841
      %v1858 = vpack.c.bf16 %v1852, %v1849
      %v1863 = vunpack.c.l.b16 %v1265
      %v1864 = vunpack.c.l.b16 %v1266
      %v1865 = vunpack.c.l.b16 %v1267
      %v1866 = vunpack.c.l.b16 %v1268
      %v1867 = vpack.c.b16 %v1864, %v1863
      %v1868 = vpack.c.b16 %v1866, %v1865
      %v1872 = vsel %vm1277, %v1855, 0
      %v1875 = vsel %vm1277, %v1856, 0
      %v1878 = vsel %vm1277, %v1857, 0
      %v1881 = vsel %vm1277, %v1858, 0
      %1883 = vmatprep.subr.bf16.mxu0 0
      %1884 = vmatpush1.bf16.msra.mxu0 %v1867
      %1885 = vmatprep.subr.bf16.mxu0 0
      %1886 = vmatpush1.bf16.msra.mxu0 %v1868
      %1887 = vmatprep.subr.bf16.mxu0 0
      %1888 = vmatpush1.bf16.msra.mxu0 0
      %1889 = vmatprep.subr.bf16.mxu0 0
      %1890 = vmatpush1.bf16.msra.mxu0 0
      %1891 = vmatprep.subr.bf16.mxu0 0
      %1892 = vmatpush1.bf16.msra.mxu0 0
      %1893 = vmatprep.subr.bf16.mxu0 0
      %1894 = vmatpush1.bf16.msra.mxu0 0
      %1895 = vmatprep.subr.bf16.mxu0 0
      %1896 = vmatpush1.bf16.msra.mxu0 0
      %1897 = vmatprep.subr.bf16.mxu0 0
      %1898 = vmatpush1.bf16.msra.mxu0 0
      %1899 = vmatprep.subr.bf16.mxu0 0
      %1900 = vmatpush1.bf16.msra.mxu0 0
      %1901 = vmatprep.subr.bf16.mxu0 0
      %1902 = vmatpush1.bf16.msra.mxu0 0
      %1903 = vmatprep.subr.bf16.mxu0 0
      %1904 = vmatpush1.bf16.msra.mxu0 0
      %1905 = vmatprep.subr.bf16.mxu0 0
      %1906 = vmatpush1.bf16.msra.mxu0 0
      %1907 = vmatprep.subr.bf16.mxu0 0
      %1908 = vmatpush1.bf16.msra.mxu0 0
      %1909 = vmatprep.subr.bf16.mxu0 0
      %1910 = vmatpush1.bf16.msra.mxu0 0
      %1911 = vmatprep.subr.bf16.mxu0 0
      %1912 = vmatpush1.bf16.msra.mxu0 0
      %1913 = vmatprep.subr.bf16.mxu0 0
      %1914 = vmatpush1.bf16.msra.mxu0 0
      %1915 = vmatprep.mubr.bf16.mxu0 0
      %1916 = vmatmul.mubr.bf16.gmra.mrb[0].mxu0 %v1872
      %v1917 = vpop.f32.mrb[0].mxu0
      %v1918 = vadd.f32 0.0, %v1917
      %v1919 = vpop.f32.mrb[0].mxu0
      %v1920 = vpop.f32.mrb[0].mxu0
      %v1921 = vadd.f32 0.0, %v1920
      %v1922 = vpop.f32.mrb[0].mxu0
      %1923 = vmatprep.mubr.bf16.mxu0 0
      %1924 = vmatmul.mubr.bf16.gmra.mrb[0].mxu0 %v1875
      %v1925 = vpop.f32.mrb[0].mxu0
      %v1926 = vadd.f32 0.0, %v1925
      %v1927 = vpop.f32.mrb[0].mxu0
      %v1928 = vpop.f32.mrb[0].mxu0
      %v1929 = vadd.f32 0.0, %v1928
      %v1930 = vpop.f32.mrb[0].mxu0
      %1931 = vmatprep.mubr.bf16.mxu0 0
      %1932 = vmatmul.mubr.bf16.gmra.mrb[0].mxu0 %v1878
      %v1933 = vpop.f32.mrb[0].mxu0
      %v1934 = vadd.f32 0.0, %v1933
      %v1935 = vpop.f32.mrb[0].mxu0
      %v1936 = vpop.f32.mrb[0].mxu0
      %v1937 = vadd.f32 0.0, %v1936
      %v1938 = vpop.f32.mrb[0].mxu0
      %1939 = vmatprep.mubr.bf16.mxu0 0
      %1940 = vmatmul.mubr.bf16.gmra.mrb[0].mxu0 %v1881
      %v1941 = vpop.f32.mrb[0].mxu0
      %v1942 = vadd.f32 0.0, %v1941
      %v1943 = vpop.f32.mrb[0].mxu0
      %v1944 = vpop.f32.mrb[0].mxu0
      %v1945 = vadd.f32 0.0, %v1944
      %v1946 = vpop.f32.mrb[0].mxu0
      %1947 = vdwg.mxu0
      %v1952 = vunpack.c.l.b16 %v1261
      %v1953 = vunpack.c.l.b16 %v1262
      %v1954 = vunpack.c.l.b16 %v1263
      %v1955 = vunpack.c.l.b16 %v1264
      %v1956 = vpack.c.b16 %v1953, %v1952
      %v1957 = vpack.c.b16 %v1955, %v1954
      %v1961 = vsel %vm1277, %v1545, 0
      %v1964 = vsel %vm1277, %v1546, 0
      %v1967 = vsel %vm1277, %v1547, 0
      %v1970 = vsel %vm1277, %v1548, 0
      %1972 = vmatprep.subr.bf16.mxu0 0
      %1973 = vmatpush1.bf16.msra.mxu0 %v1956
      %1974 = vmatprep.subr.bf16.mxu0 0
      %1975 = vmatpush1.bf16.msra.mxu0 %v1957
      %1976 = vmatprep.subr.bf16.mxu0 0
      %1977 = vmatpush1.bf16.msra.mxu0 0
      %1978 = vmatprep.subr.bf16.mxu0 0
      %1979 = vmatpush1.bf16.msra.mxu0 0
      %1980 = vmatprep.subr.bf16.mxu0 0
      %1981 = vmatpush1.bf16.msra.mxu0 0
      %1982 = vmatprep.subr.bf16.mxu0 0
      %1983 = vmatpush1.bf16.msra.mxu0 0
      %1984 = vmatprep.subr.bf16.mxu0 0
      %1985 = vmatpush1.bf16.msra.mxu0 0
      %1986 = vmatprep.subr.bf16.mxu0 0
      %1987 = vmatpush1.bf16.msra.mxu0 0
      %1988 = vmatprep.subr.bf16.mxu0 0
      %1989 = vmatpush1.bf16.msra.mxu0 0
      %1990 = vmatprep.subr.bf16.mxu0 0
      %1991 = vmatpush1.bf16.msra.mxu0 0
      %1992 = vmatprep.subr.bf16.mxu0 0
      %1993 = vmatpush1.bf16.msra.mxu0 0
      %1994 = vmatprep.subr.bf16.mxu0 0
      %1995 = vmatpush1.bf16.msra.mxu0 0
      %1996 = vmatprep.subr.bf16.mxu0 0
      %1997 = vmatpush1.bf16.msra.mxu0 0
      %1998 = vmatprep.subr.bf16.mxu0 0
      %1999 = vmatpush1.bf16.msra.mxu0 0
      %2000 = vmatprep.subr.bf16.mxu0 0
      %2001 = vmatpush1.bf16.msra.mxu0 0
      %2002 = vmatprep.subr.bf16.mxu0 0
      %2003 = vmatpush1.bf16.msra.mxu0 0
      %2004 = vmatprep.mubr.bf16.mxu0 0
      %2005 = vmatmul.mubr.bf16.gmra.mrb[0].mxu0 %v1961
      %v2006 = vpop.f32.mrb[0].mxu0
      %v2007 = vadd.f32 %v1918, %v2006
      %v2008 = vpop.f32.mrb[0].mxu0
      %v2009 = vpop.f32.mrb[0].mxu0
      %v2010 = vadd.f32 %v1921, %v2009
      %v2011 = vpop.f32.mrb[0].mxu0
      %2012 = vmatprep.mubr.bf16.mxu0 0
      %2013 = vmatmul.mubr.bf16.gmra.mrb[0].mxu0 %v1964
      %v2014 = vpop.f32.mrb[0].mxu0
      %v2015 = vadd.f32 %v1926, %v2014
      %v2016 = vpop.f32.mrb[0].mxu0
      %v2017 = vpop.f32.mrb[0].mxu0
      %v2018 = vadd.f32 %v1929, %v2017
      %v2019 = vpop.f32.mrb[0].mxu0
      %2020 = vmatprep.mubr.bf16.mxu0 0
      %2021 = vmatmul.mubr.bf16.gmra.mrb[0].mxu0 %v1967
      %v2022 = vpop.f32.mrb[0].mxu0
      %v2023 = vadd.f32 %v1934, %v2022
      %v2024 = vpop.f32.mrb[0].mxu0
      %v2025 = vpop.f32.mrb[0].mxu0
      %v2026 = vadd.f32 %v1937, %v2025
      %v2027 = vpop.f32.mrb[0].mxu0
      %2028 = vmatprep.mubr.bf16.mxu0 0
      %2029 = vmatmul.mubr.bf16.gmra.mrb[0].mxu0 %v1970
      %v2030 = vpop.f32.mrb[0].mxu0
      %v2031 = vadd.f32 %v1942, %v2030
      %v2032 = vpop.f32.mrb[0].mxu0
      %v2033 = vpop.f32.mrb[0].mxu0
      %v2034 = vadd.f32 %v1945, %v2033
      %v2035 = vpop.f32.mrb[0].mxu0
      %2036 = vdwg.mxu0
      %2037 = vrot.lane.b32.xlu0 %v1249, 64
      %v2038 = vpop.permute.xlu0 %2037
      %2039 = vrot.lane.b32.xlu0 %v1252, 64
      %v2040 = vpop.permute.xlu0 %2039
      %2041 = vrot.lane.b32.xlu0 %v1255, 64
      %v2042 = vpop.permute.xlu0 %2041
      %2043 = vrot.lane.b32.xlu0 %v1258, 64
      %v2044 = vpop.permute.xlu0 %2043
      %2045 = vrot.lane.b32.xlu0 %v1250, 64
      %v2046 = vpop.permute.xlu0 %2045
      %2047 = vrot.lane.b32.xlu0 %v1253, 64
      %v2048 = vpop.permute.xlu0 %2047
      %2049 = vrot.lane.b32.xlu0 %v1256, 64
      %v2050 = vpop.permute.xlu0 %2049
      %2051 = vrot.lane.b32.xlu0 %v1259, 64
      %v2052 = vpop.permute.xlu0 %2051
      %v2054 = vsel %vm1277, %v2038, 0
      %v2057 = vsel %vm1277, %v2040, 0
      %v2060 = vsel %vm1277, %v2042, 0
      %v2063 = vsel %vm1277, %v2044, 0
      %v2066 = vsel %vm1277, %v2046, 0
      %v2069 = vsel %vm1277, %v2048, 0
      %v2072 = vsel %vm1277, %v2050, 0
      %v2075 = vsel %vm1277, %v2052, 0
      %2077 = vmatprep.subr.bf16.mxu0 0
      %2078 = vmatpush1.bf16.xpose.msra.mxu0 %v2066
      %2079 = vmatprep.subr.bf16.mxu0 0
      %2080 = vmatpush1.bf16.xpose.msra.mxu0 %v2069
      %2081 = vmatprep.subr.bf16.mxu0 0
      %2082 = vmatpush1.bf16.xpose.msra.mxu0 %v2072
      %2083 = vmatprep.subr.bf16.mxu0 0
      %2084 = vmatpush1.bf16.xpose.msra.mxu0 %v2075
      %2085 = vmatprep.subr.bf16.mxu0 0
      %2086 = vmatpush1.bf16.xpose.msra.mxu0 0
      %2087 = vmatprep.subr.bf16.mxu0 0
      %2088 = vmatpush1.bf16.xpose.msra.mxu0 0
      %2089 = vmatprep.subr.bf16.mxu0 0
      %2090 = vmatpush1.bf16.xpose.msra.mxu0 0
      %2091 = vmatprep.subr.bf16.mxu0 0
      %2092 = vmatpush1.bf16.xpose.msra.mxu0 0
      %2093 = vmatprep.subr.bf16.mxu0 0
      %2094 = vmatpush1.bf16.xpose.msra.mxu0 0
      %2095 = vmatprep.subr.bf16.mxu0 0
      %2096 = vmatpush1.bf16.xpose.msra.mxu0 0
      %2097 = vmatprep.subr.bf16.mxu0 0
      %2098 = vmatpush1.bf16.xpose.msra.mxu0 0
      %2099 = vmatprep.subr.bf16.mxu0 0
      %2100 = vmatpush1.bf16.xpose.msra.mxu0 0
      %2101 = vmatprep.subr.bf16.mxu0 0
      %2102 = vmatpush1.bf16.xpose.msra.mxu0 0
      %2103 = vmatprep.subr.bf16.mxu0 0
      %2104 = vmatpush1.bf16.xpose.msra.mxu0 0
      %2105 = vmatprep.subr.bf16.mxu0 0
      %2106 = vmatpush1.bf16.xpose.msra.mxu0 0
      %2107 = vmatprep.subr.bf16.mxu0 0
      %2108 = vmatpush1.bf16.xpose.msra.mxu0 0
      %2109 = vmatprep.mubr.bf16.mxu0 0
      %2110 = vmatmul.mubr.bf16.gmra.mrb[0].mxu0 %v2054
      %v2111 = vpop.f32.mrb[0].mxu0
      %v2112 = vadd.f32 0.0, %v2111
      %v2113 = vpop.f32.mrb[0].mxu0
      %v2114 = vpop.f32.mrb[0].mxu0
      %v2115 = vadd.f32 0.0, %v2114
      %v2116 = vpop.f32.mrb[0].mxu0
      %2117 = vmatprep.mubr.bf16.mxu0 0
      %2118 = vmatmul.mubr.bf16.gmra.mrb[0].mxu0 %v2057
      %v2119 = vpop.f32.mrb[0].mxu0
      %v2120 = vadd.f32 0.0, %v2119
      %v2121 = vpop.f32.mrb[0].mxu0
      %v2122 = vpop.f32.mrb[0].mxu0
      %v2123 = vadd.f32 0.0, %v2122
      %v2124 = vpop.f32.mrb[0].mxu0
      %2125 = vmatprep.mubr.bf16.mxu0 0
      %2126 = vmatmul.mubr.bf16.gmra.mrb[0].mxu0 %v2060
      %v2127 = vpop.f32.mrb[0].mxu0
      %v2128 = vadd.f32 0.0, %v2127
      %v2129 = vpop.f32.mrb[0].mxu0
      %v2130 = vpop.f32.mrb[0].mxu0
      %v2131 = vadd.f32 0.0, %v2130
      %v2132 = vpop.f32.mrb[0].mxu0
      %2133 = vmatprep.mubr.bf16.mxu0 0
      %2134 = vmatmul.mubr.bf16.gmra.mrb[0].mxu0 %v2063
      %v2135 = vpop.f32.mrb[0].mxu0
      %v2136 = vadd.f32 0.0, %v2135
      %v2137 = vpop.f32.mrb[0].mxu0
      %v2138 = vpop.f32.mrb[0].mxu0
      %v2139 = vadd.f32 0.0, %v2138
      %v2140 = vpop.f32.mrb[0].mxu0
      %2141 = vdwg.mxu0
      %v2142 = vmul.f32 %v2112, 0.17677669
      %v2143 = vmul.f32 %v2115, 0.17677669
      %v2144 = vmul.f32 %v2120, 0.17677669
      %v2145 = vmul.f32 %v2123, 0.17677669
      %v2146 = vmul.f32 %v2128, 0.17677669
      %v2147 = vmul.f32 %v2131, 0.17677669
      %v2148 = vmul.f32 %v2136, 0.17677669
      %v2149 = vmul.f32 %v2139, 0.17677669
      %v2150 = vsel %vm1375, %v2142, -inf
      %2151 = vmax.xlane.f32.xlu0 %v2150
      %v2152 = vpop.xlane.xlu0 %2151
      %v2153 = vsel %vm1375, %v2143, -inf
      %2154 = vmax.xlane.f32.xlu0 %v2153
      %v2155 = vpop.xlane.xlu0 %2154
      %v2156 = vsel %vm1375, %v2144, -inf
      %2157 = vmax.xlane.f32.xlu0 %v2156
      %v2158 = vpop.xlane.xlu0 %2157
      %v2159 = vsel %vm1375, %v2145, -inf
      %2160 = vmax.xlane.f32.xlu0 %v2159
      %v2161 = vpop.xlane.xlu0 %2160
      %v2162 = vsel %vm1375, %v2146, -inf
      %2163 = vmax.xlane.f32.xlu0 %v2162
      %v2164 = vpop.xlane.xlu0 %2163
      %v2165 = vsel %vm1375, %v2147, -inf
      %2166 = vmax.xlane.f32.xlu0 %v2165
      %v2167 = vpop.xlane.xlu0 %2166
      %v2168 = vsel %vm1375, %v2148, -inf
      %2169 = vmax.xlane.f32.xlu0 %v2168
      %v2170 = vpop.xlane.xlu0 %2169
      %v2171 = vsel %vm1375, %v2149, -inf
      %2172 = vmax.xlane.f32.xlu0 %v2171
      %v2173 = vpop.xlane.xlu0 %2172
      %v2174 = vsub.f32 %v2142, %v2152
      %v2175 = vsub.f32 %v2143, %v2155
      %v2176 = vsub.f32 %v2144, %v2158
      %v2177 = vsub.f32 %v2145, %v2161
      %v2178 = vsub.f32 %v2146, %v2164
      %v2179 = vsub.f32 %v2147, %v2167
      %v2180 = vsub.f32 %v2148, %v2170
      %v2181 = vsub.f32 %v2149, %v2173
      %v2182 = vmul.f32 %v2174, 1.442695
      %v2183 = vpow.pop %v2182
      %v2184 = vmul.f32 %v2175, 1.442695
      %v2185 = vpow.pop %v2184
      %v2186 = vmul.f32 %v2176, 1.442695
      %v2187 = vpow.pop %v2186
      %v2188 = vmul.f32 %v2177, 1.442695
      %v2189 = vpow.pop %v2188
      %v2190 = vmul.f32 %v2178, 1.442695
      %v2191 = vpow.pop %v2190
      %v2192 = vmul.f32 %v2179, 1.442695
      %v2193 = vpow.pop %v2192
      %v2194 = vmul.f32 %v2180, 1.442695
      %v2195 = vpow.pop %v2194
      %v2196 = vmul.f32 %v2181, 1.442695
      %v2197 = vpow.pop %v2196
      %v2198 = vsel %vm1375, %v2183, 0.0
      %2199 = vadd.xlane.f32.xlu0 %v2198
      %v2200 = vpop.xlane.xlu0 %2199
      %v2201 = vsel %vm1375, %v2185, 0.0
      %2202 = vadd.xlane.f32.xlu0 %v2201
      %v2203 = vpop.xlane.xlu0 %2202
      %v2204 = vsel %vm1375, %v2187, 0.0
      %2205 = vadd.xlane.f32.xlu0 %v2204
      %v2206 = vpop.xlane.xlu0 %2205
      %v2207 = vsel %vm1375, %v2189, 0.0
      %2208 = vadd.xlane.f32.xlu0 %v2207
      %v2209 = vpop.xlane.xlu0 %2208
      %v2210 = vsel %vm1375, %v2191, 0.0
      %2211 = vadd.xlane.f32.xlu0 %v2210
      %v2212 = vpop.xlane.xlu0 %2211
      %v2213 = vsel %vm1375, %v2193, 0.0
      %2214 = vadd.xlane.f32.xlu0 %v2213
      %v2215 = vpop.xlane.xlu0 %2214
      %v2216 = vsel %vm1375, %v2195, 0.0
      %2217 = vadd.xlane.f32.xlu0 %v2216
      %v2218 = vpop.xlane.xlu0 %2217
      %v2219 = vsel %vm1375, %v2197, 0.0
      %2220 = vadd.xlane.f32.xlu0 %v2219
      %v2221 = vpop.xlane.xlu0 %2220
      %v2222 = vrcp.pop %v2200
      %v2223 = vrcp.pop %v2203
      %v2224 = vrcp.pop %v2206
      %v2225 = vrcp.pop %v2209
      %v2226 = vrcp.pop %v2212
      %v2227 = vrcp.pop %v2215
      %v2228 = vrcp.pop %v2218
      %v2229 = vrcp.pop %v2221
      %v2230 = vmul.f32 %v2183, %v2222
      %v2231 = vmul.f32 %v2185, %v2223
      %v2232 = vmul.f32 %v2187, %v2224
      %v2233 = vmul.f32 %v2189, %v2225
      %v2234 = vmul.f32 %v2191, %v2226
      %v2235 = vmul.f32 %v2193, %v2227
      %v2236 = vmul.f32 %v2195, %v2228
      %v2237 = vmul.f32 %v2197, %v2229
      %v2238 = vpack.c.bf16 %v2231, %v2230
      %v2239 = vpack.c.bf16 %v2233, %v2232
      %v2240 = vpack.c.bf16 %v2235, %v2234
      %v2241 = vpack.c.bf16 %v2237, %v2236
      %2242 = vrot.lane.b32.xlu0 %v1251, 64
      %v2243 = vpop.permute.xlu0 %2242
      %2244 = vrot.lane.b32.xlu0 %v1254, 64
      %v2245 = vpop.permute.xlu0 %2244
      %2246 = vrot.lane.b32.xlu0 %v1257, 64
      %v2247 = vpop.permute.xlu0 %2246
      %2248 = vrot.lane.b32.xlu0 %v1260, 64
      %v2249 = vpop.permute.xlu0 %2248
      %v2255 = vsel %vm1375, %v2238, 0
      %v2258 = vsel %vm1375, %v2239, 0
      %v2261 = vsel %vm1375, %v2240, 0
      %v2264 = vsel %vm1375, %v2241, 0
      %2266 = vmatprep.subr.bf16.mxu0 0
      %2267 = vmatpush1.bf16.msra.mxu0 %v2243
      %2268 = vmatprep.subr.bf16.mxu0 0
      %2269 = vmatpush1.bf16.msra.mxu0 %v2245
      %2270 = vmatprep.subr.bf16.mxu0 0
      %2271 = vmatpush1.bf16.msra.mxu0 %v2247
      %2272 = vmatprep.subr.bf16.mxu0 0
      %2273 = vmatpush1.bf16.msra.mxu0 %v2249
      %2274 = vmatprep.subr.bf16.mxu0 0
      %2275 = vmatpush1.bf16.msra.mxu0 0
      %2276 = vmatprep.subr.bf16.mxu0 0
      %2277 = vmatpush1.bf16.msra.mxu0 0
      %2278 = vmatprep.subr.bf16.mxu0 0
      %2279 = vmatpush1.bf16.msra.mxu0 0
      %2280 = vmatprep.subr.bf16.mxu0 0
      %2281 = vmatpush1.bf16.msra.mxu0 0
      %2282 = vmatprep.subr.bf16.mxu0 0
      %2283 = vmatpush1.bf16.msra.mxu0 0
      %2284 = vmatprep.subr.bf16.mxu0 0
      %2285 = vmatpush1.bf16.msra.mxu0 0
      %2286 = vmatprep.subr.bf16.mxu0 0
      %2287 = vmatpush1.bf16.msra.mxu0 0
      %2288 = vmatprep.subr.bf16.mxu0 0
      %2289 = vmatpush1.bf16.msra.mxu0 0
      %2290 = vmatprep.subr.bf16.mxu0 0
      %2291 = vmatpush1.bf16.msra.mxu0 0
      %2292 = vmatprep.subr.bf16.mxu0 0
      %2293 = vmatpush1.bf16.msra.mxu0 0
      %2294 = vmatprep.subr.bf16.mxu0 0
      %2295 = vmatpush1.bf16.msra.mxu0 0
      %2296 = vmatprep.subr.bf16.mxu0 0
      %2297 = vmatpush1.bf16.msra.mxu0 0
      %2298 = vmatprep.mubr.bf16.mxu0 0
      %2299 = vmatmul.mubr.bf16.gmra.mrb[0].mxu0 %v2255
      %v2300 = vpop.f32.mrb[0].mxu0
      %v2301 = vadd.f32 0.0, %v2300
      %v2302 = vpop.f32.mrb[0].mxu0
      %v2303 = vpop.f32.mrb[0].mxu0
      %v2304 = vadd.f32 0.0, %v2303
      %v2305 = vpop.f32.mrb[0].mxu0
      %2306 = vmatprep.mubr.bf16.mxu0 0
      %2307 = vmatmul.mubr.bf16.gmra.mrb[0].mxu0 %v2258
      %v2308 = vpop.f32.mrb[0].mxu0
      %v2309 = vadd.f32 0.0, %v2308
      %v2310 = vpop.f32.mrb[0].mxu0
      %v2311 = vpop.f32.mrb[0].mxu0
      %v2312 = vadd.f32 0.0, %v2311
      %v2313 = vpop.f32.mrb[0].mxu0
      %2314 = vmatprep.mubr.bf16.mxu0 0
      %2315 = vmatmul.mubr.bf16.gmra.mrb[0].mxu0 %v2261
      %v2316 = vpop.f32.mrb[0].mxu0
      %v2317 = vadd.f32 0.0, %v2316
      %v2318 = vpop.f32.mrb[0].mxu0
      %v2319 = vpop.f32.mrb[0].mxu0
      %v2320 = vadd.f32 0.0, %v2319
      %v2321 = vpop.f32.mrb[0].mxu0
      %2322 = vmatprep.mubr.bf16.mxu0 0
      %2323 = vmatmul.mubr.bf16.gmra.mrb[0].mxu0 %v2264
      %v2324 = vpop.f32.mrb[0].mxu0
      %v2325 = vadd.f32 0.0, %v2324
      %v2326 = vpop.f32.mrb[0].mxu0
      %v2327 = vpop.f32.mrb[0].mxu0
      %v2328 = vadd.f32 0.0, %v2327
      %v2329 = vpop.f32.mrb[0].mxu0
      %2330 = vdwg.mxu0
      %v2331 = vpack.c.bf16 %v2304, %v2301
      %v2332 = vpack.c.bf16 %v2312, %v2309
      %v2333 = vpack.c.bf16 %v2320, %v2317
      %v2334 = vpack.c.bf16 %v2328, %v2325
      %v2339 = vunpack.c.l.b16 %v1269
      %v2340 = vunpack.c.l.b16 %v1270
      %v2341 = vunpack.c.l.b16 %v1271
      %v2342 = vunpack.c.l.b16 %v1272
      %v2343 = vpack.c.b16 %v2340, %v2339
      %v2344 = vpack.c.b16 %v2342, %v2341
      %v2348 = vsel %vm1277, %v2331, 0
      %v2351 = vsel %vm1277, %v2332, 0
      %v2354 = vsel %vm1277, %v2333, 0
      %v2357 = vsel %vm1277, %v2334, 0
      %2359 = vmatprep.subr.bf16.mxu0 0
      %2360 = vmatpush1.bf16.msra.mxu0 %v2343
      %2361 = vmatprep.subr.bf16.mxu0 0
      %2362 = vmatpush1.bf16.msra.mxu0 %v2344
      %2363 = vmatprep.subr.bf16.mxu0 0
      %2364 = vmatpush1.bf16.msra.mxu0 0
      %2365 = vmatprep.subr.bf16.mxu0 0
      %2366 = vmatpush1.bf16.msra.mxu0 0
      %2367 = vmatprep.subr.bf16.mxu0 0
      %2368 = vmatpush1.bf16.msra.mxu0 0
      %2369 = vmatprep.subr.bf16.mxu0 0
      %2370 = vmatpush1.bf16.msra.mxu0 0
      %2371 = vmatprep.subr.bf16.mxu0 0
      %2372 = vmatpush1.bf16.msra.mxu0 0
      %2373 = vmatprep.subr.bf16.mxu0 0
      %2374 = vmatpush1.bf16.msra.mxu0 0
      %2375 = vmatprep.subr.bf16.mxu0 0
      %2376 = vmatpush1.bf16.msra.mxu0 0
      %2377 = vmatprep.subr.bf16.mxu0 0
      %2378 = vmatpush1.bf16.msra.mxu0 0
      %2379 = vmatprep.subr.bf16.mxu0 0
      %2380 = vmatpush1.bf16.msra.mxu0 0
      %2381 = vmatprep.subr.bf16.mxu0 0
      %2382 = vmatpush1.bf16.msra.mxu0 0
      %2383 = vmatprep.subr.bf16.mxu0 0
      %2384 = vmatpush1.bf16.msra.mxu0 0
      %2385 = vmatprep.subr.bf16.mxu0 0
      %2386 = vmatpush1.bf16.msra.mxu0 0
      %2387 = vmatprep.subr.bf16.mxu0 0
      %2388 = vmatpush1.bf16.msra.mxu0 0
      %2389 = vmatprep.subr.bf16.mxu0 0
      %2390 = vmatpush1.bf16.msra.mxu0 0
      %2391 = vmatprep.mubr.bf16.mxu0 0
      %2392 = vmatmul.mubr.bf16.gmra.mrb[0].mxu0 %v2348
      %v2393 = vpop.f32.mrb[0].mxu0
      %v2394 = vadd.f32 0.0, %v2393
      %v2395 = vpop.f32.mrb[0].mxu0
      %v2396 = vpop.f32.mrb[0].mxu0
      %v2397 = vadd.f32 0.0, %v2396
      %v2398 = vpop.f32.mrb[0].mxu0
      %2399 = vmatprep.mubr.bf16.mxu0 0
      %2400 = vmatmul.mubr.bf16.gmra.mrb[0].mxu0 %v2351
      %v2401 = vpop.f32.mrb[0].mxu0
      %v2402 = vadd.f32 0.0, %v2401
      %v2403 = vpop.f32.mrb[0].mxu0
      %v2404 = vpop.f32.mrb[0].mxu0
      %v2405 = vadd.f32 0.0, %v2404
      %v2406 = vpop.f32.mrb[0].mxu0
      %2407 = vmatprep.mubr.bf16.mxu0 0
      %2408 = vmatmul.mubr.bf16.gmra.mrb[0].mxu0 %v2354
      %v2409 = vpop.f32.mrb[0].mxu0
      %v2410 = vadd.f32 0.0, %v2409
      %v2411 = vpop.f32.mrb[0].mxu0
      %v2412 = vpop.f32.mrb[0].mxu0
      %v2413 = vadd.f32 0.0, %v2412
      %v2414 = vpop.f32.mrb[0].mxu0
      %2415 = vmatprep.mubr.bf16.mxu0 0
      %2416 = vmatmul.mubr.bf16.gmra.mrb[0].mxu0 %v2357
      %v2417 = vpop.f32.mrb[0].mxu0
      %v2418 = vadd.f32 0.0, %v2417
      %v2419 = vpop.f32.mrb[0].mxu0
      %v2420 = vpop.f32.mrb[0].mxu0
      %v2421 = vadd.f32 0.0, %v2420
      %v2422 = vpop.f32.mrb[0].mxu0
      %2423 = vdwg.mxu0
      %v2424 = vadd.f32 %v2007, %v2394
      %v2425 = vadd.f32 %v2010, %v2397
      %v2426 = vadd.f32 %v2015, %v2402
      %v2427 = vadd.f32 %v2018, %v2405
      %v2428 = vadd.f32 %v2023, %v2410
      %v2429 = vadd.f32 %v2026, %v2413
      %v2430 = vadd.f32 %v2031, %v2418
      %v2431 = vadd.f32 %v2034, %v2421
      %2432 = vrot.lane.b32.xlu0 %v1249, 32
      %v2433 = vpop.permute.xlu0 %2432
      %2434 = vrot.lane.b32.xlu0 %v1252, 32
      %v2435 = vpop.permute.xlu0 %2434
      %2436 = vrot.lane.b32.xlu0 %v1255, 32
      %v2437 = vpop.permute.xlu0 %2436
      %2438 = vrot.lane.b32.xlu0 %v1258, 32
      %v2439 = vpop.permute.xlu0 %2438
      %2440 = vrot.lane.b32.xlu0 %v1250, 32
      %v2441 = vpop.permute.xlu0 %2440
      %2442 = vrot.lane.b32.xlu0 %v1253, 32
      %v2443 = vpop.permute.xlu0 %2442
      %2444 = vrot.lane.b32.xlu0 %v1256, 32
      %v2445 = vpop.permute.xlu0 %2444
      %2446 = vrot.lane.b32.xlu0 %v1259, 32
      %v2447 = vpop.permute.xlu0 %2446
      %v2449 = vsel %vm1277, %v2433, 0
      %v2452 = vsel %vm1277, %v2435, 0
      %v2455 = vsel %vm1277, %v2437, 0
      %v2458 = vsel %vm1277, %v2439, 0
      %v2461 = vsel %vm1277, %v2441, 0
      %v2464 = vsel %vm1277, %v2443, 0
      %v2467 = vsel %vm1277, %v2445, 0
      %v2470 = vsel %vm1277, %v2447, 0
      %2472 = vmatprep.subr.bf16.mxu0 0
      %2473 = vmatpush1.bf16.xpose.msra.mxu0 %v2461
      %2474 = vmatprep.subr.bf16.mxu0 0
      %2475 = vmatpush1.bf16.xpose.msra.mxu0 %v2464
      %2476 = vmatprep.subr.bf16.mxu0 0
      %2477 = vmatpush1.bf16.xpose.msra.mxu0 %v2467
      %2478 = vmatprep.subr.bf16.mxu0 0
      %2479 = vmatpush1.bf16.xpose.msra.mxu0 %v2470
      %2480 = vmatprep.subr.bf16.mxu0 0
      %2481 = vmatpush1.bf16.xpose.msra.mxu0 0
      %2482 = vmatprep.subr.bf16.mxu0 0
      %2483 = vmatpush1.bf16.xpose.msra.mxu0 0
      %2484 = vmatprep.subr.bf16.mxu0 0
      %2485 = vmatpush1.bf16.xpose.msra.mxu0 0
      %2486 = vmatprep.subr.bf16.mxu0 0
      %2487 = vmatpush1.bf16.xpose.msra.mxu0 0
      %2488 = vmatprep.subr.bf16.mxu0 0
      %2489 = vmatpush1.bf16.xpose.msra.mxu0 0
      %2490 = vmatprep.subr.bf16.mxu0 0
      %2491 = vmatpush1.bf16.xpose.msra.mxu0 0
      %2492 = vmatprep.subr.bf16.mxu0 0
      %2493 = vmatpush1.bf16.xpose.msra.mxu0 0
      %2494 = vmatprep.subr.bf16.mxu0 0
      %2495 = vmatpush1.bf16.xpose.msra.mxu0 0
      %2496 = vmatprep.subr.bf16.mxu0 0
      %2497 = vmatpush1.bf16.xpose.msra.mxu0 0
      %2498 = vmatprep.subr.bf16.mxu0 0
      %2499 = vmatpush1.bf16.xpose.msra.mxu0 0
      %2500 = vmatprep.subr.bf16.mxu0 0
      %2501 = vmatpush1.bf16.xpose.msra.mxu0 0
      %2502 = vmatprep.subr.bf16.mxu0 0
      %2503 = vmatpush1.bf16.xpose.msra.mxu0 0
      %2504 = vmatprep.mubr.bf16.mxu0 0
      %2505 = vmatmul.mubr.bf16.gmra.mrb[0].mxu0 %v2449
      %v2506 = vpop.f32.mrb[0].mxu0
      %v2507 = vadd.f32 0.0, %v2506
      %v2508 = vpop.f32.mrb[0].mxu0
      %v2509 = vpop.f32.mrb[0].mxu0
      %v2510 = vadd.f32 0.0, %v2509
      %v2511 = vpop.f32.mrb[0].mxu0
      %2512 = vmatprep.mubr.bf16.mxu0 0
      %2513 = vmatmul.mubr.bf16.gmra.mrb[0].mxu0 %v2452
      %v2514 = vpop.f32.mrb[0].mxu0
      %v2515 = vadd.f32 0.0, %v2514
      %v2516 = vpop.f32.mrb[0].mxu0
      %v2517 = vpop.f32.mrb[0].mxu0
      %v2518 = vadd.f32 0.0, %v2517
      %v2519 = vpop.f32.mrb[0].mxu0
      %2520 = vmatprep.mubr.bf16.mxu0 0
      %2521 = vmatmul.mubr.bf16.gmra.mrb[0].mxu0 %v2455
      %v2522 = vpop.f32.mrb[0].mxu0
      %v2523 = vadd.f32 0.0, %v2522
      %v2524 = vpop.f32.mrb[0].mxu0
      %v2525 = vpop.f32.mrb[0].mxu0
      %v2526 = vadd.f32 0.0, %v2525
      %v2527 = vpop.f32.mrb[0].mxu0
      %2528 = vmatprep.mubr.bf16.mxu0 0
      %2529 = vmatmul.mubr.bf16.gmra.mrb[0].mxu0 %v2458
      %v2530 = vpop.f32.mrb[0].mxu0
      %v2531 = vadd.f32 0.0, %v2530
      %v2532 = vpop.f32.mrb[0].mxu0
      %v2533 = vpop.f32.mrb[0].mxu0
      %v2534 = vadd.f32 0.0, %v2533
      %v2535 = vpop.f32.mrb[0].mxu0
      %2536 = vdwg.mxu0
      %v2537 = vmul.f32 %v2507, 0.17677669
      %v2538 = vmul.f32 %v2510, 0.17677669
      %v2539 = vmul.f32 %v2515, 0.17677669
      %v2540 = vmul.f32 %v2518, 0.17677669
      %v2541 = vmul.f32 %v2523, 0.17677669
      %v2542 = vmul.f32 %v2526, 0.17677669
      %v2543 = vmul.f32 %v2531, 0.17677669
      %v2544 = vmul.f32 %v2534, 0.17677669
      %v2545 = vsel %vm1375, %v2537, -inf
      %2546 = vmax.xlane.f32.xlu0 %v2545
      %v2547 = vpop.xlane.xlu0 %2546
      %v2548 = vsel %vm1375, %v2538, -inf
      %2549 = vmax.xlane.f32.xlu0 %v2548
      %v2550 = vpop.xlane.xlu0 %2549
      %v2551 = vsel %vm1375, %v2539, -inf
      %2552 = vmax.xlane.f32.xlu0 %v2551
      %v2553 = vpop.xlane.xlu0 %2552
      %v2554 = vsel %vm1375, %v2540, -inf
      %2555 = vmax.xlane.f32.xlu0 %v2554
      %v2556 = vpop.xlane.xlu0 %2555
      %v2557 = vsel %vm1375, %v2541, -inf
      %2558 = vmax.xlane.f32.xlu0 %v2557
      %v2559 = vpop.xlane.xlu0 %2558
      %v2560 = vsel %vm1375, %v2542, -inf
      %2561 = vmax.xlane.f32.xlu0 %v2560
      %v2562 = vpop.xlane.xlu0 %2561
      %v2563 = vsel %vm1375, %v2543, -inf
      %2564 = vmax.xlane.f32.xlu0 %v2563
      %v2565 = vpop.xlane.xlu0 %2564
      %v2566 = vsel %vm1375, %v2544, -inf
      %2567 = vmax.xlane.f32.xlu0 %v2566
      %v2568 = vpop.xlane.xlu0 %2567
      %v2569 = vsub.f32 %v2537, %v2547
      %v2570 = vsub.f32 %v2538, %v2550
      %v2571 = vsub.f32 %v2539, %v2553
      %v2572 = vsub.f32 %v2540, %v2556
      %v2573 = vsub.f32 %v2541, %v2559
      %v2574 = vsub.f32 %v2542, %v2562
      %v2575 = vsub.f32 %v2543, %v2565
      %v2576 = vsub.f32 %v2544, %v2568
      %v2577 = vmul.f32 %v2569, 1.442695
      %v2578 = vpow.pop %v2577
      %v2579 = vmul.f32 %v2570, 1.442695
      %v2580 = vpow.pop %v2579
      %v2581 = vmul.f32 %v2571, 1.442695
      %v2582 = vpow.pop %v2581
      %v2583 = vmul.f32 %v2572, 1.442695
      %v2584 = vpow.pop %v2583
      %v2585 = vmul.f32 %v2573, 1.442695
      %v2586 = vpow.pop %v2585
      %v2587 = vmul.f32 %v2574, 1.442695
      %v2588 = vpow.pop %v2587
      %v2589 = vmul.f32 %v2575, 1.442695
      %v2590 = vpow.pop %v2589
      %v2591 = vmul.f32 %v2576, 1.442695
      %v2592 = vpow.pop %v2591
      %v2593 = vsel %vm1375, %v2578, 0.0
      %2594 = vadd.xlane.f32.xlu0 %v2593
      %v2595 = vpop.xlane.xlu0 %2594
      %v2596 = vsel %vm1375, %v2580, 0.0
      %2597 = vadd.xlane.f32.xlu0 %v2596
      %v2598 = vpop.xlane.xlu0 %2597
      %v2599 = vsel %vm1375, %v2582, 0.0
      %2600 = vadd.xlane.f32.xlu0 %v2599
      %v2601 = vpop.xlane.xlu0 %2600
      %v2602 = vsel %vm1375, %v2584, 0.0
      %2603 = vadd.xlane.f32.xlu0 %v2602
      %v2604 = vpop.xlane.xlu0 %2603
      %v2605 = vsel %vm1375, %v2586, 0.0
      %2606 = vadd.xlane.f32.xlu0 %v2605
      %v2607 = vpop.xlane.xlu0 %2606
      %v2608 = vsel %vm1375, %v2588, 0.0
      %2609 = vadd.xlane.f32.xlu0 %v2608
      %v2610 = vpop.xlane.xlu0 %2609
      %v2611 = vsel %vm1375, %v2590, 0.0
      %2612 = vadd.xlane.f32.xlu0 %v2611
      %v2613 = vpop.xlane.xlu0 %2612
      %v2614 = vsel %vm1375, %v2592, 0.0
      %2615 = vadd.xlane.f32.xlu0 %v2614
      %v2616 = vpop.xlane.xlu0 %2615
      %v2617 = vrcp.pop %v2595
      %v2618 = vrcp.pop %v2598
      %v2619 = vrcp.pop %v2601
      %v2620 = vrcp.pop %v2604
      %v2621 = vrcp.pop %v2607
      %v2622 = vrcp.pop %v2610
      %v2623 = vrcp.pop %v2613
      %v2624 = vrcp.pop %v2616
      %v2625 = vmul.f32 %v2578, %v2617
      %v2626 = vmul.f32 %v2580, %v2618
      %v2627 = vmul.f32 %v2582, %v2619
      %v2628 = vmul.f32 %v2584, %v2620
      %v2629 = vmul.f32 %v2586, %v2621
      %v2630 = vmul.f32 %v2588, %v2622
      %v2631 = vmul.f32 %v2590, %v2623
      %v2632 = vmul.f32 %v2592, %v2624
      %v2633 = vpack.c.bf16 %v2626, %v2625
      %v2634 = vpack.c.bf16 %v2628, %v2627
      %v2635 = vpack.c.bf16 %v2630, %v2629
      %v2636 = vpack.c.bf16 %v2632, %v2631
      %2637 = vrot.lane.b32.xlu0 %v1251, 32
      %v2638 = vpop.permute.xlu0 %2637
      %2639 = vrot.lane.b32.xlu0 %v1254, 32
      %v2640 = vpop.permute.xlu0 %2639
      %2641 = vrot.lane.b32.xlu0 %v1257, 32
      %v2642 = vpop.permute.xlu0 %2641
      %2643 = vrot.lane.b32.xlu0 %v1260, 32
      %v2644 = vpop.permute.xlu0 %2643
      %v2650 = vsel %vm1375, %v2633, 0
      %v2653 = vsel %vm1375, %v2634, 0
      %v2656 = vsel %vm1375, %v2635, 0
      %v2659 = vsel %vm1375, %v2636, 0
      %2661 = vmatprep.subr.bf16.mxu0 0
      %2662 = vmatpush1.bf16.msra.mxu0 %v2638
      %2663 = vmatprep.subr.bf16.mxu0 0
      %2664 = vmatpush1.bf16.msra.mxu0 %v2640
      %2665 = vmatprep.subr.bf16.mxu0 0
      %2666 = vmatpush1.bf16.msra.mxu0 %v2642
      %2667 = vmatprep.subr.bf16.mxu0 0
      %2668 = vmatpush1.bf16.msra.mxu0 %v2644
      %2669 = vmatprep.subr.bf16.mxu0 0
      %2670 = vmatpush1.bf16.msra.mxu0 0
      %2671 = vmatprep.subr.bf16.mxu0 0
      %2672 = vmatpush1.bf16.msra.mxu0 0
      %2673 = vmatprep.subr.bf16.mxu0 0
      %2674 = vmatpush1.bf16.msra.mxu0 0
      %2675 = vmatprep.subr.bf16.mxu0 0
      %2676 = vmatpush1.bf16.msra.mxu0 0
      %2677 = vmatprep.subr.bf16.mxu0 0
      %2678 = vmatpush1.bf16.msra.mxu0 0
      %2679 = vmatprep.subr.bf16.mxu0 0
      %2680 = vmatpush1.bf16.msra.mxu0 0
      %2681 = vmatprep.subr.bf16.mxu0 0
      %2682 = vmatpush1.bf16.msra.mxu0 0
      %2683 = vmatprep.subr.bf16.mxu0 0
      %2684 = vmatpush1.bf16.msra.mxu0 0
      %2685 = vmatprep.subr.bf16.mxu0 0
      %2686 = vmatpush1.bf16.msra.mxu0 0
      %2687 = vmatprep.subr.bf16.mxu0 0
      %2688 = vmatpush1.bf16.msra.mxu0 0
      %2689 = vmatprep.subr.bf16.mxu0 0
      %2690 = vmatpush1.bf16.msra.mxu0 0
      %2691 = vmatprep.subr.bf16.mxu0 0
      %2692 = vmatpush1.bf16.msra.mxu0 0
      %2693 = vmatprep.mubr.bf16.mxu0 0
      %2694 = vmatmul.mubr.bf16.gmra.mrb[0].mxu0 %v2650
      %v2695 = vpop.f32.mrb[0].mxu0
      %v2696 = vadd.f32 0.0, %v2695
      %v2697 = vpop.f32.mrb[0].mxu0
      %v2698 = vpop.f32.mrb[0].mxu0
      %v2699 = vadd.f32 0.0, %v2698
      %v2700 = vpop.f32.mrb[0].mxu0
      %2701 = vmatprep.mubr.bf16.mxu0 0
      %2702 = vmatmul.mubr.bf16.gmra.mrb[0].mxu0 %v2653
      %v2703 = vpop.f32.mrb[0].mxu0
      %v2704 = vadd.f32 0.0, %v2703
      %v2705 = vpop.f32.mrb[0].mxu0
      %v2706 = vpop.f32.mrb[0].mxu0
      %v2707 = vadd.f32 0.0, %v2706
      %v2708 = vpop.f32.mrb[0].mxu0
      %2709 = vmatprep.mubr.bf16.mxu0 0
      %2710 = vmatmul.mubr.bf16.gmra.mrb[0].mxu0 %v2656
      %v2711 = vpop.f32.mrb[0].mxu0
      %v2712 = vadd.f32 0.0, %v2711
      %v2713 = vpop.f32.mrb[0].mxu0
      %v2714 = vpop.f32.mrb[0].mxu0
      %v2715 = vadd.f32 0.0, %v2714
      %v2716 = vpop.f32.mrb[0].mxu0
      %2717 = vmatprep.mubr.bf16.mxu0 0
      %2718 = vmatmul.mubr.bf16.gmra.mrb[0].mxu0 %v2659
      %v2719 = vpop.f32.mrb[0].mxu0
      %v2720 = vadd.f32 0.0, %v2719
      %v2721 = vpop.f32.mrb[0].mxu0
      %v2722 = vpop.f32.mrb[0].mxu0
      %v2723 = vadd.f32 0.0, %v2722
      %v2724 = vpop.f32.mrb[0].mxu0
      %2725 = vdwg.mxu0
      %v2726 = vpack.c.bf16 %v2699, %v2696
      %v2727 = vpack.c.bf16 %v2707, %v2704
      %v2728 = vpack.c.bf16 %v2715, %v2712
      %v2729 = vpack.c.bf16 %v2723, %v2720
      %v2734 = vunpack.c.l.b16 %v1273
      %v2735 = vunpack.c.l.b16 %v1274
      %v2736 = vunpack.c.l.b16 %v1275
      %v2737 = vunpack.c.l.b16 %v1276
      %v2738 = vpack.c.b16 %v2735, %v2734
      %v2739 = vpack.c.b16 %v2737, %v2736
      %v2743 = vsel %vm1277, %v2726, 0
      %v2746 = vsel %vm1277, %v2727, 0
      %v2749 = vsel %vm1277, %v2728, 0
      %v2752 = vsel %vm1277, %v2729, 0
      %2754 = vmatprep.subr.bf16.mxu0 0
      %2755 = vmatpush1.bf16.msra.mxu0 %v2738
      %2756 = vmatprep.subr.bf16.mxu0 0
      %2757 = vmatpush1.bf16.msra.mxu0 %v2739
      %2758 = vmatprep.subr.bf16.mxu0 0
      %2759 = vmatpush1.bf16.msra.mxu0 0
      %2760 = vmatprep.subr.bf16.mxu0 0
      %2761 = vmatpush1.bf16.msra.mxu0 0
      %2762 = vmatprep.subr.bf16.mxu0 0
      %2763 = vmatpush1.bf16.msra.mxu0 0
      %2764 = vmatprep.subr.bf16.mxu0 0
      %2765 = vmatpush1.bf16.msra.mxu0 0
      %2766 = vmatprep.subr.bf16.mxu0 0
      %2767 = vmatpush1.bf16.msra.mxu0 0
      %2768 = vmatprep.subr.bf16.mxu0 0
      %2769 = vmatpush1.bf16.msra.mxu0 0
      %2770 = vmatprep.subr.bf16.mxu0 0
      %2771 = vmatpush1.bf16.msra.mxu0 0
      %2772 = vmatprep.subr.bf16.mxu0 0
      %2773 = vmatpush1.bf16.msra.mxu0 0
      %2774 = vmatprep.subr.bf16.mxu0 0
      %2775 = vmatpush1.bf16.msra.mxu0 0
      %2776 = vmatprep.subr.bf16.mxu0 0
      %2777 = vmatpush1.bf16.msra.mxu0 0
      %2778 = vmatprep.subr.bf16.mxu0 0
      %2779 = vmatpush1.bf16.msra.mxu0 0
      %2780 = vmatprep.subr.bf16.mxu0 0
      %2781 = vmatpush1.bf16.msra.mxu0 0
      %2782 = vmatprep.subr.bf16.mxu0 0
      %2783 = vmatpush1.bf16.msra.mxu0 0
      %2784 = vmatprep.subr.bf16.mxu0 0
      %2785 = vmatpush1.bf16.msra.mxu0 0
      %2786 = vmatprep.mubr.bf16.mxu0 0
      %2787 = vmatmul.mubr.bf16.gmra.mrb[0].mxu0 %v2743
      %v2788 = vpop.f32.mrb[0].mxu0
      %v2789 = vadd.f32 0.0, %v2788
      %v2790 = vpop.f32.mrb[0].mxu0
      %v2791 = vpop.f32.mrb[0].mxu0
      %v2792 = vadd.f32 0.0, %v2791
      %v2793 = vpop.f32.mrb[0].mxu0
      %2794 = vmatprep.mubr.bf16.mxu0 0
      %2795 = vmatmul.mubr.bf16.gmra.mrb[0].mxu0 %v2746
      %v2796 = vpop.f32.mrb[0].mxu0
      %v2797 = vadd.f32 0.0, %v2796
      %v2798 = vpop.f32.mrb[0].mxu0
      %v2799 = vpop.f32.mrb[0].mxu0
      %v2800 = vadd.f32 0.0, %v2799
      %v2801 = vpop.f32.mrb[0].mxu0
      %2802 = vmatprep.mubr.bf16.mxu0 0
      %2803 = vmatmul.mubr.bf16.gmra.mrb[0].mxu0 %v2749
      %v2804 = vpop.f32.mrb[0].mxu0
      %v2805 = vadd.f32 0.0, %v2804
      %v2806 = vpop.f32.mrb[0].mxu0
      %v2807 = vpop.f32.mrb[0].mxu0
      %v2808 = vadd.f32 0.0, %v2807
      %v2809 = vpop.f32.mrb[0].mxu0
      %2810 = vmatprep.mubr.bf16.mxu0 0
      %2811 = vmatmul.mubr.bf16.gmra.mrb[0].mxu0 %v2752
      %v2812 = vpop.f32.mrb[0].mxu0
      %v2813 = vadd.f32 0.0, %v2812
      %v2814 = vpop.f32.mrb[0].mxu0
      %v2815 = vpop.f32.mrb[0].mxu0
      %v2816 = vadd.f32 0.0, %v2815
      %v2817 = vpop.f32.mrb[0].mxu0
      %2818 = vdwg.mxu0
      %v2819 = vadd.f32 %v2424, %v2789
      %v2820 = vadd.f32 %v2425, %v2792
      %v2821 = vadd.f32 %v2426, %v2797
      %v2822 = vadd.f32 %v2427, %v2800
      %v2823 = vadd.f32 %v2428, %v2805
      %v2824 = vadd.f32 %v2429, %v2808
      %v2825 = vadd.f32 %v2430, %v2813
      %v2826 = vadd.f32 %v2431, %v2816
      %v2827 = vld [vmem:[%s8] sm:$0x1]
      %v2829 = vlaneseq
      %v2830 = vshrl.u32 %v2829, 7
      %v2831 = vsub.s32 0, %v2830
      %v2832 = vrot.slane %v2827, %v2831
      %v2834 = vadd.f32 %v2819, %v2832
      %v2835 = vadd.f32 %v2820, %v2832
      %v2836 = vadd.f32 %v2821, %v2832
      %v2837 = vadd.f32 %v2822, %v2832
      %v2838 = vadd.f32 %v2823, %v2832
      %v2839 = vadd.f32 %v2824, %v2832
      %v2840 = vadd.f32 %v2825, %v2832
      %v2841 = vadd.f32 %v2826, %v2832
      %v2842 = vunpack.c.l.bf16 %v930
      %v2843 = vunpack.c.h.bf16 %v930
      %v2844 = vunpack.c.l.bf16 %v931
      %v2845 = vunpack.c.h.bf16 %v931
      %v2846 = vunpack.c.l.bf16 %v932
      %v2847 = vunpack.c.h.bf16 %v932
      %v2848 = vunpack.c.l.bf16 %v933
      %v2849 = vunpack.c.h.bf16 %v933
      %v2850 = vadd.f32 %v2842, %v2834
      %v2851 = vadd.f32 %v2843, %v2835
      %v2852 = vadd.f32 %v2844, %v2836
      %v2853 = vadd.f32 %v2845, %v2837
      %v2854 = vadd.f32 %v2846, %v2838
      %v2855 = vadd.f32 %v2847, %v2839
      %v2856 = vadd.f32 %v2848, %v2840
      %v2857 = vadd.f32 %v2849, %v2841
      %v2858 = vld [vmem:[%s9] sm:$0x1]
      %v2859 = vld [vmem:[%s10] sm:$0x1]
      %2860 = vadd.xlane.f32.xlu0 %v2850
      %v2861 = vpop.xlane.xlu0 %2860
      %2862 = vadd.xlane.f32.xlu0 %v2851
      %v2863 = vpop.xlane.xlu0 %2862
      %2864 = vadd.xlane.f32.xlu0 %v2852
      %v2865 = vpop.xlane.xlu0 %2864
      %2866 = vadd.xlane.f32.xlu0 %v2853
      %v2867 = vpop.xlane.xlu0 %2866
      %2868 = vadd.xlane.f32.xlu0 %v2854
      %v2869 = vpop.xlane.xlu0 %2868
      %2870 = vadd.xlane.f32.xlu0 %v2855
      %v2871 = vpop.xlane.xlu0 %2870
      %2872 = vadd.xlane.f32.xlu0 %v2856
      %v2873 = vpop.xlane.xlu0 %2872
      %2874 = vadd.xlane.f32.xlu0 %v2857
      %v2875 = vpop.xlane.xlu0 %2874
      %v2876 = vmul.f32 %v2861, %v829
      %v2877 = vmul.f32 %v2863, %v829
      %v2878 = vmul.f32 %v2865, %v829
      %v2879 = vmul.f32 %v2867, %v829
      %v2880 = vmul.f32 %v2869, %v829
      %v2881 = vmul.f32 %v2871, %v829
      %v2882 = vmul.f32 %v2873, %v829
      %v2883 = vmul.f32 %v2875, %v829
      %v2884 = vsub.f32 %v2850, %v2876
      %v2885 = vsub.f32 %v2851, %v2877
      %v2886 = vsub.f32 %v2852, %v2878
      %v2887 = vsub.f32 %v2853, %v2879
      %v2888 = vsub.f32 %v2854, %v2880
      %v2889 = vsub.f32 %v2855, %v2881
      %v2890 = vsub.f32 %v2856, %v2882
      %v2891 = vsub.f32 %v2857, %v2883
      %v2892 = vmul.f32 %v2884, %v2884
      %v2893 = vmul.f32 %v2885, %v2885
      %v2894 = vmul.f32 %v2886, %v2886
      %v2895 = vmul.f32 %v2887, %v2887
      %v2896 = vmul.f32 %v2888, %v2888
      %v2897 = vmul.f32 %v2889, %v2889
      %v2898 = vmul.f32 %v2890, %v2890
      %v2899 = vmul.f32 %v2891, %v2891
      %2900 = vadd.xlane.f32.xlu0 %v2892
      %v2901 = vpop.xlane.xlu0 %2900
      %2902 = vadd.xlane.f32.xlu0 %v2893
      %v2903 = vpop.xlane.xlu0 %2902
      %2904 = vadd.xlane.f32.xlu0 %v2894
      %v2905 = vpop.xlane.xlu0 %2904
      %2906 = vadd.xlane.f32.xlu0 %v2895
      %v2907 = vpop.xlane.xlu0 %2906
      %2908 = vadd.xlane.f32.xlu0 %v2896
      %v2909 = vpop.xlane.xlu0 %2908
      %2910 = vadd.xlane.f32.xlu0 %v2897
      %v2911 = vpop.xlane.xlu0 %2910
      %2912 = vadd.xlane.f32.xlu0 %v2898
      %v2913 = vpop.xlane.xlu0 %2912
      %2914 = vadd.xlane.f32.xlu0 %v2899
      %v2915 = vpop.xlane.xlu0 %2914
      %v2916 = vmul.f32 %v2901, %v829
      %v2917 = vmul.f32 %v2903, %v829
      %v2918 = vmul.f32 %v2905, %v829
      %v2919 = vmul.f32 %v2907, %v829
      %v2920 = vmul.f32 %v2909, %v829
      %v2921 = vmul.f32 %v2911, %v829
      %v2922 = vmul.f32 %v2913, %v829
      %v2923 = vmul.f32 %v2915, %v829
      %v2924 = vadd.f32 %v2916, 1e-05
      %v2925 = vadd.f32 %v2917, 1e-05
      %v2926 = vadd.f32 %v2918, 1e-05
      %v2927 = vadd.f32 %v2919, 1e-05
      %v2928 = vadd.f32 %v2920, 1e-05
      %v2929 = vadd.f32 %v2921, 1e-05
      %v2930 = vadd.f32 %v2922, 1e-05
      %v2931 = vadd.f32 %v2923, 1e-05
      %v2932 = vrsqrt.pop %v2924
      %v2933 = vrsqrt.pop %v2925
      %v2934 = vrsqrt.pop %v2926
      %v2935 = vrsqrt.pop %v2927
      %v2936 = vrsqrt.pop %v2928
      %v2937 = vrsqrt.pop %v2929
      %v2938 = vrsqrt.pop %v2930
      %v2939 = vrsqrt.pop %v2931
      %v2940 = vmul.f32 %v2884, %v2932
      %v2941 = vmul.f32 %v2885, %v2933
      %v2942 = vmul.f32 %v2886, %v2934
      %v2943 = vmul.f32 %v2887, %v2935
      %v2944 = vmul.f32 %v2888, %v2936
      %v2945 = vmul.f32 %v2889, %v2937
      %v2946 = vmul.f32 %v2890, %v2938
      %v2947 = vmul.f32 %v2891, %v2939
      %v2949 = vlaneseq
      %v2950 = vshrl.u32 %v2949, 7
      %v2951 = vsub.s32 0, %v2950
      %v2952 = vrot.slane %v2858, %v2951
      %v2954 = vmul.f32 %v2940, %v2952
      %v2955 = vmul.f32 %v2941, %v2952
      %v2956 = vmul.f32 %v2942, %v2952
      %v2957 = vmul.f32 %v2943, %v2952
      %v2958 = vmul.f32 %v2944, %v2952
      %v2959 = vmul.f32 %v2945, %v2952
      %v2960 = vmul.f32 %v2946, %v2952
      %v2961 = vmul.f32 %v2947, %v2952
      %v2963 = vlaneseq
      %v2964 = vshrl.u32 %v2963, 7
      %v2965 = vsub.s32 0, %v2964
      %v2966 = vrot.slane %v2859, %v2965
      %v2968 = vadd.f32 %v2954, %v2966
      %v2969 = vadd.f32 %v2955, %v2966
      %v2970 = vadd.f32 %v2956, %v2966
      %v2971 = vadd.f32 %v2957, %v2966
      %v2972 = vadd.f32 %v2958, %v2966
      %v2973 = vadd.f32 %v2959, %v2966
      %v2974 = vadd.f32 %v2960, %v2966
      %v2975 = vadd.f32 %v2961, %v2966
      %v2976 = vpack.c.bf16 %v2969, %v2968
      %v2977 = vpack.c.bf16 %v2971, %v2970
      %v2978 = vpack.c.bf16 %v2973, %v2972
      %v2979 = vpack.c.bf16 %v2975, %v2974
      %v2980 = vld [vmem:[%s11] sm:$0xff]
      %v2981 = vld [vmem:[%s11 + $0x8] sm:$0xff]
      %v2982 = vld [vmem:[%s11 + $0x10] sm:$0xff]
      %v2983 = vld [vmem:[%s11 + $0x18] sm:$0xff]
      %v2984 = vld [vmem:[%s11 + $0x20] sm:$0xff]
      %v2985 = vld [vmem:[%s11 + $0x28] sm:$0xff]
      %v2986 = vld [vmem:[%s11 + $0x30] sm:$0xff]
      %v2987 = vld [vmem:[%s11 + $0x38] sm:$0xff]
      %v2988 = vld [vmem:[%s11 + $0x40] sm:$0xff]
      %v2989 = vld [vmem:[%s11 + $0x48] sm:$0xff]
      %v2990 = vld [vmem:[%s11 + $0x50] sm:$0xff]
      %v2991 = vld [vmem:[%s11 + $0x58] sm:$0xff]
      %v2992 = vld [vmem:[%s11 + $0x60] sm:$0xff]
      %v2993 = vld [vmem:[%s11 + $0x68] sm:$0xff]
      %v2994 = vld [vmem:[%s11 + $0x70] sm:$0xff]
      %v2995 = vld [vmem:[%s11 + $0x78] sm:$0xff]
      %v2996 = vld [vmem:[%s11 + $0x80] sm:$0xff]
      %v2997 = vld [vmem:[%s11 + $0x88] sm:$0xff]
      %v2998 = vld [vmem:[%s11 + $0x90] sm:$0xff]
      %v2999 = vld [vmem:[%s11 + $0x98] sm:$0xff]
      %v3000 = vld [vmem:[%s11 + $0xa0] sm:$0xff]
      %v3001 = vld [vmem:[%s11 + $0xa8] sm:$0xff]
      %v3002 = vld [vmem:[%s11 + $0xb0] sm:$0xff]
      %v3003 = vld [vmem:[%s11 + $0xb8] sm:$0xff]
      %v3004 = vld [vmem:[%s11 + $0xc0] sm:$0xff]
      %v3005 = vld [vmem:[%s11 + $0xc8] sm:$0xff]
      %v3006 = vld [vmem:[%s11 + $0xd0] sm:$0xff]
      %v3007 = vld [vmem:[%s11 + $0xd8] sm:$0xff]
      %v3008 = vld [vmem:[%s11 + $0xe0] sm:$0xff]
      %v3009 = vld [vmem:[%s11 + $0xe8] sm:$0xff]
      %v3010 = vld [vmem:[%s11 + $0xf0] sm:$0xff]
      %v3011 = vld [vmem:[%s11 + $0xf8] sm:$0xff]
      %v3012 = vld [vmem:[%s12] sm:$0xf]
      %v3014 = vlaneseq
      %v3015 = vshrl.u32 %v3014, 7
      %v3016 = vsub.s32 0, %v3015
      %v3017 = vrot.slane %v3012, %v3016
      %v3018 = vlaneseq
      %v3019 = vshrl.u32 %v3018, 7
      %v3020 = vsub.s32 1, %v3019
      %v3021 = vrot.slane %v3012, %v3020
      %v3022 = vlaneseq
      %v3023 = vshrl.u32 %v3022, 7
      %v3024 = vsub.s32 2, %v3023
      %v3025 = vrot.slane %v3012, %v3024
      %v3026 = vlaneseq
      %v3027 = vshrl.u32 %v3026, 7
      %v3028 = vsub.s32 3, %v3027
      %v3029 = vrot.slane %v3012, %v3028
      %v3066 = vunpack.c.l.b16 %v2980
      %v3067 = vunpack.c.h.b16 %v2980
      %v3068 = vunpack.c.l.b16 %v2981
      %v3069 = vunpack.c.h.b16 %v2981
      %v3070 = vunpack.c.l.b16 %v2982
      %v3071 = vunpack.c.h.b16 %v2982
      %v3072 = vunpack.c.l.b16 %v2983
      %v3073 = vunpack.c.h.b16 %v2983
      %v3074 = vunpack.c.l.b16 %v2984
      %v3075 = vunpack.c.h.b16 %v2984
      %v3076 = vunpack.c.l.b16 %v2985
      %v3077 = vunpack.c.h.b16 %v2985
      %v3078 = vunpack.c.l.b16 %v2986
      %v3079 = vunpack.c.h.b16 %v2986
      %v3080 = vunpack.c.l.b16 %v2987
      %v3081 = vunpack.c.h.b16 %v2987
      %v3082 = vunpack.c.l.b16 %v2988
      %v3083 = vunpack.c.h.b16 %v2988
      %v3084 = vunpack.c.l.b16 %v2989
      %v3085 = vunpack.c.h.b16 %v2989
      %v3086 = vunpack.c.l.b16 %v2990
      %v3087 = vunpack.c.h.b16 %v2990
      %v3088 = vunpack.c.l.b16 %v2991
      %v3089 = vunpack.c.h.b16 %v2991
      %v3090 = vunpack.c.l.b16 %v2992
      %v3091 = vunpack.c.h.b16 %v2992
      %v3092 = vunpack.c.l.b16 %v2993
      %v3093 = vunpack.c.h.b16 %v2993
      %v3094 = vunpack.c.l.b16 %v2994
      %v3095 = vunpack.c.h.b16 %v2994
      %v3096 = vunpack.c.l.b16 %v2995
      %v3097 = vunpack.c.h.b16 %v2995
      %v3098 = vunpack.c.l.b16 %v2996
      %v3099 = vunpack.c.h.b16 %v2996
      %v3100 = vunpack.c.l.b16 %v2997
      %v3101 = vunpack.c.h.b16 %v2997
      %v3102 = vunpack.c.l.b16 %v2998
      %v3103 = vunpack.c.h.b16 %v2998
      %v3104 = vunpack.c.l.b16 %v2999
      %v3105 = vunpack.c.h.b16 %v2999
      %v3106 = vunpack.c.l.b16 %v3000
      %v3107 = vunpack.c.h.b16 %v3000
      %v3108 = vunpack.c.l.b16 %v3001
      %v3109 = vunpack.c.h.b16 %v3001
      %v3110 = vunpack.c.l.b16 %v3002
      %v3111 = vunpack.c.h.b16 %v3002
      %v3112 = vunpack.c.l.b16 %v3003
      %v3113 = vunpack.c.h.b16 %v3003
      %v3114 = vunpack.c.l.b16 %v3004
      %v3115 = vunpack.c.h.b16 %v3004
      %v3116 = vunpack.c.l.b16 %v3005
      %v3117 = vunpack.c.h.b16 %v3005
      %v3118 = vunpack.c.l.b16 %v3006
      %v3119 = vunpack.c.h.b16 %v3006
      %v3120 = vunpack.c.l.b16 %v3007
      %v3121 = vunpack.c.h.b16 %v3007
      %v3122 = vunpack.c.l.b16 %v3008
      %v3123 = vunpack.c.h.b16 %v3008
      %v3124 = vunpack.c.l.b16 %v3009
      %v3125 = vunpack.c.h.b16 %v3009
      %v3126 = vunpack.c.l.b16 %v3010
      %v3127 = vunpack.c.h.b16 %v3010
      %v3128 = vunpack.c.l.b16 %v3011
      %v3129 = vunpack.c.h.b16 %v3011
      %v3130 = vpack.c.b16 %v3070, %v3066
      %v3131 = vpack.c.b16 %v3071, %v3067
      %v3132 = vpack.c.b16 %v3072, %v3068
      %v3133 = vpack.c.b16 %v3073, %v3069
      %v3134 = vpack.c.b16 %v3078, %v3074
      %v3135 = vpack.c.b16 %v3079, %v3075
      %v3136 = vpack.c.b16 %v3080, %v3076
      %v3137 = vpack.c.b16 %v3081, %v3077
      %v3138 = vpack.c.b16 %v3086, %v3082
      %v3139 = vpack.c.b16 %v3087, %v3083
      %v3140 = vpack.c.b16 %v3088, %v3084
      %v3141 = vpack.c.b16 %v3089, %v3085
      %v3142 = vpack.c.b16 %v3094, %v3090
      %v3143 = vpack.c.b16 %v3095, %v3091
      %v3144 = vpack.c.b16 %v3096, %v3092
      %v3145 = vpack.c.b16 %v3097, %v3093
      %v3146 = vpack.c.b16 %v3102, %v3098
      %v3147 = vpack.c.b16 %v3103, %v3099
      %v3148 = vpack.c.b16 %v3104, %v3100
      %v3149 = vpack.c.b16 %v3105, %v3101
      %v3150 = vpack.c.b16 %v3110, %v3106
      %v3151 = vpack.c.b16 %v3111, %v3107
      %v3152 = vpack.c.b16 %v3112, %v3108
      %v3153 = vpack.c.b16 %v3113, %v3109
      %v3154 = vpack.c.b16 %v3118, %v3114
      %v3155 = vpack.c.b16 %v3119, %v3115
      %v3156 = vpack.c.b16 %v3120, %v3116
      %v3157 = vpack.c.b16 %v3121, %v3117
      %v3158 = vpack.c.b16 %v3126, %v3122
      %v3159 = vpack.c.b16 %v3127, %v3123
      %v3160 = vpack.c.b16 %v3128, %v3124
      %v3161 = vpack.c.b16 %v3129, %v3125
      %3194 = vmatprep.subr.bf16.mxu0 %v3131
      %3195 = vmatpush1.bf16.msra.mxu0 %v3130
      %3196 = vmatprep.subr.bf16.mxu0 %v3135
      %3197 = vmatpush1.bf16.msra.mxu0 %v3134
      %3198 = vmatprep.subr.bf16.mxu0 %v3139
      %3199 = vmatpush1.bf16.msra.mxu0 %v3138
      %3200 = vmatprep.subr.bf16.mxu0 %v3143
      %3201 = vmatpush1.bf16.msra.mxu0 %v3142
      %3202 = vmatprep.subr.bf16.mxu0 %v3147
      %3203 = vmatpush1.bf16.msra.mxu0 %v3146
      %3204 = vmatprep.subr.bf16.mxu0 %v3151
      %3205 = vmatpush1.bf16.msra.mxu0 %v3150
      %3206 = vmatprep.subr.bf16.mxu0 %v3155
      %3207 = vmatpush1.bf16.msra.mxu0 %v3154
      %3208 = vmatprep.subr.bf16.mxu0 %v3159
      %3209 = vmatpush1.bf16.msra.mxu0 %v3158
      %3210 = vmatprep.subr.bf16.mxu0 0
      %3211 = vmatpush1.bf16.msra.mxu0 0
      %3212 = vmatprep.subr.bf16.mxu0 0
      %3213 = vmatpush1.bf16.msra.mxu0 0
      %3214 = vmatprep.subr.bf16.mxu0 0
      %3215 = vmatpush1.bf16.msra.mxu0 0
      %3216 = vmatprep.subr.bf16.mxu0 0
      %3217 = vmatpush1.bf16.msra.mxu0 0
      %3218 = vmatprep.subr.bf16.mxu0 0
      %3219 = vmatpush1.bf16.msra.mxu0 0
      %3220 = vmatprep.subr.bf16.mxu0 0
      %3221 = vmatpush1.bf16.msra.mxu0 0
      %3222 = vmatprep.subr.bf16.mxu0 0
      %3223 = vmatpush1.bf16.msra.mxu0 0
      %3224 = vmatprep.subr.bf16.mxu0 0
      %3225 = vmatpush1.bf16.msra.mxu0 0
      %3226 = vmatprep.mubr.bf16.mxu0 0
      %3227 = vmatmul.mubr.bf16.gmra.mrb[0].mxu0 %v2976
      %v3228 = vpop.f32.mrb[0].mxu0
      %v3229 = vadd.f32 %v3017, %v3228
      %v3230 = vpop.f32.mrb[0].mxu0
      %v3231 = vadd.f32 %v3021, %v3230
      %v3232 = vpop.f32.mrb[0].mxu0
      %v3233 = vadd.f32 %v3017, %v3232
      %v3234 = vpop.f32.mrb[0].mxu0
      %v3235 = vadd.f32 %v3021, %v3234
      %3236 = vmatprep.mubr.bf16.mxu0 0
      %3237 = vmatmul.mubr.bf16.gmra.mrb[0].mxu0 %v2977
      %v3238 = vpop.f32.mrb[0].mxu0
      %v3239 = vadd.f32 %v3017, %v3238
      %v3240 = vpop.f32.mrb[0].mxu0
      %v3241 = vadd.f32 %v3021, %v3240
      %v3242 = vpop.f32.mrb[0].mxu0
      %v3243 = vadd.f32 %v3017, %v3242
      %v3244 = vpop.f32.mrb[0].mxu0
      %v3245 = vadd.f32 %v3021, %v3244
      %3246 = vmatprep.mubr.bf16.mxu0 0
      %3247 = vmatmul.mubr.bf16.gmra.mrb[0].mxu0 %v2978
      %v3248 = vpop.f32.mrb[0].mxu0
      %v3249 = vadd.f32 %v3017, %v3248
      %v3250 = vpop.f32.mrb[0].mxu0
      %v3251 = vadd.f32 %v3021, %v3250
      %v3252 = vpop.f32.mrb[0].mxu0
      %v3253 = vadd.f32 %v3017, %v3252
      %v3254 = vpop.f32.mrb[0].mxu0
      %v3255 = vadd.f32 %v3021, %v3254
      %3256 = vmatprep.mubr.bf16.mxu0 0
      %3257 = vmatmul.mubr.bf16.gmra.mrb[0].mxu0 %v2979
      %v3258 = vpop.f32.mrb[0].mxu0
      %v3259 = vadd.f32 %v3017, %v3258
      %v3260 = vpop.f32.mrb[0].mxu0
      %v3261 = vadd.f32 %v3021, %v3260
      %v3262 = vpop.f32.mrb[0].mxu0
      %v3263 = vadd.f32 %v3017, %v3262
      %v3264 = vpop.f32.mrb[0].mxu0
      %v3265 = vadd.f32 %v3021, %v3264
      %3266 = vdwg.mxu0
      %3267 = vmatprep.subr.bf16.mxu0 %v3133
      %3268 = vmatpush1.bf16.msra.mxu0 %v3132
      %3269 = vmatprep.subr.bf16.mxu0 %v3137
      %3270 = vmatpush1.bf16.msra.mxu0 %v3136
      %3271 = vmatprep.subr.bf16.mxu0 %v3141
      %3272 = vmatpush1.bf16.msra.mxu0 %v3140
      %3273 = vmatprep.subr.bf16.mxu0 %v3145
      %3274 = vmatpush1.bf16.msra.mxu0 %v3144
      %3275 = vmatprep.subr.bf16.mxu0 %v3149
      %3276 = vmatpush1.bf16.msra.mxu0 %v3148
      %3277 = vmatprep.subr.bf16.mxu0 %v3153
      %3278 = vmatpush1.bf16.msra.mxu0 %v3152
      %3279 = vmatprep.subr.bf16.mxu0 %v3157
      %3280 = vmatpush1.bf16.msra.mxu0 %v3156
      %3281 = vmatprep.subr.bf16.mxu0 %v3161
      %3282 = vmatpush1.bf16.msra.mxu0 %v3160
      %3283 = vmatprep.subr.bf16.mxu0 0
      %3284 = vmatpush1.bf16.msra.mxu0 0
      %3285 = vmatprep.subr.bf16.mxu0 0
      %3286 = vmatpush1.bf16.msra.mxu0 0
      %3287 = vmatprep.subr.bf16.mxu0 0
      %3288 = vmatpush1.bf16.msra.mxu0 0
      %3289 = vmatprep.subr.bf16.mxu0 0
      %3290 = vmatpush1.bf16.msra.mxu0 0
      %3291 = vmatprep.subr.bf16.mxu0 0
      %3292 = vmatpush1.bf16.msra.mxu0 0
      %3293 = vmatprep.subr.bf16.mxu0 0
      %3294 = vmatpush1.bf16.msra.mxu0 0
      %3295 = vmatprep.subr.bf16.mxu0 0
      %3296 = vmatpush1.bf16.msra.mxu0 0
      %3297 = vmatprep.subr.bf16.mxu0 0
      %3298 = vmatpush1.bf16.msra.mxu0 0
      %3299 = vmatprep.mubr.bf16.mxu0 0
      %3300 = vmatmul.mubr.bf16.gmra.mrb[0].mxu0 %v2976
      %v3301 = vpop.f32.mrb[0].mxu0
      %v3302 = vadd.f32 %v3025, %v3301
      %v3303 = vpop.f32.mrb[0].mxu0
      %v3304 = vadd.f32 %v3029, %v3303
      %v3305 = vpop.f32.mrb[0].mxu0
      %v3306 = vadd.f32 %v3025, %v3305
      %v3307 = vpop.f32.mrb[0].mxu0
      %v3308 = vadd.f32 %v3029, %v3307
      %3309 = vmatprep.mubr.bf16.mxu0 0
      %3310 = vmatmul.mubr.bf16.gmra.mrb[0].mxu0 %v2977
      %v3311 = vpop.f32.mrb[0].mxu0
      %v3312 = vadd.f32 %v3025, %v3311
      %v3313 = vpop.f32.mrb[0].mxu0
      %v3314 = vadd.f32 %v3029, %v3313
      %v3315 = vpop.f32.mrb[0].mxu0
      %v3316 = vadd.f32 %v3025, %v3315
      %v3317 = vpop.f32.mrb[0].mxu0
      %v3318 = vadd.f32 %v3029, %v3317
      %3319 = vmatprep.mubr.bf16.mxu0 0
      %3320 = vmatmul.mubr.bf16.gmra.mrb[0].mxu0 %v2978
      %v3321 = vpop.f32.mrb[0].mxu0
      %v3322 = vadd.f32 %v3025, %v3321
      %v3323 = vpop.f32.mrb[0].mxu0
      %v3324 = vadd.f32 %v3029, %v3323
      %v3325 = vpop.f32.mrb[0].mxu0
      %v3326 = vadd.f32 %v3025, %v3325
      %v3327 = vpop.f32.mrb[0].mxu0
      %v3328 = vadd.f32 %v3029, %v3327
      %3329 = vmatprep.mubr.bf16.mxu0 0
      %3330 = vmatmul.mubr.bf16.gmra.mrb[0].mxu0 %v2979
      %v3331 = vpop.f32.mrb[0].mxu0
      %v3332 = vadd.f32 %v3025, %v3331
      %v3333 = vpop.f32.mrb[0].mxu0
      %v3334 = vadd.f32 %v3029, %v3333
      %v3335 = vpop.f32.mrb[0].mxu0
      %v3336 = vadd.f32 %v3025, %v3335
      %v3337 = vpop.f32.mrb[0].mxu0
      %v3338 = vadd.f32 %v3029, %v3337
      %3339 = vdwg.mxu0
      %v3340 = vmax.f32 %v3229, 0.0
      %v3341 = vmax.f32 %v3231, 0.0
      %v3342 = vmax.f32 %v3302, 0.0
      %v3343 = vmax.f32 %v3304, 0.0
      %v3344 = vmax.f32 %v3233, 0.0
      %v3345 = vmax.f32 %v3235, 0.0
      %v3346 = vmax.f32 %v3306, 0.0
      %v3347 = vmax.f32 %v3308, 0.0
      %v3348 = vmax.f32 %v3239, 0.0
      %v3349 = vmax.f32 %v3241, 0.0
      %v3350 = vmax.f32 %v3312, 0.0
      %v3351 = vmax.f32 %v3314, 0.0
      %v3352 = vmax.f32 %v3243, 0.0
      %v3353 = vmax.f32 %v3245, 0.0
      %v3354 = vmax.f32 %v3316, 0.0
      %v3355 = vmax.f32 %v3318, 0.0
      %v3356 = vmax.f32 %v3249, 0.0
      %v3357 = vmax.f32 %v3251, 0.0
      %v3358 = vmax.f32 %v3322, 0.0
      %v3359 = vmax.f32 %v3324, 0.0
      %v3360 = vmax.f32 %v3253, 0.0
      %v3361 = vmax.f32 %v3255, 0.0
      %v3362 = vmax.f32 %v3326, 0.0
      %v3363 = vmax.f32 %v3328, 0.0
      %v3364 = vmax.f32 %v3259, 0.0
      %v3365 = vmax.f32 %v3261, 0.0
      %v3366 = vmax.f32 %v3332, 0.0
      %v3367 = vmax.f32 %v3334, 0.0
      %v3368 = vmax.f32 %v3263, 0.0
      %v3369 = vmax.f32 %v3265, 0.0
      %v3370 = vmax.f32 %v3336, 0.0
      %v3371 = vmax.f32 %v3338, 0.0
      %v3372 = vpack.c.bf16 %v3344, %v3340
      %v3373 = vpack.c.bf16 %v3345, %v3341
      %v3374 = vpack.c.bf16 %v3346, %v3342
      %v3375 = vpack.c.bf16 %v3347, %v3343
      %v3376 = vpack.c.bf16 %v3352, %v3348
      %v3377 = vpack.c.bf16 %v3353, %v3349
      %v3378 = vpack.c.bf16 %v3354, %v3350
      %v3379 = vpack.c.bf16 %v3355, %v3351
      %v3380 = vpack.c.bf16 %v3360, %v3356
      %v3381 = vpack.c.bf16 %v3361, %v3357
      %v3382 = vpack.c.bf16 %v3362, %v3358
      %v3383 = vpack.c.bf16 %v3363, %v3359
      %v3384 = vpack.c.bf16 %v3368, %v3364
      %v3385 = vpack.c.bf16 %v3369, %v3365
      %v3386 = vpack.c.bf16 %v3370, %v3366
      %v3387 = vpack.c.bf16 %v3371, %v3367
      %v3388 = vld [vmem:[%s13] sm:$0xf]
      %v3389 = vld [vmem:[%s13 + $0x4] sm:$0xf]
      %v3390 = vld [vmem:[%s13 + $0x8] sm:$0xf]
      %v3391 = vld [vmem:[%s13 + $0xc] sm:$0xf]
      %v3392 = vld [vmem:[%s13 + $0x10] sm:$0xf]
      %v3393 = vld [vmem:[%s13 + $0x14] sm:$0xf]
      %v3394 = vld [vmem:[%s13 + $0x18] sm:$0xf]
      %v3395 = vld [vmem:[%s13 + $0x1c] sm:$0xf]
      %v3396 = vld [vmem:[%s13 + $0x20] sm:$0xf]
      %v3397 = vld [vmem:[%s13 + $0x24] sm:$0xf]
      %v3398 = vld [vmem:[%s13 + $0x28] sm:$0xf]
      %v3399 = vld [vmem:[%s13 + $0x2c] sm:$0xf]
      %v3400 = vld [vmem:[%s13 + $0x30] sm:$0xf]
      %v3401 = vld [vmem:[%s13 + $0x34] sm:$0xf]
      %v3402 = vld [vmem:[%s13 + $0x38] sm:$0xf]
      %v3403 = vld [vmem:[%s13 + $0x3c] sm:$0xf]
      %v3404 = vld [vmem:[%s13 + $0x40] sm:$0xf]
      %v3405 = vld [vmem:[%s13 + $0x44] sm:$0xf]
      %v3406 = vld [vmem:[%s13 + $0x48] sm:$0xf]
      %v3407 = vld [vmem:[%s13 + $0x4c] sm:$0xf]
      %v3408 = vld [vmem:[%s13 + $0x50] sm:$0xf]
      %v3409 = vld [vmem:[%s13 + $0x54] sm:$0xf]
      %v3410 = vld [vmem:[%s13 + $0x58] sm:$0xf]
      %v3411 = vld [vmem:[%s13 + $0x5c] sm:$0xf]
      %v3412 = vld [vmem:[%s13 + $0x60] sm:$0xf]
      %v3413 = vld [vmem:[%s13 + $0x64] sm:$0xf]
      %v3414 = vld [vmem:[%s13 + $0x68] sm:$0xf]
      %v3415 = vld [vmem:[%s13 + $0x6c] sm:$0xf]
      %v3416 = vld [vmem:[%s13 + $0x70] sm:$0xf]
      %v3417 = vld [vmem:[%s13 + $0x74] sm:$0xf]
      %v3418 = vld [vmem:[%s13 + $0x78] sm:$0xf]
      %v3419 = vld [vmem:[%s13 + $0x7c] sm:$0xf]
      %v3420 = vld [vmem:[%s13 + $0x80] sm:$0xf]
      %v3421 = vld [vmem:[%s13 + $0x84] sm:$0xf]
      %v3422 = vld [vmem:[%s13 + $0x88] sm:$0xf]
      %v3423 = vld [vmem:[%s13 + $0x8c] sm:$0xf]
      %v3424 = vld [vmem:[%s13 + $0x90] sm:$0xf]
      %v3425 = vld [vmem:[%s13 + $0x94] sm:$0xf]
      %v3426 = vld [vmem:[%s13 + $0x98] sm:$0xf]
      %v3427 = vld [vmem:[%s13 + $0x9c] sm:$0xf]
      %v3428 = vld [vmem:[%s13 + $0xa0] sm:$0xf]
      %v3429 = vld [vmem:[%s13 + $0xa4] sm:$0xf]
      %v3430 = vld [vmem:[%s13 + $0xa8] sm:$0xf]
      %v3431 = vld [vmem:[%s13 + $0xac] sm:$0xf]
      %v3432 = vld [vmem:[%s13 + $0xb0] sm:$0xf]
      %v3433 = vld [vmem:[%s13 + $0xb4] sm:$0xf]
      %v3434 = vld [vmem:[%s13 + $0xb8] sm:$0xf]
      %v3435 = vld [vmem:[%s13 + $0xbc] sm:$0xf]
      %v3436 = vld [vmem:[%s13 + $0xc0] sm:$0xf]
      %v3437 = vld [vmem:[%s13 + $0xc4] sm:$0xf]
      %v3438 = vld [vmem:[%s13 + $0xc8] sm:$0xf]
      %v3439 = vld [vmem:[%s13 + $0xcc] sm:$0xf]
      %v3440 = vld [vmem:[%s13 + $0xd0] sm:$0xf]
      %v3441 = vld [vmem:[%s13 + $0xd4] sm:$0xf]
      %v3442 = vld [vmem:[%s13 + $0xd8] sm:$0xf]
      %v3443 = vld [vmem:[%s13 + $0xdc] sm:$0xf]
      %v3444 = vld [vmem:[%s13 + $0xe0] sm:$0xf]
      %v3445 = vld [vmem:[%s13 + $0xe4] sm:$0xf]
      %v3446 = vld [vmem:[%s13 + $0xe8] sm:$0xf]
      %v3447 = vld [vmem:[%s13 + $0xec] sm:$0xf]
      %v3448 = vld [vmem:[%s13 + $0xf0] sm:$0xf]
      %v3449 = vld [vmem:[%s13 + $0xf4] sm:$0xf]
      %v3450 = vld [vmem:[%s13 + $0xf8] sm:$0xf]
      %v3451 = vld [vmem:[%s13 + $0xfc] sm:$0xf]
      %v3452 = vld [vmem:[%s14] sm:$0x1]
      %v3454 = vlaneseq
      %v3455 = vshrl.u32 %v3454, 7
      %v3456 = vsub.s32 0, %v3455
      %v3457 = vrot.slane %v3452, %v3456
      %v3523 = vunpack.c.l.b16 %v3388
      %v3524 = vunpack.c.l.b16 %v3389
      %v3525 = vunpack.c.l.b16 %v3390
      %v3526 = vunpack.c.l.b16 %v3391
      %v3527 = vunpack.c.l.b16 %v3392
      %v3528 = vunpack.c.l.b16 %v3393
      %v3529 = vunpack.c.l.b16 %v3394
      %v3530 = vunpack.c.l.b16 %v3395
      %v3531 = vunpack.c.l.b16 %v3396
      %v3532 = vunpack.c.l.b16 %v3397
      %v3533 = vunpack.c.l.b16 %v3398
      %v3534 = vunpack.c.l.b16 %v3399
      %v3535 = vunpack.c.l.b16 %v3400
      %v3536 = vunpack.c.l.b16 %v3401
      %v3537 = vunpack.c.l.b16 %v3402
      %v3538 = vunpack.c.l.b16 %v3403
      %v3539 = vunpack.c.l.b16 %v3404
      %v3540 = vunpack.c.l.b16 %v3405
      %v3541 = vunpack.c.l.b16 %v3406
      %v3542 = vunpack.c.l.b16 %v3407
      %v3543 = vunpack.c.l.b16 %v3408
      %v3544 = vunpack.c.l.b16 %v3409
      %v3545 = vunpack.c.l.b16 %v3410
      %v3546 = vunpack.c.l.b16 %v3411
      %v3547 = vunpack.c.l.b16 %v3412
      %v3548 = vunpack.c.l.b16 %v3413
      %v3549 = vunpack.c.l.b16 %v3414
      %v3550 = vunpack.c.l.b16 %v3415
      %v3551 = vunpack.c.l.b16 %v3416
      %v3552 = vunpack.c.l.b16 %v3417
      %v3553 = vunpack.c.l.b16 %v3418
      %v3554 = vunpack.c.l.b16 %v3419
      %v3555 = vunpack.c.l.b16 %v3420
      %v3556 = vunpack.c.l.b16 %v3421
      %v3557 = vunpack.c.l.b16 %v3422
      %v3558 = vunpack.c.l.b16 %v3423
      %v3559 = vunpack.c.l.b16 %v3424
      %v3560 = vunpack.c.l.b16 %v3425
      %v3561 = vunpack.c.l.b16 %v3426
      %v3562 = vunpack.c.l.b16 %v3427
      %v3563 = vunpack.c.l.b16 %v3428
      %v3564 = vunpack.c.l.b16 %v3429
      %v3565 = vunpack.c.l.b16 %v3430
      %v3566 = vunpack.c.l.b16 %v3431
      %v3567 = vunpack.c.l.b16 %v3432
      %v3568 = vunpack.c.l.b16 %v3433
      %v3569 = vunpack.c.l.b16 %v3434
      %v3570 = vunpack.c.l.b16 %v3435
      %v3571 = vunpack.c.l.b16 %v3436
      %v3572 = vunpack.c.l.b16 %v3437
      %v3573 = vunpack.c.l.b16 %v3438
      %v3574 = vunpack.c.l.b16 %v3439
      %v3575 = vunpack.c.l.b16 %v3440
      %v3576 = vunpack.c.l.b16 %v3441
      %v3577 = vunpack.c.l.b16 %v3442
      %v3578 = vunpack.c.l.b16 %v3443
      %v3579 = vunpack.c.l.b16 %v3444
      %v3580 = vunpack.c.l.b16 %v3445
      %v3581 = vunpack.c.l.b16 %v3446
      %v3582 = vunpack.c.l.b16 %v3447
      %v3583 = vunpack.c.l.b16 %v3448
      %v3584 = vunpack.c.l.b16 %v3449
      %v3585 = vunpack.c.l.b16 %v3450
      %v3586 = vunpack.c.l.b16 %v3451
      %v3587 = vpack.c.b16 %v3524, %v3523
      %v3588 = vpack.c.b16 %v3526, %v3525
      %v3589 = vpack.c.b16 %v3528, %v3527
      %v3590 = vpack.c.b16 %v3530, %v3529
      %v3591 = vpack.c.b16 %v3532, %v3531
      %v3592 = vpack.c.b16 %v3534, %v3533
      %v3593 = vpack.c.b16 %v3536, %v3535
      %v3594 = vpack.c.b16 %v3538, %v3537
      %v3595 = vpack.c.b16 %v3540, %v3539
      %v3596 = vpack.c.b16 %v3542, %v3541
      %v3597 = vpack.c.b16 %v3544, %v3543
      %v3598 = vpack.c.b16 %v3546, %v3545
      %v3599 = vpack.c.b16 %v3548, %v3547
      %v3600 = vpack.c.b16 %v3550, %v3549
      %v3601 = vpack.c.b16 %v3552, %v3551
      %v3602 = vpack.c.b16 %v3554, %v3553
      %v3603 = vpack.c.b16 %v3556, %v3555
      %v3604 = vpack.c.b16 %v3558, %v3557
      %v3605 = vpack.c.b16 %v3560, %v3559
      %v3606 = vpack.c.b16 %v3562, %v3561
      %v3607 = vpack.c.b16 %v3564, %v3563
      %v3608 = vpack.c.b16 %v3566, %v3565
      %v3609 = vpack.c.b16 %v3568, %v3567
      %v3610 = vpack.c.b16 %v3570, %v3569
      %v3611 = vpack.c.b16 %v3572, %v3571
      %v3612 = vpack.c.b16 %v3574, %v3573
      %v3613 = vpack.c.b16 %v3576, %v3575
      %v3614 = vpack.c.b16 %v3578, %v3577
      %v3615 = vpack.c.b16 %v3580, %v3579
      %v3616 = vpack.c.b16 %v3582, %v3581
      %v3617 = vpack.c.b16 %v3584, %v3583
      %v3618 = vpack.c.b16 %v3586, %v3585
      %3651 = vmatprep.subr.bf16.mxu0 0
      %3652 = vmatpush1.bf16.msra.mxu0 %v3587
      %3653 = vmatprep.subr.bf16.mxu0 0
      %3654 = vmatpush1.bf16.msra.mxu0 %v3588
      %3655 = vmatprep.subr.bf16.mxu0 0
      %3656 = vmatpush1.bf16.msra.mxu0 %v3589
      %3657 = vmatprep.subr.bf16.mxu0 0
      %3658 = vmatpush1.bf16.msra.mxu0 %v3590
      %3659 = vmatprep.subr.bf16.mxu0 0
      %3660 = vmatpush1.bf16.msra.mxu0 %v3591
      %3661 = vmatprep.subr.bf16.mxu0 0
      %3662 = vmatpush1.bf16.msra.mxu0 %v3592
      %3663 = vmatprep.subr.bf16.mxu0 0
      %3664 = vmatpush1.bf16.msra.mxu0 %v3593
      %3665 = vmatprep.subr.bf16.mxu0 0
      %3666 = vmatpush1.bf16.msra.mxu0 %v3594
      %3667 = vmatprep.subr.bf16.mxu0 0
      %3668 = vmatpush1.bf16.msra.mxu0 %v3595
      %3669 = vmatprep.subr.bf16.mxu0 0
      %3670 = vmatpush1.bf16.msra.mxu0 %v3596
      %3671 = vmatprep.subr.bf16.mxu0 0
      %3672 = vmatpush1.bf16.msra.mxu0 %v3597
      %3673 = vmatprep.subr.bf16.mxu0 0
      %3674 = vmatpush1.bf16.msra.mxu0 %v3598
      %3675 = vmatprep.subr.bf16.mxu0 0
      %3676 = vmatpush1.bf16.msra.mxu0 %v3599
      %3677 = vmatprep.subr.bf16.mxu0 0
      %3678 = vmatpush1.bf16.msra.mxu0 %v3600
      %3679 = vmatprep.subr.bf16.mxu0 0
      %3680 = vmatpush1.bf16.msra.mxu0 %v3601
      %3681 = vmatprep.subr.bf16.mxu0 0
      %3682 = vmatpush1.bf16.msra.mxu0 %v3602
      %3683 = vmatprep.mubr.bf16.mxu0 %v3373
      %3684 = vmatmul.mubr.bf16.gmra.mrb[0].mxu0 %v3372
      %v3685 = vpop.f32.mrb[0].mxu0
      %v3686 = vadd.f32 %v3457, %v3685
      %v3687 = vpop.f32.mrb[0].mxu0
      %v3688 = vpop.f32.mrb[0].mxu0
      %v3689 = vadd.f32 %v3457, %v3688
      %v3690 = vpop.f32.mrb[0].mxu0
      %3691 = vmatprep.mubr.bf16.mxu0 %v3377
      %3692 = vmatmul.mubr.bf16.gmra.mrb[0].mxu0 %v3376
      %v3693 = vpop.f32.mrb[0].mxu0
      %v3694 = vadd.f32 %v3457, %v3693
      %v3695 = vpop.f32.mrb[0].mxu0
      %v3696 = vpop.f32.mrb[0].mxu0
      %v3697 = vadd.f32 %v3457, %v3696
      %v3698 = vpop.f32.mrb[0].mxu0
      %3699 = vmatprep.mubr.bf16.mxu0 %v3381
      %3700 = vmatmul.mubr.bf16.gmra.mrb[0].mxu0 %v3380
      %v3701 = vpop.f32.mrb[0].mxu0
      %v3702 = vadd.f32 %v3457, %v3701
      %v3703 = vpop.f32.mrb[0].mxu0
      %v3704 = vpop.f32.mrb[0].mxu0
      %v3705 = vadd.f32 %v3457, %v3704
      %v3706 = vpop.f32.mrb[0].mxu0
      %3707 = vmatprep.mubr.bf16.mxu0 %v3385
      %3708 = vmatmul.mubr.bf16.gmra.mrb[0].mxu0 %v3384
      %v3709 = vpop.f32.mrb[0].mxu0
      %v3710 = vadd.f32 %v3457, %v3709
      %v3711 = vpop.f32.mrb[0].mxu0
      %v3712 = vpop.f32.mrb[0].mxu0
      %v3713 = vadd.f32 %v3457, %v3712
      %v3714 = vpop.f32.mrb[0].mxu0
      %3715 = vdwg.mxu0
      %3716 = vmatprep.subr.bf16.mxu0 0
      %3717 = vmatpush1.bf16.msra.mxu0 %v3603
      %3718 = vmatprep.subr.bf16.mxu0 0
      %3719 = vmatpush1.bf16.msra.mxu0 %v3604
      %3720 = vmatprep.subr.bf16.mxu0 0
      %3721 = vmatpush1.bf16.msra.mxu0 %v3605
      %3722 = vmatprep.subr.bf16.mxu0 0
      %3723 = vmatpush1.bf16.msra.mxu0 %v3606
      %3724 = vmatprep.subr.bf16.mxu0 0
      %3725 = vmatpush1.bf16.msra.mxu0 %v3607
      %3726 = vmatprep.subr.bf16.mxu0 0
      %3727 = vmatpush1.bf16.msra.mxu0 %v3608
      %3728 = vmatprep.subr.bf16.mxu0 0
      %3729 = vmatpush1.bf16.msra.mxu0 %v3609
      %3730 = vmatprep.subr.bf16.mxu0 0
      %3731 = vmatpush1.bf16.msra.mxu0 %v3610
      %3732 = vmatprep.subr.bf16.mxu0 0
      %3733 = vmatpush1.bf16.msra.mxu0 %v3611
      %3734 = vmatprep.subr.bf16.mxu0 0
      %3735 = vmatpush1.bf16.msra.mxu0 %v3612
      %3736 = vmatprep.subr.bf16.mxu0 0
      %3737 = vmatpush1.bf16.msra.mxu0 %v3613
      %3738 = vmatprep.subr.bf16.mxu0 0
      %3739 = vmatpush1.bf16.msra.mxu0 %v3614
      %3740 = vmatprep.subr.bf16.mxu0 0
      %3741 = vmatpush1.bf16.msra.mxu0 %v3615
      %3742 = vmatprep.subr.bf16.mxu0 0
      %3743 = vmatpush1.bf16.msra.mxu0 %v3616
      %3744 = vmatprep.subr.bf16.mxu0 0
      %3745 = vmatpush1.bf16.msra.mxu0 %v3617
      %3746 = vmatprep.subr.bf16.mxu0 0
      %3747 = vmatpush1.bf16.msra.mxu0 %v3618
      %3748 = vmatprep.mubr.bf16.mxu0 %v3375
      %3749 = vmatmul.mubr.bf16.gmra.mrb[0].mxu0 %v3374
      %v3750 = vpop.f32.mrb[0].mxu0
      %v3751 = vadd.f32 %v3686, %v3750
      %v3752 = vpop.f32.mrb[0].mxu0
      %v3753 = vpop.f32.mrb[0].mxu0
      %v3754 = vadd.f32 %v3689, %v3753
      %v3755 = vpop.f32.mrb[0].mxu0
      %3756 = vmatprep.mubr.bf16.mxu0 %v3379
      %3757 = vmatmul.mubr.bf16.gmra.mrb[0].mxu0 %v3378
      %v3758 = vpop.f32.mrb[0].mxu0
      %v3759 = vadd.f32 %v3694, %v3758
      %v3760 = vpop.f32.mrb[0].mxu0
      %v3761 = vpop.f32.mrb[0].mxu0
      %v3762 = vadd.f32 %v3697, %v3761
      %v3763 = vpop.f32.mrb[0].mxu0
      %3764 = vmatprep.mubr.bf16.mxu0 %v3383
      %3765 = vmatmul.mubr.bf16.gmra.mrb[0].mxu0 %v3382
      %v3766 = vpop.f32.mrb[0].mxu0
      %v3767 = vadd.f32 %v3702, %v3766
      %v3768 = vpop.f32.mrb[0].mxu0
      %v3769 = vpop.f32.mrb[0].mxu0
      %v3770 = vadd.f32 %v3705, %v3769
      %v3771 = vpop.f32.mrb[0].mxu0
      %3772 = vmatprep.mubr.bf16.mxu0 %v3387
      %3773 = vmatmul.mubr.bf16.gmra.mrb[0].mxu0 %v3386
      %v3774 = vpop.f32.mrb[0].mxu0
      %v3775 = vadd.f32 %v3710, %v3774
      %v3776 = vpop.f32.mrb[0].mxu0
      %v3777 = vpop.f32.mrb[0].mxu0
      %v3778 = vadd.f32 %v3713, %v3777
      %v3779 = vpop.f32.mrb[0].mxu0
      %3780 = vdwg.mxu0
      %v3781 = vadd.f32 %v2968, %v3751
      %v3782 = vadd.f32 %v2969, %v3754
      %v3783 = vadd.f32 %v2970, %v3759
      %v3784 = vadd.f32 %v2971, %v3762
      %v3785 = vadd.f32 %v2972, %v3767
      %v3786 = vadd.f32 %v2973, %v3770
      %v3787 = vadd.f32 %v2974, %v3775
      %v3788 = vadd.f32 %v2975, %v3778
      %v3789 = vld [vmem:[%s15] sm:$0x1]
      %v3790 = vld [vmem:[%s16] sm:$0x1]
      %3791 = vadd.xlane.f32.xlu0 %v3781
      %v3792 = vpop.xlane.xlu0 %3791
      %3793 = vadd.xlane.f32.xlu0 %v3782
      %v3794 = vpop.xlane.xlu0 %3793
      %3795 = vadd.xlane.f32.xlu0 %v3783
      %v3796 = vpop.xlane.xlu0 %3795
      %3797 = vadd.xlane.f32.xlu0 %v3784
      %v3798 = vpop.xlane.xlu0 %3797
      %3799 = vadd.xlane.f32.xlu0 %v3785
      %v3800 = vpop.xlane.xlu0 %3799
      %3801 = vadd.xlane.f32.xlu0 %v3786
      %v3802 = vpop.xlane.xlu0 %3801
      %3803 = vadd.xlane.f32.xlu0 %v3787
      %v3804 = vpop.xlane.xlu0 %3803
      %3805 = vadd.xlane.f32.xlu0 %v3788
      %v3806 = vpop.xlane.xlu0 %3805
      %v3807 = vmul.f32 %v3792, %v829
      %v3808 = vmul.f32 %v3794, %v829
      %v3809 = vmul.f32 %v3796, %v829
      %v3810 = vmul.f32 %v3798, %v829
      %v3811 = vmul.f32 %v3800, %v829
      %v3812 = vmul.f32 %v3802, %v829
      %v3813 = vmul.f32 %v3804, %v829
      %v3814 = vmul.f32 %v3806, %v829
      %v3815 = vsub.f32 %v3781, %v3807
      %v3816 = vsub.f32 %v3782, %v3808
      %v3817 = vsub.f32 %v3783, %v3809
      %v3818 = vsub.f32 %v3784, %v3810
      %v3819 = vsub.f32 %v3785, %v3811
      %v3820 = vsub.f32 %v3786, %v3812
      %v3821 = vsub.f32 %v3787, %v3813
      %v3822 = vsub.f32 %v3788, %v3814
      %v3823 = vmul.f32 %v3815, %v3815
      %v3824 = vmul.f32 %v3816, %v3816
      %v3825 = vmul.f32 %v3817, %v3817
      %v3826 = vmul.f32 %v3818, %v3818
      %v3827 = vmul.f32 %v3819, %v3819
      %v3828 = vmul.f32 %v3820, %v3820
      %v3829 = vmul.f32 %v3821, %v3821
      %v3830 = vmul.f32 %v3822, %v3822
      %3831 = vadd.xlane.f32.xlu0 %v3823
      %v3832 = vpop.xlane.xlu0 %3831
      %3833 = vadd.xlane.f32.xlu0 %v3824
      %v3834 = vpop.xlane.xlu0 %3833
      %3835 = vadd.xlane.f32.xlu0 %v3825
      %v3836 = vpop.xlane.xlu0 %3835
      %3837 = vadd.xlane.f32.xlu0 %v3826
      %v3838 = vpop.xlane.xlu0 %3837
      %3839 = vadd.xlane.f32.xlu0 %v3827
      %v3840 = vpop.xlane.xlu0 %3839
      %3841 = vadd.xlane.f32.xlu0 %v3828
      %v3842 = vpop.xlane.xlu0 %3841
      %3843 = vadd.xlane.f32.xlu0 %v3829
      %v3844 = vpop.xlane.xlu0 %3843
      %3845 = vadd.xlane.f32.xlu0 %v3830
      %v3846 = vpop.xlane.xlu0 %3845
      %v3847 = vmul.f32 %v3832, %v829
      %v3848 = vmul.f32 %v3834, %v829
      %v3849 = vmul.f32 %v3836, %v829
      %v3850 = vmul.f32 %v3838, %v829
      %v3851 = vmul.f32 %v3840, %v829
      %v3852 = vmul.f32 %v3842, %v829
      %v3853 = vmul.f32 %v3844, %v829
      %v3854 = vmul.f32 %v3846, %v829
      %v3855 = vadd.f32 %v3847, 1e-05
      %v3856 = vadd.f32 %v3848, 1e-05
      %v3857 = vadd.f32 %v3849, 1e-05
      %v3858 = vadd.f32 %v3850, 1e-05
      %v3859 = vadd.f32 %v3851, 1e-05
      %v3860 = vadd.f32 %v3852, 1e-05
      %v3861 = vadd.f32 %v3853, 1e-05
      %v3862 = vadd.f32 %v3854, 1e-05
      %v3863 = vrsqrt.pop %v3855
      %v3864 = vrsqrt.pop %v3856
      %v3865 = vrsqrt.pop %v3857
      %v3866 = vrsqrt.pop %v3858
      %v3867 = vrsqrt.pop %v3859
      %v3868 = vrsqrt.pop %v3860
      %v3869 = vrsqrt.pop %v3861
      %v3870 = vrsqrt.pop %v3862
      %v3871 = vmul.f32 %v3815, %v3863
      %v3872 = vmul.f32 %v3816, %v3864
      %v3873 = vmul.f32 %v3817, %v3865
      %v3874 = vmul.f32 %v3818, %v3866
      %v3875 = vmul.f32 %v3819, %v3867
      %v3876 = vmul.f32 %v3820, %v3868
      %v3877 = vmul.f32 %v3821, %v3869
      %v3878 = vmul.f32 %v3822, %v3870
      %v3880 = vlaneseq
      %v3881 = vshrl.u32 %v3880, 7
      %v3882 = vsub.s32 0, %v3881
      %v3883 = vrot.slane %v3789, %v3882
      %v3885 = vmul.f32 %v3871, %v3883
      %v3886 = vmul.f32 %v3872, %v3883
      %v3887 = vmul.f32 %v3873, %v3883
      %v3888 = vmul.f32 %v3874, %v3883
      %v3889 = vmul.f32 %v3875, %v3883
      %v3890 = vmul.f32 %v3876, %v3883
      %v3891 = vmul.f32 %v3877, %v3883
      %v3892 = vmul.f32 %v3878, %v3883
      %v3894 = vlaneseq
      %v3895 = vshrl.u32 %v3894, 7
      %v3896 = vsub.s32 0, %v3895
      %v3897 = vrot.slane %v3790, %v3896
      %v3899 = vadd.f32 %v3885, %v3897
      %v3900 = vadd.f32 %v3886, %v3897
      %v3901 = vadd.f32 %v3887, %v3897
      %v3902 = vadd.f32 %v3888, %v3897
      %v3903 = vadd.f32 %v3889, %v3897
      %v3904 = vadd.f32 %v3890, %v3897
      %v3905 = vadd.f32 %v3891, %v3897
      %v3906 = vadd.f32 %v3892, %v3897
      %v3907 = vpack.c.bf16 %v3900, %v3899
      %v3908 = vpack.c.bf16 %v3902, %v3901
      %v3909 = vpack.c.bf16 %v3904, %v3903
      %v3910 = vpack.c.bf16 %v3906, %v3905
      %s3911 = scalar_lea.vmem %s5, 192
      %v3912 = vld [vmem:[%s3911] sm:$0xff]
      %v3913 = vld [vmem:[%s3911 + $0x8] sm:$0xf]
      %v3914 = vld [vmem:[%s3911 + $0xc] sm:$0xff]
      %v3915 = vld [vmem:[%s3911 + $0x14] sm:$0xf]
      %v3916 = vld [vmem:[%s3911 + $0x18] sm:$0xff]
      %v3917 = vld [vmem:[%s3911 + $0x20] sm:$0xf]
      %v3918 = vld [vmem:[%s3911 + $0x24] sm:$0xff]
      %v3919 = vld [vmem:[%s3911 + $0x2c] sm:$0xf]
      %v3920 = vld [vmem:[%s3911 + $0x30] sm:$0xff]
      %v3921 = vld [vmem:[%s3911 + $0x38] sm:$0xf]
      %v3922 = vld [vmem:[%s3911 + $0x3c] sm:$0xff]
      %v3923 = vld [vmem:[%s3911 + $0x44] sm:$0xf]
      %v3924 = vld [vmem:[%s3911 + $0x48] sm:$0xff]
      %v3925 = vld [vmem:[%s3911 + $0x50] sm:$0xf]
      %v3926 = vld [vmem:[%s3911 + $0x54] sm:$0xff]
      %v3927 = vld [vmem:[%s3911 + $0x5c] sm:$0xf]
      %v3928 = vld [vmem:[%s3911 + $0x60] sm:$0xff]
      %v3929 = vld [vmem:[%s3911 + $0x68] sm:$0xf]
      %v3930 = vld [vmem:[%s3911 + $0x6c] sm:$0xff]
      %v3931 = vld [vmem:[%s3911 + $0x74] sm:$0xf]
      %v3932 = vld [vmem:[%s3911 + $0x78] sm:$0xff]
      %v3933 = vld [vmem:[%s3911 + $0x80] sm:$0xf]
      %v3934 = vld [vmem:[%s3911 + $0x84] sm:$0xff]
      %v3935 = vld [vmem:[%s3911 + $0x8c] sm:$0xf]
      %v3936 = vld [vmem:[%s3911 + $0x90] sm:$0xff]
      %v3937 = vld [vmem:[%s3911 + $0x98] sm:$0xf]
      %v3938 = vld [vmem:[%s3911 + $0x9c] sm:$0xff]
      %v3939 = vld [vmem:[%s3911 + $0xa4] sm:$0xf]
      %v3940 = vld [vmem:[%s3911 + $0xa8] sm:$0xff]
      %v3941 = vld [vmem:[%s3911 + $0xb0] sm:$0xf]
      %v3942 = vld [vmem:[%s3911 + $0xb4] sm:$0xff]
      %v3943 = vld [vmem:[%s3911 + $0xbc] sm:$0xf]
      %s3944 = scalar_lea.vmem %s6, 3
      %v3945 = vld [vmem:[%s3944] sm:$0x7]
      %v3947 = vlaneseq
      %v3948 = vshrl.u32 %v3947, 7
      %v3949 = vsub.s32 0, %v3948
      %v3950 = vrot.slane %v3945, %v3949
      %v3951 = vlaneseq
      %v3952 = vshrl.u32 %v3951, 7
      %v3953 = vsub.s32 1, %v3952
      %v3954 = vrot.slane %v3945, %v3953
      %v3955 = vlaneseq
      %v3956 = vshrl.u32 %v3955, 7
      %v3957 = vsub.s32 2, %v3956
      %v3958 = vrot.slane %v3945, %v3957
      %v3994 = vunpack.c.l.b16 %v3912
      %v3995 = vunpack.c.h.b16 %v3912
      %v3996 = vunpack.c.l.b16 %v3913
      %v3997 = vunpack.c.l.b16 %v3914
      %v3998 = vunpack.c.h.b16 %v3914
      %v3999 = vunpack.c.l.b16 %v3915
      %v4000 = vunpack.c.l.b16 %v3916
      %v4001 = vunpack.c.h.b16 %v3916
      %v4002 = vunpack.c.l.b16 %v3917
      %v4003 = vunpack.c.l.b16 %v3918
      %v4004 = vunpack.c.h.b16 %v3918
      %v4005 = vunpack.c.l.b16 %v3919
      %v4006 = vunpack.c.l.b16 %v3920
      %v4007 = vunpack.c.h.b16 %v3920
      %v4008 = vunpack.c.l.b16 %v3921
      %v4009 = vunpack.c.l.b16 %v3922
      %v4010 = vunpack.c.h.b16 %v3922
      %v4011 = vunpack.c.l.b16 %v3923
      %v4012 = vunpack.c.l.b16 %v3924
      %v4013 = vunpack.c.h.b16 %v3924
      %v4014 = vunpack.c.l.b16 %v3925
      %v4015 = vunpack.c.l.b16 %v3926
      %v4016 = vunpack.c.h.b16 %v3926
      %v4017 = vunpack.c.l.b16 %v3927
      %v4018 = vunpack.c.l.b16 %v3928
      %v4019 = vunpack.c.h.b16 %v3928
      %v4020 = vunpack.c.l.b16 %v3929
      %v4021 = vunpack.c.l.b16 %v3930
      %v4022 = vunpack.c.h.b16 %v3930
      %v4023 = vunpack.c.l.b16 %v3931
      %v4024 = vunpack.c.l.b16 %v3932
      %v4025 = vunpack.c.h.b16 %v3932
      %v4026 = vunpack.c.l.b16 %v3933
      %v4027 = vunpack.c.l.b16 %v3934
      %v4028 = vunpack.c.h.b16 %v3934
      %v4029 = vunpack.c.l.b16 %v3935
      %v4030 = vunpack.c.l.b16 %v3936
      %v4031 = vunpack.c.h.b16 %v3936
      %v4032 = vunpack.c.l.b16 %v3937
      %v4033 = vunpack.c.l.b16 %v3938
      %v4034 = vunpack.c.h.b16 %v3938
      %v4035 = vunpack.c.l.b16 %v3939
      %v4036 = vunpack.c.l.b16 %v3940
      %v4037 = vunpack.c.h.b16 %v3940
      %v4038 = vunpack.c.l.b16 %v3941
      %v4039 = vunpack.c.l.b16 %v3942
      %v4040 = vunpack.c.h.b16 %v3942
      %v4041 = vunpack.c.l.b16 %v3943
      %v4042 = vpack.c.b16 %v3997, %v3994
      %v4043 = vpack.c.b16 %v3998, %v3995
      %v4044 = vpack.c.b16 %v3999, %v3996
      %v4045 = vpack.c.b16 %v4003, %v4000
      %v4046 = vpack.c.b16 %v4004, %v4001
      %v4047 = vpack.c.b16 %v4005, %v4002
      %v4048 = vpack.c.b16 %v4009, %v4006
      %v4049 = vpack.c.b16 %v4010, %v4007
      %v4050 = vpack.c.b16 %v4011, %v4008
      %v4051 = vpack.c.b16 %v4015, %v4012
      %v4052 = vpack.c.b16 %v4016, %v4013
      %v4053 = vpack.c.b16 %v4017, %v4014
      %v4054 = vpack.c.b16 %v4021, %v4018
      %v4055 = vpack.c.b16 %v4022, %v4019
      %v4056 = vpack.c.b16 %v4023, %v4020
      %v4057 = vpack.c.b16 %v4027, %v4024
      %v4058 = vpack.c.b16 %v4028, %v4025
      %v4059 = vpack.c.b16 %v4029, %v4026
      %v4060 = vpack.c.b16 %v4033, %v4030
      %v4061 = vpack.c.b16 %v4034, %v4031
      %v4062 = vpack.c.b16 %v4035, %v4032
      %v4063 = vpack.c.b16 %v4039, %v4036
      %v4064 = vpack.c.b16 %v4040, %v4037
      %v4065 = vpack.c.b16 %v4041, %v4038
      %4090 = vmatprep.subr.bf16.mxu0 %v4043
      %4091 = vmatpush1.bf16.msra.mxu0 %v4042
      %4092 = vmatprep.subr.bf16.mxu0 %v4046
      %4093 = vmatpush1.bf16.msra.mxu0 %v4045
      %4094 = vmatprep.subr.bf16.mxu0 %v4049
      %4095 = vmatpush1.bf16.msra.mxu0 %v4048
      %4096 = vmatprep.subr.bf16.mxu0 %v4052
      %4097 = vmatpush1.bf16.msra.mxu0 %v4051
      %4098 = vmatprep.subr.bf16.mxu0 %v4055
      %4099 = vmatpush1.bf16.msra.mxu0 %v4054
      %4100 = vmatprep.subr.bf16.mxu0 %v4058
      %4101 = vmatpush1.bf16.msra.mxu0 %v4057
      %4102 = vmatprep.subr.bf16.mxu0 %v4061
      %4103 = vmatpush1.bf16.msra.mxu0 %v4060
      %4104 = vmatprep.subr.bf16.mxu0 %v4064
      %4105 = vmatpush1.bf16.msra.mxu0 %v4063
      %4106 = vmatprep.subr.bf16.mxu0 0
      %4107 = vmatpush1.bf16.msra.mxu0 0
      %4108 = vmatprep.subr.bf16.mxu0 0
      %4109 = vmatpush1.bf16.msra.mxu0 0
      %4110 = vmatprep.subr.bf16.mxu0 0
      %4111 = vmatpush1.bf16.msra.mxu0 0
      %4112 = vmatprep.subr.bf16.mxu0 0
      %4113 = vmatpush1.bf16.msra.mxu0 0
      %4114 = vmatprep.subr.bf16.mxu0 0
      %4115 = vmatpush1.bf16.msra.mxu0 0
      %4116 = vmatprep.subr.bf16.mxu0 0
      %4117 = vmatpush1.bf16.msra.mxu0 0
      %4118 = vmatprep.subr.bf16.mxu0 0
      %4119 = vmatpush1.bf16.msra.mxu0 0
      %4120 = vmatprep.subr.bf16.mxu0 0
      %4121 = vmatpush1.bf16.msra.mxu0 0
      %4122 = vmatprep.mubr.bf16.mxu0 0
      %4123 = vmatmul.mubr.bf16.gmra.mrb[0].mxu0 %v3907
      %v4124 = vpop.f32.mrb[0].mxu0
      %v4125 = vadd.f32 %v3950, %v4124
      %v4126 = vpop.f32.mrb[0].mxu0
      %v4127 = vadd.f32 %v3954, %v4126
      %v4128 = vpop.f32.mrb[0].mxu0
      %v4129 = vadd.f32 %v3950, %v4128
      %v4130 = vpop.f32.mrb[0].mxu0
      %v4131 = vadd.f32 %v3954, %v4130
      %4132 = vmatprep.mubr.bf16.mxu0 0
      %4133 = vmatmul.mubr.bf16.gmra.mrb[0].mxu0 %v3908
      %v4134 = vpop.f32.mrb[0].mxu0
      %v4135 = vadd.f32 %v3950, %v4134
      %v4136 = vpop.f32.mrb[0].mxu0
      %v4137 = vadd.f32 %v3954, %v4136
      %v4138 = vpop.f32.mrb[0].mxu0
      %v4139 = vadd.f32 %v3950, %v4138
      %v4140 = vpop.f32.mrb[0].mxu0
      %v4141 = vadd.f32 %v3954, %v4140
      %4142 = vmatprep.mubr.bf16.mxu0 0
      %4143 = vmatmul.mubr.bf16.gmra.mrb[0].mxu0 %v3909
      %v4144 = vpop.f32.mrb[0].mxu0
      %v4145 = vadd.f32 %v3950, %v4144
      %v4146 = vpop.f32.mrb[0].mxu0
      %v4147 = vadd.f32 %v3954, %v4146
      %v4148 = vpop.f32.mrb[0].mxu0
      %v4149 = vadd.f32 %v3950, %v4148
      %v4150 = vpop.f32.mrb[0].mxu0
      %v4151 = vadd.f32 %v3954, %v4150
      %4152 = vmatprep.mubr.bf16.mxu0 0
      %4153 = vmatmul.mubr.bf16.gmra.mrb[0].mxu0 %v3910
      %v4154 = vpop.f32.mrb[0].mxu0
      %v4155 = vadd.f32 %v3950, %v4154
      %v4156 = vpop.f32.mrb[0].mxu0
      %v4157 = vadd.f32 %v3954, %v4156
      %v4158 = vpop.f32.mrb[0].mxu0
      %v4159 = vadd.f32 %v3950, %v4158
      %v4160 = vpop.f32.mrb[0].mxu0
      %v4161 = vadd.f32 %v3954, %v4160
      %4162 = vdwg.mxu0
      %4163 = vmatprep.subr.bf16.mxu0 0
      %4164 = vmatpush1.bf16.msra.mxu0 %v4044
      %4165 = vmatprep.subr.bf16.mxu0 0
      %4166 = vmatpush1.bf16.msra.mxu0 %v4047
      %4167 = vmatprep.subr.bf16.mxu0 0
      %4168 = vmatpush1.bf16.msra.mxu0 %v4050
      %4169 = vmatprep.subr.bf16.mxu0 0
      %4170 = vmatpush1.bf16.msra.mxu0 %v4053
      %4171 = vmatprep.subr.bf16.mxu0 0
      %4172 = vmatpush1.bf16.msra.mxu0 %v4056
      %4173 = vmatprep.subr.bf16.mxu0 0
      %4174 = vmatpush1.bf16.msra.mxu0 %v4059
      %4175 = vmatprep.subr.bf16.mxu0 0
      %4176 = vmatpush1.bf16.msra.mxu0 %v4062
      %4177 = vmatprep.subr.bf16.mxu0 0
      %4178 = vmatpush1.bf16.msra.mxu0 %v4065
      %4179 = vmatprep.subr.bf16.mxu0 0
      %4180 = vmatpush1.bf16.msra.mxu0 0
      %4181 = vmatprep.subr.bf16.mxu0 0
      %4182 = vmatpush1.bf16.msra.mxu0 0
      %4183 = vmatprep.subr.bf16.mxu0 0
      %4184 = vmatpush1.bf16.msra.mxu0 0
      %4185 = vmatprep.subr.bf16.mxu0 0
      %4186 = vmatpush1.bf16.msra.mxu0 0
      %4187 = vmatprep.subr.bf16.mxu0 0
      %4188 = vmatpush1.bf16.msra.mxu0 0
      %4189 = vmatprep.subr.bf16.mxu0 0
      %4190 = vmatpush1.bf16.msra.mxu0 0
      %4191 = vmatprep.subr.bf16.mxu0 0
      %4192 = vmatpush1.bf16.msra.mxu0 0
      %4193 = vmatprep.subr.bf16.mxu0 0
      %4194 = vmatpush1.bf16.msra.mxu0 0
      %4195 = vmatprep.mubr.bf16.mxu0 0
      %4196 = vmatmul.mubr.bf16.gmra.mrb[0].mxu0 %v3907
      %v4197 = vpop.f32.mrb[0].mxu0
      %v4198 = vadd.f32 %v3958, %v4197
      %v4199 = vpop.f32.mrb[0].mxu0
      %v4200 = vpop.f32.mrb[0].mxu0
      %v4201 = vadd.f32 %v3958, %v4200
      %v4202 = vpop.f32.mrb[0].mxu0
      %4203 = vmatprep.mubr.bf16.mxu0 0
      %4204 = vmatmul.mubr.bf16.gmra.mrb[0].mxu0 %v3908
      %v4205 = vpop.f32.mrb[0].mxu0
      %v4206 = vadd.f32 %v3958, %v4205
      %v4207 = vpop.f32.mrb[0].mxu0
      %v4208 = vpop.f32.mrb[0].mxu0
      %v4209 = vadd.f32 %v3958, %v4208
      %v4210 = vpop.f32.mrb[0].mxu0
      %4211 = vmatprep.mubr.bf16.mxu0 0
      %4212 = vmatmul.mubr.bf16.gmra.mrb[0].mxu0 %v3909
      %v4213 = vpop.f32.mrb[0].mxu0
      %v4214 = vadd.f32 %v3958, %v4213
      %v4215 = vpop.f32.mrb[0].mxu0
      %v4216 = vpop.f32.mrb[0].mxu0
      %v4217 = vadd.f32 %v3958, %v4216
      %v4218 = vpop.f32.mrb[0].mxu0
      %4219 = vmatprep.mubr.bf16.mxu0 0
      %4220 = vmatmul.mubr.bf16.gmra.mrb[0].mxu0 %v3910
      %v4221 = vpop.f32.mrb[0].mxu0
      %v4222 = vadd.f32 %v3958, %v4221
      %v4223 = vpop.f32.mrb[0].mxu0
      %v4224 = vpop.f32.mrb[0].mxu0
      %v4225 = vadd.f32 %v3958, %v4224
      %v4226 = vpop.f32.mrb[0].mxu0
      %4227 = vdwg.mxu0
      %v4228 = vpack.c.bf16 %v4129, %v4125
      %v4229 = vpack.c.bf16 %v4131, %v4127
      %v4230 = vpack.c.bf16 %v4201, %v4198
      %v4231 = vpack.c.bf16 %v4139, %v4135
      %v4232 = vpack.c.bf16 %v4141, %v4137
      %v4233 = vpack.c.bf16 %v4209, %v4206
      %v4234 = vpack.c.bf16 %v4149, %v4145
      %v4235 = vpack.c.bf16 %v4151, %v4147
      %v4236 = vpack.c.bf16 %v4217, %v4214
      %v4237 = vpack.c.bf16 %v4159, %v4155
      %v4238 = vpack.c.bf16 %v4161, %v4157
      %v4239 = vpack.c.bf16 %v4225, %v4222
      %s4240 = scalar_lea.vmem %s7, 64
      %v4241 = vld [vmem:[%s4240] sm:$0xf]
      %v4242 = vld [vmem:[%s4240 + $0x4] sm:$0xf]
      %v4243 = vld [vmem:[%s4240 + $0x8] sm:$0xf]
      %v4244 = vld [vmem:[%s4240 + $0xc] sm:$0xf]
      %v4245 = vld [vmem:[%s4240 + $0x10] sm:$0xf]
      %v4246 = vld [vmem:[%s4240 + $0x14] sm:$0xf]
      %v4247 = vld [vmem:[%s4240 + $0x18] sm:$0xf]
      %v4248 = vld [vmem:[%s4240 + $0x1c] sm:$0xf]
      %v4249 = vld [vmem:[%s4240 + $0x20] sm:$0xf]
      %v4250 = vld [vmem:[%s4240 + $0x24] sm:$0xf]
      %v4251 = vld [vmem:[%s4240 + $0x28] sm:$0xf]
      %v4252 = vld [vmem:[%s4240 + $0x2c] sm:$0xf]
      %v4253 = vld [vmem:[%s4240 + $0x30] sm:$0xf]
      %v4254 = vld [vmem:[%s4240 + $0x34] sm:$0xf]
      %v4255 = vld [vmem:[%s4240 + $0x38] sm:$0xf]
      %v4256 = vld [vmem:[%s4240 + $0x3c] sm:$0xf]
      %v4258 = vsel %vm1277, %v4228, 0
      %v4261 = vsel %vm1277, %v4231, 0
      %v4264 = vsel %vm1277, %v4234, 0
      %v4267 = vsel %vm1277, %v4237, 0
      %v4270 = vsel %vm1277, %v4229, 0
      %v4273 = vsel %vm1277, %v4232, 0
      %v4276 = vsel %vm1277, %v4235, 0
      %v4279 = vsel %vm1277, %v4238, 0
      %4281 = vmatprep.subr.bf16.mxu0 0
      %4282 = vmatpush1.bf16.xpose.msra.mxu0 %v4270
      %4283 = vmatprep.subr.bf16.mxu0 0
      %4284 = vmatpush1.bf16.xpose.msra.mxu0 %v4273
      %4285 = vmatprep.subr.bf16.mxu0 0
      %4286 = vmatpush1.bf16.xpose.msra.mxu0 %v4276
      %4287 = vmatprep.subr.bf16.mxu0 0
      %4288 = vmatpush1.bf16.xpose.msra.mxu0 %v4279
      %4289 = vmatprep.subr.bf16.mxu0 0
      %4290 = vmatpush1.bf16.xpose.msra.mxu0 0
      %4291 = vmatprep.subr.bf16.mxu0 0
      %4292 = vmatpush1.bf16.xpose.msra.mxu0 0
      %4293 = vmatprep.subr.bf16.mxu0 0
      %4294 = vmatpush1.bf16.xpose.msra.mxu0 0
      %4295 = vmatprep.subr.bf16.mxu0 0
      %4296 = vmatpush1.bf16.xpose.msra.mxu0 0
      %4297 = vmatprep.subr.bf16.mxu0 0
      %4298 = vmatpush1.bf16.xpose.msra.mxu0 0
      %4299 = vmatprep.subr.bf16.mxu0 0
      %4300 = vmatpush1.bf16.xpose.msra.mxu0 0
      %4301 = vmatprep.subr.bf16.mxu0 0
      %4302 = vmatpush1.bf16.xpose.msra.mxu0 0
      %4303 = vmatprep.subr.bf16.mxu0 0
      %4304 = vmatpush1.bf16.xpose.msra.mxu0 0
      %4305 = vmatprep.subr.bf16.mxu0 0
      %4306 = vmatpush1.bf16.xpose.msra.mxu0 0
      %4307 = vmatprep.subr.bf16.mxu0 0
      %4308 = vmatpush1.bf16.xpose.msra.mxu0 0
      %4309 = vmatprep.subr.bf16.mxu0 0
      %4310 = vmatpush1.bf16.xpose.msra.mxu0 0
      %4311 = vmatprep.subr.bf16.mxu0 0
      %4312 = vmatpush1.bf16.xpose.msra.mxu0 0
      %4313 = vmatprep.mubr.bf16.mxu0 0
      %4314 = vmatmul.mubr.bf16.gmra.mrb[0].mxu0 %v4258
      %v4315 = vpop.f32.mrb[0].mxu0
      %v4316 = vadd.f32 0.0, %v4315
      %v4317 = vpop.f32.mrb[0].mxu0
      %v4318 = vpop.f32.mrb[0].mxu0
      %v4319 = vadd.f32 0.0, %v4318
      %v4320 = vpop.f32.mrb[0].mxu0
      %4321 = vmatprep.mubr.bf16.mxu0 0
      %4322 = vmatmul.mubr.bf16.gmra.mrb[0].mxu0 %v4261
      %v4323 = vpop.f32.mrb[0].mxu0
      %v4324 = vadd.f32 0.0, %v4323
      %v4325 = vpop.f32.mrb[0].mxu0
      %v4326 = vpop.f32.mrb[0].mxu0
      %v4327 = vadd.f32 0.0, %v4326
      %v4328 = vpop.f32.mrb[0].mxu0
      %4329 = vmatprep.mubr.bf16.mxu0 0
      %4330 = vmatmul.mubr.bf16.gmra.mrb[0].mxu0 %v4264
      %v4331 = vpop.f32.mrb[0].mxu0
      %v4332 = vadd.f32 0.0, %v4331
      %v4333 = vpop.f32.mrb[0].mxu0
      %v4334 = vpop.f32.mrb[0].mxu0
      %v4335 = vadd.f32 0.0, %v4334
      %v4336 = vpop.f32.mrb[0].mxu0
      %4337 = vmatprep.mubr.bf16.mxu0 0
      %4338 = vmatmul.mubr.bf16.gmra.mrb[0].mxu0 %v4267
      %v4339 = vpop.f32.mrb[0].mxu0
      %v4340 = vadd.f32 0.0, %v4339
      %v4341 = vpop.f32.mrb[0].mxu0
      %v4342 = vpop.f32.mrb[0].mxu0
      %v4343 = vadd.f32 0.0, %v4342
      %v4344 = vpop.f32.mrb[0].mxu0
      %4345 = vdwg.mxu0
      %v4346 = vmul.f32 %v4316, 0.17677669
      %v4347 = vmul.f32 %v4319, 0.17677669
      %v4348 = vmul.f32 %v4324, 0.17677669
      %v4349 = vmul.f32 %v4327, 0.17677669
      %v4350 = vmul.f32 %v4332, 0.17677669
      %v4351 = vmul.f32 %v4335, 0.17677669
      %v4352 = vmul.f32 %v4340, 0.17677669
      %v4353 = vmul.f32 %v4343, 0.17677669
      %v4354 = vsel %vm1375, %v4346, -inf
      %4355 = vmax.xlane.f32.xlu0 %v4354
      %v4356 = vpop.xlane.xlu0 %4355
      %v4357 = vsel %vm1375, %v4347, -inf
      %4358 = vmax.xlane.f32.xlu0 %v4357
      %v4359 = vpop.xlane.xlu0 %4358
      %v4360 = vsel %vm1375, %v4348, -inf
      %4361 = vmax.xlane.f32.xlu0 %v4360
      %v4362 = vpop.xlane.xlu0 %4361
      %v4363 = vsel %vm1375, %v4349, -inf
      %4364 = vmax.xlane.f32.xlu0 %v4363
      %v4365 = vpop.xlane.xlu0 %4364
      %v4366 = vsel %vm1375, %v4350, -inf
      %4367 = vmax.xlane.f32.xlu0 %v4366
      %v4368 = vpop.xlane.xlu0 %4367
      %v4369 = vsel %vm1375, %v4351, -inf
      %4370 = vmax.xlane.f32.xlu0 %v4369
      %v4371 = vpop.xlane.xlu0 %4370
      %v4372 = vsel %vm1375, %v4352, -inf
      %4373 = vmax.xlane.f32.xlu0 %v4372
      %v4374 = vpop.xlane.xlu0 %4373
      %v4375 = vsel %vm1375, %v4353, -inf
      %4376 = vmax.xlane.f32.xlu0 %v4375
      %v4377 = vpop.xlane.xlu0 %4376
      %v4378 = vsub.f32 %v4346, %v4356
      %v4379 = vsub.f32 %v4347, %v4359
      %v4380 = vsub.f32 %v4348, %v4362
      %v4381 = vsub.f32 %v4349, %v4365
      %v4382 = vsub.f32 %v4350, %v4368
      %v4383 = vsub.f32 %v4351, %v4371
      %v4384 = vsub.f32 %v4352, %v4374
      %v4385 = vsub.f32 %v4353, %v4377
      %v4386 = vmul.f32 %v4378, 1.442695
      %v4387 = vpow.pop %v4386
      %v4388 = vmul.f32 %v4379, 1.442695
      %v4389 = vpow.pop %v4388
      %v4390 = vmul.f32 %v4380, 1.442695
      %v4391 = vpow.pop %v4390
      %v4392 = vmul.f32 %v4381, 1.442695
      %v4393 = vpow.pop %v4392
      %v4394 = vmul.f32 %v4382, 1.442695
      %v4395 = vpow.pop %v4394
      %v4396 = vmul.f32 %v4383, 1.442695
      %v4397 = vpow.pop %v4396
      %v4398 = vmul.f32 %v4384, 1.442695
      %v4399 = vpow.pop %v4398
      %v4400 = vmul.f32 %v4385, 1.442695
      %v4401 = vpow.pop %v4400
      %v4402 = vsel %vm1375, %v4387, 0.0
      %4403 = vadd.xlane.f32.xlu0 %v4402
      %v4404 = vpop.xlane.xlu0 %4403
      %v4405 = vsel %vm1375, %v4389, 0.0
      %4406 = vadd.xlane.f32.xlu0 %v4405
      %v4407 = vpop.xlane.xlu0 %4406
      %v4408 = vsel %vm1375, %v4391, 0.0
      %4409 = vadd.xlane.f32.xlu0 %v4408
      %v4410 = vpop.xlane.xlu0 %4409
      %v4411 = vsel %vm1375, %v4393, 0.0
      %4412 = vadd.xlane.f32.xlu0 %v4411
      %v4413 = vpop.xlane.xlu0 %4412
      %v4414 = vsel %vm1375, %v4395, 0.0
      %4415 = vadd.xlane.f32.xlu0 %v4414
      %v4416 = vpop.xlane.xlu0 %4415
      %v4417 = vsel %vm1375, %v4397, 0.0
      %4418 = vadd.xlane.f32.xlu0 %v4417
      %v4419 = vpop.xlane.xlu0 %4418
      %v4420 = vsel %vm1375, %v4399, 0.0
      %4421 = vadd.xlane.f32.xlu0 %v4420
      %v4422 = vpop.xlane.xlu0 %4421
      %v4423 = vsel %vm1375, %v4401, 0.0
      %4424 = vadd.xlane.f32.xlu0 %v4423
      %v4425 = vpop.xlane.xlu0 %4424
      %v4426 = vrcp.pop %v4404
      %v4427 = vrcp.pop %v4407
      %v4428 = vrcp.pop %v4410
      %v4429 = vrcp.pop %v4413
      %v4430 = vrcp.pop %v4416
      %v4431 = vrcp.pop %v4419
      %v4432 = vrcp.pop %v4422
      %v4433 = vrcp.pop %v4425
      %v4434 = vmul.f32 %v4387, %v4426
      %v4435 = vmul.f32 %v4389, %v4427
      %v4436 = vmul.f32 %v4391, %v4428
      %v4437 = vmul.f32 %v4393, %v4429
      %v4438 = vmul.f32 %v4395, %v4430
      %v4439 = vmul.f32 %v4397, %v4431
      %v4440 = vmul.f32 %v4399, %v4432
      %v4441 = vmul.f32 %v4401, %v4433
      %v4442 = vpack.c.bf16 %v4435, %v4434
      %v4443 = vpack.c.bf16 %v4437, %v4436
      %v4444 = vpack.c.bf16 %v4439, %v4438
      %v4445 = vpack.c.bf16 %v4441, %v4440
      %v4447 = vsel %vm1375, %v4442, 0
      %v4450 = vsel %vm1375, %v4443, 0
      %v4453 = vsel %vm1375, %v4444, 0
      %v4456 = vsel %vm1375, %v4445, 0
      %4458 = vmatprep.subr.bf16.mxu0 0
      %4459 = vmatpush1.bf16.msra.mxu0 %v4230
      %4460 = vmatprep.subr.bf16.mxu0 0
      %4461 = vmatpush1.bf16.msra.mxu0 %v4233
      %4462 = vmatprep.subr.bf16.mxu0 0
      %4463 = vmatpush1.bf16.msra.mxu0 %v4236
      %4464 = vmatprep.subr.bf16.mxu0 0
      %4465 = vmatpush1.bf16.msra.mxu0 %v4239
      %4466 = vmatprep.subr.bf16.mxu0 0
      %4467 = vmatpush1.bf16.msra.mxu0 0
      %4468 = vmatprep.subr.bf16.mxu0 0
      %4469 = vmatpush1.bf16.msra.mxu0 0
      %4470 = vmatprep.subr.bf16.mxu0 0
      %4471 = vmatpush1.bf16.msra.mxu0 0
      %4472 = vmatprep.subr.bf16.mxu0 0
      %4473 = vmatpush1.bf16.msra.mxu0 0
      %4474 = vmatprep.subr.bf16.mxu0 0
      %4475 = vmatpush1.bf16.msra.mxu0 0
      %4476 = vmatprep.subr.bf16.mxu0 0
      %4477 = vmatpush1.bf16.msra.mxu0 0
      %4478 = vmatprep.subr.bf16.mxu0 0
      %4479 = vmatpush1.bf16.msra.mxu0 0
      %4480 = vmatprep.subr.bf16.mxu0 0
      %4481 = vmatpush1.bf16.msra.mxu0 0
      %4482 = vmatprep.subr.bf16.mxu0 0
      %4483 = vmatpush1.bf16.msra.mxu0 0
      %4484 = vmatprep.subr.bf16.mxu0 0
      %4485 = vmatpush1.bf16.msra.mxu0 0
      %4486 = vmatprep.subr.bf16.mxu0 0
      %4487 = vmatpush1.bf16.msra.mxu0 0
      %4488 = vmatprep.subr.bf16.mxu0 0
      %4489 = vmatpush1.bf16.msra.mxu0 0
      %4490 = vmatprep.mubr.bf16.mxu0 0
      %4491 = vmatmul.mubr.bf16.gmra.mrb[0].mxu0 %v4447
      %v4492 = vpop.f32.mrb[0].mxu0
      %v4493 = vadd.f32 0.0, %v4492
      %v4494 = vpop.f32.mrb[0].mxu0
      %v4495 = vpop.f32.mrb[0].mxu0
      %v4496 = vadd.f32 0.0, %v4495
      %v4497 = vpop.f32.mrb[0].mxu0
      %4498 = vmatprep.mubr.bf16.mxu0 0
      %4499 = vmatmul.mubr.bf16.gmra.mrb[0].mxu0 %v4450
      %v4500 = vpop.f32.mrb[0].mxu0
      %v4501 = vadd.f32 0.0, %v4500
      %v4502 = vpop.f32.mrb[0].mxu0
      %v4503 = vpop.f32.mrb[0].mxu0
      %v4504 = vadd.f32 0.0, %v4503
      %v4505 = vpop.f32.mrb[0].mxu0
      %4506 = vmatprep.mubr.bf16.mxu0 0
      %4507 = vmatmul.mubr.bf16.gmra.mrb[0].mxu0 %v4453
      %v4508 = vpop.f32.mrb[0].mxu0
      %v4509 = vadd.f32 0.0, %v4508
      %v4510 = vpop.f32.mrb[0].mxu0
      %v4511 = vpop.f32.mrb[0].mxu0
      %v4512 = vadd.f32 0.0, %v4511
      %v4513 = vpop.f32.mrb[0].mxu0
      %4514 = vmatprep.mubr.bf16.mxu0 0
      %4515 = vmatmul.mubr.bf16.gmra.mrb[0].mxu0 %v4456
      %v4516 = vpop.f32.mrb[0].mxu0
      %v4517 = vadd.f32 0.0, %v4516
      %v4518 = vpop.f32.mrb[0].mxu0
      %v4519 = vpop.f32.mrb[0].mxu0
      %v4520 = vadd.f32 0.0, %v4519
      %v4521 = vpop.f32.mrb[0].mxu0
      %4522 = vdwg.mxu0
      %v4523 = vpack.c.bf16 %v4496, %v4493
      %v4524 = vpack.c.bf16 %v4504, %v4501
      %v4525 = vpack.c.bf16 %v4512, %v4509
      %v4526 = vpack.c.bf16 %v4520, %v4517
      %4531 = vrot.lane.b32.xlu0 %v4228, 96
      %v4532 = vpop.permute.xlu0 %4531
      %4533 = vrot.lane.b32.xlu0 %v4231, 96
      %v4534 = vpop.permute.xlu0 %4533
      %4535 = vrot.lane.b32.xlu0 %v4234, 96
      %v4536 = vpop.permute.xlu0 %4535
      %4537 = vrot.lane.b32.xlu0 %v4237, 96
      %v4538 = vpop.permute.xlu0 %4537
      %4543 = vrot.lane.b32.xlu0 %v4229, 96
      %v4544 = vpop.permute.xlu0 %4543
      %4545 = vrot.lane.b32.xlu0 %v4232, 96
      %v4546 = vpop.permute.xlu0 %4545
      %4547 = vrot.lane.b32.xlu0 %v4235, 96
      %v4548 = vpop.permute.xlu0 %4547
      %4549 = vrot.lane.b32.xlu0 %v4238, 96
      %v4550 = vpop.permute.xlu0 %4549
      %v4552 = vsel %vm1277, %v4532, 0
      %v4555 = vsel %vm1277, %v4534, 0
      %v4558 = vsel %vm1277, %v4536, 0
      %v4561 = vsel %vm1277, %v4538, 0
      %v4564 = vsel %vm1277, %v4544, 0
      %v4567 = vsel %vm1277, %v4546, 0
      %v4570 = vsel %vm1277, %v4548, 0
      %v4573 = vsel %vm1277, %v4550, 0
      %4575 = vmatprep.subr.bf16.mxu0 0
      %4576 = vmatpush1.bf16.xpose.msra.mxu0 %v4564
      %4577 = vmatprep.subr.bf16.mxu0 0
      %4578 = vmatpush1.bf16.xpose.msra.mxu0 %v4567
      %4579 = vmatprep.subr.bf16.mxu0 0
      %4580 = vmatpush1.bf16.xpose.msra.mxu0 %v4570
      %4581 = vmatprep.subr.bf16.mxu0 0
      %4582 = vmatpush1.bf16.xpose.msra.mxu0 %v4573
      %4583 = vmatprep.subr.bf16.mxu0 0
      %4584 = vmatpush1.bf16.xpose.msra.mxu0 0
      %4585 = vmatprep.subr.bf16.mxu0 0
      %4586 = vmatpush1.bf16.xpose.msra.mxu0 0
      %4587 = vmatprep.subr.bf16.mxu0 0
      %4588 = vmatpush1.bf16.xpose.msra.mxu0 0
      %4589 = vmatprep.subr.bf16.mxu0 0
      %4590 = vmatpush1.bf16.xpose.msra.mxu0 0
      %4591 = vmatprep.subr.bf16.mxu0 0
      %4592 = vmatpush1.bf16.xpose.msra.mxu0 0
      %4593 = vmatprep.subr.bf16.mxu0 0
      %4594 = vmatpush1.bf16.xpose.msra.mxu0 0
      %4595 = vmatprep.subr.bf16.mxu0 0
      %4596 = vmatpush1.bf16.xpose.msra.mxu0 0
      %4597 = vmatprep.subr.bf16.mxu0 0
      %4598 = vmatpush1.bf16.xpose.msra.mxu0 0
      %4599 = vmatprep.subr.bf16.mxu0 0
      %4600 = vmatpush1.bf16.xpose.msra.mxu0 0
      %4601 = vmatprep.subr.bf16.mxu0 0
      %4602 = vmatpush1.bf16.xpose.msra.mxu0 0
      %4603 = vmatprep.subr.bf16.mxu0 0
      %4604 = vmatpush1.bf16.xpose.msra.mxu0 0
      %4605 = vmatprep.subr.bf16.mxu0 0
      %4606 = vmatpush1.bf16.xpose.msra.mxu0 0
      %4607 = vmatprep.mubr.bf16.mxu0 0
      %4608 = vmatmul.mubr.bf16.gmra.mrb[0].mxu0 %v4552
      %v4609 = vpop.f32.mrb[0].mxu0
      %v4610 = vadd.f32 0.0, %v4609
      %v4611 = vpop.f32.mrb[0].mxu0
      %v4612 = vpop.f32.mrb[0].mxu0
      %v4613 = vadd.f32 0.0, %v4612
      %v4614 = vpop.f32.mrb[0].mxu0
      %4615 = vmatprep.mubr.bf16.mxu0 0
      %4616 = vmatmul.mubr.bf16.gmra.mrb[0].mxu0 %v4555
      %v4617 = vpop.f32.mrb[0].mxu0
      %v4618 = vadd.f32 0.0, %v4617
      %v4619 = vpop.f32.mrb[0].mxu0
      %v4620 = vpop.f32.mrb[0].mxu0
      %v4621 = vadd.f32 0.0, %v4620
      %v4622 = vpop.f32.mrb[0].mxu0
      %4623 = vmatprep.mubr.bf16.mxu0 0
      %4624 = vmatmul.mubr.bf16.gmra.mrb[0].mxu0 %v4558
      %v4625 = vpop.f32.mrb[0].mxu0
      %v4626 = vadd.f32 0.0, %v4625
      %v4627 = vpop.f32.mrb[0].mxu0
      %v4628 = vpop.f32.mrb[0].mxu0
      %v4629 = vadd.f32 0.0, %v4628
      %v4630 = vpop.f32.mrb[0].mxu0
      %4631 = vmatprep.mubr.bf16.mxu0 0
      %4632 = vmatmul.mubr.bf16.gmra.mrb[0].mxu0 %v4561
      %v4633 = vpop.f32.mrb[0].mxu0
      %v4634 = vadd.f32 0.0, %v4633
      %v4635 = vpop.f32.mrb[0].mxu0
      %v4636 = vpop.f32.mrb[0].mxu0
      %v4637 = vadd.f32 0.0, %v4636
      %v4638 = vpop.f32.mrb[0].mxu0
      %4639 = vdwg.mxu0
      %v4640 = vmul.f32 %v4610, 0.17677669
      %v4641 = vmul.f32 %v4613, 0.17677669
      %v4642 = vmul.f32 %v4618, 0.17677669
      %v4643 = vmul.f32 %v4621, 0.17677669
      %v4644 = vmul.f32 %v4626, 0.17677669
      %v4645 = vmul.f32 %v4629, 0.17677669
      %v4646 = vmul.f32 %v4634, 0.17677669
      %v4647 = vmul.f32 %v4637, 0.17677669
      %v4648 = vsel %vm1375, %v4640, -inf
      %4649 = vmax.xlane.f32.xlu0 %v4648
      %v4650 = vpop.xlane.xlu0 %4649
      %v4651 = vsel %vm1375, %v4641, -inf
      %4652 = vmax.xlane.f32.xlu0 %v4651
      %v4653 = vpop.xlane.xlu0 %4652
      %v4654 = vsel %vm1375, %v4642, -inf
      %4655 = vmax.xlane.f32.xlu0 %v4654
      %v4656 = vpop.xlane.xlu0 %4655
      %v4657 = vsel %vm1375, %v4643, -inf
      %4658 = vmax.xlane.f32.xlu0 %v4657
      %v4659 = vpop.xlane.xlu0 %4658
      %v4660 = vsel %vm1375, %v4644, -inf
      %4661 = vmax.xlane.f32.xlu0 %v4660
      %v4662 = vpop.xlane.xlu0 %4661
      %v4663 = vsel %vm1375, %v4645, -inf
      %4664 = vmax.xlane.f32.xlu0 %v4663
      %v4665 = vpop.xlane.xlu0 %4664
      %v4666 = vsel %vm1375, %v4646, -inf
      %4667 = vmax.xlane.f32.xlu0 %v4666
      %v4668 = vpop.xlane.xlu0 %4667
      %v4669 = vsel %vm1375, %v4647, -inf
      %4670 = vmax.xlane.f32.xlu0 %v4669
      %v4671 = vpop.xlane.xlu0 %4670
      %v4672 = vsub.f32 %v4640, %v4650
      %v4673 = vsub.f32 %v4641, %v4653
      %v4674 = vsub.f32 %v4642, %v4656
      %v4675 = vsub.f32 %v4643, %v4659
      %v4676 = vsub.f32 %v4644, %v4662
      %v4677 = vsub.f32 %v4645, %v4665
      %v4678 = vsub.f32 %v4646, %v4668
      %v4679 = vsub.f32 %v4647, %v4671
      %v4680 = vmul.f32 %v4672, 1.442695
      %v4681 = vpow.pop %v4680
      %v4682 = vmul.f32 %v4673, 1.442695
      %v4683 = vpow.pop %v4682
      %v4684 = vmul.f32 %v4674, 1.442695
      %v4685 = vpow.pop %v4684
      %v4686 = vmul.f32 %v4675, 1.442695
      %v4687 = vpow.pop %v4686
      %v4688 = vmul.f32 %v4676, 1.442695
      %v4689 = vpow.pop %v4688
      %v4690 = vmul.f32 %v4677, 1.442695
      %v4691 = vpow.pop %v4690
      %v4692 = vmul.f32 %v4678, 1.442695
      %v4693 = vpow.pop %v4692
      %v4694 = vmul.f32 %v4679, 1.442695
      %v4695 = vpow.pop %v4694
      %v4696 = vsel %vm1375, %v4681, 0.0
      %4697 = vadd.xlane.f32.xlu0 %v4696
      %v4698 = vpop.xlane.xlu0 %4697
      %v4699 = vsel %vm1375, %v4683, 0.0
      %4700 = vadd.xlane.f32.xlu0 %v4699
      %v4701 = vpop.xlane.xlu0 %4700
      %v4702 = vsel %vm1375, %v4685, 0.0
      %4703 = vadd.xlane.f32.xlu0 %v4702
      %v4704 = vpop.xlane.xlu0 %4703
      %v4705 = vsel %vm1375, %v4687, 0.0
      %4706 = vadd.xlane.f32.xlu0 %v4705
      %v4707 = vpop.xlane.xlu0 %4706
      %v4708 = vsel %vm1375, %v4689, 0.0
      %4709 = vadd.xlane.f32.xlu0 %v4708
      %v4710 = vpop.xlane.xlu0 %4709
      %v4711 = vsel %vm1375, %v4691, 0.0
      %4712 = vadd.xlane.f32.xlu0 %v4711
      %v4713 = vpop.xlane.xlu0 %4712
      %v4714 = vsel %vm1375, %v4693, 0.0
      %4715 = vadd.xlane.f32.xlu0 %v4714
      %v4716 = vpop.xlane.xlu0 %4715
      %v4717 = vsel %vm1375, %v4695, 0.0
      %4718 = vadd.xlane.f32.xlu0 %v4717
      %v4719 = vpop.xlane.xlu0 %4718
      %v4720 = vrcp.pop %v4698
      %v4721 = vrcp.pop %v4701
      %v4722 = vrcp.pop %v4704
      %v4723 = vrcp.pop %v4707
      %v4724 = vrcp.pop %v4710
      %v4725 = vrcp.pop %v4713
      %v4726 = vrcp.pop %v4716
      %v4727 = vrcp.pop %v4719
      %v4728 = vmul.f32 %v4681, %v4720
      %v4729 = vmul.f32 %v4683, %v4721
      %v4730 = vmul.f32 %v4685, %v4722
      %v4731 = vmul.f32 %v4687, %v4723
      %v4732 = vmul.f32 %v4689, %v4724
      %v4733 = vmul.f32 %v4691, %v4725
      %v4734 = vmul.f32 %v4693, %v4726
      %v4735 = vmul.f32 %v4695, %v4727
      %v4736 = vpack.c.bf16 %v4729, %v4728
      %v4737 = vpack.c.bf16 %v4731, %v4730
      %v4738 = vpack.c.bf16 %v4733, %v4732
      %v4739 = vpack.c.bf16 %v4735, %v4734
      %4744 = vrot.lane.b32.xlu0 %v4230, 96
      %v4745 = vpop.permute.xlu0 %4744
      %4746 = vrot.lane.b32.xlu0 %v4233, 96
      %v4747 = vpop.permute.xlu0 %4746
      %4748 = vrot.lane.b32.xlu0 %v4236, 96
      %v4749 = vpop.permute.xlu0 %4748
      %4750 = vrot.lane.b32.xlu0 %v4239, 96
      %v4751 = vpop.permute.xlu0 %4750
      %v4757 = vsel %vm1375, %v4736, 0
      %v4760 = vsel %vm1375, %v4737, 0
      %v4763 = vsel %vm1375, %v4738, 0
      %v4766 = vsel %vm1375, %v4739, 0
      %4768 = vmatprep.subr.bf16.mxu0 0
      %4769 = vmatpush1.bf16.msra.mxu0 %v4745
      %4770 = vmatprep.subr.bf16.mxu0 0
      %4771 = vmatpush1.bf16.msra.mxu0 %v4747
      %4772 = vmatprep.subr.bf16.mxu0 0
      %4773 = vmatpush1.bf16.msra.mxu0 %v4749
      %4774 = vmatprep.subr.bf16.mxu0 0
      %4775 = vmatpush1.bf16.msra.mxu0 %v4751
      %4776 = vmatprep.subr.bf16.mxu0 0
      %4777 = vmatpush1.bf16.msra.mxu0 0
      %4778 = vmatprep.subr.bf16.mxu0 0
      %4779 = vmatpush1.bf16.msra.mxu0 0
      %4780 = vmatprep.subr.bf16.mxu0 0
      %4781 = vmatpush1.bf16.msra.mxu0 0
      %4782 = vmatprep.subr.bf16.mxu0 0
      %4783 = vmatpush1.bf16.msra.mxu0 0
      %4784 = vmatprep.subr.bf16.mxu0 0
      %4785 = vmatpush1.bf16.msra.mxu0 0
      %4786 = vmatprep.subr.bf16.mxu0 0
      %4787 = vmatpush1.bf16.msra.mxu0 0
      %4788 = vmatprep.subr.bf16.mxu0 0
      %4789 = vmatpush1.bf16.msra.mxu0 0
      %4790 = vmatprep.subr.bf16.mxu0 0
      %4791 = vmatpush1.bf16.msra.mxu0 0
      %4792 = vmatprep.subr.bf16.mxu0 0
      %4793 = vmatpush1.bf16.msra.mxu0 0
      %4794 = vmatprep.subr.bf16.mxu0 0
      %4795 = vmatpush1.bf16.msra.mxu0 0
      %4796 = vmatprep.subr.bf16.mxu0 0
      %4797 = vmatpush1.bf16.msra.mxu0 0
      %4798 = vmatprep.subr.bf16.mxu0 0
      %4799 = vmatpush1.bf16.msra.mxu0 0
      %4800 = vmatprep.mubr.bf16.mxu0 0
      %4801 = vmatmul.mubr.bf16.gmra.mrb[0].mxu0 %v4757
      %v4802 = vpop.f32.mrb[0].mxu0
      %v4803 = vadd.f32 0.0, %v4802
      %v4804 = vpop.f32.mrb[0].mxu0
      %v4805 = vpop.f32.mrb[0].mxu0
      %v4806 = vadd.f32 0.0, %v4805
      %v4807 = vpop.f32.mrb[0].mxu0
      %4808 = vmatprep.mubr.bf16.mxu0 0
      %4809 = vmatmul.mubr.bf16.gmra.mrb[0].mxu0 %v4760
      %v4810 = vpop.f32.mrb[0].mxu0
      %v4811 = vadd.f32 0.0, %v4810
      %v4812 = vpop.f32.mrb[0].mxu0
      %v4813 = vpop.f32.mrb[0].mxu0
      %v4814 = vadd.f32 0.0, %v4813
      %v4815 = vpop.f32.mrb[0].mxu0
      %4816 = vmatprep.mubr.bf16.mxu0 0
      %4817 = vmatmul.mubr.bf16.gmra.mrb[0].mxu0 %v4763
      %v4818 = vpop.f32.mrb[0].mxu0
      %v4819 = vadd.f32 0.0, %v4818
      %v4820 = vpop.f32.mrb[0].mxu0
      %v4821 = vpop.f32.mrb[0].mxu0
      %v4822 = vadd.f32 0.0, %v4821
      %v4823 = vpop.f32.mrb[0].mxu0
      %4824 = vmatprep.mubr.bf16.mxu0 0
      %4825 = vmatmul.mubr.bf16.gmra.mrb[0].mxu0 %v4766
      %v4826 = vpop.f32.mrb[0].mxu0
      %v4827 = vadd.f32 0.0, %v4826
      %v4828 = vpop.f32.mrb[0].mxu0
      %v4829 = vpop.f32.mrb[0].mxu0
      %v4830 = vadd.f32 0.0, %v4829
      %v4831 = vpop.f32.mrb[0].mxu0
      %4832 = vdwg.mxu0
      %v4833 = vpack.c.bf16 %v4806, %v4803
      %v4834 = vpack.c.bf16 %v4814, %v4811
      %v4835 = vpack.c.bf16 %v4822, %v4819
      %v4836 = vpack.c.bf16 %v4830, %v4827
      %v4841 = vunpack.c.l.b16 %v4245
      %v4842 = vunpack.c.l.b16 %v4246
      %v4843 = vunpack.c.l.b16 %v4247
      %v4844 = vunpack.c.l.b16 %v4248
      %v4845 = vpack.c.b16 %v4842, %v4841
      %v4846 = vpack.c.b16 %v4844, %v4843
      %v4850 = vsel %vm1277, %v4833, 0
      %v4853 = vsel %vm1277, %v4834, 0
      %v4856 = vsel %vm1277, %v4835, 0
      %v4859 = vsel %vm1277, %v4836, 0
      %4861 = vmatprep.subr.bf16.mxu0 0
      %4862 = vmatpush1.bf16.msra.mxu0 %v4845
      %4863 = vmatprep.subr.bf16.mxu0 0
      %4864 = vmatpush1.bf16.msra.mxu0 %v4846
      %4865 = vmatprep.subr.bf16.mxu0 0
      %4866 = vmatpush1.bf16.msra.mxu0 0
      %4867 = vmatprep.subr.bf16.mxu0 0
      %4868 = vmatpush1.bf16.msra.mxu0 0
      %4869 = vmatprep.subr.bf16.mxu0 0
      %4870 = vmatpush1.bf16.msra.mxu0 0
      %4871 = vmatprep.subr.bf16.mxu0 0
      %4872 = vmatpush1.bf16.msra.mxu0 0
      %4873 = vmatprep.subr.bf16.mxu0 0
      %4874 = vmatpush1.bf16.msra.mxu0 0
      %4875 = vmatprep.subr.bf16.mxu0 0
      %4876 = vmatpush1.bf16.msra.mxu0 0
      %4877 = vmatprep.subr.bf16.mxu0 0
      %4878 = vmatpush1.bf16.msra.mxu0 0
      %4879 = vmatprep.subr.bf16.mxu0 0
      %4880 = vmatpush1.bf16.msra.mxu0 0
      %4881 = vmatprep.subr.bf16.mxu0 0
      %4882 = vmatpush1.bf16.msra.mxu0 0
      %4883 = vmatprep.subr.bf16.mxu0 0
      %4884 = vmatpush1.bf16.msra.mxu0 0
      %4885 = vmatprep.subr.bf16.mxu0 0
      %4886 = vmatpush1.bf16.msra.mxu0 0
      %4887 = vmatprep.subr.bf16.mxu0 0
      %4888 = vmatpush1.bf16.msra.mxu0 0
      %4889 = vmatprep.subr.bf16.mxu0 0
      %4890 = vmatpush1.bf16.msra.mxu0 0
      %4891 = vmatprep.subr.bf16.mxu0 0
      %4892 = vmatpush1.bf16.msra.mxu0 0
      %4893 = vmatprep.mubr.bf16.mxu0 0
      %4894 = vmatmul.mubr.bf16.gmra.mrb[0].mxu0 %v4850
      %v4895 = vpop.f32.mrb[0].mxu0
      %v4896 = vadd.f32 0.0, %v4895
      %v4897 = vpop.f32.mrb[0].mxu0
      %v4898 = vpop.f32.mrb[0].mxu0
      %v4899 = vadd.f32 0.0, %v4898
      %v4900 = vpop.f32.mrb[0].mxu0
      %4901 = vmatprep.mubr.bf16.mxu0 0
      %4902 = vmatmul.mubr.bf16.gmra.mrb[0].mxu0 %v4853
      %v4903 = vpop.f32.mrb[0].mxu0
      %v4904 = vadd.f32 0.0, %v4903
      %v4905 = vpop.f32.mrb[0].mxu0
      %v4906 = vpop.f32.mrb[0].mxu0
      %v4907 = vadd.f32 0.0, %v4906
      %v4908 = vpop.f32.mrb[0].mxu0
      %4909 = vmatprep.mubr.bf16.mxu0 0
      %4910 = vmatmul.mubr.bf16.gmra.mrb[0].mxu0 %v4856
      %v4911 = vpop.f32.mrb[0].mxu0
      %v4912 = vadd.f32 0.0, %v4911
      %v4913 = vpop.f32.mrb[0].mxu0
      %v4914 = vpop.f32.mrb[0].mxu0
      %v4915 = vadd.f32 0.0, %v4914
      %v4916 = vpop.f32.mrb[0].mxu0
      %4917 = vmatprep.mubr.bf16.mxu0 0
      %4918 = vmatmul.mubr.bf16.gmra.mrb[0].mxu0 %v4859
      %v4919 = vpop.f32.mrb[0].mxu0
      %v4920 = vadd.f32 0.0, %v4919
      %v4921 = vpop.f32.mrb[0].mxu0
      %v4922 = vpop.f32.mrb[0].mxu0
      %v4923 = vadd.f32 0.0, %v4922
      %v4924 = vpop.f32.mrb[0].mxu0
      %4925 = vdwg.mxu0
      %v4930 = vunpack.c.l.b16 %v4241
      %v4931 = vunpack.c.l.b16 %v4242
      %v4932 = vunpack.c.l.b16 %v4243
      %v4933 = vunpack.c.l.b16 %v4244
      %v4934 = vpack.c.b16 %v4931, %v4930
      %v4935 = vpack.c.b16 %v4933, %v4932
      %v4939 = vsel %vm1277, %v4523, 0
      %v4942 = vsel %vm1277, %v4524, 0
      %v4945 = vsel %vm1277, %v4525, 0
      %v4948 = vsel %vm1277, %v4526, 0
      %4950 = vmatprep.subr.bf16.mxu0 0
      %4951 = vmatpush1.bf16.msra.mxu0 %v4934
      %4952 = vmatprep.subr.bf16.mxu0 0
      %4953 = vmatpush1.bf16.msra.mxu0 %v4935
      %4954 = vmatprep.subr.bf16.mxu0 0
      %4955 = vmatpush1.bf16.msra.mxu0 0
      %4956 = vmatprep.subr.bf16.mxu0 0
      %4957 = vmatpush1.bf16.msra.mxu0 0
      %4958 = vmatprep.subr.bf16.mxu0 0
      %4959 = vmatpush1.bf16.msra.mxu0 0
      %4960 = vmatprep.subr.bf16.mxu0 0
      %4961 = vmatpush1.bf16.msra.mxu0 0
      %4962 = vmatprep.subr.bf16.mxu0 0
      %4963 = vmatpush1.bf16.msra.mxu0 0
      %4964 = vmatprep.subr.bf16.mxu0 0
      %4965 = vmatpush1.bf16.msra.mxu0 0
      %4966 = vmatprep.subr.bf16.mxu0 0
      %4967 = vmatpush1.bf16.msra.mxu0 0
      %4968 = vmatprep.subr.bf16.mxu0 0
      %4969 = vmatpush1.bf16.msra.mxu0 0
      %4970 = vmatprep.subr.bf16.mxu0 0
      %4971 = vmatpush1.bf16.msra.mxu0 0
      %4972 = vmatprep.subr.bf16.mxu0 0
      %4973 = vmatpush1.bf16.msra.mxu0 0
      %4974 = vmatprep.subr.bf16.mxu0 0
      %4975 = vmatpush1.bf16.msra.mxu0 0
      %4976 = vmatprep.subr.bf16.mxu0 0
      %4977 = vmatpush1.bf16.msra.mxu0 0
      %4978 = vmatprep.subr.bf16.mxu0 0
      %4979 = vmatpush1.bf16.msra.mxu0 0
      %4980 = vmatprep.subr.bf16.mxu0 0
      %4981 = vmatpush1.bf16.msra.mxu0 0
      %4982 = vmatprep.mubr.bf16.mxu0 0
      %4983 = vmatmul.mubr.bf16.gmra.mrb[0].mxu0 %v4939
      %v4984 = vpop.f32.mrb[0].mxu0
      %v4985 = vadd.f32 %v4896, %v4984
      %v4986 = vpop.f32.mrb[0].mxu0
      %v4987 = vpop.f32.mrb[0].mxu0
      %v4988 = vadd.f32 %v4899, %v4987
      %v4989 = vpop.f32.mrb[0].mxu0
      %4990 = vmatprep.mubr.bf16.mxu0 0
      %4991 = vmatmul.mubr.bf16.gmra.mrb[0].mxu0 %v4942
      %v4992 = vpop.f32.mrb[0].mxu0
      %v4993 = vadd.f32 %v4904, %v4992
      %v4994 = vpop.f32.mrb[0].mxu0
      %v4995 = vpop.f32.mrb[0].mxu0
      %v4996 = vadd.f32 %v4907, %v4995
      %v4997 = vpop.f32.mrb[0].mxu0
      %4998 = vmatprep.mubr.bf16.mxu0 0
      %4999 = vmatmul.mubr.bf16.gmra.mrb[0].mxu0 %v4945
      %v5000 = vpop.f32.mrb[0].mxu0
      %v5001 = vadd.f32 %v4912, %v5000
      %v5002 = vpop.f32.mrb[0].mxu0
      %v5003 = vpop.f32.mrb[0].mxu0
      %v5004 = vadd.f32 %v4915, %v5003
      %v5005 = vpop.f32.mrb[0].mxu0
      %5006 = vmatprep.mubr.bf16.mxu0 0
      %5007 = vmatmul.mubr.bf16.gmra.mrb[0].mxu0 %v4948
      %v5008 = vpop.f32.mrb[0].mxu0
      %v5009 = vadd.f32 %v4920, %v5008
      %v5010 = vpop.f32.mrb[0].mxu0
      %v5011 = vpop.f32.mrb[0].mxu0
      %v5012 = vadd.f32 %v4923, %v5011
      %v5013 = vpop.f32.mrb[0].mxu0
      %5014 = vdwg.mxu0
      %5015 = vrot.lane.b32.xlu0 %v4228, 64
      %v5016 = vpop.permute.xlu0 %5015
      %5017 = vrot.lane.b32.xlu0 %v4231, 64
      %v5018 = vpop.permute.xlu0 %5017
      %5019 = vrot.lane.b32.xlu0 %v4234, 64
      %v5020 = vpop.permute.xlu0 %5019
      %5021 = vrot.lane.b32.xlu0 %v4237, 64
      %v5022 = vpop.permute.xlu0 %5021
      %5023 = vrot.lane.b32.xlu0 %v4229, 64
      %v5024 = vpop.permute.xlu0 %5023
      %5025 = vrot.lane.b32.xlu0 %v4232, 64
      %v5026 = vpop.permute.xlu0 %5025
      %5027 = vrot.lane.b32.xlu0 %v4235, 64
      %v5028 = vpop.permute.xlu0 %5027
      %5029 = vrot.lane.b32.xlu0 %v4238, 64
      %v5030 = vpop.permute.xlu0 %5029
      %v5032 = vsel %vm1277, %v5016, 0
      %v5035 = vsel %vm1277, %v5018, 0
      %v5038 = vsel %vm1277, %v5020, 0
      %v5041 = vsel %vm1277, %v5022, 0
      %v5044 = vsel %vm1277, %v5024, 0
      %v5047 = vsel %vm1277, %v5026, 0
      %v5050 = vsel %vm1277, %v5028, 0
      %v5053 = vsel %vm1277, %v5030, 0
      %5055 = vmatprep.subr.bf16.mxu0 0
      %5056 = vmatpush1.bf16.xpose.msra.mxu0 %v5044
      %5057 = vmatprep.subr.bf16.mxu0 0
      %5058 = vmatpush1.bf16.xpose.msra.mxu0 %v5047
      %5059 = vmatprep.subr.bf16.mxu0 0
      %5060 = vmatpush1.bf16.xpose.msra.mxu0 %v5050
      %5061 = vmatprep.subr.bf16.mxu0 0
      %5062 = vmatpush1.bf16.xpose.msra.mxu0 %v5053
      %5063 = vmatprep.subr.bf16.mxu0 0
      %5064 = vmatpush1.bf16.xpose.msra.mxu0 0
      %5065 = vmatprep.subr.bf16.mxu0 0
      %5066 = vmatpush1.bf16.xpose.msra.mxu0 0
      %5067 = vmatprep.subr.bf16.mxu0 0
      %5068 = vmatpush1.bf16.xpose.msra.mxu0 0
      %5069 = vmatprep.subr.bf16.mxu0 0
      %5070 = vmatpush1.bf16.xpose.msra.mxu0 0
      %5071 = vmatprep.subr.bf16.mxu0 0
      %5072 = vmatpush1.bf16.xpose.msra.mxu0 0
      %5073 = vmatprep.subr.bf16.mxu0 0
      %5074 = vmatpush1.bf16.xpose.msra.mxu0 0
      %5075 = vmatprep.subr.bf16.mxu0 0
      %5076 = vmatpush1.bf16.xpose.msra.mxu0 0
      %5077 = vmatprep.subr.bf16.mxu0 0
      %5078 = vmatpush1.bf16.xpose.msra.mxu0 0
      %5079 = vmatprep.subr.bf16.mxu0 0
      %5080 = vmatpush1.bf16.xpose.msra.mxu0 0
      %5081 = vmatprep.subr.bf16.mxu0 0
      %5082 = vmatpush1.bf16.xpose.msra.mxu0 0
      %5083 = vmatprep.subr.bf16.mxu0 0
      %5084 = vmatpush1.bf16.xpose.msra.mxu0 0
      %5085 = vmatprep.subr.bf16.mxu0 0
      %5086 = vmatpush1.bf16.xpose.msra.mxu0 0
      %5087 = vmatprep.mubr.bf16.mxu0 0
      %5088 = vmatmul.mubr.bf16.gmra.mrb[0].mxu0 %v5032
      %v5089 = vpop.f32.mrb[0].mxu0
      %v5090 = vadd.f32 0.0, %v5089
      %v5091 = vpop.f32.mrb[0].mxu0
      %v5092 = vpop.f32.mrb[0].mxu0
      %v5093 = vadd.f32 0.0, %v5092
      %v5094 = vpop.f32.mrb[0].mxu0
      %5095 = vmatprep.mubr.bf16.mxu0 0
      %5096 = vmatmul.mubr.bf16.gmra.mrb[0].mxu0 %v5035
      %v5097 = vpop.f32.mrb[0].mxu0
      %v5098 = vadd.f32 0.0, %v5097
      %v5099 = vpop.f32.mrb[0].mxu0
      %v5100 = vpop.f32.mrb[0].mxu0
      %v5101 = vadd.f32 0.0, %v5100
      %v5102 = vpop.f32.mrb[0].mxu0
      %5103 = vmatprep.mubr.bf16.mxu0 0
      %5104 = vmatmul.mubr.bf16.gmra.mrb[0].mxu0 %v5038
      %v5105 = vpop.f32.mrb[0].mxu0
      %v5106 = vadd.f32 0.0, %v5105
      %v5107 = vpop.f32.mrb[0].mxu0
      %v5108 = vpop.f32.mrb[0].mxu0
      %v5109 = vadd.f32 0.0, %v5108
      %v5110 = vpop.f32.mrb[0].mxu0
      %5111 = vmatprep.mubr.bf16.mxu0 0
      %5112 = vmatmul.mubr.bf16.gmra.mrb[0].mxu0 %v5041
      %v5113 = vpop.f32.mrb[0].mxu0
      %v5114 = vadd.f32 0.0, %v5113
      %v5115 = vpop.f32.mrb[0].mxu0
      %v5116 = vpop.f32.mrb[0].mxu0
      %v5117 = vadd.f32 0.0, %v5116
      %v5118 = vpop.f32.mrb[0].mxu0
      %5119 = vdwg.mxu0
      %v5120 = vmul.f32 %v5090, 0.17677669
      %v5121 = vmul.f32 %v5093, 0.17677669
      %v5122 = vmul.f32 %v5098, 0.17677669
      %v5123 = vmul.f32 %v5101, 0.17677669
      %v5124 = vmul.f32 %v5106, 0.17677669
      %v5125 = vmul.f32 %v5109, 0.17677669
      %v5126 = vmul.f32 %v5114, 0.17677669
      %v5127 = vmul.f32 %v5117, 0.17677669
      %v5128 = vsel %vm1375, %v5120, -inf
      %5129 = vmax.xlane.f32.xlu0 %v5128
      %v5130 = vpop.xlane.xlu0 %5129
      %v5131 = vsel %vm1375, %v5121, -inf
      %5132 = vmax.xlane.f32.xlu0 %v5131
      %v5133 = vpop.xlane.xlu0 %5132
      %v5134 = vsel %vm1375, %v5122, -inf
      %5135 = vmax.xlane.f32.xlu0 %v5134
      %v5136 = vpop.xlane.xlu0 %5135
      %v5137 = vsel %vm1375, %v5123, -inf
      %5138 = vmax.xlane.f32.xlu0 %v5137
      %v5139 = vpop.xlane.xlu0 %5138
      %v5140 = vsel %vm1375, %v5124, -inf
      %5141 = vmax.xlane.f32.xlu0 %v5140
      %v5142 = vpop.xlane.xlu0 %5141
      %v5143 = vsel %vm1375, %v5125, -inf
      %5144 = vmax.xlane.f32.xlu0 %v5143
      %v5145 = vpop.xlane.xlu0 %5144
      %v5146 = vsel %vm1375, %v5126, -inf
      %5147 = vmax.xlane.f32.xlu0 %v5146
      %v5148 = vpop.xlane.xlu0 %5147
      %v5149 = vsel %vm1375, %v5127, -inf
      %5150 = vmax.xlane.f32.xlu0 %v5149
      %v5151 = vpop.xlane.xlu0 %5150
      %v5152 = vsub.f32 %v5120, %v5130
      %v5153 = vsub.f32 %v5121, %v5133
      %v5154 = vsub.f32 %v5122, %v5136
      %v5155 = vsub.f32 %v5123, %v5139
      %v5156 = vsub.f32 %v5124, %v5142
      %v5157 = vsub.f32 %v5125, %v5145
      %v5158 = vsub.f32 %v5126, %v5148
      %v5159 = vsub.f32 %v5127, %v5151
      %v5160 = vmul.f32 %v5152, 1.442695
      %v5161 = vpow.pop %v5160
      %v5162 = vmul.f32 %v5153, 1.442695
      %v5163 = vpow.pop %v5162
      %v5164 = vmul.f32 %v5154, 1.442695
      %v5165 = vpow.pop %v5164
      %v5166 = vmul.f32 %v5155, 1.442695
      %v5167 = vpow.pop %v5166
      %v5168 = vmul.f32 %v5156, 1.442695
      %v5169 = vpow.pop %v5168
      %v5170 = vmul.f32 %v5157, 1.442695
      %v5171 = vpow.pop %v5170
      %v5172 = vmul.f32 %v5158, 1.442695
      %v5173 = vpow.pop %v5172
      %v5174 = vmul.f32 %v5159, 1.442695
      %v5175 = vpow.pop %v5174
      %v5176 = vsel %vm1375, %v5161, 0.0
      %5177 = vadd.xlane.f32.xlu0 %v5176
      %v5178 = vpop.xlane.xlu0 %5177
      %v5179 = vsel %vm1375, %v5163, 0.0
      %5180 = vadd.xlane.f32.xlu0 %v5179
      %v5181 = vpop.xlane.xlu0 %5180
      %v5182 = vsel %vm1375, %v5165, 0.0
      %5183 = vadd.xlane.f32.xlu0 %v5182
      %v5184 = vpop.xlane.xlu0 %5183
      %v5185 = vsel %vm1375, %v5167, 0.0
      %5186 = vadd.xlane.f32.xlu0 %v5185
      %v5187 = vpop.xlane.xlu0 %5186
      %v5188 = vsel %vm1375, %v5169, 0.0
      %5189 = vadd.xlane.f32.xlu0 %v5188
      %v5190 = vpop.xlane.xlu0 %5189
      %v5191 = vsel %vm1375, %v5171, 0.0
      %5192 = vadd.xlane.f32.xlu0 %v5191
      %v5193 = vpop.xlane.xlu0 %5192
      %v5194 = vsel %vm1375, %v5173, 0.0
      %5195 = vadd.xlane.f32.xlu0 %v5194
      %v5196 = vpop.xlane.xlu0 %5195
      %v5197 = vsel %vm1375, %v5175, 0.0
      %5198 = vadd.xlane.f32.xlu0 %v5197
      %v5199 = vpop.xlane.xlu0 %5198
      %v5200 = vrcp.pop %v5178
      %v5201 = vrcp.pop %v5181
      %v5202 = vrcp.pop %v5184
      %v5203 = vrcp.pop %v5187
      %v5204 = vrcp.pop %v5190
      %v5205 = vrcp.pop %v5193
      %v5206 = vrcp.pop %v5196
      %v5207 = vrcp.pop %v5199
      %v5208 = vmul.f32 %v5161, %v5200
      %v5209 = vmul.f32 %v5163, %v5201
      %v5210 = vmul.f32 %v5165, %v5202
      %v5211 = vmul.f32 %v5167, %v5203
      %v5212 = vmul.f32 %v5169, %v5204
      %v5213 = vmul.f32 %v5171, %v5205
      %v5214 = vmul.f32 %v5173, %v5206
      %v5215 = vmul.f32 %v5175, %v5207
      %v5216 = vpack.c.bf16 %v5209, %v5208
      %v5217 = vpack.c.bf16 %v5211, %v5210
      %v5218 = vpack.c.bf16 %v5213, %v5212
      %v5219 = vpack.c.bf16 %v5215, %v5214
      %5220 = vrot.lane.b32.xlu0 %v4230, 64
      %v5221 = vpop.permute.xlu0 %5220
      %5222 = vrot.lane.b32.xlu0 %v4233, 64
      %v5223 = vpop.permute.xlu0 %5222
      %5224 = vrot.lane.b32.xlu0 %v4236, 64
      %v5225 = vpop.permute.xlu0 %5224
      %5226 = vrot.lane.b32.xlu0 %v4239, 64
      %v5227 = vpop.permute.xlu0 %5226
      %v5233 = vsel %vm1375, %v5216, 0
      %v5236 = vsel %vm1375, %v5217, 0
      %v5239 = vsel %vm1375, %v5218, 0
      %v5242 = vsel %vm1375, %v5219, 0
      %5244 = vmatprep.subr.bf16.mxu0 0
      %5245 = vmatpush1.bf16.msra.mxu0 %v5221
      %5246 = vmatprep.subr.bf16.mxu0 0
      %5247 = vmatpush1.bf16.msra.mxu0 %v5223
      %5248 = vmatprep.subr.bf16.mxu0 0
      %5249 = vmatpush1.bf16.msra.mxu0 %v5225
      %5250 = vmatprep.subr.bf16.mxu0 0
      %5251 = vmatpush1.bf16.msra.mxu0 %v5227
      %5252 = vmatprep.subr.bf16.mxu0 0
      %5253 = vmatpush1.bf16.msra.mxu0 0
      %5254 = vmatprep.subr.bf16.mxu0 0
      %5255 = vmatpush1.bf16.msra.mxu0 0
      %5256 = vmatprep.subr.bf16.mxu0 0
      %5257 = vmatpush1.bf16.msra.mxu0 0
      %5258 = vmatprep.subr.bf16.mxu0 0
      %5259 = vmatpush1.bf16.msra.mxu0 0
      %5260 = vmatprep.subr.bf16.mxu0 0
      %5261 = vmatpush1.bf16.msra.mxu0 0
      %5262 = vmatprep.subr.bf16.mxu0 0
      %5263 = vmatpush1.bf16.msra.mxu0 0
      %5264 = vmatprep.subr.bf16.mxu0 0
      %5265 = vmatpush1.bf16.msra.mxu0 0
      %5266 = vmatprep.subr.bf16.mxu0 0
      %5267 = vmatpush1.bf16.msra.mxu0 0
      %5268 = vmatprep.subr.bf16.mxu0 0
      %5269 = vmatpush1.bf16.msra.mxu0 0
      %5270 = vmatprep.subr.bf16.mxu0 0
      %5271 = vmatpush1.bf16.msra.mxu0 0
      %5272 = vmatprep.subr.bf16.mxu0 0
      %5273 = vmatpush1.bf16.msra.mxu0 0
      %5274 = vmatprep.subr.bf16.mxu0 0
      %5275 = vmatpush1.bf16.msra.mxu0 0
      %5276 = vmatprep.mubr.bf16.mxu0 0
      %5277 = vmatmul.mubr.bf16.gmra.mrb[0].mxu0 %v5233
      %v5278 = vpop.f32.mrb[0].mxu0
      %v5279 = vadd.f32 0.0, %v5278
      %v5280 = vpop.f32.mrb[0].mxu0
      %v5281 = vpop.f32.mrb[0].mxu0
      %v5282 = vadd.f32 0.0, %v5281
      %v5283 = vpop.f32.mrb[0].mxu0
      %5284 = vmatprep.mubr.bf16.mxu0 0
      %5285 = vmatmul.mubr.bf16.gmra.mrb[0].mxu0 %v5236
      %v5286 = vpop.f32.mrb[0].mxu0
      %v5287 = vadd.f32 0.0, %v5286
      %v5288 = vpop.f32.mrb[0].mxu0
      %v5289 = vpop.f32.mrb[0].mxu0
      %v5290 = vadd.f32 0.0, %v5289
      %v5291 = vpop.f32.mrb[0].mxu0
      %5292 = vmatprep.mubr.bf16.mxu0 0
      %5293 = vmatmul.mubr.bf16.gmra.mrb[0].mxu0 %v5239
      %v5294 = vpop.f32.mrb[0].mxu0
      %v5295 = vadd.f32 0.0, %v5294
      %v5296 = vpop.f32.mrb[0].mxu0
      %v5297 = vpop.f32.mrb[0].mxu0
      %v5298 = vadd.f32 0.0, %v5297
      %v5299 = vpop.f32.mrb[0].mxu0
      %5300 = vmatprep.mubr.bf16.mxu0 0
      %5301 = vmatmul.mubr.bf16.gmra.mrb[0].mxu0 %v5242
      %v5302 = vpop.f32.mrb[0].mxu0
      %v5303 = vadd.f32 0.0, %v5302
      %v5304 = vpop.f32.mrb[0].mxu0
      %v5305 = vpop.f32.mrb[0].mxu0
      %v5306 = vadd.f32 0.0, %v5305
      %v5307 = vpop.f32.mrb[0].mxu0
      %5308 = vdwg.mxu0
      %v5309 = vpack.c.bf16 %v5282, %v5279
      %v5310 = vpack.c.bf16 %v5290, %v5287
      %v5311 = vpack.c.bf16 %v5298, %v5295
      %v5312 = vpack.c.bf16 %v5306, %v5303
      %v5317 = vunpack.c.l.b16 %v4249
      %v5318 = vunpack.c.l.b16 %v4250
      %v5319 = vunpack.c.l.b16 %v4251
      %v5320 = vunpack.c.l.b16 %v4252
      %v5321 = vpack.c.b16 %v5318, %v5317
      %v5322 = vpack.c.b16 %v5320, %v5319
      %v5326 = vsel %vm1277, %v5309, 0
      %v5329 = vsel %vm1277, %v5310, 0
      %v5332 = vsel %vm1277, %v5311, 0
      %v5335 = vsel %vm1277, %v5312, 0
      %5337 = vmatprep.subr.bf16.mxu0 0
      %5338 = vmatpush1.bf16.msra.mxu0 %v5321
      %5339 = vmatprep.subr.bf16.mxu0 0
      %5340 = vmatpush1.bf16.msra.mxu0 %v5322
      %5341 = vmatprep.subr.bf16.mxu0 0
      %5342 = vmatpush1.bf16.msra.mxu0 0
      %5343 = vmatprep.subr.bf16.mxu0 0
      %5344 = vmatpush1.bf16.msra.mxu0 0
      %5345 = vmatprep.subr.bf16.mxu0 0
      %5346 = vmatpush1.bf16.msra.mxu0 0
      %5347 = vmatprep.subr.bf16.mxu0 0
      %5348 = vmatpush1.bf16.msra.mxu0 0
      %5349 = vmatprep.subr.bf16.mxu0 0
      %5350 = vmatpush1.bf16.msra.mxu0 0
      %5351 = vmatprep.subr.bf16.mxu0 0
      %5352 = vmatpush1.bf16.msra.mxu0 0
      %5353 = vmatprep.subr.bf16.mxu0 0
      %5354 = vmatpush1.bf16.msra.mxu0 0
      %5355 = vmatprep.subr.bf16.mxu0 0
      %5356 = vmatpush1.bf16.msra.mxu0 0
      %5357 = vmatprep.subr.bf16.mxu0 0
      %5358 = vmatpush1.bf16.msra.mxu0 0
      %5359 = vmatprep.subr.bf16.mxu0 0
      %5360 = vmatpush1.bf16.msra.mxu0 0
      %5361 = vmatprep.subr.bf16.mxu0 0
      %5362 = vmatpush1.bf16.msra.mxu0 0
      %5363 = vmatprep.subr.bf16.mxu0 0
      %5364 = vmatpush1.bf16.msra.mxu0 0
      %5365 = vmatprep.subr.bf16.mxu0 0
      %5366 = vmatpush1.bf16.msra.mxu0 0
      %5367 = vmatprep.subr.bf16.mxu0 0
      %5368 = vmatpush1.bf16.msra.mxu0 0
      %5369 = vmatprep.mubr.bf16.mxu0 0
      %5370 = vmatmul.mubr.bf16.gmra.mrb[0].mxu0 %v5326
      %v5371 = vpop.f32.mrb[0].mxu0
      %v5372 = vadd.f32 0.0, %v5371
      %v5373 = vpop.f32.mrb[0].mxu0
      %v5374 = vpop.f32.mrb[0].mxu0
      %v5375 = vadd.f32 0.0, %v5374
      %v5376 = vpop.f32.mrb[0].mxu0
      %5377 = vmatprep.mubr.bf16.mxu0 0
      %5378 = vmatmul.mubr.bf16.gmra.mrb[0].mxu0 %v5329
      %v5379 = vpop.f32.mrb[0].mxu0
      %v5380 = vadd.f32 0.0, %v5379
      %v5381 = vpop.f32.mrb[0].mxu0
      %v5382 = vpop.f32.mrb[0].mxu0
      %v5383 = vadd.f32 0.0, %v5382
      %v5384 = vpop.f32.mrb[0].mxu0
      %5385 = vmatprep.mubr.bf16.mxu0 0
      %5386 = vmatmul.mubr.bf16.gmra.mrb[0].mxu0 %v5332
      %v5387 = vpop.f32.mrb[0].mxu0
      %v5388 = vadd.f32 0.0, %v5387
      %v5389 = vpop.f32.mrb[0].mxu0
      %v5390 = vpop.f32.mrb[0].mxu0
      %v5391 = vadd.f32 0.0, %v5390
      %v5392 = vpop.f32.mrb[0].mxu0
      %5393 = vmatprep.mubr.bf16.mxu0 0
      %5394 = vmatmul.mubr.bf16.gmra.mrb[0].mxu0 %v5335
      %v5395 = vpop.f32.mrb[0].mxu0
      %v5396 = vadd.f32 0.0, %v5395
      %v5397 = vpop.f32.mrb[0].mxu0
      %v5398 = vpop.f32.mrb[0].mxu0
      %v5399 = vadd.f32 0.0, %v5398
      %v5400 = vpop.f32.mrb[0].mxu0
      %5401 = vdwg.mxu0
      %v5402 = vadd.f32 %v4985, %v5372
      %v5403 = vadd.f32 %v4988, %v5375
      %v5404 = vadd.f32 %v4993, %v5380
      %v5405 = vadd.f32 %v4996, %v5383
      %v5406 = vadd.f32 %v5001, %v5388
      %v5407 = vadd.f32 %v5004, %v5391
      %v5408 = vadd.f32 %v5009, %v5396
      %v5409 = vadd.f32 %v5012, %v5399
      %5410 = vrot.lane.b32.xlu0 %v4228, 32
      %v5411 = vpop.permute.xlu0 %5410
      %5412 = vrot.lane.b32.xlu0 %v4231, 32
      %v5413 = vpop.permute.xlu0 %5412
      %5414 = vrot.lane.b32.xlu0 %v4234, 32
      %v5415 = vpop.permute.xlu0 %5414
      %5416 = vrot.lane.b32.xlu0 %v4237, 32
      %v5417 = vpop.permute.xlu0 %5416
      %5418 = vrot.lane.b32.xlu0 %v4229, 32
      %v5419 = vpop.permute.xlu0 %5418
      %5420 = vrot.lane.b32.xlu0 %v4232, 32
      %v5421 = vpop.permute.xlu0 %5420
      %5422 = vrot.lane.b32.xlu0 %v4235, 32
      %v5423 = vpop.permute.xlu0 %5422
      %5424 = vrot.lane.b32.xlu0 %v4238, 32
      %v5425 = vpop.permute.xlu0 %5424
      %v5427 = vsel %vm1277, %v5411, 0
      %v5430 = vsel %vm1277, %v5413, 0
      %v5433 = vsel %vm1277, %v5415, 0
      %v5436 = vsel %vm1277, %v5417, 0
      %v5439 = vsel %vm1277, %v5419, 0
      %v5442 = vsel %vm1277, %v5421, 0
      %v5445 = vsel %vm1277, %v5423, 0
      %v5448 = vsel %vm1277, %v5425, 0
      %5450 = vmatprep.subr.bf16.mxu0 0
      %5451 = vmatpush1.bf16.xpose.msra.mxu0 %v5439
      %5452 = vmatprep.subr.bf16.mxu0 0
      %5453 = vmatpush1.bf16.xpose.msra.mxu0 %v5442
      %5454 = vmatprep.subr.bf16.mxu0 0
      %5455 = vmatpush1.bf16.xpose.msra.mxu0 %v5445
      %5456 = vmatprep.subr.bf16.mxu0 0
      %5457 = vmatpush1.bf16.xpose.msra.mxu0 %v5448
      %5458 = vmatprep.subr.bf16.mxu0 0
      %5459 = vmatpush1.bf16.xpose.msra.mxu0 0
      %5460 = vmatprep.subr.bf16.mxu0 0
      %5461 = vmatpush1.bf16.xpose.msra.mxu0 0
      %5462 = vmatprep.subr.bf16.mxu0 0
      %5463 = vmatpush1.bf16.xpose.msra.mxu0 0
      %5464 = vmatprep.subr.bf16.mxu0 0
      %5465 = vmatpush1.bf16.xpose.msra.mxu0 0
      %5466 = vmatprep.subr.bf16.mxu0 0
      %5467 = vmatpush1.bf16.xpose.msra.mxu0 0
      %5468 = vmatprep.subr.bf16.mxu0 0
      %5469 = vmatpush1.bf16.xpose.msra.mxu0 0
      %5470 = vmatprep.subr.bf16.mxu0 0
      %5471 = vmatpush1.bf16.xpose.msra.mxu0 0
      %5472 = vmatprep.subr.bf16.mxu0 0
      %5473 = vmatpush1.bf16.xpose.msra.mxu0 0
      %5474 = vmatprep.subr.bf16.mxu0 0
      %5475 = vmatpush1.bf16.xpose.msra.mxu0 0
      %5476 = vmatprep.subr.bf16.mxu0 0
      %5477 = vmatpush1.bf16.xpose.msra.mxu0 0
      %5478 = vmatprep.subr.bf16.mxu0 0
      %5479 = vmatpush1.bf16.xpose.msra.mxu0 0
      %5480 = vmatprep.subr.bf16.mxu0 0
      %5481 = vmatpush1.bf16.xpose.msra.mxu0 0
      %5482 = vmatprep.mubr.bf16.mxu0 0
      %5483 = vmatmul.mubr.bf16.gmra.mrb[0].mxu0 %v5427
      %v5484 = vpop.f32.mrb[0].mxu0
      %v5485 = vadd.f32 0.0, %v5484
      %v5486 = vpop.f32.mrb[0].mxu0
      %v5487 = vpop.f32.mrb[0].mxu0
      %v5488 = vadd.f32 0.0, %v5487
      %v5489 = vpop.f32.mrb[0].mxu0
      %5490 = vmatprep.mubr.bf16.mxu0 0
      %5491 = vmatmul.mubr.bf16.gmra.mrb[0].mxu0 %v5430
      %v5492 = vpop.f32.mrb[0].mxu0
      %v5493 = vadd.f32 0.0, %v5492
      %v5494 = vpop.f32.mrb[0].mxu0
      %v5495 = vpop.f32.mrb[0].mxu0
      %v5496 = vadd.f32 0.0, %v5495
      %v5497 = vpop.f32.mrb[0].mxu0
      %5498 = vmatprep.mubr.bf16.mxu0 0
      %5499 = vmatmul.mubr.bf16.gmra.mrb[0].mxu0 %v5433
      %v5500 = vpop.f32.mrb[0].mxu0
      %v5501 = vadd.f32 0.0, %v5500
      %v5502 = vpop.f32.mrb[0].mxu0
      %v5503 = vpop.f32.mrb[0].mxu0
      %v5504 = vadd.f32 0.0, %v5503
      %v5505 = vpop.f32.mrb[0].mxu0
      %5506 = vmatprep.mubr.bf16.mxu0 0
      %5507 = vmatmul.mubr.bf16.gmra.mrb[0].mxu0 %v5436
      %v5508 = vpop.f32.mrb[0].mxu0
      %v5509 = vadd.f32 0.0, %v5508
      %v5510 = vpop.f32.mrb[0].mxu0
      %v5511 = vpop.f32.mrb[0].mxu0
      %v5512 = vadd.f32 0.0, %v5511
      %v5513 = vpop.f32.mrb[0].mxu0
      %5514 = vdwg.mxu0
      %v5515 = vmul.f32 %v5485, 0.17677669
      %v5516 = vmul.f32 %v5488, 0.17677669
      %v5517 = vmul.f32 %v5493, 0.17677669
      %v5518 = vmul.f32 %v5496, 0.17677669
      %v5519 = vmul.f32 %v5501, 0.17677669
      %v5520 = vmul.f32 %v5504, 0.17677669
      %v5521 = vmul.f32 %v5509, 0.17677669
      %v5522 = vmul.f32 %v5512, 0.17677669
      %v5523 = vsel %vm1375, %v5515, -inf
      %5524 = vmax.xlane.f32.xlu0 %v5523
      %v5525 = vpop.xlane.xlu0 %5524
      %v5526 = vsel %vm1375, %v5516, -inf
      %5527 = vmax.xlane.f32.xlu0 %v5526
      %v5528 = vpop.xlane.xlu0 %5527
      %v5529 = vsel %vm1375, %v5517, -inf
      %5530 = vmax.xlane.f32.xlu0 %v5529
      %v5531 = vpop.xlane.xlu0 %5530
      %v5532 = vsel %vm1375, %v5518, -inf
      %5533 = vmax.xlane.f32.xlu0 %v5532
      %v5534 = vpop.xlane.xlu0 %5533
      %v5535 = vsel %vm1375, %v5519, -inf
      %5536 = vmax.xlane.f32.xlu0 %v5535
      %v5537 = vpop.xlane.xlu0 %5536
      %v5538 = vsel %vm1375, %v5520, -inf
      %5539 = vmax.xlane.f32.xlu0 %v5538
      %v5540 = vpop.xlane.xlu0 %5539
      %v5541 = vsel %vm1375, %v5521, -inf
      %5542 = vmax.xlane.f32.xlu0 %v5541
      %v5543 = vpop.xlane.xlu0 %5542
      %v5544 = vsel %vm1375, %v5522, -inf
      %5545 = vmax.xlane.f32.xlu0 %v5544
      %v5546 = vpop.xlane.xlu0 %5545
      %v5547 = vsub.f32 %v5515, %v5525
      %v5548 = vsub.f32 %v5516, %v5528
      %v5549 = vsub.f32 %v5517, %v5531
      %v5550 = vsub.f32 %v5518, %v5534
      %v5551 = vsub.f32 %v5519, %v5537
      %v5552 = vsub.f32 %v5520, %v5540
      %v5553 = vsub.f32 %v5521, %v5543
      %v5554 = vsub.f32 %v5522, %v5546
      %v5555 = vmul.f32 %v5547, 1.442695
      %v5556 = vpow.pop %v5555
      %v5557 = vmul.f32 %v5548, 1.442695
      %v5558 = vpow.pop %v5557
      %v5559 = vmul.f32 %v5549, 1.442695
      %v5560 = vpow.pop %v5559
      %v5561 = vmul.f32 %v5550, 1.442695
      %v5562 = vpow.pop %v5561
      %v5563 = vmul.f32 %v5551, 1.442695
      %v5564 = vpow.pop %v5563
      %v5565 = vmul.f32 %v5552, 1.442695
      %v5566 = vpow.pop %v5565
      %v5567 = vmul.f32 %v5553, 1.442695
      %v5568 = vpow.pop %v5567
      %v5569 = vmul.f32 %v5554, 1.442695
      %v5570 = vpow.pop %v5569
      %v5571 = vsel %vm1375, %v5556, 0.0
      %5572 = vadd.xlane.f32.xlu0 %v5571
      %v5573 = vpop.xlane.xlu0 %5572
      %v5574 = vsel %vm1375, %v5558, 0.0
      %5575 = vadd.xlane.f32.xlu0 %v5574
      %v5576 = vpop.xlane.xlu0 %5575
      %v5577 = vsel %vm1375, %v5560, 0.0
      %5578 = vadd.xlane.f32.xlu0 %v5577
      %v5579 = vpop.xlane.xlu0 %5578
      %v5580 = vsel %vm1375, %v5562, 0.0
      %5581 = vadd.xlane.f32.xlu0 %v5580
      %v5582 = vpop.xlane.xlu0 %5581
      %v5583 = vsel %vm1375, %v5564, 0.0
      %5584 = vadd.xlane.f32.xlu0 %v5583
      %v5585 = vpop.xlane.xlu0 %5584
      %v5586 = vsel %vm1375, %v5566, 0.0
      %5587 = vadd.xlane.f32.xlu0 %v5586
      %v5588 = vpop.xlane.xlu0 %5587
      %v5589 = vsel %vm1375, %v5568, 0.0
      %5590 = vadd.xlane.f32.xlu0 %v5589
      %v5591 = vpop.xlane.xlu0 %5590
      %v5592 = vsel %vm1375, %v5570, 0.0
      %5593 = vadd.xlane.f32.xlu0 %v5592
      %v5594 = vpop.xlane.xlu0 %5593
      %v5595 = vrcp.pop %v5573
      %v5596 = vrcp.pop %v5576
      %v5597 = vrcp.pop %v5579
      %v5598 = vrcp.pop %v5582
      %v5599 = vrcp.pop %v5585
      %v5600 = vrcp.pop %v5588
      %v5601 = vrcp.pop %v5591
      %v5602 = vrcp.pop %v5594
      %v5603 = vmul.f32 %v5556, %v5595
      %v5604 = vmul.f32 %v5558, %v5596
      %v5605 = vmul.f32 %v5560, %v5597
      %v5606 = vmul.f32 %v5562, %v5598
      %v5607 = vmul.f32 %v5564, %v5599
      %v5608 = vmul.f32 %v5566, %v5600
      %v5609 = vmul.f32 %v5568, %v5601
      %v5610 = vmul.f32 %v5570, %v5602
      %v5611 = vpack.c.bf16 %v5604, %v5603
      %v5612 = vpack.c.bf16 %v5606, %v5605
      %v5613 = vpack.c.bf16 %v5608, %v5607
      %v5614 = vpack.c.bf16 %v5610, %v5609
      %5615 = vrot.lane.b32.xlu0 %v4230, 32
      %v5616 = vpop.permute.xlu0 %5615
      %5617 = vrot.lane.b32.xlu0 %v4233, 32
      %v5618 = vpop.permute.xlu0 %5617
      %5619 = vrot.lane.b32.xlu0 %v4236, 32
      %v5620 = vpop.permute.xlu0 %5619
      %5621 = vrot.lane.b32.xlu0 %v4239, 32
      %v5622 = vpop.permute.xlu0 %5621
      %v5628 = vsel %vm1375, %v5611, 0
      %v5631 = vsel %vm1375, %v5612, 0
      %v5634 = vsel %vm1375, %v5613, 0
      %v5637 = vsel %vm1375, %v5614, 0
      %5639 = vmatprep.subr.bf16.mxu0 0
      %5640 = vmatpush1.bf16.msra.mxu0 %v5616
      %5641 = vmatprep.subr.bf16.mxu0 0
      %5642 = vmatpush1.bf16.msra.mxu0 %v5618
      %5643 = vmatprep.subr.bf16.mxu0 0
      %5644 = vmatpush1.bf16.msra.mxu0 %v5620
      %5645 = vmatprep.subr.bf16.mxu0 0
      %5646 = vmatpush1.bf16.msra.mxu0 %v5622
      %5647 = vmatprep.subr.bf16.mxu0 0
      %5648 = vmatpush1.bf16.msra.mxu0 0
      %5649 = vmatprep.subr.bf16.mxu0 0
      %5650 = vmatpush1.bf16.msra.mxu0 0
      %5651 = vmatprep.subr.bf16.mxu0 0
      %5652 = vmatpush1.bf16.msra.mxu0 0
      %5653 = vmatprep.subr.bf16.mxu0 0
      %5654 = vmatpush1.bf16.msra.mxu0 0
      %5655 = vmatprep.subr.bf16.mxu0 0
      %5656 = vmatpush1.bf16.msra.mxu0 0
      %5657 = vmatprep.subr.bf16.mxu0 0
      %5658 = vmatpush1.bf16.msra.mxu0 0
      %5659 = vmatprep.subr.bf16.mxu0 0
      %5660 = vmatpush1.bf16.msra.mxu0 0
      %5661 = vmatprep.subr.bf16.mxu0 0
      %5662 = vmatpush1.bf16.msra.mxu0 0
      %5663 = vmatprep.subr.bf16.mxu0 0
      %5664 = vmatpush1.bf16.msra.mxu0 0
      %5665 = vmatprep.subr.bf16.mxu0 0
      %5666 = vmatpush1.bf16.msra.mxu0 0
      %5667 = vmatprep.subr.bf16.mxu0 0
      %5668 = vmatpush1.bf16.msra.mxu0 0
      %5669 = vmatprep.subr.bf16.mxu0 0
      %5670 = vmatpush1.bf16.msra.mxu0 0
      %5671 = vmatprep.mubr.bf16.mxu0 0
      %5672 = vmatmul.mubr.bf16.gmra.mrb[0].mxu0 %v5628
      %v5673 = vpop.f32.mrb[0].mxu0
      %v5674 = vadd.f32 0.0, %v5673
      %v5675 = vpop.f32.mrb[0].mxu0
      %v5676 = vpop.f32.mrb[0].mxu0
      %v5677 = vadd.f32 0.0, %v5676
      %v5678 = vpop.f32.mrb[0].mxu0
      %5679 = vmatprep.mubr.bf16.mxu0 0
      %5680 = vmatmul.mubr.bf16.gmra.mrb[0].mxu0 %v5631
      %v5681 = vpop.f32.mrb[0].mxu0
      %v5682 = vadd.f32 0.0, %v5681
      %v5683 = vpop.f32.mrb[0].mxu0
      %v5684 = vpop.f32.mrb[0].mxu0
      %v5685 = vadd.f32 0.0, %v5684
      %v5686 = vpop.f32.mrb[0].mxu0
      %5687 = vmatprep.mubr.bf16.mxu0 0
      %5688 = vmatmul.mubr.bf16.gmra.mrb[0].mxu0 %v5634
      %v5689 = vpop.f32.mrb[0].mxu0
      %v5690 = vadd.f32 0.0, %v5689
      %v5691 = vpop.f32.mrb[0].mxu0
      %v5692 = vpop.f32.mrb[0].mxu0
      %v5693 = vadd.f32 0.0, %v5692
      %v5694 = vpop.f32.mrb[0].mxu0
      %5695 = vmatprep.mubr.bf16.mxu0 0
      %5696 = vmatmul.mubr.bf16.gmra.mrb[0].mxu0 %v5637
      %v5697 = vpop.f32.mrb[0].mxu0
      %v5698 = vadd.f32 0.0, %v5697
      %v5699 = vpop.f32.mrb[0].mxu0
      %v5700 = vpop.f32.mrb[0].mxu0
      %v5701 = vadd.f32 0.0, %v5700
      %v5702 = vpop.f32.mrb[0].mxu0
      %5703 = vdwg.mxu0
      %v5704 = vpack.c.bf16 %v5677, %v5674
      %v5705 = vpack.c.bf16 %v5685, %v5682
      %v5706 = vpack.c.bf16 %v5693, %v5690
      %v5707 = vpack.c.bf16 %v5701, %v5698
      %v5712 = vunpack.c.l.b16 %v4253
      %v5713 = vunpack.c.l.b16 %v4254
      %v5714 = vunpack.c.l.b16 %v4255
      %v5715 = vunpack.c.l.b16 %v4256
      %v5716 = vpack.c.b16 %v5713, %v5712
      %v5717 = vpack.c.b16 %v5715, %v5714
      %v5721 = vsel %vm1277, %v5704, 0
      %v5724 = vsel %vm1277, %v5705, 0
      %v5727 = vsel %vm1277, %v5706, 0
      %v5730 = vsel %vm1277, %v5707, 0
      %5732 = vmatprep.subr.bf16.mxu0 0
      %5733 = vmatpush1.bf16.msra.mxu0 %v5716
      %5734 = vmatprep.subr.bf16.mxu0 0
      %5735 = vmatpush1.bf16.msra.mxu0 %v5717
      %5736 = vmatprep.subr.bf16.mxu0 0
      %5737 = vmatpush1.bf16.msra.mxu0 0
      %5738 = vmatprep.subr.bf16.mxu0 0
      %5739 = vmatpush1.bf16.msra.mxu0 0
      %5740 = vmatprep.subr.bf16.mxu0 0
      %5741 = vmatpush1.bf16.msra.mxu0 0
      %5742 = vmatprep.subr.bf16.mxu0 0
      %5743 = vmatpush1.bf16.msra.mxu0 0
      %5744 = vmatprep.subr.bf16.mxu0 0
      %5745 = vmatpush1.bf16.msra.mxu0 0
      %5746 = vmatprep.subr.bf16.mxu0 0
      %5747 = vmatpush1.bf16.msra.mxu0 0
      %5748 = vmatprep.subr.bf16.mxu0 0
      %5749 = vmatpush1.bf16.msra.mxu0 0
      %5750 = vmatprep.subr.bf16.mxu0 0
      %5751 = vmatpush1.bf16.msra.mxu0 0
      %5752 = vmatprep.subr.bf16.mxu0 0
      %5753 = vmatpush1.bf16.msra.mxu0 0
      %5754 = vmatprep.subr.bf16.mxu0 0
      %5755 = vmatpush1.bf16.msra.mxu0 0
      %5756 = vmatprep.subr.bf16.mxu0 0
      %5757 = vmatpush1.bf16.msra.mxu0 0
      %5758 = vmatprep.subr.bf16.mxu0 0
      %5759 = vmatpush1.bf16.msra.mxu0 0
      %5760 = vmatprep.subr.bf16.mxu0 0
      %5761 = vmatpush1.bf16.msra.mxu0 0
      %5762 = vmatprep.subr.bf16.mxu0 0
      %5763 = vmatpush1.bf16.msra.mxu0 0
      %5764 = vmatprep.mubr.bf16.mxu0 0
      %5765 = vmatmul.mubr.bf16.gmra.mrb[0].mxu0 %v5721
      %v5766 = vpop.f32.mrb[0].mxu0
      %v5767 = vadd.f32 0.0, %v5766
      %v5768 = vpop.f32.mrb[0].mxu0
      %v5769 = vpop.f32.mrb[0].mxu0
      %v5770 = vadd.f32 0.0, %v5769
      %v5771 = vpop.f32.mrb[0].mxu0
      %5772 = vmatprep.mubr.bf16.mxu0 0
      %5773 = vmatmul.mubr.bf16.gmra.mrb[0].mxu0 %v5724
      %v5774 = vpop.f32.mrb[0].mxu0
      %v5775 = vadd.f32 0.0, %v5774
      %v5776 = vpop.f32.mrb[0].mxu0
      %v5777 = vpop.f32.mrb[0].mxu0
      %v5778 = vadd.f32 0.0, %v5777
      %v5779 = vpop.f32.mrb[0].mxu0
      %5780 = vmatprep.mubr.bf16.mxu0 0
      %5781 = vmatmul.mubr.bf16.gmra.mrb[0].mxu0 %v5727
      %v5782 = vpop.f32.mrb[0].mxu0
      %v5783 = vadd.f32 0.0, %v5782
      %v5784 = vpop.f32.mrb[0].mxu0
      %v5785 = vpop.f32.mrb[0].mxu0
      %v5786 = vadd.f32 0.0, %v5785
      %v5787 = vpop.f32.mrb[0].mxu0
      %5788 = vmatprep.mubr.bf16.mxu0 0
      %5789 = vmatmul.mubr.bf16.gmra.mrb[0].mxu0 %v5730
      %v5790 = vpop.f32.mrb[0].mxu0
      %v5791 = vadd.f32 0.0, %v5790
      %v5792 = vpop.f32.mrb[0].mxu0
      %v5793 = vpop.f32.mrb[0].mxu0
      %v5794 = vadd.f32 0.0, %v5793
      %v5795 = vpop.f32.mrb[0].mxu0
      %5796 = vdwg.mxu0
      %v5797 = vadd.f32 %v5402, %v5767
      %v5798 = vadd.f32 %v5403, %v5770
      %v5799 = vadd.f32 %v5404, %v5775
      %v5800 = vadd.f32 %v5405, %v5778
      %v5801 = vadd.f32 %v5406, %v5783
      %v5802 = vadd.f32 %v5407, %v5786
      %v5803 = vadd.f32 %v5408, %v5791
      %v5804 = vadd.f32 %v5409, %v5794
      %s5805 = scalar_lea.vmem %s8, 1
      %v5806 = vld [vmem:[%s5805] sm:$0x1]
      %v5808 = vlaneseq
      %v5809 = vshrl.u32 %v5808, 7
      %v5810 = vsub.s32 0, %v5809
      %v5811 = vrot.slane %v5806, %v5810
      %v5813 = vadd.f32 %v5797, %v5811
      %v5814 = vadd.f32 %v5798, %v5811
      %v5815 = vadd.f32 %v5799, %v5811
      %v5816 = vadd.f32 %v5800, %v5811
      %v5817 = vadd.f32 %v5801, %v5811
      %v5818 = vadd.f32 %v5802, %v5811
      %v5819 = vadd.f32 %v5803, %v5811
      %v5820 = vadd.f32 %v5804, %v5811
      %v5821 = vunpack.c.l.bf16 %v3907
      %v5822 = vunpack.c.h.bf16 %v3907
      %v5823 = vunpack.c.l.bf16 %v3908
      %v5824 = vunpack.c.h.bf16 %v3908
      %v5825 = vunpack.c.l.bf16 %v3909
      %v5826 = vunpack.c.h.bf16 %v3909
      %v5827 = vunpack.c.l.bf16 %v3910
      %v5828 = vunpack.c.h.bf16 %v3910
      %v5829 = vadd.f32 %v5821, %v5813
      %v5830 = vadd.f32 %v5822, %v5814
      %v5831 = vadd.f32 %v5823, %v5815
      %v5832 = vadd.f32 %v5824, %v5816
      %v5833 = vadd.f32 %v5825, %v5817
      %v5834 = vadd.f32 %v5826, %v5818
      %v5835 = vadd.f32 %v5827, %v5819
      %v5836 = vadd.f32 %v5828, %v5820
      %s5837 = scalar_lea.vmem %s9, 1
      %v5838 = vld [vmem:[%s5837] sm:$0x1]
      %s5839 = scalar_lea.vmem %s10, 1
      %v5840 = vld [vmem:[%s5839] sm:$0x1]
      %5841 = vadd.xlane.f32.xlu0 %v5829
      %v5842 = vpop.xlane.xlu0 %5841
      %5843 = vadd.xlane.f32.xlu0 %v5830
      %v5844 = vpop.xlane.xlu0 %5843
      %5845 = vadd.xlane.f32.xlu0 %v5831
      %v5846 = vpop.xlane.xlu0 %5845
      %5847 = vadd.xlane.f32.xlu0 %v5832
      %v5848 = vpop.xlane.xlu0 %5847
      %5849 = vadd.xlane.f32.xlu0 %v5833
      %v5850 = vpop.xlane.xlu0 %5849
      %5851 = vadd.xlane.f32.xlu0 %v5834
      %v5852 = vpop.xlane.xlu0 %5851
      %5853 = vadd.xlane.f32.xlu0 %v5835
      %v5854 = vpop.xlane.xlu0 %5853
      %5855 = vadd.xlane.f32.xlu0 %v5836
      %v5856 = vpop.xlane.xlu0 %5855
      %v5857 = vmul.f32 %v5842, %v829
      %v5858 = vmul.f32 %v5844, %v829
      %v5859 = vmul.f32 %v5846, %v829
      %v5860 = vmul.f32 %v5848, %v829
      %v5861 = vmul.f32 %v5850, %v829
      %v5862 = vmul.f32 %v5852, %v829
      %v5863 = vmul.f32 %v5854, %v829
      %v5864 = vmul.f32 %v5856, %v829
      %v5865 = vsub.f32 %v5829, %v5857
      %v5866 = vsub.f32 %v5830, %v5858
      %v5867 = vsub.f32 %v5831, %v5859
      %v5868 = vsub.f32 %v5832, %v5860
      %v5869 = vsub.f32 %v5833, %v5861
      %v5870 = vsub.f32 %v5834, %v5862
      %v5871 = vsub.f32 %v5835, %v5863
      %v5872 = vsub.f32 %v5836, %v5864
      %v5873 = vmul.f32 %v5865, %v5865
      %v5874 = vmul.f32 %v5866, %v5866
      %v5875 = vmul.f32 %v5867, %v5867
      %v5876 = vmul.f32 %v5868, %v5868
      %v5877 = vmul.f32 %v5869, %v5869
      %v5878 = vmul.f32 %v5870, %v5870
      %v5879 = vmul.f32 %v5871, %v5871
      %v5880 = vmul.f32 %v5872, %v5872
      %5881 = vadd.xlane.f32.xlu0 %v5873
      %v5882 = vpop.xlane.xlu0 %5881
      %5883 = vadd.xlane.f32.xlu0 %v5874
      %v5884 = vpop.xlane.xlu0 %5883
      %5885 = vadd.xlane.f32.xlu0 %v5875
      %v5886 = vpop.xlane.xlu0 %5885
      %5887 = vadd.xlane.f32.xlu0 %v5876
      %v5888 = vpop.xlane.xlu0 %5887
      %5889 = vadd.xlane.f32.xlu0 %v5877
      %v5890 = vpop.xlane.xlu0 %5889
      %5891 = vadd.xlane.f32.xlu0 %v5878
      %v5892 = vpop.xlane.xlu0 %5891
      %5893 = vadd.xlane.f32.xlu0 %v5879
      %v5894 = vpop.xlane.xlu0 %5893
      %5895 = vadd.xlane.f32.xlu0 %v5880
      %v5896 = vpop.xlane.xlu0 %5895
      %v5897 = vmul.f32 %v5882, %v829
      %v5898 = vmul.f32 %v5884, %v829
      %v5899 = vmul.f32 %v5886, %v829
      %v5900 = vmul.f32 %v5888, %v829
      %v5901 = vmul.f32 %v5890, %v829
      %v5902 = vmul.f32 %v5892, %v829
      %v5903 = vmul.f32 %v5894, %v829
      %v5904 = vmul.f32 %v5896, %v829
      %v5905 = vadd.f32 %v5897, 1e-05
      %v5906 = vadd.f32 %v5898, 1e-05
      %v5907 = vadd.f32 %v5899, 1e-05
      %v5908 = vadd.f32 %v5900, 1e-05
      %v5909 = vadd.f32 %v5901, 1e-05
      %v5910 = vadd.f32 %v5902, 1e-05
      %v5911 = vadd.f32 %v5903, 1e-05
      %v5912 = vadd.f32 %v5904, 1e-05
      %v5913 = vrsqrt.pop %v5905
      %v5914 = vrsqrt.pop %v5906
      %v5915 = vrsqrt.pop %v5907
      %v5916 = vrsqrt.pop %v5908
      %v5917 = vrsqrt.pop %v5909
      %v5918 = vrsqrt.pop %v5910
      %v5919 = vrsqrt.pop %v5911
      %v5920 = vrsqrt.pop %v5912
      %v5921 = vmul.f32 %v5865, %v5913
      %v5922 = vmul.f32 %v5866, %v5914
      %v5923 = vmul.f32 %v5867, %v5915
      %v5924 = vmul.f32 %v5868, %v5916
      %v5925 = vmul.f32 %v5869, %v5917
      %v5926 = vmul.f32 %v5870, %v5918
      %v5927 = vmul.f32 %v5871, %v5919
      %v5928 = vmul.f32 %v5872, %v5920
      %v5930 = vlaneseq
      %v5931 = vshrl.u32 %v5930, 7
      %v5932 = vsub.s32 0, %v5931
      %v5933 = vrot.slane %v5838, %v5932
      %v5935 = vmul.f32 %v5921, %v5933
      %v5936 = vmul.f32 %v5922, %v5933
      %v5937 = vmul.f32 %v5923, %v5933
      %v5938 = vmul.f32 %v5924, %v5933
      %v5939 = vmul.f32 %v5925, %v5933
      %v5940 = vmul.f32 %v5926, %v5933
      %v5941 = vmul.f32 %v5927, %v5933
      %v5942 = vmul.f32 %v5928, %v5933
      %v5944 = vlaneseq
      %v5945 = vshrl.u32 %v5944, 7
      %v5946 = vsub.s32 0, %v5945
      %v5947 = vrot.slane %v5840, %v5946
      %v5949 = vadd.f32 %v5935, %v5947
      %v5950 = vadd.f32 %v5936, %v5947
      %v5951 = vadd.f32 %v5937, %v5947
      %v5952 = vadd.f32 %v5938, %v5947
      %v5953 = vadd.f32 %v5939, %v5947
      %v5954 = vadd.f32 %v5940, %v5947
      %v5955 = vadd.f32 %v5941, %v5947
      %v5956 = vadd.f32 %v5942, %v5947
      %v5957 = vpack.c.bf16 %v5950, %v5949
      %v5958 = vpack.c.bf16 %v5952, %v5951
      %v5959 = vpack.c.bf16 %v5954, %v5953
      %v5960 = vpack.c.bf16 %v5956, %v5955
      %s5961 = scalar_lea.vmem %s11, 256
      %v5962 = vld [vmem:[%s5961] sm:$0xff]
      %v5963 = vld [vmem:[%s5961 + $0x8] sm:$0xff]
      %v5964 = vld [vmem:[%s5961 + $0x10] sm:$0xff]
      %v5965 = vld [vmem:[%s5961 + $0x18] sm:$0xff]
      %v5966 = vld [vmem:[%s5961 + $0x20] sm:$0xff]
      %v5967 = vld [vmem:[%s5961 + $0x28] sm:$0xff]
      %v5968 = vld [vmem:[%s5961 + $0x30] sm:$0xff]
      %v5969 = vld [vmem:[%s5961 + $0x38] sm:$0xff]
      %v5970 = vld [vmem:[%s5961 + $0x40] sm:$0xff]
      %v5971 = vld [vmem:[%s5961 + $0x48] sm:$0xff]
      %v5972 = vld [vmem:[%s5961 + $0x50] sm:$0xff]
      %v5973 = vld [vmem:[%s5961 + $0x58] sm:$0xff]
      %v5974 = vld [vmem:[%s5961 + $0x60] sm:$0xff]
      %v5975 = vld [vmem:[%s5961 + $0x68] sm:$0xff]
      %v5976 = vld [vmem:[%s5961 + $0x70] sm:$0xff]
      %v5977 = vld [vmem:[%s5961 + $0x78] sm:$0xff]
      %v5978 = vld [vmem:[%s5961 + $0x80] sm:$0xff]
      %v5979 = vld [vmem:[%s5961 + $0x88] sm:$0xff]
      %v5980 = vld [vmem:[%s5961 + $0x90] sm:$0xff]
      %v5981 = vld [vmem:[%s5961 + $0x98] sm:$0xff]
      %v5982 = vld [vmem:[%s5961 + $0xa0] sm:$0xff]
      %v5983 = vld [vmem:[%s5961 + $0xa8] sm:$0xff]
      %v5984 = vld [vmem:[%s5961 + $0xb0] sm:$0xff]
      %v5985 = vld [vmem:[%s5961 + $0xb8] sm:$0xff]
      %v5986 = vld [vmem:[%s5961 + $0xc0] sm:$0xff]
      %v5987 = vld [vmem:[%s5961 + $0xc8] sm:$0xff]
      %v5988 = vld [vmem:[%s5961 + $0xd0] sm:$0xff]
      %v5989 = vld [vmem:[%s5961 + $0xd8] sm:$0xff]
      %v5990 = vld [vmem:[%s5961 + $0xe0] sm:$0xff]
      %v5991 = vld [vmem:[%s5961 + $0xe8] sm:$0xff]
      %v5992 = vld [vmem:[%s5961 + $0xf0] sm:$0xff]
      %v5993 = vld [vmem:[%s5961 + $0xf8] sm:$0xff]
      %s5994 = scalar_lea.vmem %s12, 4
      %v5995 = vld [vmem:[%s5994] sm:$0xf]
      %v5997 = vlaneseq
      %v5998 = vshrl.u32 %v5997, 7
      %v5999 = vsub.s32 0, %v5998
      %v6000 = vrot.slane %v5995, %v5999
      %v6001 = vlaneseq
      %v6002 = vshrl.u32 %v6001, 7
      %v6003 = vsub.s32 1, %v6002
      %v6004 = vrot.slane %v5995, %v6003
      %v6005 = vlaneseq
      %v6006 = vshrl.u32 %v6005, 7
      %v6007 = vsub.s32 2, %v6006
      %v6008 = vrot.slane %v5995, %v6007
      %v6009 = vlaneseq
      %v6010 = vshrl.u32 %v6009, 7
      %v6011 = vsub.s32 3, %v6010
      %v6012 = vrot.slane %v5995, %v6011
      %v6049 = vunpack.c.l.b16 %v5962
      %v6050 = vunpack.c.h.b16 %v5962
      %v6051 = vunpack.c.l.b16 %v5963
      %v6052 = vunpack.c.h.b16 %v5963
      %v6053 = vunpack.c.l.b16 %v5964
      %v6054 = vunpack.c.h.b16 %v5964
      %v6055 = vunpack.c.l.b16 %v5965
      %v6056 = vunpack.c.h.b16 %v5965
      %v6057 = vunpack.c.l.b16 %v5966
      %v6058 = vunpack.c.h.b16 %v5966
      %v6059 = vunpack.c.l.b16 %v5967
      %v6060 = vunpack.c.h.b16 %v5967
      %v6061 = vunpack.c.l.b16 %v5968
      %v6062 = vunpack.c.h.b16 %v5968
      %v6063 = vunpack.c.l.b16 %v5969
      %v6064 = vunpack.c.h.b16 %v5969
      %v6065 = vunpack.c.l.b16 %v5970
      %v6066 = vunpack.c.h.b16 %v5970
      %v6067 = vunpack.c.l.b16 %v5971
      %v6068 = vunpack.c.h.b16 %v5971
      %v6069 = vunpack.c.l.b16 %v5972
      %v6070 = vunpack.c.h.b16 %v5972
      %v6071 = vunpack.c.l.b16 %v5973
      %v6072 = vunpack.c.h.b16 %v5973
      %v6073 = vunpack.c.l.b16 %v5974
      %v6074 = vunpack.c.h.b16 %v5974
      %v6075 = vunpack.c.l.b16 %v5975
      %v6076 = vunpack.c.h.b16 %v5975
      %v6077 = vunpack.c.l.b16 %v5976
      %v6078 = vunpack.c.h.b16 %v5976
      %v6079 = vunpack.c.l.b16 %v5977
      %v6080 = vunpack.c.h.b16 %v5977
      %v6081 = vunpack.c.l.b16 %v5978
      %v6082 = vunpack.c.h.b16 %v5978
      %v6083 = vunpack.c.l.b16 %v5979
      %v6084 = vunpack.c.h.b16 %v5979
      %v6085 = vunpack.c.l.b16 %v5980
      %v6086 = vunpack.c.h.b16 %v5980
      %v6087 = vunpack.c.l.b16 %v5981
      %v6088 = vunpack.c.h.b16 %v5981
      %v6089 = vunpack.c.l.b16 %v5982
      %v6090 = vunpack.c.h.b16 %v5982
      %v6091 = vunpack.c.l.b16 %v5983
      %v6092 = vunpack.c.h.b16 %v5983
      %v6093 = vunpack.c.l.b16 %v5984
      %v6094 = vunpack.c.h.b16 %v5984
      %v6095 = vunpack.c.l.b16 %v5985
      %v6096 = vunpack.c.h.b16 %v5985
      %v6097 = vunpack.c.l.b16 %v5986
      %v6098 = vunpack.c.h.b16 %v5986
      %v6099 = vunpack.c.l.b16 %v5987
      %v6100 = vunpack.c.h.b16 %v5987
      %v6101 = vunpack.c.l.b16 %v5988
      %v6102 = vunpack.c.h.b16 %v5988
      %v6103 = vunpack.c.l.b16 %v5989
      %v6104 = vunpack.c.h.b16 %v5989
      %v6105 = vunpack.c.l.b16 %v5990
      %v6106 = vunpack.c.h.b16 %v5990
      %v6107 = vunpack.c.l.b16 %v5991
      %v6108 = vunpack.c.h.b16 %v5991
      %v6109 = vunpack.c.l.b16 %v5992
      %v6110 = vunpack.c.h.b16 %v5992
      %v6111 = vunpack.c.l.b16 %v5993
      %v6112 = vunpack.c.h.b16 %v5993
      %v6113 = vpack.c.b16 %v6053, %v6049
      %v6114 = vpack.c.b16 %v6054, %v6050
      %v6115 = vpack.c.b16 %v6055, %v6051
      %v6116 = vpack.c.b16 %v6056, %v6052
      %v6117 = vpack.c.b16 %v6061, %v6057
      %v6118 = vpack.c.b16 %v6062, %v6058
      %v6119 = vpack.c.b16 %v6063, %v6059
      %v6120 = vpack.c.b16 %v6064, %v6060
      %v6121 = vpack.c.b16 %v6069, %v6065
      %v6122 = vpack.c.b16 %v6070, %v6066
      %v6123 = vpack.c.b16 %v6071, %v6067
      %v6124 = vpack.c.b16 %v6072, %v6068
      %v6125 = vpack.c.b16 %v6077, %v6073
      %v6126 = vpack.c.b16 %v6078, %v6074
      %v6127 = vpack.c.b16 %v6079, %v6075
      %v6128 = vpack.c.b16 %v6080, %v6076
      %v6129 = vpack.c.b16 %v6085, %v6081
      %v6130 = vpack.c.b16 %v6086, %v6082
      %v6131 = vpack.c.b16 %v6087, %v6083
      %v6132 = vpack.c.b16 %v6088, %v6084
      %v6133 = vpack.c.b16 %v6093, %v6089
      %v6134 = vpack.c.b16 %v6094, %v6090
      %v6135 = vpack.c.b16 %v6095, %v6091
      %v6136 = vpack.c.b16 %v6096, %v6092
      %v6137 = vpack.c.b16 %v6101, %v6097
      %v6138 = vpack.c.b16 %v6102, %v6098
      %v6139 = vpack.c.b16 %v6103, %v6099
      %v6140 = vpack.c.b16 %v6104, %v6100
      %v6141 = vpack.c.b16 %v6109, %v6105
      %v6142 = vpack.c.b16 %v6110, %v6106
      %v6143 = vpack.c.b16 %v6111, %v6107
      %v6144 = vpack.c.b16 %v6112, %v6108
      %6177 = vmatprep.subr.bf16.mxu0 %v6114
      %6178 = vmatpush1.bf16.msra.mxu0 %v6113
      %6179 = vmatprep.subr.bf16.mxu0 %v6118
      %6180 = vmatpush1.bf16.msra.mxu0 %v6117
      %6181 = vmatprep.subr.bf16.mxu0 %v6122
      %6182 = vmatpush1.bf16.msra.mxu0 %v6121
      %6183 = vmatprep.subr.bf16.mxu0 %v6126
      %6184 = vmatpush1.bf16.msra.mxu0 %v6125
      %6185 = vmatprep.subr.bf16.mxu0 %v6130
      %6186 = vmatpush1.bf16.msra.mxu0 %v6129
      %6187 = vmatprep.subr.bf16.mxu0 %v6134
      %6188 = vmatpush1.bf16.msra.mxu0 %v6133
      %6189 = vmatprep.subr.bf16.mxu0 %v6138
      %6190 = vmatpush1.bf16.msra.mxu0 %v6137
      %6191 = vmatprep.subr.bf16.mxu0 %v6142
      %6192 = vmatpush1.bf16.msra.mxu0 %v6141
      %6193 = vmatprep.subr.bf16.mxu0 0
      %6194 = vmatpush1.bf16.msra.mxu0 0
      %6195 = vmatprep.subr.bf16.mxu0 0
      %6196 = vmatpush1.bf16.msra.mxu0 0
      %6197 = vmatprep.subr.bf16.mxu0 0
      %6198 = vmatpush1.bf16.msra.mxu0 0
      %6199 = vmatprep.subr.bf16.mxu0 0
      %6200 = vmatpush1.bf16.msra.mxu0 0
      %6201 = vmatprep.subr.bf16.mxu0 0
      %6202 = vmatpush1.bf16.msra.mxu0 0
      %6203 = vmatprep.subr.bf16.mxu0 0
      %6204 = vmatpush1.bf16.msra.mxu0 0
      %6205 = vmatprep.subr.bf16.mxu0 0
      %6206 = vmatpush1.bf16.msra.mxu0 0
      %6207 = vmatprep.subr.bf16.mxu0 0
      %6208 = vmatpush1.bf16.msra.mxu0 0
      %6209 = vmatprep.mubr.bf16.mxu0 0
      %6210 = vmatmul.mubr.bf16.gmra.mrb[0].mxu0 %v5957
      %v6211 = vpop.f32.mrb[0].mxu0
      %v6212 = vadd.f32 %v6000, %v6211
      %v6213 = vpop.f32.mrb[0].mxu0
      %v6214 = vadd.f32 %v6004, %v6213
      %v6215 = vpop.f32.mrb[0].mxu0
      %v6216 = vadd.f32 %v6000, %v6215
      %v6217 = vpop.f32.mrb[0].mxu0
      %v6218 = vadd.f32 %v6004, %v6217
      %6219 = vmatprep.mubr.bf16.mxu0 0
      %6220 = vmatmul.mubr.bf16.gmra.mrb[0].mxu0 %v5958
      %v6221 = vpop.f32.mrb[0].mxu0
      %v6222 = vadd.f32 %v6000, %v6221
      %v6223 = vpop.f32.mrb[0].mxu0
      %v6224 = vadd.f32 %v6004, %v6223
      %v6225 = vpop.f32.mrb[0].mxu0
      %v6226 = vadd.f32 %v6000, %v6225
      %v6227 = vpop.f32.mrb[0].mxu0
      %v6228 = vadd.f32 %v6004, %v6227
      %6229 = vmatprep.mubr.bf16.mxu0 0
      %6230 = vmatmul.mubr.bf16.gmra.mrb[0].mxu0 %v5959
      %v6231 = vpop.f32.mrb[0].mxu0
      %v6232 = vadd.f32 %v6000, %v6231
      %v6233 = vpop.f32.mrb[0].mxu0
      %v6234 = vadd.f32 %v6004, %v6233
      %v6235 = vpop.f32.mrb[0].mxu0
      %v6236 = vadd.f32 %v6000, %v6235
      %v6237 = vpop.f32.mrb[0].mxu0
      %v6238 = vadd.f32 %v6004, %v6237
      %6239 = vmatprep.mubr.bf16.mxu0 0
      %6240 = vmatmul.mubr.bf16.gmra.mrb[0].mxu0 %v5960
      %v6241 = vpop.f32.mrb[0].mxu0
      %v6242 = vadd.f32 %v6000, %v6241
      %v6243 = vpop.f32.mrb[0].mxu0
      %v6244 = vadd.f32 %v6004, %v6243
      %v6245 = vpop.f32.mrb[0].mxu0
      %v6246 = vadd.f32 %v6000, %v6245
      %v6247 = vpop.f32.mrb[0].mxu0
      %v6248 = vadd.f32 %v6004, %v6247
      %6249 = vdwg.mxu0
      %6250 = vmatprep.subr.bf16.mxu0 %v6116
      %6251 = vmatpush1.bf16.msra.mxu0 %v6115
      %6252 = vmatprep.subr.bf16.mxu0 %v6120
      %6253 = vmatpush1.bf16.msra.mxu0 %v6119
      %6254 = vmatprep.subr.bf16.mxu0 %v6124
      %6255 = vmatpush1.bf16.msra.mxu0 %v6123
      %6256 = vmatprep.subr.bf16.mxu0 %v6128
      %6257 = vmatpush1.bf16.msra.mxu0 %v6127
      %6258 = vmatprep.subr.bf16.mxu0 %v6132
      %6259 = vmatpush1.bf16.msra.mxu0 %v6131
      %6260 = vmatprep.subr.bf16.mxu0 %v6136
      %6261 = vmatpush1.bf16.msra.mxu0 %v6135
      %6262 = vmatprep.subr.bf16.mxu0 %v6140
      %6263 = vmatpush1.bf16.msra.mxu0 %v6139
      %6264 = vmatprep.subr.bf16.mxu0 %v6144
      %6265 = vmatpush1.bf16.msra.mxu0 %v6143
      %6266 = vmatprep.subr.bf16.mxu0 0
      %6267 = vmatpush1.bf16.msra.mxu0 0
      %6268 = vmatprep.subr.bf16.mxu0 0
      %6269 = vmatpush1.bf16.msra.mxu0 0
      %6270 = vmatprep.subr.bf16.mxu0 0
      %6271 = vmatpush1.bf16.msra.mxu0 0
      %6272 = vmatprep.subr.bf16.mxu0 0
      %6273 = vmatpush1.bf16.msra.mxu0 0
      %6274 = vmatprep.subr.bf16.mxu0 0
      %6275 = vmatpush1.bf16.msra.mxu0 0
      %6276 = vmatprep.subr.bf16.mxu0 0
      %6277 = vmatpush1.bf16.msra.mxu0 0
      %6278 = vmatprep.subr.bf16.mxu0 0
      %6279 = vmatpush1.bf16.msra.mxu0 0
      %6280 = vmatprep.subr.bf16.mxu0 0
      %6281 = vmatpush1.bf16.msra.mxu0 0
      %6282 = vmatprep.mubr.bf16.mxu0 0
      %6283 = vmatmul.mubr.bf16.gmra.mrb[0].mxu0 %v5957
      %v6284 = vpop.f32.mrb[0].mxu0
      %v6285 = vadd.f32 %v6008, %v6284
      %v6286 = vpop.f32.mrb[0].mxu0
      %v6287 = vadd.f32 %v6012, %v6286
      %v6288 = vpop.f32.mrb[0].mxu0
      %v6289 = vadd.f32 %v6008, %v6288
      %v6290 = vpop.f32.mrb[0].mxu0
      %v6291 = vadd.f32 %v6012, %v6290
      %6292 = vmatprep.mubr.bf16.mxu0 0
      %6293 = vmatmul.mubr.bf16.gmra.mrb[0].mxu0 %v5958
      %v6294 = vpop.f32.mrb[0].mxu0
      %v6295 = vadd.f32 %v6008, %v6294
      %v6296 = vpop.f32.mrb[0].mxu0
      %v6297 = vadd.f32 %v6012, %v6296
      %v6298 = vpop.f32.mrb[0].mxu0
      %v6299 = vadd.f32 %v6008, %v6298
      %v6300 = vpop.f32.mrb[0].mxu0
      %v6301 = vadd.f32 %v6012, %v6300
      %6302 = vmatprep.mubr.bf16.mxu0 0
      %6303 = vmatmul.mubr.bf16.gmra.mrb[0].mxu0 %v5959
      %v6304 = vpop.f32.mrb[0].mxu0
      %v6305 = vadd.f32 %v6008, %v6304
      %v6306 = vpop.f32.mrb[0].mxu0
      %v6307 = vadd.f32 %v6012, %v6306
      %v6308 = vpop.f32.mrb[0].mxu0
      %v6309 = vadd.f32 %v6008, %v6308
      %v6310 = vpop.f32.mrb[0].mxu0
      %v6311 = vadd.f32 %v6012, %v6310
      %6312 = vmatprep.mubr.bf16.mxu0 0
      %6313 = vmatmul.mubr.bf16.gmra.mrb[0].mxu0 %v5960
      %v6314 = vpop.f32.mrb[0].mxu0
      %v6315 = vadd.f32 %v6008, %v6314
      %v6316 = vpop.f32.mrb[0].mxu0
      %v6317 = vadd.f32 %v6012, %v6316
      %v6318 = vpop.f32.mrb[0].mxu0
      %v6319 = vadd.f32 %v6008, %v6318
      %v6320 = vpop.f32.mrb[0].mxu0
      %v6321 = vadd.f32 %v6012, %v6320
      %6322 = vdwg.mxu0
      %v6323 = vmax.f32 %v6212, 0.0
      %v6324 = vmax.f32 %v6214, 0.0
      %v6325 = vmax.f32 %v6285, 0.0
      %v6326 = vmax.f32 %v6287, 0.0
      %v6327 = vmax.f32 %v6216, 0.0
      %v6328 = vmax.f32 %v6218, 0.0
      %v6329 = vmax.f32 %v6289, 0.0
      %v6330 = vmax.f32 %v6291, 0.0
      %v6331 = vmax.f32 %v6222, 0.0
      %v6332 = vmax.f32 %v6224, 0.0
      %v6333 = vmax.f32 %v6295, 0.0
      %v6334 = vmax.f32 %v6297, 0.0
      %v6335 = vmax.f32 %v6226, 0.0
      %v6336 = vmax.f32 %v6228, 0.0
      %v6337 = vmax.f32 %v6299, 0.0
      %v6338 = vmax.f32 %v6301, 0.0
      %v6339 = vmax.f32 %v6232, 0.0
      %v6340 = vmax.f32 %v6234, 0.0
      %v6341 = vmax.f32 %v6305, 0.0
      %v6342 = vmax.f32 %v6307, 0.0
      %v6343 = vmax.f32 %v6236, 0.0
      %v6344 = vmax.f32 %v6238, 0.0
      %v6345 = vmax.f32 %v6309, 0.0
      %v6346 = vmax.f32 %v6311, 0.0
      %v6347 = vmax.f32 %v6242, 0.0
      %v6348 = vmax.f32 %v6244, 0.0
      %v6349 = vmax.f32 %v6315, 0.0
      %v6350 = vmax.f32 %v6317, 0.0
      %v6351 = vmax.f32 %v6246, 0.0
      %v6352 = vmax.f32 %v6248, 0.0
      %v6353 = vmax.f32 %v6319, 0.0
      %v6354 = vmax.f32 %v6321, 0.0
      %v6355 = vpack.c.bf16 %v6327, %v6323
      %v6356 = vpack.c.bf16 %v6328, %v6324
      %v6357 = vpack.c.bf16 %v6329, %v6325
      %v6358 = vpack.c.bf16 %v6330, %v6326
      %v6359 = vpack.c.bf16 %v6335, %v6331
      %v6360 = vpack.c.bf16 %v6336, %v6332
      %v6361 = vpack.c.bf16 %v6337, %v6333
      %v6362 = vpack.c.bf16 %v6338, %v6334
      %v6363 = vpack.c.bf16 %v6343, %v6339
      %v6364 = vpack.c.bf16 %v6344, %v6340
      %v6365 = vpack.c.bf16 %v6345, %v6341
      %v6366 = vpack.c.bf16 %v6346, %v6342
      %v6367 = vpack.c.bf16 %v6351, %v6347
      %v6368 = vpack.c.bf16 %v6352, %v6348
      %v6369 = vpack.c.bf16 %v6353, %v6349
      %v6370 = vpack.c.bf16 %v6354, %v6350
      %s6371 = scalar_lea.vmem %s13, 256
      %v6372 = vld [vmem:[%s6371] sm:$0xf]
      %v6373 = vld [vmem:[%s6371 + $0x4] sm:$0xf]
      %v6374 = vld [vmem:[%s6371 + $0x8] sm:$0xf]
      %v6375 = vld [vmem:[%s6371 + $0xc] sm:$0xf]
      %v6376 = vld [vmem:[%s6371 + $0x10] sm:$0xf]
      %v6377 = vld [vmem:[%s6371 + $0x14] sm:$0xf]
      %v6378 = vld [vmem:[%s6371 + $0x18] sm:$0xf]
      %v6379 = vld [vmem:[%s6371 + $0x1c] sm:$0xf]
      %v6380 = vld [vmem:[%s6371 + $0x20] sm:$0xf]
      %v6381 = vld [vmem:[%s6371 + $0x24] sm:$0xf]
      %v6382 = vld [vmem:[%s6371 + $0x28] sm:$0xf]
      %v6383 = vld [vmem:[%s6371 + $0x2c] sm:$0xf]
      %v6384 = vld [vmem:[%s6371 + $0x30] sm:$0xf]
      %v6385 = vld [vmem:[%s6371 + $0x34] sm:$0xf]
      %v6386 = vld [vmem:[%s6371 + $0x38] sm:$0xf]
      %v6387 = vld [vmem:[%s6371 + $0x3c] sm:$0xf]
      %v6388 = vld [vmem:[%s6371 + $0x40] sm:$0xf]
      %v6389 = vld [vmem:[%s6371 + $0x44] sm:$0xf]
      %v6390 = vld [vmem:[%s6371 + $0x48] sm:$0xf]
      %v6391 = vld [vmem:[%s6371 + $0x4c] sm:$0xf]
      %v6392 = vld [vmem:[%s6371 + $0x50] sm:$0xf]
      %v6393 = vld [vmem:[%s6371 + $0x54] sm:$0xf]
      %v6394 = vld [vmem:[%s6371 + $0x58] sm:$0xf]
      %v6395 = vld [vmem:[%s6371 + $0x5c] sm:$0xf]
      %v6396 = vld [vmem:[%s6371 + $0x60] sm:$0xf]
      %v6397 = vld [vmem:[%s6371 + $0x64] sm:$0xf]
      %v6398 = vld [vmem:[%s6371 + $0x68] sm:$0xf]
      %v6399 = vld [vmem:[%s6371 + $0x6c] sm:$0xf]
      %v6400 = vld [vmem:[%s6371 + $0x70] sm:$0xf]
      %v6401 = vld [vmem:[%s6371 + $0x74] sm:$0xf]
      %v6402 = vld [vmem:[%s6371 + $0x78] sm:$0xf]
      %v6403 = vld [vmem:[%s6371 + $0x7c] sm:$0xf]
      %v6404 = vld [vmem:[%s6371 + $0x80] sm:$0xf]
      %v6405 = vld [vmem:[%s6371 + $0x84] sm:$0xf]
      %v6406 = vld [vmem:[%s6371 + $0x88] sm:$0xf]
      %v6407 = vld [vmem:[%s6371 + $0x8c] sm:$0xf]
      %v6408 = vld [vmem:[%s6371 + $0x90] sm:$0xf]
      %v6409 = vld [vmem:[%s6371 + $0x94] sm:$0xf]
      %v6410 = vld [vmem:[%s6371 + $0x98] sm:$0xf]
      %v6411 = vld [vmem:[%s6371 + $0x9c] sm:$0xf]
      %v6412 = vld [vmem:[%s6371 + $0xa0] sm:$0xf]
      %v6413 = vld [vmem:[%s6371 + $0xa4] sm:$0xf]
      %v6414 = vld [vmem:[%s6371 + $0xa8] sm:$0xf]
      %v6415 = vld [vmem:[%s6371 + $0xac] sm:$0xf]
      %v6416 = vld [vmem:[%s6371 + $0xb0] sm:$0xf]
      %v6417 = vld [vmem:[%s6371 + $0xb4] sm:$0xf]
      %v6418 = vld [vmem:[%s6371 + $0xb8] sm:$0xf]
      %v6419 = vld [vmem:[%s6371 + $0xbc] sm:$0xf]
      %v6420 = vld [vmem:[%s6371 + $0xc0] sm:$0xf]
      %v6421 = vld [vmem:[%s6371 + $0xc4] sm:$0xf]
      %v6422 = vld [vmem:[%s6371 + $0xc8] sm:$0xf]
      %v6423 = vld [vmem:[%s6371 + $0xcc] sm:$0xf]
      %v6424 = vld [vmem:[%s6371 + $0xd0] sm:$0xf]
      %v6425 = vld [vmem:[%s6371 + $0xd4] sm:$0xf]
      %v6426 = vld [vmem:[%s6371 + $0xd8] sm:$0xf]
      %v6427 = vld [vmem:[%s6371 + $0xdc] sm:$0xf]
      %v6428 = vld [vmem:[%s6371 + $0xe0] sm:$0xf]
      %v6429 = vld [vmem:[%s6371 + $0xe4] sm:$0xf]
      %v6430 = vld [vmem:[%s6371 + $0xe8] sm:$0xf]
      %v6431 = vld [vmem:[%s6371 + $0xec] sm:$0xf]
      %v6432 = vld [vmem:[%s6371 + $0xf0] sm:$0xf]
      %v6433 = vld [vmem:[%s6371 + $0xf4] sm:$0xf]
      %v6434 = vld [vmem:[%s6371 + $0xf8] sm:$0xf]
      %v6435 = vld [vmem:[%s6371 + $0xfc] sm:$0xf]
      %s6436 = scalar_lea.vmem %s14, 1
      %v6437 = vld [vmem:[%s6436] sm:$0x1]
      %v6439 = vlaneseq
      %v6440 = vshrl.u32 %v6439, 7
      %v6441 = vsub.s32 0, %v6440
      %v6442 = vrot.slane %v6437, %v6441
      %v6508 = vunpack.c.l.b16 %v6372
      %v6509 = vunpack.c.l.b16 %v6373
      %v6510 = vunpack.c.l.b16 %v6374
      %v6511 = vunpack.c.l.b16 %v6375
      %v6512 = vunpack.c.l.b16 %v6376
      %v6513 = vunpack.c.l.b16 %v6377
      %v6514 = vunpack.c.l.b16 %v6378
      %v6515 = vunpack.c.l.b16 %v6379
      %v6516 = vunpack.c.l.b16 %v6380
      %v6517 = vunpack.c.l.b16 %v6381
      %v6518 = vunpack.c.l.b16 %v6382
      %v6519 = vunpack.c.l.b16 %v6383
      %v6520 = vunpack.c.l.b16 %v6384
      %v6521 = vunpack.c.l.b16 %v6385
      %v6522 = vunpack.c.l.b16 %v6386
      %v6523 = vunpack.c.l.b16 %v6387
      %v6524 = vunpack.c.l.b16 %v6388
      %v6525 = vunpack.c.l.b16 %v6389
      %v6526 = vunpack.c.l.b16 %v6390
      %v6527 = vunpack.c.l.b16 %v6391
      %v6528 = vunpack.c.l.b16 %v6392
      %v6529 = vunpack.c.l.b16 %v6393
      %v6530 = vunpack.c.l.b16 %v6394
      %v6531 = vunpack.c.l.b16 %v6395
      %v6532 = vunpack.c.l.b16 %v6396
      %v6533 = vunpack.c.l.b16 %v6397
      %v6534 = vunpack.c.l.b16 %v6398
      %v6535 = vunpack.c.l.b16 %v6399
      %v6536 = vunpack.c.l.b16 %v6400
      %v6537 = vunpack.c.l.b16 %v6401
      %v6538 = vunpack.c.l.b16 %v6402
      %v6539 = vunpack.c.l.b16 %v6403
      %v6540 = vunpack.c.l.b16 %v6404
      %v6541 = vunpack.c.l.b16 %v6405
      %v6542 = vunpack.c.l.b16 %v6406
      %v6543 = vunpack.c.l.b16 %v6407
      %v6544 = vunpack.c.l.b16 %v6408
      %v6545 = vunpack.c.l.b16 %v6409
      %v6546 = vunpack.c.l.b16 %v6410
      %v6547 = vunpack.c.l.b16 %v6411
      %v6548 = vunpack.c.l.b16 %v6412
      %v6549 = vunpack.c.l.b16 %v6413
      %v6550 = vunpack.c.l.b16 %v6414
      %v6551 = vunpack.c.l.b16 %v6415
      %v6552 = vunpack.c.l.b16 %v6416
      %v6553 = vunpack.c.l.b16 %v6417
      %v6554 = vunpack.c.l.b16 %v6418
      %v6555 = vunpack.c.l.b16 %v6419
      %v6556 = vunpack.c.l.b16 %v6420
      %v6557 = vunpack.c.l.b16 %v6421
      %v6558 = vunpack.c.l.b16 %v6422
      %v6559 = vunpack.c.l.b16 %v6423
      %v6560 = vunpack.c.l.b16 %v6424
      %v6561 = vunpack.c.l.b16 %v6425
      %v6562 = vunpack.c.l.b16 %v6426
      %v6563 = vunpack.c.l.b16 %v6427
      %v6564 = vunpack.c.l.b16 %v6428
      %v6565 = vunpack.c.l.b16 %v6429
      %v6566 = vunpack.c.l.b16 %v6430
      %v6567 = vunpack.c.l.b16 %v6431
      %v6568 = vunpack.c.l.b16 %v6432
      %v6569 = vunpack.c.l.b16 %v6433
      %v6570 = vunpack.c.l.b16 %v6434
      %v6571 = vunpack.c.l.b16 %v6435
      %v6572 = vpack.c.b16 %v6509, %v6508
      %v6573 = vpack.c.b16 %v6511, %v6510
      %v6574 = vpack.c.b16 %v6513, %v6512
      %v6575 = vpack.c.b16 %v6515, %v6514
      %v6576 = vpack.c.b16 %v6517, %v6516
      %v6577 = vpack.c.b16 %v6519, %v6518
      %v6578 = vpack.c.b16 %v6521, %v6520
      %v6579 = vpack.c.b16 %v6523, %v6522
      %v6580 = vpack.c.b16 %v6525, %v6524
      %v6581 = vpack.c.b16 %v6527, %v6526
      %v6582 = vpack.c.b16 %v6529, %v6528
      %v6583 = vpack.c.b16 %v6531, %v6530
      %v6584 = vpack.c.b16 %v6533, %v6532
      %v6585 = vpack.c.b16 %v6535, %v6534
      %v6586 = vpack.c.b16 %v6537, %v6536
      %v6587 = vpack.c.b16 %v6539, %v6538
      %v6588 = vpack.c.b16 %v6541, %v6540
      %v6589 = vpack.c.b16 %v6543, %v6542
      %v6590 = vpack.c.b16 %v6545, %v6544
      %v6591 = vpack.c.b16 %v6547, %v6546
      %v6592 = vpack.c.b16 %v6549, %v6548
      %v6593 = vpack.c.b16 %v6551, %v6550
      %v6594 = vpack.c.b16 %v6553, %v6552
      %v6595 = vpack.c.b16 %v6555, %v6554
      %v6596 = vpack.c.b16 %v6557, %v6556
      %v6597 = vpack.c.b16 %v6559, %v6558
      %v6598 = vpack.c.b16 %v6561, %v6560
      %v6599 = vpack.c.b16 %v6563, %v6562
      %v6600 = vpack.c.b16 %v6565, %v6564
      %v6601 = vpack.c.b16 %v6567, %v6566
      %v6602 = vpack.c.b16 %v6569, %v6568
      %v6603 = vpack.c.b16 %v6571, %v6570
      %6636 = vmatprep.subr.bf16.mxu0 0
      %6637 = vmatpush1.bf16.msra.mxu0 %v6572
      %6638 = vmatprep.subr.bf16.mxu0 0
      %6639 = vmatpush1.bf16.msra.mxu0 %v6573
      %6640 = vmatprep.subr.bf16.mxu0 0
      %6641 = vmatpush1.bf16.msra.mxu0 %v6574
      %6642 = vmatprep.subr.bf16.mxu0 0
      %6643 = vmatpush1.bf16.msra.mxu0 %v6575
      %6644 = vmatprep.subr.bf16.mxu0 0
      %6645 = vmatpush1.bf16.msra.mxu0 %v6576
      %6646 = vmatprep.subr.bf16.mxu0 0
      %6647 = vmatpush1.bf16.msra.mxu0 %v6577
      %6648 = vmatprep.subr.bf16.mxu0 0
      %6649 = vmatpush1.bf16.msra.mxu0 %v6578
      %6650 = vmatprep.subr.bf16.mxu0 0
      %6651 = vmatpush1.bf16.msra.mxu0 %v6579
      %6652 = vmatprep.subr.bf16.mxu0 0
      %6653 = vmatpush1.bf16.msra.mxu0 %v6580
      %6654 = vmatprep.subr.bf16.mxu0 0
      %6655 = vmatpush1.bf16.msra.mxu0 %v6581
      %6656 = vmatprep.subr.bf16.mxu0 0
      %6657 = vmatpush1.bf16.msra.mxu0 %v6582
      %6658 = vmatprep.subr.bf16.mxu0 0
      %6659 = vmatpush1.bf16.msra.mxu0 %v6583
      %6660 = vmatprep.subr.bf16.mxu0 0
      %6661 = vmatpush1.bf16.msra.mxu0 %v6584
      %6662 = vmatprep.subr.bf16.mxu0 0
      %6663 = vmatpush1.bf16.msra.mxu0 %v6585
      %6664 = vmatprep.subr.bf16.mxu0 0
      %6665 = vmatpush1.bf16.msra.mxu0 %v6586
      %6666 = vmatprep.subr.bf16.mxu0 0
      %6667 = vmatpush1.bf16.msra.mxu0 %v6587
      %6668 = vmatprep.mubr.bf16.mxu0 %v6356
      %6669 = vmatmul.mubr.bf16.gmra.mrb[0].mxu0 %v6355
      %v6670 = vpop.f32.mrb[0].mxu0
      %v6671 = vadd.f32 %v6442, %v6670
      %v6672 = vpop.f32.mrb[0].mxu0
      %v6673 = vpop.f32.mrb[0].mxu0
      %v6674 = vadd.f32 %v6442, %v6673
      %v6675 = vpop.f32.mrb[0].mxu0
      %6676 = vmatprep.mubr.bf16.mxu0 %v6360
      %6677 = vmatmul.mubr.bf16.gmra.mrb[0].mxu0 %v6359
      %v6678 = vpop.f32.mrb[0].mxu0
      %v6679 = vadd.f32 %v6442, %v6678
      %v6680 = vpop.f32.mrb[0].mxu0
      %v6681 = vpop.f32.mrb[0].mxu0
      %v6682 = vadd.f32 %v6442, %v6681
      %v6683 = vpop.f32.mrb[0].mxu0
      %6684 = vmatprep.mubr.bf16.mxu0 %v6364
      %6685 = vmatmul.mubr.bf16.gmra.mrb[0].mxu0 %v6363
      %v6686 = vpop.f32.mrb[0].mxu0
      %v6687 = vadd.f32 %v6442, %v6686
      %v6688 = vpop.f32.mrb[0].mxu0
      %v6689 = vpop.f32.mrb[0].mxu0
      %v6690 = vadd.f32 %v6442, %v6689
      %v6691 = vpop.f32.mrb[0].mxu0
      %6692 = vmatprep.mubr.bf16.mxu0 %v6368
      %6693 = vmatmul.mubr.bf16.gmra.mrb[0].mxu0 %v6367
      %v6694 = vpop.f32.mrb[0].mxu0
      %v6695 = vadd.f32 %v6442, %v6694
      %v6696 = vpop.f32.mrb[0].mxu0
      %v6697 = vpop.f32.mrb[0].mxu0
      %v6698 = vadd.f32 %v6442, %v6697
      %v6699 = vpop.f32.mrb[0].mxu0
      %6700 = vdwg.mxu0
      %6701 = vmatprep.subr.bf16.mxu0 0
      %6702 = vmatpush1.bf16.msra.mxu0 %v6588
      %6703 = vmatprep.subr.bf16.mxu0 0
      %6704 = vmatpush1.bf16.msra.mxu0 %v6589
      %6705 = vmatprep.subr.bf16.mxu0 0
      %6706 = vmatpush1.bf16.msra.mxu0 %v6590
      %6707 = vmatprep.subr.bf16.mxu0 0
      %6708 = vmatpush1.bf16.msra.mxu0 %v6591
      %6709 = vmatprep.subr.bf16.mxu0 0
      %6710 = vmatpush1.bf16.msra.mxu0 %v6592
      %6711 = vmatprep.subr.bf16.mxu0 0
      %6712 = vmatpush1.bf16.msra.mxu0 %v6593
      %6713 = vmatprep.subr.bf16.mxu0 0
      %6714 = vmatpush1.bf16.msra.mxu0 %v6594
      %6715 = vmatprep.subr.bf16.mxu0 0
      %6716 = vmatpush1.bf16.msra.mxu0 %v6595
      %6717 = vmatprep.subr.bf16.mxu0 0
      %6718 = vmatpush1.bf16.msra.mxu0 %v6596
      %6719 = vmatprep.subr.bf16.mxu0 0
      %6720 = vmatpush1.bf16.msra.mxu0 %v6597
      %6721 = vmatprep.subr.bf16.mxu0 0
      %6722 = vmatpush1.bf16.msra.mxu0 %v6598
      %6723 = vmatprep.subr.bf16.mxu0 0
      %6724 = vmatpush1.bf16.msra.mxu0 %v6599
      %6725 = vmatprep.subr.bf16.mxu0 0
      %6726 = vmatpush1.bf16.msra.mxu0 %v6600
      %6727 = vmatprep.subr.bf16.mxu0 0
      %6728 = vmatpush1.bf16.msra.mxu0 %v6601
      %6729 = vmatprep.subr.bf16.mxu0 0
      %6730 = vmatpush1.bf16.msra.mxu0 %v6602
      %6731 = vmatprep.subr.bf16.mxu0 0
      %6732 = vmatpush1.bf16.msra.mxu0 %v6603
      %6733 = vmatprep.mubr.bf16.mxu0 %v6358
      %6734 = vmatmul.mubr.bf16.gmra.mrb[0].mxu0 %v6357
      %v6735 = vpop.f32.mrb[0].mxu0
      %v6736 = vadd.f32 %v6671, %v6735
      %v6737 = vpop.f32.mrb[0].mxu0
      %v6738 = vpop.f32.mrb[0].mxu0
      %v6739 = vadd.f32 %v6674, %v6738
      %v6740 = vpop.f32.mrb[0].mxu0
      %6741 = vmatprep.mubr.bf16.mxu0 %v6362
      %6742 = vmatmul.mubr.bf16.gmra.mrb[0].mxu0 %v6361
      %v6743 = vpop.f32.mrb[0].mxu0
      %v6744 = vadd.f32 %v6679, %v6743
      %v6745 = vpop.f32.mrb[0].mxu0
      %v6746 = vpop.f32.mrb[0].mxu0
      %v6747 = vadd.f32 %v6682, %v6746
      %v6748 = vpop.f32.mrb[0].mxu0
      %6749 = vmatprep.mubr.bf16.mxu0 %v6366
      %6750 = vmatmul.mubr.bf16.gmra.mrb[0].mxu0 %v6365
      %v6751 = vpop.f32.mrb[0].mxu0
      %v6752 = vadd.f32 %v6687, %v6751
      %v6753 = vpop.f32.mrb[0].mxu0
      %v6754 = vpop.f32.mrb[0].mxu0
      %v6755 = vadd.f32 %v6690, %v6754
      %v6756 = vpop.f32.mrb[0].mxu0
      %6757 = vmatprep.mubr.bf16.mxu0 %v6370
      %6758 = vmatmul.mubr.bf16.gmra.mrb[0].mxu0 %v6369
      %v6759 = vpop.f32.mrb[0].mxu0
      %v6760 = vadd.f32 %v6695, %v6759
      %v6761 = vpop.f32.mrb[0].mxu0
      %v6762 = vpop.f32.mrb[0].mxu0
      %v6763 = vadd.f32 %v6698, %v6762
      %v6764 = vpop.f32.mrb[0].mxu0
      %6765 = vdwg.mxu0
      %v6766 = vadd.f32 %v5949, %v6736
      %v6767 = vadd.f32 %v5950, %v6739
      %v6768 = vadd.f32 %v5951, %v6744
      %v6769 = vadd.f32 %v5952, %v6747
      %v6770 = vadd.f32 %v5953, %v6752
      %v6771 = vadd.f32 %v5954, %v6755
      %v6772 = vadd.f32 %v5955, %v6760
      %v6773 = vadd.f32 %v5956, %v6763
      %s6774 = scalar_lea.vmem %s15, 1
      %v6775 = vld [vmem:[%s6774] sm:$0x1]
      %s6776 = scalar_lea.vmem %s16, 1
      %v6777 = vld [vmem:[%s6776] sm:$0x1]
      %6778 = vadd.xlane.f32.xlu0 %v6766
      %v6779 = vpop.xlane.xlu0 %6778
      %6780 = vadd.xlane.f32.xlu0 %v6767
      %v6781 = vpop.xlane.xlu0 %6780
      %6782 = vadd.xlane.f32.xlu0 %v6768
      %v6783 = vpop.xlane.xlu0 %6782
      %6784 = vadd.xlane.f32.xlu0 %v6769
      %v6785 = vpop.xlane.xlu0 %6784
      %6786 = vadd.xlane.f32.xlu0 %v6770
      %v6787 = vpop.xlane.xlu0 %6786
      %6788 = vadd.xlane.f32.xlu0 %v6771
      %v6789 = vpop.xlane.xlu0 %6788
      %6790 = vadd.xlane.f32.xlu0 %v6772
      %v6791 = vpop.xlane.xlu0 %6790
      %6792 = vadd.xlane.f32.xlu0 %v6773
      %v6793 = vpop.xlane.xlu0 %6792
      %v6794 = vmul.f32 %v6779, %v829
      %v6795 = vmul.f32 %v6781, %v829
      %v6796 = vmul.f32 %v6783, %v829
      %v6797 = vmul.f32 %v6785, %v829
      %v6798 = vmul.f32 %v6787, %v829
      %v6799 = vmul.f32 %v6789, %v829
      %v6800 = vmul.f32 %v6791, %v829
      %v6801 = vmul.f32 %v6793, %v829
      %v6802 = vsub.f32 %v6766, %v6794
      %v6803 = vsub.f32 %v6767, %v6795
      %v6804 = vsub.f32 %v6768, %v6796
      %v6805 = vsub.f32 %v6769, %v6797
      %v6806 = vsub.f32 %v6770, %v6798
      %v6807 = vsub.f32 %v6771, %v6799
      %v6808 = vsub.f32 %v6772, %v6800
      %v6809 = vsub.f32 %v6773, %v6801
      %v6810 = vmul.f32 %v6802, %v6802
      %v6811 = vmul.f32 %v6803, %v6803
      %v6812 = vmul.f32 %v6804, %v6804
      %v6813 = vmul.f32 %v6805, %v6805
      %v6814 = vmul.f32 %v6806, %v6806
      %v6815 = vmul.f32 %v6807, %v6807
      %v6816 = vmul.f32 %v6808, %v6808
      %v6817 = vmul.f32 %v6809, %v6809
      %6818 = vadd.xlane.f32.xlu0 %v6810
      %v6819 = vpop.xlane.xlu0 %6818
      %6820 = vadd.xlane.f32.xlu0 %v6811
      %v6821 = vpop.xlane.xlu0 %6820
      %6822 = vadd.xlane.f32.xlu0 %v6812
      %v6823 = vpop.xlane.xlu0 %6822
      %6824 = vadd.xlane.f32.xlu0 %v6813
      %v6825 = vpop.xlane.xlu0 %6824
      %6826 = vadd.xlane.f32.xlu0 %v6814
      %v6827 = vpop.xlane.xlu0 %6826
      %6828 = vadd.xlane.f32.xlu0 %v6815
      %v6829 = vpop.xlane.xlu0 %6828
      %6830 = vadd.xlane.f32.xlu0 %v6816
      %v6831 = vpop.xlane.xlu0 %6830
      %6832 = vadd.xlane.f32.xlu0 %v6817
      %v6833 = vpop.xlane.xlu0 %6832
      %v6834 = vmul.f32 %v6819, %v829
      %v6835 = vmul.f32 %v6821, %v829
      %v6836 = vmul.f32 %v6823, %v829
      %v6837 = vmul.f32 %v6825, %v829
      %v6838 = vmul.f32 %v6827, %v829
      %v6839 = vmul.f32 %v6829, %v829
      %v6840 = vmul.f32 %v6831, %v829
      %v6841 = vmul.f32 %v6833, %v829
      %v6842 = vadd.f32 %v6834, 1e-05
      %v6843 = vadd.f32 %v6835, 1e-05
      %v6844 = vadd.f32 %v6836, 1e-05
      %v6845 = vadd.f32 %v6837, 1e-05
      %v6846 = vadd.f32 %v6838, 1e-05
      %v6847 = vadd.f32 %v6839, 1e-05
      %v6848 = vadd.f32 %v6840, 1e-05
      %v6849 = vadd.f32 %v6841, 1e-05
      %v6850 = vrsqrt.pop %v6842
      %v6851 = vrsqrt.pop %v6843
      %v6852 = vrsqrt.pop %v6844
      %v6853 = vrsqrt.pop %v6845
      %v6854 = vrsqrt.pop %v6846
      %v6855 = vrsqrt.pop %v6847
      %v6856 = vrsqrt.pop %v6848
      %v6857 = vrsqrt.pop %v6849
      %v6858 = vmul.f32 %v6802, %v6850
      %v6859 = vmul.f32 %v6803, %v6851
      %v6860 = vmul.f32 %v6804, %v6852
      %v6861 = vmul.f32 %v6805, %v6853
      %v6862 = vmul.f32 %v6806, %v6854
      %v6863 = vmul.f32 %v6807, %v6855
      %v6864 = vmul.f32 %v6808, %v6856
      %v6865 = vmul.f32 %v6809, %v6857
      %v6867 = vlaneseq
      %v6868 = vshrl.u32 %v6867, 7
      %v6869 = vsub.s32 0, %v6868
      %v6870 = vrot.slane %v6775, %v6869
      %v6872 = vmul.f32 %v6858, %v6870
      %v6873 = vmul.f32 %v6859, %v6870
      %v6874 = vmul.f32 %v6860, %v6870
      %v6875 = vmul.f32 %v6861, %v6870
      %v6876 = vmul.f32 %v6862, %v6870
      %v6877 = vmul.f32 %v6863, %v6870
      %v6878 = vmul.f32 %v6864, %v6870
      %v6879 = vmul.f32 %v6865, %v6870
      %v6881 = vlaneseq
      %v6882 = vshrl.u32 %v6881, 7
      %v6883 = vsub.s32 0, %v6882
      %v6884 = vrot.slane %v6777, %v6883
      %v6886 = vadd.f32 %v6872, %v6884
      %v6887 = vadd.f32 %v6873, %v6884
      %v6888 = vadd.f32 %v6874, %v6884
      %v6889 = vadd.f32 %v6875, %v6884
      %v6890 = vadd.f32 %v6876, %v6884
      %v6891 = vadd.f32 %v6877, %v6884
      %v6892 = vadd.f32 %v6878, %v6884
      %v6893 = vadd.f32 %v6879, %v6884
      %v6894 = vpack.c.bf16 %v6887, %v6886
      %v6895 = vpack.c.bf16 %v6889, %v6888
      %v6896 = vpack.c.bf16 %v6891, %v6890
      %v6897 = vpack.c.bf16 %v6893, %v6892
      %v6898 = vld [vmem:[%s17] sm:$0xf]
      %v6899 = vld [vmem:[%s17 + $0x4] sm:$0xf]
      %v6900 = vld [vmem:[%s17 + $0x8] sm:$0xf]
      %v6901 = vld [vmem:[%s17 + $0xc] sm:$0xf]
      %v6902 = vld [vmem:[%s17 + $0x10] sm:$0xf]
      %v6903 = vld [vmem:[%s17 + $0x14] sm:$0xf]
      %v6904 = vld [vmem:[%s17 + $0x18] sm:$0xf]
      %v6905 = vld [vmem:[%s17 + $0x1c] sm:$0xf]
      %v6906 = vld [vmem:[%s17 + $0x20] sm:$0xf]
      %v6907 = vld [vmem:[%s17 + $0x24] sm:$0xf]
      %v6908 = vld [vmem:[%s17 + $0x28] sm:$0xf]
      %v6909 = vld [vmem:[%s17 + $0x2c] sm:$0xf]
      %v6910 = vld [vmem:[%s17 + $0x30] sm:$0xf]
      %v6911 = vld [vmem:[%s17 + $0x34] sm:$0xf]
      %v6912 = vld [vmem:[%s17 + $0x38] sm:$0xf]
      %v6913 = vld [vmem:[%s17 + $0x3c] sm:$0xf]
      %v6914 = vld [vmem:[%s18] sm:$0x1]
      %v6916 = vlaneseq
      %v6917 = vshrl.u32 %v6916, 7
      %v6918 = vsub.s32 0, %v6917
      %v6919 = vrot.slane %v6914, %v6918
      %v6937 = vunpack.c.l.b16 %v6898
      %v6938 = vunpack.c.l.b16 %v6899
      %v6939 = vunpack.c.l.b16 %v6900
      %v6940 = vunpack.c.l.b16 %v6901
      %v6941 = vunpack.c.l.b16 %v6902
      %v6942 = vunpack.c.l.b16 %v6903
      %v6943 = vunpack.c.l.b16 %v6904
      %v6944 = vunpack.c.l.b16 %v6905
      %v6945 = vunpack.c.l.b16 %v6906
      %v6946 = vunpack.c.l.b16 %v6907
      %v6947 = vunpack.c.l.b16 %v6908
      %v6948 = vunpack.c.l.b16 %v6909
      %v6949 = vunpack.c.l.b16 %v6910
      %v6950 = vunpack.c.l.b16 %v6911
      %v6951 = vunpack.c.l.b16 %v6912
      %v6952 = vunpack.c.l.b16 %v6913
      %v6953 = vpack.c.b16 %v6938, %v6937
      %v6954 = vpack.c.b16 %v6940, %v6939
      %v6955 = vpack.c.b16 %v6942, %v6941
      %v6956 = vpack.c.b16 %v6944, %v6943
      %v6957 = vpack.c.b16 %v6946, %v6945
      %v6958 = vpack.c.b16 %v6948, %v6947
      %v6959 = vpack.c.b16 %v6950, %v6949
      %v6960 = vpack.c.b16 %v6952, %v6951
      %6969 = vmatprep.subr.bf16.mxu0 0
      %6970 = vmatpush1.bf16.msra.mxu0 %v6953
      %6971 = vmatprep.subr.bf16.mxu0 0
      %6972 = vmatpush1.bf16.msra.mxu0 %v6954
      %6973 = vmatprep.subr.bf16.mxu0 0
      %6974 = vmatpush1.bf16.msra.mxu0 %v6955
      %6975 = vmatprep.subr.bf16.mxu0 0
      %6976 = vmatpush1.bf16.msra.mxu0 %v6956
      %6977 = vmatprep.subr.bf16.mxu0 0
      %6978 = vmatpush1.bf16.msra.mxu0 %v6957
      %6979 = vmatprep.subr.bf16.mxu0 0
      %6980 = vmatpush1.bf16.msra.mxu0 %v6958
      %6981 = vmatprep.subr.bf16.mxu0 0
      %6982 = vmatpush1.bf16.msra.mxu0 %v6959
      %6983 = vmatprep.subr.bf16.mxu0 0
      %6984 = vmatpush1.bf16.msra.mxu0 %v6960
      %6985 = vmatprep.subr.bf16.mxu0 0
      %6986 = vmatpush1.bf16.msra.mxu0 0
      %6987 = vmatprep.subr.bf16.mxu0 0
      %6988 = vmatpush1.bf16.msra.mxu0 0
      %6989 = vmatprep.subr.bf16.mxu0 0
      %6990 = vmatpush1.bf16.msra.mxu0 0
      %6991 = vmatprep.subr.bf16.mxu0 0
      %6992 = vmatpush1.bf16.msra.mxu0 0
      %6993 = vmatprep.subr.bf16.mxu0 0
      %6994 = vmatpush1.bf16.msra.mxu0 0
      %6995 = vmatprep.subr.bf16.mxu0 0
      %6996 = vmatpush1.bf16.msra.mxu0 0
      %6997 = vmatprep.subr.bf16.mxu0 0
      %6998 = vmatpush1.bf16.msra.mxu0 0
      %6999 = vmatprep.subr.bf16.mxu0 0
      %7000 = vmatpush1.bf16.msra.mxu0 0
      %7001 = vmatprep.mubr.bf16.mxu0 0
      %7002 = vmatmul.mubr.bf16.gmra.mrb[0].mxu0 %v6894
      %v7003 = vpop.f32.mrb[0].mxu0
      %v7004 = vadd.f32 %v6919, %v7003
      %v7005 = vpop.f32.mrb[0].mxu0
      %v7006 = vpop.f32.mrb[0].mxu0
      %v7007 = vadd.f32 %v6919, %v7006
      %v7008 = vpop.f32.mrb[0].mxu0
      %7009 = vmatprep.mubr.bf16.mxu0 0
      %7010 = vmatmul.mubr.bf16.gmra.mrb[0].mxu0 %v6895
      %v7011 = vpop.f32.mrb[0].mxu0
      %v7012 = vadd.f32 %v6919, %v7011
      %v7013 = vpop.f32.mrb[0].mxu0
      %v7014 = vpop.f32.mrb[0].mxu0
      %v7015 = vadd.f32 %v6919, %v7014
      %v7016 = vpop.f32.mrb[0].mxu0
      %7017 = vmatprep.mubr.bf16.mxu0 0
      %7018 = vmatmul.mubr.bf16.gmra.mrb[0].mxu0 %v6896
      %v7019 = vpop.f32.mrb[0].mxu0
      %v7020 = vadd.f32 %v6919, %v7019
      %v7021 = vpop.f32.mrb[0].mxu0
      %v7022 = vpop.f32.mrb[0].mxu0
      %v7023 = vadd.f32 %v6919, %v7022
      %v7024 = vpop.f32.mrb[0].mxu0
      %7025 = vmatprep.mubr.bf16.mxu0 0
      %7026 = vmatmul.mubr.bf16.gmra.mrb[0].mxu0 %v6897
      %v7027 = vpop.f32.mrb[0].mxu0
      %v7028 = vadd.f32 %v6919, %v7027
      %v7029 = vpop.f32.mrb[0].mxu0
      %v7030 = vpop.f32.mrb[0].mxu0
      %v7031 = vadd.f32 %v6919, %v7030
      %v7032 = vpop.f32.mrb[0].mxu0
      %7033 = vdwg.mxu0
      %7034 = vst [vmem:[%s602] sm:$0xff] %v7004
      %7035 = vst [vmem:[%s602 + $0x8] sm:$0xff] %v7007
      %7036 = vst [vmem:[%s602 + $0x10] sm:$0xff] %v7012
      %7037 = vst [vmem:[%s602 + $0x18] sm:$0xff] %v7015
      %7038 = vst [vmem:[%s602 + $0x20] sm:$0xff] %v7020
      %7039 = vst [vmem:[%s602 + $0x28] sm:$0xff] %v7023
      %7040 = vst [vmem:[%s602 + $0x30] sm:$0xff] %v7028
      %7041 = vst [vmem:[%s602 + $0x38] sm:$0xff] %v7031
      %p7042 = scmp.lt.s32.totalorder %s30, 1
      %s7043 = scalar_select %p7042, %s30, 1
      %s7044 = smul.addr %s7043, 8
      %s7045 = smul.addr %s7044, 8
      %s7046 = scalar_lea.vmem %s19, %s7045
      // Predicated region
      $region97: #{_lambda_.1} parent=95 // pred_check
        %p7047 = pneg %p452
      $region98: #{_lambda_.1} parent=95 // pred_check_branch
        %7049 = sbr.rel (%p7047) target = $region100
      $region99: #{_lambda_.1} parent=95 // pred_region
        _
      $region100: #{_lambda_.1} parent=95 // pred_fallthru
        _
    $region96: #{_lambda_.1} parent=5 // pred_fallthru
      _
    %p7050 = scmp.le.s32.totalorder 2, %s25
    // Predicated region
    $region101: #{_lambda_.1} parent=5 // pred_check
      %p7051 = pneg %p7050
    $region102: #{_lambda_.1} parent=5 // pred_check_branch
      %7053 = sbr.rel (%p7051) target = $region104
    $region103: #{_lambda_.1} parent=5 // pred_region
      %s7054 = ssub.s32 %s25, 2
      // Predicated region
      $region105: #{_lambda_.1} parent=103 // pred_check
        %p7055 = pneg %p458
      $region106: #{_lambda_.1} parent=103 // pred_check_branch
        %7057 = sbr.rel (%p7055) target = $region108
      $region107: #{_lambda_.1} parent=103 // pred_region
        %p7058 = scmp.lt.s32.totalorder %s31, 1
        %s7059 = scalar_select %p7058, %s31, 1
        %s7060 = smul.addr %s7059, 8
        %s7061 = smul.addr %s7060, 8
        %s7062 = scalar_lea.vmem %s19, %s7061
      $region108: #{_lambda_.1} parent=103 // pred_fallthru
        _
    $region104: #{_lambda_.1} parent=5 // pred_fallthru
      _
  $region6: #{_lambda_.1} parent=0 // loop_footer
    %s29 = sadd.s32 1, %s25
  $region7: #{_lambda_.1} parent=0 // loop_footer_branch
    %24 = sbr.rel target = $region3
  $region8: #{_lambda_.1} parent=0 // loop_exit
    _

</llo_original>
